<compile_context>
chip_gen: v7x
topology: tpu7x:2x2x1
jax: 0.10.0
libtpu: 0.0.40
codegen_flags: <defaults>
</compile_context>

<pallas_src>
import numpy as np

import jax
import jax.numpy as jnp
from jax import lax
from jax.experimental import pallas as pl
from jax.experimental.pallas import tpu as pltpu

KH = KW = 3
CIN = 1
COUT = 16
HIN = WIN = 28          # forced by fc1: 2704 = 16 * 13 * 13
HC = HIN - KH + 1       # 26 (conv output height)
WC = WIN - KW + 1       # 26 (conv output width)
HP = HC // 2            # 13 (pooled height)
WP = WC // 2            # 13 (pooled width)
NCLASS = 10
FCIN = COUT * HP * WP   # 2704
FEAT = WP * COUT        # 208 lane-dense feature lanes: lane = j*16 + c
LANES = 256             # FEAT padded to 2 full lane tiles


# --------------------------------------------------------------------------
# Fused kernel: conv + bias + ReLU + 2x2 max-pool + flatten + FC + log_softmax
# --------------------------------------------------------------------------
def fused_net_kernel(x_ref, m_ref, cb_ref, g_ref, fb_ref, o_ref, hp_ref):
    """x_ref:  (N, 28, 28)    input images
       m_ref:  (6, 28, 256)   conv weights folded with im2col column selection;
                              index = s*3 + di, lane = j*16 + c
                              (s = conv-column parity, di = conv-row tap,
                               j = pooled column, c = output channel)
       cb_ref: (1, 256)       conv bias broadcast over pooled columns
       g_ref:  (13, 10, 256)  fc1 weight permuted to (pooled_row, class, lane)
       fb_ref: (1, 10)        fc1 bias
       o_ref:  (N, 10)        log-softmax output
       hp_ref: (N, 25, 256)   VMEM scratch: adjacent-row pooled activations
                              (valid 2x2-pool results sit at even row indices)
    """
    nb = x_ref.shape[0]

    # ---- conv(1->16) + 2x2 max-pool (lane-dense, no spills) ---------------
    for n in range(nb):
        xn = x_ref[n]                                       # (28, 28)
        parity_acc = []
        for s in range(2):                                  # conv column 2j + s
            a = None
            for di in range(KH):                            # conv row tap
                p = jnp.dot(xn, m_ref[s * KH + di],
                            preferred_element_type=jnp.float32,
                            precision=lax.Precision.HIGHEST)     # (28, 256)
                part = p[di:di + HC, :]                     # (26, 256)
                a = part if a is None else a + part
            parity_acc.append(a)
        # pool over the two columns of each 2x2 window, add conv bias
        cols = jnp.maximum(parity_acc[0], parity_acc[1]) + cb_ref[...]   # (26, 256)
        # pool over adjacent rows; true 2x2-pool values live at even rows
        rows = jnp.maximum(cols[0:HC - 1, :], cols[1:HC, :])             # (25, 256)
        # ReLU commutes with max-pool, apply once at the end
        hp_ref[n] = jnp.maximum(rows, 0.0)

    # ---- Linear(2704 -> 10) as VPU broadcast-FMA + lane reduce ------------
    acc_fc = jnp.zeros((nb, NCLASS, LANES), jnp.float32)
    for p in range(HP):                                     # 13 pooled rows
        row = hp_ref[:, 2 * p:2 * p + 1, :]                 # (N, 1, 256)
        acc_fc = acc_fc + row * g_ref[p]                    # (N, 10, 256)
    logits = jnp.sum(acc_fc, axis=-1) + fb_ref[...]         # (N, 10)

    # ---- log_softmax (stable) ---------------------------------------------
    mx = jnp.max(logits, axis=-1, keepdims=True)
    sh = logits - mx
    lse = jnp.log(jnp.sum(jnp.exp(sh), axis=-1, keepdims=True))
    o_ref[...] = sh - lse


# --------------------------------------------------------------------------
# Host-side (one-time-able) weight relayouts -- parameters only, never
# per-inference activations.
# --------------------------------------------------------------------------
def _prep_conv_mats(conv_w):
    """conv weight (OIHW, 16x1x3x3) -> 6 matrices (28, 256).

    m[s*3+di][w, j*16+c] = conv_w[c, 0, di, w - 2j - s]  when 0 <= w-2j-s < 3,
    so (x[n] @ m[s*3+di])[h, j*16+c] = sum_dj x[n, h, 2j+s+dj] * W[c, di, dj].
    """
    w = conv_w[:, 0, :, :]                                  # (16, 3, 3) [c, di, dj]
    sel = np.zeros((2, HIN, WP, KW), np.float32)            # [s, w, j, dj]
    for s in range(2):
        for j in range(WP):
            for dj in range(KW):
                sel[s, 2 * j + s + dj, j, dj] = 1.0
    m = jnp.einsum('swjd,cid->siwjc', jnp.asarray(sel), w,
                   precision=lax.Precision.HIGHEST)         # (2, 3, 28, 13, 16)
    m = m.reshape(2 * KH, HIN, FEAT)                        # (6, 28, 208)
    return jnp.pad(m, ((0, 0), (0, 0), (0, LANES - FEAT)))  # (6, 28, 256)


def _prep_fc_weight(fc_w):
    """fc1 weight (10, 2704) -> (13, 10, 256), (pooled_row, class, j*16+c).

    Absorbs torch.flatten's (C, H, W) ordering into a one-time permutation so
    the kernel never transposes activations."""
    g = fc_w.reshape(NCLASS, COUT, HP, WP)                  # [k, c, p, j]
    g = jnp.transpose(g, (2, 0, 3, 1))                      # [p, k, j, c]
    g = g.reshape(HP, NCLASS, FEAT)                         # (13, 10, 208)
    return jnp.pad(g, ((0, 0), (0, 0), (0, LANES - FEAT)))  # (13, 10, 256)


def _prep_conv_bias(conv_b):
    b = jnp.tile(conv_b, WP)                                # (208,), index j*16+c
    return jnp.pad(b, (0, LANES - FEAT)).reshape(1, LANES)  # (1, 256)


# --------------------------------------------------------------------------
# pallas_call wrapper
# --------------------------------------------------------------------------
def _fused_forward(x3, m6, cb, g, fb):
    n = x3.shape[0]
    return pl.pallas_call(
        fused_net_kernel,
        out_shape=jax.ShapeDtypeStruct((n, NCLASS), jnp.float32),
        grid=(1,),
        in_specs=[pl.BlockSpec((n, HIN, WIN), lambda i: (0, 0, 0)),
                  pl.BlockSpec((2 * KH, HIN, LANES), lambda i: (0, 0, 0)),
                  pl.BlockSpec((1, LANES), lambda i: (0, 0)),
                  pl.BlockSpec((HP, NCLASS, LANES), lambda i: (0, 0, 0)),
                  pl.BlockSpec((1, NCLASS), lambda i: (0, 0))],
        out_specs=pl.BlockSpec((n, NCLASS), lambda i: (0, 0)),
        scratch_shapes=[pltpu.VMEM((n, HC - 1, LANES), jnp.float32)],
        compiler_params=pltpu.CompilerParams(
            dimension_semantics=("arbitrary",)),
    )(x3, m6, cb, g, fb)


@jax.jit
def net_forward(x_nchw, conv_w, conv_b, fc_w, fc_b):
    """Inference forward pass (dropout layers are identity in eval mode)."""
    m6 = _prep_conv_mats(conv_w)        # parameter relayouts (constant-foldable
    cb = _prep_conv_bias(conv_b)        # in a real deployment; cheap XLA here)
    g = _prep_fc_weight(fc_w)
    fb = fc_b.reshape(1, NCLASS)
    x3 = x_nchw[:, 0, :, :]             # (N, 28, 28); CIN == 1
    return _fused_forward(x3, m6, cb, g, fb)


# --------------------------------------------------------------------------
# Pure-JAX reference (mirrors the PyTorch forward in eval mode), exact f32 conv
# --------------------------------------------------------------------------
def reference_forward(x_nchw, conv_w, conv_b, fc_w, fc_b):
    n = x_nchw.shape[0]
    acc = jnp.zeros((n, COUT, HC, WC), jnp.float32)
    for kh in range(KH):
        for kw in range(KW):
            acc = acc + (x_nchw[:, :, kh:kh + HC, kw:kw + WC]
                         * conv_w[None, :, 0, kh, kw, None, None])
    out = acc + conv_b[None, :, None, None]
    out = jnp.maximum(out, 0.0)
    out = out.reshape(n, COUT, HP, 2, WP, 2).max(axis=(3, 5))
    flat = out.reshape(n, -1)
    logits = jnp.dot(flat, fc_w.T, precision=lax.Precision.HIGHEST) + fc_b
    return jax.nn.log_softmax(logits, axis=1)


if __name__ == "__main__":
    key = jax.random.PRNGKey(0)
    kx, kw1, kb1, kw2, kb2 = jax.random.split(key, 5)
    x = jax.random.normal(kx, (2, CIN, HIN, WIN), jnp.float32)
    conv_w = jax.random.normal(kw1, (COUT, CIN, KH, KW), jnp.float32) / 3.0
    conv_b = jax.random.normal(kb1, (COUT,), jnp.float32) * 0.1
    fc_w = jax.random.normal(kw2, (NCLASS, FCIN), jnp.float32) * 0.02
    fc_b = jax.random.normal(kb2, (NCLASS,), jnp.float32) * 0.1

    out = jax.block_until_ready(net_forward(x, conv_w, conv_b, fc_w, fc_b))
    ref = reference_forward(x, conv_w, conv_b, fc_w, fc_b)

    assert out.shape == (2, NCLASS), out.shape
    assert jnp.allclose(out, ref, atol=1e-4, rtol=1e-4), (out, ref)
    print("KERNEL_OK")
</pallas_src>

<mosaic_0001>
module attributes {stable_mosaic.version = 11 : i64} {
  func.func @fused_net_kernel(%arg0: i32, %arg1: memref<2x28x28xf32, #tpu.memory_space<vmem>>, %arg2: memref<6x28x256xf32, #tpu.memory_space<vmem>>, %arg3: memref<1x256xf32, #tpu.memory_space<vmem>>, %arg4: memref<13x10x256xf32, #tpu.memory_space<vmem>>, %arg5: memref<1x10xf32, #tpu.memory_space<vmem>>, %arg6: memref<2x10xf32, #tpu.memory_space<vmem>>, %arg7: memref<2x25x256xf32, #tpu.memory_space<vmem>>) attributes {dimension_semantics = [#tpu.dimension_semantics<arbitrary>], iteration_bounds = array<i64: 1>, scalar_prefetch = 0 : i64, scratch_operands = 1 : i64, tpu.core_type = #tpu.core_type<tc>, window_params = [{pipeline_mode = #tpu.pipeline_mode<synchronous>, transform_indices = @transform_0, window_bounds = array<i64: 2, 28, 28>}, {pipeline_mode = #tpu.pipeline_mode<synchronous>, transform_indices = @transform_1, window_bounds = array<i64: 6, 28, 256>}, {pipeline_mode = #tpu.pipeline_mode<synchronous>, transform_indices = @transform_2, window_bounds = array<i64: 1, 256>}, {pipeline_mode = #tpu.pipeline_mode<synchronous>, transform_indices = @transform_3, window_bounds = array<i64: 13, 10, 256>}, {pipeline_mode = #tpu.pipeline_mode<synchronous>, transform_indices = @transform_4, window_bounds = array<i64: 1, 10>}, {pipeline_mode = #tpu.pipeline_mode<synchronous>, transform_indices = @transform_5, window_bounds = array<i64: 2, 10>}]} {
    %c0 = arith.constant 0 : index
    %c0_0 = arith.constant 0 : index
    %c0_1 = arith.constant 0 : index
    %0 = vector.load %arg1[%c0, %c0_0, %c0_1] : memref<2x28x28xf32, #tpu.memory_space<vmem>>, vector<1x28x28xf32>
    %1 = vector.shape_cast %0 : vector<1x28x28xf32> to vector<28x28xf32>
    %c0_2 = arith.constant 0 : index
    %c0_3 = arith.constant 0 : index
    %c0_4 = arith.constant 0 : index
    %2 = vector.load %arg2[%c0_2, %c0_3, %c0_4] : memref<6x28x256xf32, #tpu.memory_space<vmem>>, vector<1x28x256xf32>
    %3 = vector.shape_cast %2 : vector<1x28x256xf32> to vector<28x256xf32>
    %cst = arith.constant dense<0.000000e+00> : vector<28x256xf32>
    %4 = tpu.matmul %1, %3, %cst {dimension_numbers = #tpu.dot_dimension_numbers<[1], [0], [0], [1], [0, 0, 1, 1], [], []>, precision = #tpu.contract_precision<fp32>} : vector<28x28xf32>, vector<28x256xf32>, vector<28x256xf32> -> vector<28x256xf32>
    %5 = vector.extract_strided_slice %4 {offsets = [0, 0], sizes = [26, 256], strides = [1, 1]} : vector<28x256xf32> to vector<26x256xf32>
    %c1 = arith.constant 1 : index
    %c0_5 = arith.constant 0 : index
    %c0_6 = arith.constant 0 : index
    %6 = vector.load %arg2[%c1, %c0_5, %c0_6] : memref<6x28x256xf32, #tpu.memory_space<vmem>>, vector<1x28x256xf32>
    %7 = vector.shape_cast %6 : vector<1x28x256xf32> to vector<28x256xf32>
    %cst_7 = arith.constant dense<0.000000e+00> : vector<28x256xf32>
    %8 = tpu.matmul %1, %7, %cst_7 {dimension_numbers = #tpu.dot_dimension_numbers<[1], [0], [0], [1], [0, 0, 1, 1], [], []>, precision = #tpu.contract_precision<fp32>} : vector<28x28xf32>, vector<28x256xf32>, vector<28x256xf32> -> vector<28x256xf32>
    %9 = vector.extract_strided_slice %8 {offsets = [1, 0], sizes = [26, 256], strides = [1, 1]} : vector<28x256xf32> to vector<26x256xf32>
    %10 = arith.addf %5, %9 : vector<26x256xf32>
    %c2 = arith.constant 2 : index
    %c0_8 = arith.constant 0 : index
    %c0_9 = arith.constant 0 : index
    %11 = vector.load %arg2[%c2, %c0_8, %c0_9] : memref<6x28x256xf32, #tpu.memory_space<vmem>>, vector<1x28x256xf32>
    %12 = vector.shape_cast %11 : vector<1x28x256xf32> to vector<28x256xf32>
    %cst_10 = arith.constant dense<0.000000e+00> : vector<28x256xf32>
    %13 = tpu.matmul %1, %12, %cst_10 {dimension_numbers = #tpu.dot_dimension_numbers<[1], [0], [0], [1], [0, 0, 1, 1], [], []>, precision = #tpu.contract_precision<fp32>} : vector<28x28xf32>, vector<28x256xf32>, vector<28x256xf32> -> vector<28x256xf32>
    %14 = vector.extract_strided_slice %13 {offsets = [2, 0], sizes = [26, 256], strides = [1, 1]} : vector<28x256xf32> to vector<26x256xf32>
    %15 = arith.addf %10, %14 : vector<26x256xf32>
    %c3 = arith.constant 3 : index
    %c0_11 = arith.constant 0 : index
    %c0_12 = arith.constant 0 : index
    %16 = vector.load %arg2[%c3, %c0_11, %c0_12] : memref<6x28x256xf32, #tpu.memory_space<vmem>>, vector<1x28x256xf32>
    %17 = vector.shape_cast %16 : vector<1x28x256xf32> to vector<28x256xf32>
    %cst_13 = arith.constant dense<0.000000e+00> : vector<28x256xf32>
    %18 = tpu.matmul %1, %17, %cst_13 {dimension_numbers = #tpu.dot_dimension_numbers<[1], [0], [0], [1], [0, 0, 1, 1], [], []>, precision = #tpu.contract_precision<fp32>} : vector<28x28xf32>, vector<28x256xf32>, vector<28x256xf32> -> vector<28x256xf32>
    %19 = vector.extract_strided_slice %18 {offsets = [0, 0], sizes = [26, 256], strides = [1, 1]} : vector<28x256xf32> to vector<26x256xf32>
    %c4 = arith.constant 4 : index
    %c0_14 = arith.constant 0 : index
    %c0_15 = arith.constant 0 : index
    %20 = vector.load %arg2[%c4, %c0_14, %c0_15] : memref<6x28x256xf32, #tpu.memory_space<vmem>>, vector<1x28x256xf32>
    %21 = vector.shape_cast %20 : vector<1x28x256xf32> to vector<28x256xf32>
    %cst_16 = arith.constant dense<0.000000e+00> : vector<28x256xf32>
    %22 = tpu.matmul %1, %21, %cst_16 {dimension_numbers = #tpu.dot_dimension_numbers<[1], [0], [0], [1], [0, 0, 1, 1], [], []>, precision = #tpu.contract_precision<fp32>} : vector<28x28xf32>, vector<28x256xf32>, vector<28x256xf32> -> vector<28x256xf32>
    %23 = vector.extract_strided_slice %22 {offsets = [1, 0], sizes = [26, 256], strides = [1, 1]} : vector<28x256xf32> to vector<26x256xf32>
    %24 = arith.addf %19, %23 : vector<26x256xf32>
    %c5 = arith.constant 5 : index
    %c0_17 = arith.constant 0 : index
    %c0_18 = arith.constant 0 : index
    %25 = vector.load %arg2[%c5, %c0_17, %c0_18] : memref<6x28x256xf32, #tpu.memory_space<vmem>>, vector<1x28x256xf32>
    %26 = vector.shape_cast %25 : vector<1x28x256xf32> to vector<28x256xf32>
    %cst_19 = arith.constant dense<0.000000e+00> : vector<28x256xf32>
    %27 = tpu.matmul %1, %26, %cst_19 {dimension_numbers = #tpu.dot_dimension_numbers<[1], [0], [0], [1], [0, 0, 1, 1], [], []>, precision = #tpu.contract_precision<fp32>} : vector<28x28xf32>, vector<28x256xf32>, vector<28x256xf32> -> vector<28x256xf32>
    %28 = vector.extract_strided_slice %27 {offsets = [2, 0], sizes = [26, 256], strides = [1, 1]} : vector<28x256xf32> to vector<26x256xf32>
    %29 = arith.addf %24, %28 : vector<26x256xf32>
    %30 = arith.maximumf %15, %29 : vector<26x256xf32>
    %c0_20 = arith.constant 0 : index
    %c0_21 = arith.constant 0 : index
    %31 = vector.load %arg3[%c0_20, %c0_21] : memref<1x256xf32, #tpu.memory_space<vmem>>, vector<1x256xf32>
    %32 = vector.broadcast %31 : vector<1x256xf32> to vector<26x256xf32>
    %33 = arith.addf %30, %32 : vector<26x256xf32>
    %34 = vector.extract_strided_slice %33 {offsets = [0, 0], sizes = [25, 256], strides = [1, 1]} : vector<26x256xf32> to vector<25x256xf32>
    %35 = vector.extract_strided_slice %33 {offsets = [1, 0], sizes = [25, 256], strides = [1, 1]} : vector<26x256xf32> to vector<25x256xf32>
    %36 = arith.maximumf %34, %35 : vector<25x256xf32>
    %cst_22 = arith.constant 0.000000e+00 : f32
    %37 = vector.broadcast %cst_22 : f32 to vector<25x256xf32>
    %38 = arith.maximumf %36, %37 : vector<25x256xf32>
    %c0_23 = arith.constant 0 : index
    %c0_24 = arith.constant 0 : index
    %c0_25 = arith.constant 0 : index
    %39 = vector.load %arg7[%c0_23, %c0_24, %c0_25] : memref<2x25x256xf32, #tpu.memory_space<vmem>>, vector<1x25x256xf32>
    %40 = vector.shape_cast %39 : vector<1x25x256xf32> to vector<25x256xf32>
    %41 = vector.shape_cast %38 : vector<25x256xf32> to vector<1x25x256xf32>
    tpu.vector_store %arg7[%c0_23, %c0_24, %c0_25], %41 {strides = array<i32>} : memref<2x25x256xf32, #tpu.memory_space<vmem>>, vector<1x25x256xf32>,
    %c1_26 = arith.constant 1 : index
    %c0_27 = arith.constant 0 : index
    %c0_28 = arith.constant 0 : index
    %42 = vector.load %arg1[%c1_26, %c0_27, %c0_28] : memref<2x28x28xf32, #tpu.memory_space<vmem>>, vector<1x28x28xf32>
    %43 = vector.shape_cast %42 : vector<1x28x28xf32> to vector<28x28xf32>
    %c0_29 = arith.constant 0 : index
    %c0_30 = arith.constant 0 : index
    %c0_31 = arith.constant 0 : index
    %44 = vector.load %arg2[%c0_29, %c0_30, %c0_31] : memref<6x28x256xf32, #tpu.memory_space<vmem>>, vector<1x28x256xf32>
    %45 = vector.shape_cast %44 : vector<1x28x256xf32> to vector<28x256xf32>
    %cst_32 = arith.constant dense<0.000000e+00> : vector<28x256xf32>
    %46 = tpu.matmul %43, %45, %cst_32 {dimension_numbers = #tpu.dot_dimension_numbers<[1], [0], [0], [1], [0, 0, 1, 1], [], []>, precision = #tpu.contract_precision<fp32>} : vector<28x28xf32>, vector<28x256xf32>, vector<28x256xf32> -> vector<28x256xf32>
    %47 = vector.extract_strided_slice %46 {offsets = [0, 0], sizes = [26, 256], strides = [1, 1]} : vector<28x256xf32> to vector<26x256xf32>
    %c1_33 = arith.constant 1 : index
    %c0_34 = arith.constant 0 : index
    %c0_35 = arith.constant 0 : index
    %48 = vector.load %arg2[%c1_33, %c0_34, %c0_35] : memref<6x28x256xf32, #tpu.memory_space<vmem>>, vector<1x28x256xf32>
    %49 = vector.shape_cast %48 : vector<1x28x256xf32> to vector<28x256xf32>
    %cst_36 = arith.constant dense<0.000000e+00> : vector<28x256xf32>
    %50 = tpu.matmul %43, %49, %cst_36 {dimension_numbers = #tpu.dot_dimension_numbers<[1], [0], [0], [1], [0, 0, 1, 1], [], []>, precision = #tpu.contract_precision<fp32>} : vector<28x28xf32>, vector<28x256xf32>, vector<28x256xf32> -> vector<28x256xf32>
    %51 = vector.extract_strided_slice %50 {offsets = [1, 0], sizes = [26, 256], strides = [1, 1]} : vector<28x256xf32> to vector<26x256xf32>
    %52 = arith.addf %47, %51 : vector<26x256xf32>
    %c2_37 = arith.constant 2 : index
    %c0_38 = arith.constant 0 : index
    %c0_39 = arith.constant 0 : index
    %53 = vector.load %arg2[%c2_37, %c0_38, %c0_39] : memref<6x28x256xf32, #tpu.memory_space<vmem>>, vector<1x28x256xf32>
    %54 = vector.shape_cast %53 : vector<1x28x256xf32> to vector<28x256xf32>
    %cst_40 = arith.constant dense<0.000000e+00> : vector<28x256xf32>
    %55 = tpu.matmul %43, %54, %cst_40 {dimension_numbers = #tpu.dot_dimension_numbers<[1], [0], [0], [1], [0, 0, 1, 1], [], []>, precision = #tpu.contract_precision<fp32>} : vector<28x28xf32>, vector<28x256xf32>, vector<28x256xf32> -> vector<28x256xf32>
    %56 = vector.extract_strided_slice %55 {offsets = [2, 0], sizes = [26, 256], strides = [1, 1]} : vector<28x256xf32> to vector<26x256xf32>
    %57 = arith.addf %52, %56 : vector<26x256xf32>
    %c3_41 = arith.constant 3 : index
    %c0_42 = arith.constant 0 : index
    %c0_43 = arith.constant 0 : index
    %58 = vector.load %arg2[%c3_41, %c0_42, %c0_43] : memref<6x28x256xf32, #tpu.memory_space<vmem>>, vector<1x28x256xf32>
    %59 = vector.shape_cast %58 : vector<1x28x256xf32> to vector<28x256xf32>
    %cst_44 = arith.constant dense<0.000000e+00> : vector<28x256xf32>
    %60 = tpu.matmul %43, %59, %cst_44 {dimension_numbers = #tpu.dot_dimension_numbers<[1], [0], [0], [1], [0, 0, 1, 1], [], []>, precision = #tpu.contract_precision<fp32>} : vector<28x28xf32>, vector<28x256xf32>, vector<28x256xf32> -> vector<28x256xf32>
    %61 = vector.extract_strided_slice %60 {offsets = [0, 0], sizes = [26, 256], strides = [1, 1]} : vector<28x256xf32> to vector<26x256xf32>
    %c4_45 = arith.constant 4 : index
    %c0_46 = arith.constant 0 : index
    %c0_47 = arith.constant 0 : index
    %62 = vector.load %arg2[%c4_45, %c0_46, %c0_47] : memref<6x28x256xf32, #tpu.memory_space<vmem>>, vector<1x28x256xf32>
    %63 = vector.shape_cast %62 : vector<1x28x256xf32> to vector<28x256xf32>
    %cst_48 = arith.constant dense<0.000000e+00> : vector<28x256xf32>
    %64 = tpu.matmul %43, %63, %cst_48 {dimension_numbers = #tpu.dot_dimension_numbers<[1], [0], [0], [1], [0, 0, 1, 1], [], []>, precision = #tpu.contract_precision<fp32>} : vector<28x28xf32>, vector<28x256xf32>, vector<28x256xf32> -> vector<28x256xf32>
    %65 = vector.extract_strided_slice %64 {offsets = [1, 0], sizes = [26, 256], strides = [1, 1]} : vector<28x256xf32> to vector<26x256xf32>
    %66 = arith.addf %61, %65 : vector<26x256xf32>
    %c5_49 = arith.constant 5 : index
    %c0_50 = arith.constant 0 : index
    %c0_51 = arith.constant 0 : index
    %67 = vector.load %arg2[%c5_49, %c0_50, %c0_51] : memref<6x28x256xf32, #tpu.memory_space<vmem>>, vector<1x28x256xf32>
    %68 = vector.shape_cast %67 : vector<1x28x256xf32> to vector<28x256xf32>
    %cst_52 = arith.constant dense<0.000000e+00> : vector<28x256xf32>
    %69 = tpu.matmul %43, %68, %cst_52 {dimension_numbers = #tpu.dot_dimension_numbers<[1], [0], [0], [1], [0, 0, 1, 1], [], []>, precision = #tpu.contract_precision<fp32>} : vector<28x28xf32>, vector<28x256xf32>, vector<28x256xf32> -> vector<28x256xf32>
    %70 = vector.extract_strided_slice %69 {offsets = [2, 0], sizes = [26, 256], strides = [1, 1]} : vector<28x256xf32> to vector<26x256xf32>
    %71 = arith.addf %66, %70 : vector<26x256xf32>
    %72 = arith.maximumf %57, %71 : vector<26x256xf32>
    %c0_53 = arith.constant 0 : index
    %c0_54 = arith.constant 0 : index
    %73 = vector.load %arg3[%c0_53, %c0_54] : memref<1x256xf32, #tpu.memory_space<vmem>>, vector<1x256xf32>
    %74 = vector.broadcast %73 : vector<1x256xf32> to vector<26x256xf32>
    %75 = arith.addf %72, %74 : vector<26x256xf32>
    %76 = vector.extract_strided_slice %75 {offsets = [0, 0], sizes = [25, 256], strides = [1, 1]} : vector<26x256xf32> to vector<25x256xf32>
    %77 = vector.extract_strided_slice %75 {offsets = [1, 0], sizes = [25, 256], strides = [1, 1]} : vector<26x256xf32> to vector<25x256xf32>
    %78 = arith.maximumf %76, %77 : vector<25x256xf32>
    %cst_55 = arith.constant 0.000000e+00 : f32
    %79 = vector.broadcast %cst_55 : f32 to vector<25x256xf32>
    %80 = arith.maximumf %78, %79 : vector<25x256xf32>
    %c1_56 = arith.constant 1 : index
    %c0_57 = arith.constant 0 : index
    %c0_58 = arith.constant 0 : index
    %81 = vector.load %arg7[%c1_56, %c0_57, %c0_58] : memref<2x25x256xf32, #tpu.memory_space<vmem>>, vector<1x25x256xf32>
    %82 = vector.shape_cast %81 : vector<1x25x256xf32> to vector<25x256xf32>
    %83 = vector.shape_cast %80 : vector<25x256xf32> to vector<1x25x256xf32>
    tpu.vector_store %arg7[%c1_56, %c0_57, %c0_58], %83 {strides = array<i32>} : memref<2x25x256xf32, #tpu.memory_space<vmem>>, vector<1x25x256xf32>,
    %cst_59 = arith.constant 0.000000e+00 : f32
    %84 = vector.broadcast %cst_59 : f32 to vector<2x10x256xf32>
    %c0_60 = arith.constant 0 : index
    %c0_61 = arith.constant 0 : index
    %c0_62 = arith.constant 0 : index
    %85 = vector.load %arg7[%c0_60, %c0_61, %c0_62] : memref<2x25x256xf32, #tpu.memory_space<vmem>>, vector<2x1x256xf32>
    %c0_63 = arith.constant 0 : index
    %c0_64 = arith.constant 0 : index
    %c0_65 = arith.constant 0 : index
    %86 = vector.load %arg4[%c0_63, %c0_64, %c0_65] : memref<13x10x256xf32, #tpu.memory_space<vmem>>, vector<1x10x256xf32>
    %87 = vector.shape_cast %86 : vector<1x10x256xf32> to vector<10x256xf32>
    %88 = vector.shape_cast %87 : vector<10x256xf32> to vector<1x10x256xf32>
    %89 = vector.broadcast %85 : vector<2x1x256xf32> to vector<2x10x256xf32>
    %90 = vector.broadcast %88 : vector<1x10x256xf32> to vector<2x10x256xf32>
    %91 = arith.mulf %89, %90 : vector<2x10x256xf32>
    %92 = arith.addf %84, %91 : vector<2x10x256xf32>
    %c0_66 = arith.constant 0 : index
    %c2_67 = arith.constant 2 : index
    %c0_68 = arith.constant 0 : index
    %93 = vector.load %arg7[%c0_66, %c2_67, %c0_68] : memref<2x25x256xf32, #tpu.memory_space<vmem>>, vector<2x1x256xf32>
    %c1_69 = arith.constant 1 : index
    %c0_70 = arith.constant 0 : index
    %c0_71 = arith.constant 0 : index
    %94 = vector.load %arg4[%c1_69, %c0_70, %c0_71] : memref<13x10x256xf32, #tpu.memory_space<vmem>>, vector<1x10x256xf32>
    %95 = vector.shape_cast %94 : vector<1x10x256xf32> to vector<10x256xf32>
    %96 = vector.shape_cast %95 : vector<10x256xf32> to vector<1x10x256xf32>
    %97 = vector.broadcast %93 : vector<2x1x256xf32> to vector<2x10x256xf32>
    %98 = vector.broadcast %96 : vector<1x10x256xf32> to vector<2x10x256xf32>
    %99 = arith.mulf %97, %98 : vector<2x10x256xf32>
    %100 = arith.addf %92, %99 : vector<2x10x256xf32>
    %c0_72 = arith.constant 0 : index
    %c4_73 = arith.constant 4 : index
    %c0_74 = arith.constant 0 : index
    %101 = vector.load %arg7[%c0_72, %c4_73, %c0_74] : memref<2x25x256xf32, #tpu.memory_space<vmem>>, vector<2x1x256xf32>
    %c2_75 = arith.constant 2 : index
    %c0_76 = arith.constant 0 : index
    %c0_77 = arith.constant 0 : index
    %102 = vector.load %arg4[%c2_75, %c0_76, %c0_77] : memref<13x10x256xf32, #tpu.memory_space<vmem>>, vector<1x10x256xf32>
    %103 = vector.shape_cast %102 : vector<1x10x256xf32> to vector<10x256xf32>
    %104 = vector.shape_cast %103 : vector<10x256xf32> to vector<1x10x256xf32>
    %105 = vector.broadcast %101 : vector<2x1x256xf32> to vector<2x10x256xf32>
    %106 = vector.broadcast %104 : vector<1x10x256xf32> to vector<2x10x256xf32>
    %107 = arith.mulf %105, %106 : vector<2x10x256xf32>
    %108 = arith.addf %100, %107 : vector<2x10x256xf32>
    %c0_78 = arith.constant 0 : index
    %c6 = arith.constant 6 : index
    %c0_79 = arith.constant 0 : index
    %109 = vector.load %arg7[%c0_78, %c6, %c0_79] : memref<2x25x256xf32, #tpu.memory_space<vmem>>, vector<2x1x256xf32>
    %c3_80 = arith.constant 3 : index
    %c0_81 = arith.constant 0 : index
    %c0_82 = arith.constant 0 : index
    %110 = vector.load %arg4[%c3_80, %c0_81, %c0_82] : memref<13x10x256xf32, #tpu.memory_space<vmem>>, vector<1x10x256xf32>
    %111 = vector.shape_cast %110 : vector<1x10x256xf32> to vector<10x256xf32>
    %112 = vector.shape_cast %111 : vector<10x256xf32> to vector<1x10x256xf32>
    %113 = vector.broadcast %109 : vector<2x1x256xf32> to vector<2x10x256xf32>
    %114 = vector.broadcast %112 : vector<1x10x256xf32> to vector<2x10x256xf32>
    %115 = arith.mulf %113, %114 : vector<2x10x256xf32>
    %116 = arith.addf %108, %115 : vector<2x10x256xf32>
    %c0_83 = arith.constant 0 : index
    %c8 = arith.constant 8 : index
    %c0_84 = arith.constant 0 : index
    %117 = vector.load %arg7[%c0_83, %c8, %c0_84] : memref<2x25x256xf32, #tpu.memory_space<vmem>>, vector<2x1x256xf32>
    %c4_85 = arith.constant 4 : index
    %c0_86 = arith.constant 0 : index
    %c0_87 = arith.constant 0 : index
    %118 = vector.load %arg4[%c4_85, %c0_86, %c0_87] : memref<13x10x256xf32, #tpu.memory_space<vmem>>, vector<1x10x256xf32>
    %119 = vector.shape_cast %118 : vector<1x10x256xf32> to vector<10x256xf32>
    %120 = vector.shape_cast %119 : vector<10x256xf32> to vector<1x10x256xf32>
    %121 = vector.broadcast %117 : vector<2x1x256xf32> to vector<2x10x256xf32>
    %122 = vector.broadcast %120 : vector<1x10x256xf32> to vector<2x10x256xf32>
    %123 = arith.mulf %121, %122 : vector<2x10x256xf32>
    %124 = arith.addf %116, %123 : vector<2x10x256xf32>
    %c0_88 = arith.constant 0 : index
    %c10 = arith.constant 10 : index
    %c0_89 = arith.constant 0 : index
    %125 = vector.load %arg7[%c0_88, %c10, %c0_89] : memref<2x25x256xf32, #tpu.memory_space<vmem>>, vector<2x1x256xf32>
    %c5_90 = arith.constant 5 : index
    %c0_91 = arith.constant 0 : index
    %c0_92 = arith.constant 0 : index
    %126 = vector.load %arg4[%c5_90, %c0_91, %c0_92] : memref<13x10x256xf32, #tpu.memory_space<vmem>>, vector<1x10x256xf32>
    %127 = vector.shape_cast %126 : vector<1x10x256xf32> to vector<10x256xf32>
    %128 = vector.shape_cast %127 : vector<10x256xf32> to vector<1x10x256xf32>
    %129 = vector.broadcast %125 : vector<2x1x256xf32> to vector<2x10x256xf32>
    %130 = vector.broadcast %128 : vector<1x10x256xf32> to vector<2x10x256xf32>
    %131 = arith.mulf %129, %130 : vector<2x10x256xf32>
    %132 = arith.addf %124, %131 : vector<2x10x256xf32>
    %c0_93 = arith.constant 0 : index
    %c12 = arith.constant 12 : index
    %c0_94 = arith.constant 0 : index
    %133 = vector.load %arg7[%c0_93, %c12, %c0_94] : memref<2x25x256xf32, #tpu.memory_space<vmem>>, vector<2x1x256xf32>
    %c6_95 = arith.constant 6 : index
    %c0_96 = arith.constant 0 : index
    %c0_97 = arith.constant 0 : index
    %134 = vector.load %arg4[%c6_95, %c0_96, %c0_97] : memref<13x10x256xf32, #tpu.memory_space<vmem>>, vector<1x10x256xf32>
    %135 = vector.shape_cast %134 : vector<1x10x256xf32> to vector<10x256xf32>
    %136 = vector.shape_cast %135 : vector<10x256xf32> to vector<1x10x256xf32>
    %137 = vector.broadcast %133 : vector<2x1x256xf32> to vector<2x10x256xf32>
    %138 = vector.broadcast %136 : vector<1x10x256xf32> to vector<2x10x256xf32>
    %139 = arith.mulf %137, %138 : vector<2x10x256xf32>
    %140 = arith.addf %132, %139 : vector<2x10x256xf32>
    %c0_98 = arith.constant 0 : index
    %c14 = arith.constant 14 : index
    %c0_99 = arith.constant 0 : index
    %141 = vector.load %arg7[%c0_98, %c14, %c0_99] : memref<2x25x256xf32, #tpu.memory_space<vmem>>, vector<2x1x256xf32>
    %c7 = arith.constant 7 : index
    %c0_100 = arith.constant 0 : index
    %c0_101 = arith.constant 0 : index
    %142 = vector.load %arg4[%c7, %c0_100, %c0_101] : memref<13x10x256xf32, #tpu.memory_space<vmem>>, vector<1x10x256xf32>
    %143 = vector.shape_cast %142 : vector<1x10x256xf32> to vector<10x256xf32>
    %144 = vector.shape_cast %143 : vector<10x256xf32> to vector<1x10x256xf32>
    %145 = vector.broadcast %141 : vector<2x1x256xf32> to vector<2x10x256xf32>
    %146 = vector.broadcast %144 : vector<1x10x256xf32> to vector<2x10x256xf32>
    %147 = arith.mulf %145, %146 : vector<2x10x256xf32>
    %148 = arith.addf %140, %147 : vector<2x10x256xf32>
    %c0_102 = arith.constant 0 : index
    %c16 = arith.constant 16 : index
    %c0_103 = arith.constant 0 : index
    %149 = vector.load %arg7[%c0_102, %c16, %c0_103] : memref<2x25x256xf32, #tpu.memory_space<vmem>>, vector<2x1x256xf32>
    %c8_104 = arith.constant 8 : index
    %c0_105 = arith.constant 0 : index
    %c0_106 = arith.constant 0 : index
    %150 = vector.load %arg4[%c8_104, %c0_105, %c0_106] : memref<13x10x256xf32, #tpu.memory_space<vmem>>, vector<1x10x256xf32>
    %151 = vector.shape_cast %150 : vector<1x10x256xf32> to vector<10x256xf32>
    %152 = vector.shape_cast %151 : vector<10x256xf32> to vector<1x10x256xf32>
    %153 = vector.broadcast %149 : vector<2x1x256xf32> to vector<2x10x256xf32>
    %154 = vector.broadcast %152 : vector<1x10x256xf32> to vector<2x10x256xf32>
    %155 = arith.mulf %153, %154 : vector<2x10x256xf32>
    %156 = arith.addf %148, %155 : vector<2x10x256xf32>
    %c0_107 = arith.constant 0 : index
    %c18 = arith.constant 18 : index
    %c0_108 = arith.constant 0 : index
    %157 = vector.load %arg7[%c0_107, %c18, %c0_108] : memref<2x25x256xf32, #tpu.memory_space<vmem>>, vector<2x1x256xf32>
    %c9 = arith.constant 9 : index
    %c0_109 = arith.constant 0 : index
    %c0_110 = arith.constant 0 : index
    %158 = vector.load %arg4[%c9, %c0_109, %c0_110] : memref<13x10x256xf32, #tpu.memory_space<vmem>>, vector<1x10x256xf32>
    %159 = vector.shape_cast %158 : vector<1x10x256xf32> to vector<10x256xf32>
    %160 = vector.shape_cast %159 : vector<10x256xf32> to vector<1x10x256xf32>
    %161 = vector.broadcast %157 : vector<2x1x256xf32> to vector<2x10x256xf32>
    %162 = vector.broadcast %160 : vector<1x10x256xf32> to vector<2x10x256xf32>
    %163 = arith.mulf %161, %162 : vector<2x10x256xf32>
    %164 = arith.addf %156, %163 : vector<2x10x256xf32>
    %c0_111 = arith.constant 0 : index
    %c20 = arith.constant 20 : index
    %c0_112 = arith.constant 0 : index
    %165 = vector.load %arg7[%c0_111, %c20, %c0_112] : memref<2x25x256xf32, #tpu.memory_space<vmem>>, vector<2x1x256xf32>
    %c10_113 = arith.constant 10 : index
    %c0_114 = arith.constant 0 : index
    %c0_115 = arith.constant 0 : index
    %166 = vector.load %arg4[%c10_113, %c0_114, %c0_115] : memref<13x10x256xf32, #tpu.memory_space<vmem>>, vector<1x10x256xf32>
    %167 = vector.shape_cast %166 : vector<1x10x256xf32> to vector<10x256xf32>
    %168 = vector.shape_cast %167 : vector<10x256xf32> to vector<1x10x256xf32>
    %169 = vector.broadcast %165 : vector<2x1x256xf32> to vector<2x10x256xf32>
    %170 = vector.broadcast %168 : vector<1x10x256xf32> to vector<2x10x256xf32>
    %171 = arith.mulf %169, %170 : vector<2x10x256xf32>
    %172 = arith.addf %164, %171 : vector<2x10x256xf32>
    %c0_116 = arith.constant 0 : index
    %c22 = arith.constant 22 : index
    %c0_117 = arith.constant 0 : index
    %173 = vector.load %arg7[%c0_116, %c22, %c0_117] : memref<2x25x256xf32, #tpu.memory_space<vmem>>, vector<2x1x256xf32>
    %c11 = arith.constant 11 : index
    %c0_118 = arith.constant 0 : index
    %c0_119 = arith.constant 0 : index
    %174 = vector.load %arg4[%c11, %c0_118, %c0_119] : memref<13x10x256xf32, #tpu.memory_space<vmem>>, vector<1x10x256xf32>
    %175 = vector.shape_cast %174 : vector<1x10x256xf32> to vector<10x256xf32>
    %176 = vector.shape_cast %175 : vector<10x256xf32> to vector<1x10x256xf32>
    %177 = vector.broadcast %173 : vector<2x1x256xf32> to vector<2x10x256xf32>
    %178 = vector.broadcast %176 : vector<1x10x256xf32> to vector<2x10x256xf32>
    %179 = arith.mulf %177, %178 : vector<2x10x256xf32>
    %180 = arith.addf %172, %179 : vector<2x10x256xf32>
    %c0_120 = arith.constant 0 : index
    %c24 = arith.constant 24 : index
    %c0_121 = arith.constant 0 : index
    %181 = vector.load %arg7[%c0_120, %c24, %c0_121] : memref<2x25x256xf32, #tpu.memory_space<vmem>>, vector<2x1x256xf32>
    %c12_122 = arith.constant 12 : index
    %c0_123 = arith.constant 0 : index
    %c0_124 = arith.constant 0 : index
    %182 = vector.load %arg4[%c12_122, %c0_123, %c0_124] : memref<13x10x256xf32, #tpu.memory_space<vmem>>, vector<1x10x256xf32>
    %183 = vector.shape_cast %182 : vector<1x10x256xf32> to vector<10x256xf32>
    %184 = vector.shape_cast %183 : vector<10x256xf32> to vector<1x10x256xf32>
    %185 = vector.broadcast %181 : vector<2x1x256xf32> to vector<2x10x256xf32>
    %186 = vector.broadcast %184 : vector<1x10x256xf32> to vector<2x10x256xf32>
    %187 = arith.mulf %185, %186 : vector<2x10x256xf32>
    %188 = arith.addf %180, %187 : vector<2x10x256xf32>
    %cst_125 = arith.constant dense<0.000000e+00> : vector<2x10xf32>
    %189 = vector.multi_reduction <add>, %188, %cst_125 [2] : vector<2x10x256xf32> to vector<2x10xf32>
    %c0_126 = arith.constant 0 : index
    %c0_127 = arith.constant 0 : index
    %190 = vector.load %arg5[%c0_126, %c0_127] : memref<1x10xf32, #tpu.memory_space<vmem>>, vector<1x10xf32>
    %191 = vector.broadcast %190 : vector<1x10xf32> to vector<2x10xf32>
    %192 = arith.addf %189, %191 : vector<2x10xf32>
    %cst_128 = arith.constant dense<0xFF800000> : vector<2xf32>
    %193 = vector.multi_reduction <maximumf>, %192, %cst_128 [1] : vector<2x10xf32> to vector<2xf32>
    %194 = vector.shape_cast %193 : vector<2xf32> to vector<2x1xf32>
    %195 = vector.broadcast %194 : vector<2x1xf32> to vector<2x10xf32>
    %196 = arith.subf %192, %195 : vector<2x10xf32>
    %197 = math.exp %196 : vector<2x10xf32>
    %cst_129 = arith.constant dense<0.000000e+00> : vector<2xf32>
    %198 = vector.multi_reduction <add>, %197, %cst_129 [1] : vector<2x10xf32> to vector<2xf32>
    %199 = vector.shape_cast %198 : vector<2xf32> to vector<2x1xf32>
    %200 = math.log %199 : vector<2x1xf32>
    %201 = vector.broadcast %200 : vector<2x1xf32> to vector<2x10xf32>
    %202 = arith.subf %196, %201 : vector<2x10xf32>
    %c0_130 = arith.constant 0 : index
    %c0_131 = arith.constant 0 : index
    %203 = vector.load %arg6[%c0_130, %c0_131] : memref<2x10xf32, #tpu.memory_space<vmem>>, vector<2x10xf32>
    tpu.vector_store %arg6[%c0_130, %c0_131], %202 {strides = array<i32>} : memref<2x10xf32, #tpu.memory_space<vmem>>, vector<2x10xf32>,
    return
  }
  func.func @transform_0(%arg0: i32) -> (i32, i32, i32) {
    %c0_i32 = arith.constant 0 : i32
    %c0_i32_0 = arith.constant 0 : i32
    %c0_i32_1 = arith.constant 0 : i32
    %c0_i32_2 = arith.constant 0 : i32
    return %c0_i32, %c0_i32_0, %c0_i32_1 : i32, i32, i32
  }
  func.func @transform_1(%arg0: i32) -> (i32, i32, i32) {
    %c0_i32 = arith.constant 0 : i32
    %c0_i32_0 = arith.constant 0 : i32
    %c0_i32_1 = arith.constant 0 : i32
    %c0_i32_2 = arith.constant 0 : i32
    return %c0_i32, %c0_i32_0, %c0_i32_1 : i32, i32, i32
  }
  func.func @transform_2(%arg0: i32) -> (i32, i32) {
    %c0_i32 = arith.constant 0 : i32
    %c0_i32_0 = arith.constant 0 : i32
    %c0_i32_1 = arith.constant 0 : i32
    return %c0_i32, %c0_i32_0 : i32, i32
  }
  func.func @transform_3(%arg0: i32) -> (i32, i32, i32) {
    %c0_i32 = arith.constant 0 : i32
    %c0_i32_0 = arith.constant 0 : i32
    %c0_i32_1 = arith.constant 0 : i32
    %c0_i32_2 = arith.constant 0 : i32
    return %c0_i32, %c0_i32_0, %c0_i32_1 : i32, i32, i32
  }
  func.func @transform_4(%arg0: i32) -> (i32, i32) {
    %c0_i32 = arith.constant 0 : i32
    %c0_i32_0 = arith.constant 0 : i32
    %c0_i32_1 = arith.constant 0 : i32
    return %c0_i32, %c0_i32_0 : i32, i32
  }
  func.func @transform_5(%arg0: i32) -> (i32, i32) {
    %c0_i32 = arith.constant 0 : i32
    %c0_i32_0 = arith.constant 0 : i32
    %c0_i32_1 = arith.constant 0 : i32
    return %c0_i32, %c0_i32_0 : i32, i32
  }
}

</mosaic_0001>

<llo_original>
// kernel: tile.8
$region0: #{tile.8}
  #allocation0 [shape = 's32[1]{0}', space=sflag, size = 0x4, scoped, tag = 'scoped memory for tile.8']
  %s0 = inlined_call_operand.vmem [shape: f32[16], index: 0, kind: input, shape index: {}]
  %s1 = inlined_call_operand.vmem [shape: f32[13,16], index: 1, kind: output, shape index: {}]
  // Predicated region
  $region2: #{tile.8} parent=0 // pred_check
    _
  $region3: #{tile.8} parent=0 // pred_check_branch
    %3 = sbr.rel (0) target = $region5
  $region4: #{tile.8} parent=0 // pred_region
    _
  $region5: #{tile.8} parent=0 // pred_fallthru
    _
  %v4 = vld [vmem:[%s0] ss:$0 sm:$0xff]
  %5 = vst [vmem:[%s1] sm:$0xff] %v4
  %s6 = scalar_lea.vmem %s1, 8
  %7 = vst [vmem:[%s6] sm:$0xff] %v4

// kernel: tile.9
$region0: #{tile.9}
  %s0 = inlined_call_operand.vmem [shape: f32[13,16], index: 0, kind: input, shape index: {}]
  %s1 = inlined_call_operand.vmem [shape: f32[208], index: 1, kind: output, shape index: {}]
  $region1: #{tile.9} parent=0
    #allocation0 [shape = 'u8[4096]{0}', space=vmem, size = 0x1000, scoped, tag = 'scoped mem for output reshape']
    %s2 = smov 3
    %v3 = vld [vmem:[%s0] ss:$8 sm:%s2]
    %vm4 = vcmask 130048
    %5 = vst.msk [vmem:[#allocation0] sm:$0x3] %vm4, %v3
    %s6 = scalar_lea.vmem %s0, 7
    %v7 = vld [vmem:[%s6] sm:$0x1]
    %8 = vrot.lane.b32.xlu0 %v7, 112
    %v9 = vpop.permute.xlu0 %8
    %vm10 = vcmask 1048448
    %11 = vst.msk [vmem:[#allocation0] sm:$0x1] %vm10, %v9
    %s12 = scalar_lea.vmem %s0, 6
    %v13 = vld [vmem:[%s12] sm:$0x1]
    %14 = vrot.lane.b32.xlu0 %v13, 96
    %v15 = vpop.permute.xlu0 %14
    %vm16 = vcmask 917248
    %17 = vst.msk [vmem:[#allocation0] sm:$0x1] %vm16, %v15
    %s18 = scalar_lea.vmem %s0, 5
    %v19 = vld [vmem:[%s18] sm:$0x1]
    %20 = vrot.lane.b32.xlu0 %v19, 80
    %v21 = vpop.permute.xlu0 %20
    %vm22 = vcmask 786048
    %23 = vst.msk [vmem:[#allocation0] sm:$0x1] %vm22, %v21
    %s24 = scalar_lea.vmem %s0, 4
    %s25 = smov 3
    %v26 = vld [vmem:[%s24] ss:$8 sm:%s25]
    %27 = vrot.lane.b32.xlu0 %v26, 64
    %v28 = vpop.permute.xlu0 %27
    %vm29 = vcmask 654848
    %30 = vst.msk [vmem:[#allocation0] sm:$0x3] %vm29, %v28
    %s31 = scalar_lea.vmem %s0, 3
    %s32 = smov 3
    %v33 = vld [vmem:[%s31] ss:$8 sm:%s32]
    %34 = vrot.lane.b32.xlu0 %v33, 48
    %v35 = vpop.permute.xlu0 %34
    %vm36 = vcmask 523648
    %37 = vst.msk [vmem:[#allocation0] sm:$0x3] %vm36, %v35
    %s38 = scalar_lea.vmem %s0, 2
    %s39 = smov 3
    %v40 = vld [vmem:[%s38] ss:$8 sm:%s39]
    %41 = vrot.lane.b32.xlu0 %v40, 32
    %v42 = vpop.permute.xlu0 %41
    %vm43 = vcmask 392448
    %44 = vst.msk [vmem:[#allocation0] sm:$0x3] %vm43, %v42
    %s45 = scalar_lea.vmem %s0, 1
    %s46 = smov 3
    %v47 = vld [vmem:[%s45] ss:$8 sm:%s46]
    %48 = vrot.lane.b32.xlu0 %v47, 16
    %v49 = vpop.permute.xlu0 %48
    %vm50 = vcmask 261248
    %51 = vst.msk [vmem:[#allocation0] sm:$0x3] %vm50, %v49
    %s53 = sshllo.u32 0, 2
    %v55 = vld [vmem:[#allocation0] sm:%s53]
    %s56 = sshllo.u32 0, 2
    %57 = vst [vmem:[%s1] sm:%s56] %v55

// kernel: net_forward.1
$region0: #{net_forward.1}
  #allocation0 [shape = 'u32[]', space=smem, size = 0x4, offset = 0x4, fixed_abs, tag = 'smem constant byte address 0x4 - core index']
  #allocation1 [shape = 'u32[144,128]{1,0:T(1,128)}', space=vmem, size = 0x12000, scoped, tag = 'internal scratch']
  #allocation2 [shape = 'f32[2,25,256]{2,1,0:T(8,128)}', space=vmem, size = 0x10000, scoped, tag = 'scratch operand']
  %s0 = inlined_call_operand.vmem [shape: f32[2,28,28], index: 0, kind: input, shape index: {}]
  %s1 = inlined_call_operand.vmem [shape: f32[6,28,256], index: 1, kind: input, shape index: {}]
  %s2 = inlined_call_operand.vmem [shape: f32[1,256], index: 2, kind: input, shape index: {}]
  %s3 = inlined_call_operand.vmem [shape: f32[13,10,256], index: 3, kind: input, shape index: {}]
  %s4 = inlined_call_operand.vmem [shape: f32[1,10], index: 4, kind: input, shape index: {}]
  %s5 = inlined_call_operand.hbm [shape: f32[2,10], index: 5, kind: output, shape index: {}]
  %s6 = sld [smem:[#allocation0]]
  $region30: #{net_forward.1} parent=0
    _
  %s8 = ssub.s32 1, %s6
  %s9 = scalar_select 0, %s8, %s6
  $region1: #{net_forward.1} parent=0
    #allocation3 [shape = 'u8[1024]{0}', space=vmem, size = 0x400, scoped, tag = 'output window, operand 0, single buffered']
    #allocation4 [shape = 's32[1]{0}', space=sflag, size = 0x4, scoped, tag = 'scoped memory for net_forward.1']
    %10 = vsyncpa [#allocation4], 0
    // Predicated region
    $region2: #{net_forward.1} parent=1 // pred_check
      _
    $region3: #{net_forward.1} parent=1 // pred_check_branch
      %12 = sbr.rel (0) target = $region5
    $region4: #{net_forward.1} parent=1 // pred_region
      _
    $region5: #{net_forward.1} parent=1 // pred_fallthru
      _
    // Predicated region
    $region6: #{net_forward.1} parent=1 // pred_check
      _
    $region7: #{net_forward.1} parent=1 // pred_check_branch
      %14 = sbr.rel (0) target = $region9
    $region8: #{net_forward.1} parent=1 // pred_region
      _
    $region9: #{net_forward.1} parent=1 // pred_fallthru
      _
    // Predicated region
    $region10: #{net_forward.1} parent=1 // pred_check
      _
    $region11: #{net_forward.1} parent=1 // pred_check_branch
      %16 = sbr.rel (0) target = $region13
    $region12: #{net_forward.1} parent=1 // pred_region
      _
    $region13: #{net_forward.1} parent=1 // pred_fallthru
      _
    // Predicated region
    $region14: #{net_forward.1} parent=1 // pred_check
      _
    $region15: #{net_forward.1} parent=1 // pred_check_branch
      %18 = sbr.rel (0) target = $region17
    $region16: #{net_forward.1} parent=1 // pred_region
      _
    $region17: #{net_forward.1} parent=1 // pred_fallthru
      _
    // Predicated region
    $region18: #{net_forward.1} parent=1 // pred_check
      _
    $region19: #{net_forward.1} parent=1 // pred_check_branch
      %20 = sbr.rel (0) target = $region21
    $region20: #{net_forward.1} parent=1 // pred_region
      _
    $region21: #{net_forward.1} parent=1 // pred_fallthru
      _
    %v21 = vld [vmem:[%s0] sm:$0xff]
    %v22 = vld [vmem:[%s0 + $0x8] sm:$0xff]
    %v23 = vld [vmem:[%s0 + $0x10] sm:$0xff]
    %v24 = vld [vmem:[%s0 + $0x18] sm:$0xf]
    %v25 = vld [vmem:[%s1] sm:$0xff]
    %v26 = vld [vmem:[%s1 + $0x8] sm:$0xff]
    %v27 = vld [vmem:[%s1 + $0x10] sm:$0xff]
    %v28 = vld [vmem:[%s1 + $0x18] sm:$0xff]
    %v29 = vld [vmem:[%s1 + $0x20] sm:$0xff]
    %v30 = vld [vmem:[%s1 + $0x28] sm:$0xff]
    %v31 = vld [vmem:[%s1 + $0x30] sm:$0xf]
    %v32 = vld [vmem:[%s1 + $0x38] sm:$0xf]
    %vm33 = vcmask 228352
    %v35 = vsel %vm33, %v21, 0
    %v38 = vsel %vm33, %v22, 0
    %v41 = vsel %vm33, %v23, 0
    %v44 = vsel %vm33, %v24, 0
    %vm46 = vcmask 1043456
    %v48 = vsel %vm46, %v31, 0
    %v51 = vsel %vm46, %v32, 0
    %v53 = vand.u32 %v26, 4294901760
    %54 = vmatprep.subr.mxu0 %v53
    %v55 = vand.u32 %v25, 4294901760
    %56 = vmatpush1.msra.mxu0 %v55
    %v57 = vand.u32 %v28, 4294901760
    %58 = vmatprep.subr.mxu0 %v57
    %v59 = vand.u32 %v27, 4294901760
    %60 = vmatpush1.msra.mxu0 %v59
    %v61 = vand.u32 %v30, 4294901760
    %62 = vmatprep.subr.mxu0 %v61
    %v63 = vand.u32 %v29, 4294901760
    %64 = vmatpush1.msra.mxu0 %v63
    %v65 = vand.u32 %v51, 4294901760
    %66 = vmatprep.subr.mxu0 %v65
    %v67 = vand.u32 %v48, 4294901760
    %68 = vmatpush1.msra.mxu0 %v67
    %69 = vmatprep.subr.mxu0 0.0
    %70 = vmatpush1.msra.mxu0 0.0
    %71 = vmatprep.subr.mxu0 0.0
    %72 = vmatpush1.msra.mxu0 0.0
    %73 = vmatprep.subr.mxu0 0.0
    %74 = vmatpush1.msra.mxu0 0.0
    %75 = vmatprep.subr.mxu0 0.0
    %76 = vmatpush1.msra.mxu0 0.0
    %77 = vmatprep.subr.mxu0 0.0
    %78 = vmatpush1.msra.mxu0 0.0
    %79 = vmatprep.subr.mxu0 0.0
    %80 = vmatpush1.msra.mxu0 0.0
    %81 = vmatprep.subr.mxu0 0.0
    %82 = vmatpush1.msra.mxu0 0.0
    %83 = vmatprep.subr.mxu0 0.0
    %84 = vmatpush1.msra.mxu0 0.0
    %85 = vmatprep.subr.mxu0 0.0
    %86 = vmatpush1.msra.mxu0 0.0
    %87 = vmatprep.subr.mxu0 0.0
    %88 = vmatpush1.msra.mxu0 0.0
    %89 = vmatprep.subr.mxu0 0.0
    %90 = vmatpush1.msra.mxu0 0.0
    %91 = vmatprep.subr.mxu0 0.0
    %92 = vmatpush1.msra.mxu0 0.0
    %93 = vmatprep.subr.mxu0 0.0
    %94 = vmatpush1.msra.mxu0 0.0
    %95 = vmatprep.subr.mxu0 0.0
    %96 = vmatpush1.msra.mxu0 0.0
    %97 = vmatprep.subr.mxu0 0.0
    %98 = vmatpush1.msra.mxu0 0.0
    %99 = vmatprep.subr.mxu0 0.0
    %100 = vmatpush1.msra.mxu0 0.0
    %101 = vmatprep.subr.mxu0 0.0
    %102 = vmatpush1.msra.mxu0 0.0
    %103 = vmatprep.subr.mxu0 0.0
    %104 = vmatpush1.msra.mxu0 0.0
    %105 = vmatprep.subr.mxu0 0.0
    %106 = vmatpush1.msra.mxu0 0.0
    %107 = vmatprep.subr.mxu0 0.0
    %108 = vmatpush1.msra.mxu0 0.0
    %109 = vmatprep.subr.mxu0 0.0
    %110 = vmatpush1.msra.mxu0 0.0
    %111 = vmatprep.subr.mxu0 0.0
    %112 = vmatpush1.msra.mxu0 0.0
    %113 = vmatprep.subr.mxu0 0.0
    %114 = vmatpush1.msra.mxu0 0.0
    %115 = vmatprep.subr.mxu0 0.0
    %116 = vmatpush1.msra.mxu0 0.0
    %117 = vmatprep.subr.mxu0 0.0
    %118 = vmatpush1.msra.mxu0 0.0
    %119 = vmatprep.subr.mxu0 0.0
    %120 = vmatpush1.msra.mxu0 0.0
    %121 = vmatprep.subr.mxu0 0.0
    %122 = vmatpush1.msra.mxu0 0.0
    %123 = vmatprep.subr.mxu0 0.0
    %124 = vmatpush1.msra.mxu0 0.0
    %125 = vmatprep.mubr.f32.mxu0 0.0
    %v126 = vand.u32 %v35, 4294901760
    %v127 = vsub.f32 %v35, %v126
    %v128 = vand.u32 %v127, 4294901760
    %v129 = vsub.f32 %v127, %v128
    %v130 = vand.u32 %v129, 4294901760
    %131 = vmatmul.mubr.f32.gmra.mrb[0].mxu0 %v130
    %v132 = vpop.f32.mrb[0].mxu0
    %v133 = vadd.f32 0.0, %v132
    %v134 = vpop.f32.mrb[0].mxu0
    %v135 = vadd.f32 0.0, %v134
    %136 = vmatprep.mubr.f32.mxu0 0.0
    %v137 = vand.u32 %v38, 4294901760
    %v138 = vsub.f32 %v38, %v137
    %v139 = vand.u32 %v138, 4294901760
    %v140 = vsub.f32 %v138, %v139
    %v141 = vand.u32 %v140, 4294901760
    %142 = vmatmul.mubr.f32.gmra.mrb[0].mxu0 %v141
    %v143 = vpop.f32.mrb[0].mxu0
    %v144 = vadd.f32 0.0, %v143
    %v145 = vpop.f32.mrb[0].mxu0
    %v146 = vadd.f32 0.0, %v145
    %147 = vmatprep.mubr.f32.mxu0 0.0
    %v148 = vand.u32 %v41, 4294901760
    %v149 = vsub.f32 %v41, %v148
    %v150 = vand.u32 %v149, 4294901760
    %v151 = vsub.f32 %v149, %v150
    %v152 = vand.u32 %v151, 4294901760
    %153 = vmatmul.mubr.f32.gmra.mrb[0].mxu0 %v152
    %v154 = vpop.f32.mrb[0].mxu0
    %v155 = vadd.f32 0.0, %v154
    %v156 = vpop.f32.mrb[0].mxu0
    %v157 = vadd.f32 0.0, %v156
    %158 = vmatprep.mubr.f32.mxu0 0.0
    %v159 = vand.u32 %v44, 4294901760
    %v160 = vsub.f32 %v44, %v159
    %v161 = vand.u32 %v160, 4294901760
    %v162 = vsub.f32 %v160, %v161
    %v163 = vand.u32 %v162, 4294901760
    %164 = vmatmul.mubr.f32.gmra.mrb[0].mxu0 %v163
    %v165 = vpop.f32.mrb[0].mxu0
    %v166 = vadd.f32 0.0, %v165
    %v167 = vpop.f32.mrb[0].mxu0
    %v168 = vadd.f32 0.0, %v167
    %169 = vdwg.mxu0
    %v170 = vand.u32 %v26, 4294901760
    %v171 = vsub.f32 %v26, %v170
    %v172 = vand.u32 %v171, 4294901760
    %v173 = vsub.f32 %v171, %v172
    %v174 = vand.u32 %v173, 4294901760
    %175 = vmatprep.subr.mxu0 %v174
    %v176 = vand.u32 %v25, 4294901760
    %v177 = vsub.f32 %v25, %v176
    %v178 = vand.u32 %v177, 4294901760
    %v179 = vsub.f32 %v177, %v178
    %v180 = vand.u32 %v179, 4294901760
    %181 = vmatpush1.msra.mxu0 %v180
    %v182 = vand.u32 %v28, 4294901760
    %v183 = vsub.f32 %v28, %v182
    %v184 = vand.u32 %v183, 4294901760
    %v185 = vsub.f32 %v183, %v184
    %v186 = vand.u32 %v185, 4294901760
    %187 = vmatprep.subr.mxu0 %v186
    %v188 = vand.u32 %v27, 4294901760
    %v189 = vsub.f32 %v27, %v188
    %v190 = vand.u32 %v189, 4294901760
    %v191 = vsub.f32 %v189, %v190
    %v192 = vand.u32 %v191, 4294901760
    %193 = vmatpush1.msra.mxu0 %v192
    %v194 = vand.u32 %v30, 4294901760
    %v195 = vsub.f32 %v30, %v194
    %v196 = vand.u32 %v195, 4294901760
    %v197 = vsub.f32 %v195, %v196
    %v198 = vand.u32 %v197, 4294901760
    %199 = vmatprep.subr.mxu0 %v198
    %v200 = vand.u32 %v29, 4294901760
    %v201 = vsub.f32 %v29, %v200
    %v202 = vand.u32 %v201, 4294901760
    %v203 = vsub.f32 %v201, %v202
    %v204 = vand.u32 %v203, 4294901760
    %205 = vmatpush1.msra.mxu0 %v204
    %v206 = vand.u32 %v51, 4294901760
    %v207 = vsub.f32 %v51, %v206
    %v208 = vand.u32 %v207, 4294901760
    %v209 = vsub.f32 %v207, %v208
    %v210 = vand.u32 %v209, 4294901760
    %211 = vmatprep.subr.mxu0 %v210
    %v212 = vand.u32 %v48, 4294901760
    %v213 = vsub.f32 %v48, %v212
    %v214 = vand.u32 %v213, 4294901760
    %v215 = vsub.f32 %v213, %v214
    %v216 = vand.u32 %v215, 4294901760
    %217 = vmatpush1.msra.mxu0 %v216
    %218 = vmatprep.subr.mxu0 0.0
    %219 = vmatpush1.msra.mxu0 0.0
    %220 = vmatprep.subr.mxu0 0.0
    %221 = vmatpush1.msra.mxu0 0.0
    %222 = vmatprep.subr.mxu0 0.0
    %223 = vmatpush1.msra.mxu0 0.0
    %224 = vmatprep.subr.mxu0 0.0
    %225 = vmatpush1.msra.mxu0 0.0
    %226 = vmatprep.subr.mxu0 0.0
    %227 = vmatpush1.msra.mxu0 0.0
    %228 = vmatprep.subr.mxu0 0.0
    %229 = vmatpush1.msra.mxu0 0.0
    %230 = vmatprep.subr.mxu0 0.0
    %231 = vmatpush1.msra.mxu0 0.0
    %232 = vmatprep.subr.mxu0 0.0
    %233 = vmatpush1.msra.mxu0 0.0
    %234 = vmatprep.subr.mxu0 0.0
    %235 = vmatpush1.msra.mxu0 0.0
    %236 = vmatprep.subr.mxu0 0.0
    %237 = vmatpush1.msra.mxu0 0.0
    %238 = vmatprep.subr.mxu0 0.0
    %239 = vmatpush1.msra.mxu0 0.0
    %240 = vmatprep.subr.mxu0 0.0
    %241 = vmatpush1.msra.mxu0 0.0
    %242 = vmatprep.subr.mxu0 0.0
    %243 = vmatpush1.msra.mxu0 0.0
    %244 = vmatprep.subr.mxu0 0.0
    %245 = vmatpush1.msra.mxu0 0.0
    %246 = vmatprep.subr.mxu0 0.0
    %247 = vmatpush1.msra.mxu0 0.0
    %248 = vmatprep.subr.mxu0 0.0
    %249 = vmatpush1.msra.mxu0 0.0
    %250 = vmatprep.subr.mxu0 0.0
    %251 = vmatpush1.msra.mxu0 0.0
    %252 = vmatprep.subr.mxu0 0.0
    %253 = vmatpush1.msra.mxu0 0.0
    %254 = vmatprep.subr.mxu0 0.0
    %255 = vmatpush1.msra.mxu0 0.0
    %256 = vmatprep.subr.mxu0 0.0
    %257 = vmatpush1.msra.mxu0 0.0
    %258 = vmatprep.subr.mxu0 0.0
    %259 = vmatpush1.msra.mxu0 0.0
    %260 = vmatprep.subr.mxu0 0.0
    %261 = vmatpush1.msra.mxu0 0.0
    %262 = vmatprep.subr.mxu0 0.0
    %263 = vmatpush1.msra.mxu0 0.0
    %264 = vmatprep.subr.mxu0 0.0
    %265 = vmatpush1.msra.mxu0 0.0
    %266 = vmatprep.subr.mxu0 0.0
    %267 = vmatpush1.msra.mxu0 0.0
    %268 = vmatprep.subr.mxu0 0.0
    %269 = vmatpush1.msra.mxu0 0.0
    %270 = vmatprep.subr.mxu0 0.0
    %271 = vmatpush1.msra.mxu0 0.0
    %272 = vmatprep.subr.mxu0 0.0
    %273 = vmatpush1.msra.mxu0 0.0
    %274 = vmatprep.mubr.f32.mxu0 0.0
    %v275 = vand.u32 %v35, 4294901760
    %276 = vmatmul.mubr.f32.gmra.mrb[0].mxu0 %v275
    %v277 = vpop.f32.mrb[0].mxu0
    %v278 = vadd.f32 %v133, %v277
    %v279 = vpop.f32.mrb[0].mxu0
    %v280 = vadd.f32 %v135, %v279
    %281 = vmatprep.mubr.f32.mxu0 0.0
    %v282 = vand.u32 %v38, 4294901760
    %283 = vmatmul.mubr.f32.gmra.mrb[0].mxu0 %v282
    %v284 = vpop.f32.mrb[0].mxu0
    %v285 = vadd.f32 %v144, %v284
    %v286 = vpop.f32.mrb[0].mxu0
    %v287 = vadd.f32 %v146, %v286
    %288 = vmatprep.mubr.f32.mxu0 0.0
    %v289 = vand.u32 %v41, 4294901760
    %290 = vmatmul.mubr.f32.gmra.mrb[0].mxu0 %v289
    %v291 = vpop.f32.mrb[0].mxu0
    %v292 = vadd.f32 %v155, %v291
    %v293 = vpop.f32.mrb[0].mxu0
    %v294 = vadd.f32 %v157, %v293
    %295 = vmatprep.mubr.f32.mxu0 0.0
    %v296 = vand.u32 %v44, 4294901760
    %297 = vmatmul.mubr.f32.gmra.mrb[0].mxu0 %v296
    %v298 = vpop.f32.mrb[0].mxu0
    %v299 = vadd.f32 %v166, %v298
    %v300 = vpop.f32.mrb[0].mxu0
    %v301 = vadd.f32 %v168, %v300
    %302 = vdwg.mxu0
    %v303 = vand.u32 %v26, 4294901760
    %v304 = vsub.f32 %v26, %v303
    %305 = vmatprep.subr.mxu0 %v304
    %v306 = vand.u32 %v25, 4294901760
    %v307 = vsub.f32 %v25, %v306
    %308 = vmatpush1.msra.mxu0 %v307
    %v309 = vand.u32 %v28, 4294901760
    %v310 = vsub.f32 %v28, %v309
    %311 = vmatprep.subr.mxu0 %v310
    %v312 = vand.u32 %v27, 4294901760
    %v313 = vsub.f32 %v27, %v312
    %314 = vmatpush1.msra.mxu0 %v313
    %v315 = vand.u32 %v30, 4294901760
    %v316 = vsub.f32 %v30, %v315
    %317 = vmatprep.subr.mxu0 %v316
    %v318 = vand.u32 %v29, 4294901760
    %v319 = vsub.f32 %v29, %v318
    %320 = vmatpush1.msra.mxu0 %v319
    %v321 = vand.u32 %v51, 4294901760
    %v322 = vsub.f32 %v51, %v321
    %323 = vmatprep.subr.mxu0 %v322
    %v324 = vand.u32 %v48, 4294901760
    %v325 = vsub.f32 %v48, %v324
    %326 = vmatpush1.msra.mxu0 %v325
    %327 = vmatprep.subr.mxu0 0.0
    %328 = vmatpush1.msra.mxu0 0.0
    %329 = vmatprep.subr.mxu0 0.0
    %330 = vmatpush1.msra.mxu0 0.0
    %331 = vmatprep.subr.mxu0 0.0
    %332 = vmatpush1.msra.mxu0 0.0
    %333 = vmatprep.subr.mxu0 0.0
    %334 = vmatpush1.msra.mxu0 0.0
    %335 = vmatprep.subr.mxu0 0.0
    %336 = vmatpush1.msra.mxu0 0.0
    %337 = vmatprep.subr.mxu0 0.0
    %338 = vmatpush1.msra.mxu0 0.0
    %339 = vmatprep.subr.mxu0 0.0
    %340 = vmatpush1.msra.mxu0 0.0
    %341 = vmatprep.subr.mxu0 0.0
    %342 = vmatpush1.msra.mxu0 0.0
    %343 = vmatprep.subr.mxu0 0.0
    %344 = vmatpush1.msra.mxu0 0.0
    %345 = vmatprep.subr.mxu0 0.0
    %346 = vmatpush1.msra.mxu0 0.0
    %347 = vmatprep.subr.mxu0 0.0
    %348 = vmatpush1.msra.mxu0 0.0
    %349 = vmatprep.subr.mxu0 0.0
    %350 = vmatpush1.msra.mxu0 0.0
    %351 = vmatprep.subr.mxu0 0.0
    %352 = vmatpush1.msra.mxu0 0.0
    %353 = vmatprep.subr.mxu0 0.0
    %354 = vmatpush1.msra.mxu0 0.0
    %355 = vmatprep.subr.mxu0 0.0
    %356 = vmatpush1.msra.mxu0 0.0
    %357 = vmatprep.subr.mxu0 0.0
    %358 = vmatpush1.msra.mxu0 0.0
    %359 = vmatprep.subr.mxu0 0.0
    %360 = vmatpush1.msra.mxu0 0.0
    %361 = vmatprep.subr.mxu0 0.0
    %362 = vmatpush1.msra.mxu0 0.0
    %363 = vmatprep.subr.mxu0 0.0
    %364 = vmatpush1.msra.mxu0 0.0
    %365 = vmatprep.subr.mxu0 0.0
    %366 = vmatpush1.msra.mxu0 0.0
    %367 = vmatprep.subr.mxu0 0.0
    %368 = vmatpush1.msra.mxu0 0.0
    %369 = vmatprep.subr.mxu0 0.0
    %370 = vmatpush1.msra.mxu0 0.0
    %371 = vmatprep.subr.mxu0 0.0
    %372 = vmatpush1.msra.mxu0 0.0
    %373 = vmatprep.subr.mxu0 0.0
    %374 = vmatpush1.msra.mxu0 0.0
    %375 = vmatprep.subr.mxu0 0.0
    %376 = vmatpush1.msra.mxu0 0.0
    %377 = vmatprep.subr.mxu0 0.0
    %378 = vmatpush1.msra.mxu0 0.0
    %379 = vmatprep.subr.mxu0 0.0
    %380 = vmatpush1.msra.mxu0 0.0
    %381 = vmatprep.subr.mxu0 0.0
    %382 = vmatpush1.msra.mxu0 0.0
    %383 = vmatprep.mubr.f32.mxu0 0.0
    %v384 = vand.u32 %v35, 4294901760
    %v385 = vsub.f32 %v35, %v384
    %386 = vmatmul.mubr.f32.gmra.mrb[0].mxu0 %v385
    %v387 = vpop.f32.mrb[0].mxu0
    %v388 = vadd.f32 %v278, %v387
    %v389 = vpop.f32.mrb[0].mxu0
    %v390 = vadd.f32 %v280, %v389
    %391 = vmatprep.mubr.f32.mxu0 0.0
    %v392 = vand.u32 %v38, 4294901760
    %v393 = vsub.f32 %v38, %v392
    %394 = vmatmul.mubr.f32.gmra.mrb[0].mxu0 %v393
    %v395 = vpop.f32.mrb[0].mxu0
    %v396 = vadd.f32 %v285, %v395
    %v397 = vpop.f32.mrb[0].mxu0
    %v398 = vadd.f32 %v287, %v397
    %399 = vmatprep.mubr.f32.mxu0 0.0
    %v400 = vand.u32 %v41, 4294901760
    %v401 = vsub.f32 %v41, %v400
    %402 = vmatmul.mubr.f32.gmra.mrb[0].mxu0 %v401
    %v403 = vpop.f32.mrb[0].mxu0
    %v404 = vadd.f32 %v292, %v403
    %v405 = vpop.f32.mrb[0].mxu0
    %v406 = vadd.f32 %v294, %v405
    %407 = vmatprep.mubr.f32.mxu0 0.0
    %v408 = vand.u32 %v44, 4294901760
    %v409 = vsub.f32 %v44, %v408
    %410 = vmatmul.mubr.f32.gmra.mrb[0].mxu0 %v409
    %v411 = vpop.f32.mrb[0].mxu0
    %v412 = vadd.f32 %v299, %v411
    %v413 = vpop.f32.mrb[0].mxu0
    %v414 = vadd.f32 %v301, %v413
    %415 = vdwg.mxu0
    %v416 = vand.u32 %v26, 4294901760
    %417 = vmatprep.subr.mxu0 %v416
    %v418 = vand.u32 %v25, 4294901760
    %419 = vmatpush1.msra.mxu0 %v418
    %v420 = vand.u32 %v28, 4294901760
    %421 = vmatprep.subr.mxu0 %v420
    %v422 = vand.u32 %v27, 4294901760
    %423 = vmatpush1.msra.mxu0 %v422
    %v424 = vand.u32 %v30, 4294901760
    %425 = vmatprep.subr.mxu0 %v424
    %v426 = vand.u32 %v29, 4294901760
    %427 = vmatpush1.msra.mxu0 %v426
    %v428 = vand.u32 %v51, 4294901760
    %429 = vmatprep.subr.mxu0 %v428
    %v430 = vand.u32 %v48, 4294901760
    %431 = vmatpush1.msra.mxu0 %v430
    %432 = vmatprep.subr.mxu0 0.0
    %433 = vmatpush1.msra.mxu0 0.0
    %434 = vmatprep.subr.mxu0 0.0
    %435 = vmatpush1.msra.mxu0 0.0
    %436 = vmatprep.subr.mxu0 0.0
    %437 = vmatpush1.msra.mxu0 0.0
    %438 = vmatprep.subr.mxu0 0.0
    %439 = vmatpush1.msra.mxu0 0.0
    %440 = vmatprep.subr.mxu0 0.0
    %441 = vmatpush1.msra.mxu0 0.0
    %442 = vmatprep.subr.mxu0 0.0
    %443 = vmatpush1.msra.mxu0 0.0
    %444 = vmatprep.subr.mxu0 0.0
    %445 = vmatpush1.msra.mxu0 0.0
    %446 = vmatprep.subr.mxu0 0.0
    %447 = vmatpush1.msra.mxu0 0.0
    %448 = vmatprep.subr.mxu0 0.0
    %449 = vmatpush1.msra.mxu0 0.0
    %450 = vmatprep.subr.mxu0 0.0
    %451 = vmatpush1.msra.mxu0 0.0
    %452 = vmatprep.subr.mxu0 0.0
    %453 = vmatpush1.msra.mxu0 0.0
    %454 = vmatprep.subr.mxu0 0.0
    %455 = vmatpush1.msra.mxu0 0.0
    %456 = vmatprep.subr.mxu0 0.0
    %457 = vmatpush1.msra.mxu0 0.0
    %458 = vmatprep.subr.mxu0 0.0
    %459 = vmatpush1.msra.mxu0 0.0
    %460 = vmatprep.subr.mxu0 0.0
    %461 = vmatpush1.msra.mxu0 0.0
    %462 = vmatprep.subr.mxu0 0.0
    %463 = vmatpush1.msra.mxu0 0.0
    %464 = vmatprep.subr.mxu0 0.0
    %465 = vmatpush1.msra.mxu0 0.0
    %466 = vmatprep.subr.mxu0 0.0
    %467 = vmatpush1.msra.mxu0 0.0
    %468 = vmatprep.subr.mxu0 0.0
    %469 = vmatpush1.msra.mxu0 0.0
    %470 = vmatprep.subr.mxu0 0.0
    %471 = vmatpush1.msra.mxu0 0.0
    %472 = vmatprep.subr.mxu0 0.0
    %473 = vmatpush1.msra.mxu0 0.0
    %474 = vmatprep.subr.mxu0 0.0
    %475 = vmatpush1.msra.mxu0 0.0
    %476 = vmatprep.subr.mxu0 0.0
    %477 = vmatpush1.msra.mxu0 0.0
    %478 = vmatprep.subr.mxu0 0.0
    %479 = vmatpush1.msra.mxu0 0.0
    %480 = vmatprep.subr.mxu0 0.0
    %481 = vmatpush1.msra.mxu0 0.0
    %482 = vmatprep.subr.mxu0 0.0
    %483 = vmatpush1.msra.mxu0 0.0
    %484 = vmatprep.subr.mxu0 0.0
    %485 = vmatpush1.msra.mxu0 0.0
    %486 = vmatprep.subr.mxu0 0.0
    %487 = vmatpush1.msra.mxu0 0.0
    %488 = vmatprep.mubr.f32.mxu0 0.0
    %v489 = vand.u32 %v35, 4294901760
    %v490 = vsub.f32 %v35, %v489
    %v491 = vand.u32 %v490, 4294901760
    %492 = vmatmul.mubr.f32.gmra.mrb[0].mxu0 %v491
    %v493 = vpop.f32.mrb[0].mxu0
    %v494 = vadd.f32 %v388, %v493
    %v495 = vpop.f32.mrb[0].mxu0
    %v496 = vadd.f32 %v390, %v495
    %497 = vmatprep.mubr.f32.mxu0 0.0
    %v498 = vand.u32 %v38, 4294901760
    %v499 = vsub.f32 %v38, %v498
    %v500 = vand.u32 %v499, 4294901760
    %501 = vmatmul.mubr.f32.gmra.mrb[0].mxu0 %v500
    %v502 = vpop.f32.mrb[0].mxu0
    %v503 = vadd.f32 %v396, %v502
    %v504 = vpop.f32.mrb[0].mxu0
    %v505 = vadd.f32 %v398, %v504
    %506 = vmatprep.mubr.f32.mxu0 0.0
    %v507 = vand.u32 %v41, 4294901760
    %v508 = vsub.f32 %v41, %v507
    %v509 = vand.u32 %v508, 4294901760
    %510 = vmatmul.mubr.f32.gmra.mrb[0].mxu0 %v509
    %v511 = vpop.f32.mrb[0].mxu0
    %v512 = vadd.f32 %v404, %v511
    %v513 = vpop.f32.mrb[0].mxu0
    %v514 = vadd.f32 %v406, %v513
    %515 = vmatprep.mubr.f32.mxu0 0.0
    %v516 = vand.u32 %v44, 4294901760
    %v517 = vsub.f32 %v44, %v516
    %v518 = vand.u32 %v517, 4294901760
    %519 = vmatmul.mubr.f32.gmra.mrb[0].mxu0 %v518
    %v520 = vpop.f32.mrb[0].mxu0
    %v521 = vadd.f32 %v412, %v520
    %v522 = vpop.f32.mrb[0].mxu0
    %v523 = vadd.f32 %v414, %v522
    %524 = vdwg.mxu0
    %v525 = vand.u32 %v26, 4294901760
    %v526 = vsub.f32 %v26, %v525
    %v527 = vand.u32 %v526, 4294901760
    %528 = vmatprep.subr.mxu0 %v527
    %v529 = vand.u32 %v25, 4294901760
    %v530 = vsub.f32 %v25, %v529
    %v531 = vand.u32 %v530, 4294901760
    %532 = vmatpush1.msra.mxu0 %v531
    %v533 = vand.u32 %v28, 4294901760
    %v534 = vsub.f32 %v28, %v533
    %v535 = vand.u32 %v534, 4294901760
    %536 = vmatprep.subr.mxu0 %v535
    %v537 = vand.u32 %v27, 4294901760
    %v538 = vsub.f32 %v27, %v537
    %v539 = vand.u32 %v538, 4294901760
    %540 = vmatpush1.msra.mxu0 %v539
    %v541 = vand.u32 %v30, 4294901760
    %v542 = vsub.f32 %v30, %v541
    %v543 = vand.u32 %v542, 4294901760
    %544 = vmatprep.subr.mxu0 %v543
    %v545 = vand.u32 %v29, 4294901760
    %v546 = vsub.f32 %v29, %v545
    %v547 = vand.u32 %v546, 4294901760
    %548 = vmatpush1.msra.mxu0 %v547
    %v549 = vand.u32 %v51, 4294901760
    %v550 = vsub.f32 %v51, %v549
    %v551 = vand.u32 %v550, 4294901760
    %552 = vmatprep.subr.mxu0 %v551
    %v553 = vand.u32 %v48, 4294901760
    %v554 = vsub.f32 %v48, %v553
    %v555 = vand.u32 %v554, 4294901760
    %556 = vmatpush1.msra.mxu0 %v555
    %557 = vmatprep.subr.mxu0 0.0
    %558 = vmatpush1.msra.mxu0 0.0
    %559 = vmatprep.subr.mxu0 0.0
    %560 = vmatpush1.msra.mxu0 0.0
    %561 = vmatprep.subr.mxu0 0.0
    %562 = vmatpush1.msra.mxu0 0.0
    %563 = vmatprep.subr.mxu0 0.0
    %564 = vmatpush1.msra.mxu0 0.0
    %565 = vmatprep.subr.mxu0 0.0
    %566 = vmatpush1.msra.mxu0 0.0
    %567 = vmatprep.subr.mxu0 0.0
    %568 = vmatpush1.msra.mxu0 0.0
    %569 = vmatprep.subr.mxu0 0.0
    %570 = vmatpush1.msra.mxu0 0.0
    %571 = vmatprep.subr.mxu0 0.0
    %572 = vmatpush1.msra.mxu0 0.0
    %573 = vmatprep.subr.mxu0 0.0
    %574 = vmatpush1.msra.mxu0 0.0
    %575 = vmatprep.subr.mxu0 0.0
    %576 = vmatpush1.msra.mxu0 0.0
    %577 = vmatprep.subr.mxu0 0.0
    %578 = vmatpush1.msra.mxu0 0.0
    %579 = vmatprep.subr.mxu0 0.0
    %580 = vmatpush1.msra.mxu0 0.0
    %581 = vmatprep.subr.mxu0 0.0
    %582 = vmatpush1.msra.mxu0 0.0
    %583 = vmatprep.subr.mxu0 0.0
    %584 = vmatpush1.msra.mxu0 0.0
    %585 = vmatprep.subr.mxu0 0.0
    %586 = vmatpush1.msra.mxu0 0.0
    %587 = vmatprep.subr.mxu0 0.0
    %588 = vmatpush1.msra.mxu0 0.0
    %589 = vmatprep.subr.mxu0 0.0
    %590 = vmatpush1.msra.mxu0 0.0
    %591 = vmatprep.subr.mxu0 0.0
    %592 = vmatpush1.msra.mxu0 0.0
    %593 = vmatprep.subr.mxu0 0.0
    %594 = vmatpush1.msra.mxu0 0.0
    %595 = vmatprep.subr.mxu0 0.0
    %596 = vmatpush1.msra.mxu0 0.0
    %597 = vmatprep.subr.mxu0 0.0
    %598 = vmatpush1.msra.mxu0 0.0
    %599 = vmatprep.subr.mxu0 0.0
    %600 = vmatpush1.msra.mxu0 0.0
    %601 = vmatprep.subr.mxu0 0.0
    %602 = vmatpush1.msra.mxu0 0.0
    %603 = vmatprep.subr.mxu0 0.0
    %604 = vmatpush1.msra.mxu0 0.0
    %605 = vmatprep.subr.mxu0 0.0
    %606 = vmatpush1.msra.mxu0 0.0
    %607 = vmatprep.subr.mxu0 0.0
    %608 = vmatpush1.msra.mxu0 0.0
    %609 = vmatprep.subr.mxu0 0.0
    %610 = vmatpush1.msra.mxu0 0.0
    %611 = vmatprep.subr.mxu0 0.0
    %612 = vmatpush1.msra.mxu0 0.0
    %613 = vmatprep.mubr.f32.mxu0 0.0
    %v614 = vand.u32 %v35, 4294901760
    %615 = vmatmul.mubr.f32.gmra.mrb[0].mxu0 %v614
    %v616 = vpop.f32.mrb[0].mxu0
    %v617 = vadd.f32 %v494, %v616
    %v618 = vpop.f32.mrb[0].mxu0
    %v619 = vadd.f32 %v496, %v618
    %620 = vmatprep.mubr.f32.mxu0 0.0
    %v621 = vand.u32 %v38, 4294901760
    %622 = vmatmul.mubr.f32.gmra.mrb[0].mxu0 %v621
    %v623 = vpop.f32.mrb[0].mxu0
    %v624 = vadd.f32 %v503, %v623
    %v625 = vpop.f32.mrb[0].mxu0
    %v626 = vadd.f32 %v505, %v625
    %627 = vmatprep.mubr.f32.mxu0 0.0
    %v628 = vand.u32 %v41, 4294901760
    %629 = vmatmul.mubr.f32.gmra.mrb[0].mxu0 %v628
    %v630 = vpop.f32.mrb[0].mxu0
    %v631 = vadd.f32 %v512, %v630
    %v632 = vpop.f32.mrb[0].mxu0
    %v633 = vadd.f32 %v514, %v632
    %634 = vmatprep.mubr.f32.mxu0 0.0
    %v635 = vand.u32 %v44, 4294901760
    %636 = vmatmul.mubr.f32.gmra.mrb[0].mxu0 %v635
    %v637 = vpop.f32.mrb[0].mxu0
    %v638 = vadd.f32 %v521, %v637
    %v639 = vpop.f32.mrb[0].mxu0
    %v640 = vadd.f32 %v523, %v639
    %641 = vdwg.mxu0
    %v642 = vand.u32 %v26, 4294901760
    %643 = vmatprep.subr.mxu0 %v642
    %v644 = vand.u32 %v25, 4294901760
    %645 = vmatpush1.msra.mxu0 %v644
    %v646 = vand.u32 %v28, 4294901760
    %647 = vmatprep.subr.mxu0 %v646
    %v648 = vand.u32 %v27, 4294901760
    %649 = vmatpush1.msra.mxu0 %v648
    %v650 = vand.u32 %v30, 4294901760
    %651 = vmatprep.subr.mxu0 %v650
    %v652 = vand.u32 %v29, 4294901760
    %653 = vmatpush1.msra.mxu0 %v652
    %v654 = vand.u32 %v51, 4294901760
    %655 = vmatprep.subr.mxu0 %v654
    %v656 = vand.u32 %v48, 4294901760
    %657 = vmatpush1.msra.mxu0 %v656
    %658 = vmatprep.subr.mxu0 0.0
    %659 = vmatpush1.msra.mxu0 0.0
    %660 = vmatprep.subr.mxu0 0.0
    %661 = vmatpush1.msra.mxu0 0.0
    %662 = vmatprep.subr.mxu0 0.0
    %663 = vmatpush1.msra.mxu0 0.0
    %664 = vmatprep.subr.mxu0 0.0
    %665 = vmatpush1.msra.mxu0 0.0
    %666 = vmatprep.subr.mxu0 0.0
    %667 = vmatpush1.msra.mxu0 0.0
    %668 = vmatprep.subr.mxu0 0.0
    %669 = vmatpush1.msra.mxu0 0.0
    %670 = vmatprep.subr.mxu0 0.0
    %671 = vmatpush1.msra.mxu0 0.0
    %672 = vmatprep.subr.mxu0 0.0
    %673 = vmatpush1.msra.mxu0 0.0
    %674 = vmatprep.subr.mxu0 0.0
    %675 = vmatpush1.msra.mxu0 0.0
    %676 = vmatprep.subr.mxu0 0.0
    %677 = vmatpush1.msra.mxu0 0.0
    %678 = vmatprep.subr.mxu0 0.0
    %679 = vmatpush1.msra.mxu0 0.0
    %680 = vmatprep.subr.mxu0 0.0
    %681 = vmatpush1.msra.mxu0 0.0
    %682 = vmatprep.subr.mxu0 0.0
    %683 = vmatpush1.msra.mxu0 0.0
    %684 = vmatprep.subr.mxu0 0.0
    %685 = vmatpush1.msra.mxu0 0.0
    %686 = vmatprep.subr.mxu0 0.0
    %687 = vmatpush1.msra.mxu0 0.0
    %688 = vmatprep.subr.mxu0 0.0
    %689 = vmatpush1.msra.mxu0 0.0
    %690 = vmatprep.subr.mxu0 0.0
    %691 = vmatpush1.msra.mxu0 0.0
    %692 = vmatprep.subr.mxu0 0.0
    %693 = vmatpush1.msra.mxu0 0.0
    %694 = vmatprep.subr.mxu0 0.0
    %695 = vmatpush1.msra.mxu0 0.0
    %696 = vmatprep.subr.mxu0 0.0
    %697 = vmatpush1.msra.mxu0 0.0
    %698 = vmatprep.subr.mxu0 0.0
    %699 = vmatpush1.msra.mxu0 0.0
    %700 = vmatprep.subr.mxu0 0.0
    %701 = vmatpush1.msra.mxu0 0.0
    %702 = vmatprep.subr.mxu0 0.0
    %703 = vmatpush1.msra.mxu0 0.0
    %704 = vmatprep.subr.mxu0 0.0
    %705 = vmatpush1.msra.mxu0 0.0
    %706 = vmatprep.subr.mxu0 0.0
    %707 = vmatpush1.msra.mxu0 0.0
    %708 = vmatprep.subr.mxu0 0.0
    %709 = vmatpush1.msra.mxu0 0.0
    %710 = vmatprep.subr.mxu0 0.0
    %711 = vmatpush1.msra.mxu0 0.0
    %712 = vmatprep.subr.mxu0 0.0
    %713 = vmatpush1.msra.mxu0 0.0
    %714 = vmatprep.mubr.f32.mxu0 0.0
    %v715 = vand.u32 %v35, 4294901760
    %716 = vmatmul.mubr.f32.gmra.mrb[0].mxu0 %v715
    %v717 = vpop.f32.mrb[0].mxu0
    %v718 = vadd.f32 %v617, %v717
    %v719 = vpop.f32.mrb[0].mxu0
    %v720 = vadd.f32 %v619, %v719
    %721 = vmatprep.mubr.f32.mxu0 0.0
    %v722 = vand.u32 %v38, 4294901760
    %723 = vmatmul.mubr.f32.gmra.mrb[0].mxu0 %v722
    %v724 = vpop.f32.mrb[0].mxu0
    %v725 = vadd.f32 %v624, %v724
    %v726 = vpop.f32.mrb[0].mxu0
    %v727 = vadd.f32 %v626, %v726
    %728 = vmatprep.mubr.f32.mxu0 0.0
    %v729 = vand.u32 %v41, 4294901760
    %730 = vmatmul.mubr.f32.gmra.mrb[0].mxu0 %v729
    %v731 = vpop.f32.mrb[0].mxu0
    %v732 = vadd.f32 %v631, %v731
    %v733 = vpop.f32.mrb[0].mxu0
    %v734 = vadd.f32 %v633, %v733
    %735 = vmatprep.mubr.f32.mxu0 0.0
    %v736 = vand.u32 %v44, 4294901760
    %737 = vmatmul.mubr.f32.gmra.mrb[0].mxu0 %v736
    %v738 = vpop.f32.mrb[0].mxu0
    %v739 = vadd.f32 %v638, %v738
    %v740 = vpop.f32.mrb[0].mxu0
    %v741 = vadd.f32 %v640, %v740
    %742 = vdwg.mxu0
    %s743 = scalar_lea.vmem %s1, 64
    %v744 = vld [vmem:[%s743] sm:$0xff]
    %v745 = vld [vmem:[%s743 + $0x8] sm:$0xff]
    %v746 = vld [vmem:[%s743 + $0x10] sm:$0xff]
    %v747 = vld [vmem:[%s743 + $0x18] sm:$0xff]
    %v748 = vld [vmem:[%s743 + $0x20] sm:$0xff]
    %v749 = vld [vmem:[%s743 + $0x28] sm:$0xff]
    %v750 = vld [vmem:[%s743 + $0x30] sm:$0xf]
    %v751 = vld [vmem:[%s743 + $0x38] sm:$0xf]
    %v753 = vsel %vm46, %v750, 0
    %v756 = vsel %vm46, %v751, 0
    %v758 = vand.u32 %v745, 4294901760
    %759 = vmatprep.subr.mxu0 %v758
    %v760 = vand.u32 %v744, 4294901760
    %761 = vmatpush1.msra.mxu0 %v760
    %v762 = vand.u32 %v747, 4294901760
    %763 = vmatprep.subr.mxu0 %v762
    %v764 = vand.u32 %v746, 4294901760
    %765 = vmatpush1.msra.mxu0 %v764
    %v766 = vand.u32 %v749, 4294901760
    %767 = vmatprep.subr.mxu0 %v766
    %v768 = vand.u32 %v748, 4294901760
    %769 = vmatpush1.msra.mxu0 %v768
    %v770 = vand.u32 %v756, 4294901760
    %771 = vmatprep.subr.mxu0 %v770
    %v772 = vand.u32 %v753, 4294901760
    %773 = vmatpush1.msra.mxu0 %v772
    %774 = vmatprep.subr.mxu0 0.0
    %775 = vmatpush1.msra.mxu0 0.0
    %776 = vmatprep.subr.mxu0 0.0
    %777 = vmatpush1.msra.mxu0 0.0
    %778 = vmatprep.subr.mxu0 0.0
    %779 = vmatpush1.msra.mxu0 0.0
    %780 = vmatprep.subr.mxu0 0.0
    %781 = vmatpush1.msra.mxu0 0.0
    %782 = vmatprep.subr.mxu0 0.0
    %783 = vmatpush1.msra.mxu0 0.0
    %784 = vmatprep.subr.mxu0 0.0
    %785 = vmatpush1.msra.mxu0 0.0
    %786 = vmatprep.subr.mxu0 0.0
    %787 = vmatpush1.msra.mxu0 0.0
    %788 = vmatprep.subr.mxu0 0.0
    %789 = vmatpush1.msra.mxu0 0.0
    %790 = vmatprep.subr.mxu0 0.0
    %791 = vmatpush1.msra.mxu0 0.0
    %792 = vmatprep.subr.mxu0 0.0
    %793 = vmatpush1.msra.mxu0 0.0
    %794 = vmatprep.subr.mxu0 0.0
    %795 = vmatpush1.msra.mxu0 0.0
    %796 = vmatprep.subr.mxu0 0.0
    %797 = vmatpush1.msra.mxu0 0.0
    %798 = vmatprep.subr.mxu0 0.0
    %799 = vmatpush1.msra.mxu0 0.0
    %800 = vmatprep.subr.mxu0 0.0
    %801 = vmatpush1.msra.mxu0 0.0
    %802 = vmatprep.subr.mxu0 0.0
    %803 = vmatpush1.msra.mxu0 0.0
    %804 = vmatprep.subr.mxu0 0.0
    %805 = vmatpush1.msra.mxu0 0.0
    %806 = vmatprep.subr.mxu0 0.0
    %807 = vmatpush1.msra.mxu0 0.0
    %808 = vmatprep.subr.mxu0 0.0
    %809 = vmatpush1.msra.mxu0 0.0
    %810 = vmatprep.subr.mxu0 0.0
    %811 = vmatpush1.msra.mxu0 0.0
    %812 = vmatprep.subr.mxu0 0.0
    %813 = vmatpush1.msra.mxu0 0.0
    %814 = vmatprep.subr.mxu0 0.0
    %815 = vmatpush1.msra.mxu0 0.0
    %816 = vmatprep.subr.mxu0 0.0
    %817 = vmatpush1.msra.mxu0 0.0
    %818 = vmatprep.subr.mxu0 0.0
    %819 = vmatpush1.msra.mxu0 0.0
    %820 = vmatprep.subr.mxu0 0.0
    %821 = vmatpush1.msra.mxu0 0.0
    %822 = vmatprep.subr.mxu0 0.0
    %823 = vmatpush1.msra.mxu0 0.0
    %824 = vmatprep.subr.mxu0 0.0
    %825 = vmatpush1.msra.mxu0 0.0
    %826 = vmatprep.subr.mxu0 0.0
    %827 = vmatpush1.msra.mxu0 0.0
    %828 = vmatprep.subr.mxu0 0.0
    %829 = vmatpush1.msra.mxu0 0.0
    %830 = vmatprep.mubr.f32.mxu0 0.0
    %v831 = vand.u32 %v35, 4294901760
    %v832 = vsub.f32 %v35, %v831
    %v833 = vand.u32 %v832, 4294901760
    %v834 = vsub.f32 %v832, %v833
    %v835 = vand.u32 %v834, 4294901760
    %836 = vmatmul.mubr.f32.gmra.mrb[0].mxu0 %v835
    %v837 = vpop.f32.mrb[0].mxu0
    %v838 = vadd.f32 0.0, %v837
    %v839 = vpop.f32.mrb[0].mxu0
    %v840 = vadd.f32 0.0, %v839
    %841 = vmatprep.mubr.f32.mxu0 0.0
    %v842 = vand.u32 %v38, 4294901760
    %v843 = vsub.f32 %v38, %v842
    %v844 = vand.u32 %v843, 4294901760
    %v845 = vsub.f32 %v843, %v844
    %v846 = vand.u32 %v845, 4294901760
    %847 = vmatmul.mubr.f32.gmra.mrb[0].mxu0 %v846
    %v848 = vpop.f32.mrb[0].mxu0
    %v849 = vadd.f32 0.0, %v848
    %v850 = vpop.f32.mrb[0].mxu0
    %v851 = vadd.f32 0.0, %v850
    %852 = vmatprep.mubr.f32.mxu0 0.0
    %v853 = vand.u32 %v41, 4294901760
    %v854 = vsub.f32 %v41, %v853
    %v855 = vand.u32 %v854, 4294901760
    %v856 = vsub.f32 %v854, %v855
    %v857 = vand.u32 %v856, 4294901760
    %858 = vmatmul.mubr.f32.gmra.mrb[0].mxu0 %v857
    %v859 = vpop.f32.mrb[0].mxu0
    %v860 = vadd.f32 0.0, %v859
    %v861 = vpop.f32.mrb[0].mxu0
    %v862 = vadd.f32 0.0, %v861
    %863 = vmatprep.mubr.f32.mxu0 0.0
    %v864 = vand.u32 %v44, 4294901760
    %v865 = vsub.f32 %v44, %v864
    %v866 = vand.u32 %v865, 4294901760
    %v867 = vsub.f32 %v865, %v866
    %v868 = vand.u32 %v867, 4294901760
    %869 = vmatmul.mubr.f32.gmra.mrb[0].mxu0 %v868
    %v870 = vpop.f32.mrb[0].mxu0
    %v871 = vadd.f32 0.0, %v870
    %v872 = vpop.f32.mrb[0].mxu0
    %v873 = vadd.f32 0.0, %v872
    %874 = vdwg.mxu0
    %v875 = vand.u32 %v745, 4294901760
    %v876 = vsub.f32 %v745, %v875
    %v877 = vand.u32 %v876, 4294901760
    %v878 = vsub.f32 %v876, %v877
    %v879 = vand.u32 %v878, 4294901760
    %880 = vmatprep.subr.mxu0 %v879
    %v881 = vand.u32 %v744, 4294901760
    %v882 = vsub.f32 %v744, %v881
    %v883 = vand.u32 %v882, 4294901760
    %v884 = vsub.f32 %v882, %v883
    %v885 = vand.u32 %v884, 4294901760
    %886 = vmatpush1.msra.mxu0 %v885
    %v887 = vand.u32 %v747, 4294901760
    %v888 = vsub.f32 %v747, %v887
    %v889 = vand.u32 %v888, 4294901760
    %v890 = vsub.f32 %v888, %v889
    %v891 = vand.u32 %v890, 4294901760
    %892 = vmatprep.subr.mxu0 %v891
    %v893 = vand.u32 %v746, 4294901760
    %v894 = vsub.f32 %v746, %v893
    %v895 = vand.u32 %v894, 4294901760
    %v896 = vsub.f32 %v894, %v895
    %v897 = vand.u32 %v896, 4294901760
    %898 = vmatpush1.msra.mxu0 %v897
    %v899 = vand.u32 %v749, 4294901760
    %v900 = vsub.f32 %v749, %v899
    %v901 = vand.u32 %v900, 4294901760
    %v902 = vsub.f32 %v900, %v901
    %v903 = vand.u32 %v902, 4294901760
    %904 = vmatprep.subr.mxu0 %v903
    %v905 = vand.u32 %v748, 4294901760
    %v906 = vsub.f32 %v748, %v905
    %v907 = vand.u32 %v906, 4294901760
    %v908 = vsub.f32 %v906, %v907
    %v909 = vand.u32 %v908, 4294901760
    %910 = vmatpush1.msra.mxu0 %v909
    %v911 = vand.u32 %v756, 4294901760
    %v912 = vsub.f32 %v756, %v911
    %v913 = vand.u32 %v912, 4294901760
    %v914 = vsub.f32 %v912, %v913
    %v915 = vand.u32 %v914, 4294901760
    %916 = vmatprep.subr.mxu0 %v915
    %v917 = vand.u32 %v753, 4294901760
    %v918 = vsub.f32 %v753, %v917
    %v919 = vand.u32 %v918, 4294901760
    %v920 = vsub.f32 %v918, %v919
    %v921 = vand.u32 %v920, 4294901760
    %922 = vmatpush1.msra.mxu0 %v921
    %923 = vmatprep.subr.mxu0 0.0
    %924 = vmatpush1.msra.mxu0 0.0
    %925 = vmatprep.subr.mxu0 0.0
    %926 = vmatpush1.msra.mxu0 0.0
    %927 = vmatprep.subr.mxu0 0.0
    %928 = vmatpush1.msra.mxu0 0.0
    %929 = vmatprep.subr.mxu0 0.0
    %930 = vmatpush1.msra.mxu0 0.0
    %931 = vmatprep.subr.mxu0 0.0
    %932 = vmatpush1.msra.mxu0 0.0
    %933 = vmatprep.subr.mxu0 0.0
    %934 = vmatpush1.msra.mxu0 0.0
    %935 = vmatprep.subr.mxu0 0.0
    %936 = vmatpush1.msra.mxu0 0.0
    %937 = vmatprep.subr.mxu0 0.0
    %938 = vmatpush1.msra.mxu0 0.0
    %939 = vmatprep.subr.mxu0 0.0
    %940 = vmatpush1.msra.mxu0 0.0
    %941 = vmatprep.subr.mxu0 0.0
    %942 = vmatpush1.msra.mxu0 0.0
    %943 = vmatprep.subr.mxu0 0.0
    %944 = vmatpush1.msra.mxu0 0.0
    %945 = vmatprep.subr.mxu0 0.0
    %946 = vmatpush1.msra.mxu0 0.0
    %947 = vmatprep.subr.mxu0 0.0
    %948 = vmatpush1.msra.mxu0 0.0
    %949 = vmatprep.subr.mxu0 0.0
    %950 = vmatpush1.msra.mxu0 0.0
    %951 = vmatprep.subr.mxu0 0.0
    %952 = vmatpush1.msra.mxu0 0.0
    %953 = vmatprep.subr.mxu0 0.0
    %954 = vmatpush1.msra.mxu0 0.0
    %955 = vmatprep.subr.mxu0 0.0
    %956 = vmatpush1.msra.mxu0 0.0
    %957 = vmatprep.subr.mxu0 0.0
    %958 = vmatpush1.msra.mxu0 0.0
    %959 = vmatprep.subr.mxu0 0.0
    %960 = vmatpush1.msra.mxu0 0.0
    %961 = vmatprep.subr.mxu0 0.0
    %962 = vmatpush1.msra.mxu0 0.0
    %963 = vmatprep.subr.mxu0 0.0
    %964 = vmatpush1.msra.mxu0 0.0
    %965 = vmatprep.subr.mxu0 0.0
    %966 = vmatpush1.msra.mxu0 0.0
    %967 = vmatprep.subr.mxu0 0.0
    %968 = vmatpush1.msra.mxu0 0.0
    %969 = vmatprep.subr.mxu0 0.0
    %970 = vmatpush1.msra.mxu0 0.0
    %971 = vmatprep.subr.mxu0 0.0
    %972 = vmatpush1.msra.mxu0 0.0
    %973 = vmatprep.subr.mxu0 0.0
    %974 = vmatpush1.msra.mxu0 0.0
    %975 = vmatprep.subr.mxu0 0.0
    %976 = vmatpush1.msra.mxu0 0.0
    %977 = vmatprep.subr.mxu0 0.0
    %978 = vmatpush1.msra.mxu0 0.0
    %979 = vmatprep.mubr.f32.mxu0 0.0
    %v980 = vand.u32 %v35, 4294901760
    %981 = vmatmul.mubr.f32.gmra.mrb[0].mxu0 %v980
    %v982 = vpop.f32.mrb[0].mxu0
    %v983 = vadd.f32 %v838, %v982
    %v984 = vpop.f32.mrb[0].mxu0
    %v985 = vadd.f32 %v840, %v984
    %986 = vmatprep.mubr.f32.mxu0 0.0
    %v987 = vand.u32 %v38, 4294901760
    %988 = vmatmul.mubr.f32.gmra.mrb[0].mxu0 %v987
    %v989 = vpop.f32.mrb[0].mxu0
    %v990 = vadd.f32 %v849, %v989
    %v991 = vpop.f32.mrb[0].mxu0
    %v992 = vadd.f32 %v851, %v991
    %993 = vmatprep.mubr.f32.mxu0 0.0
    %v994 = vand.u32 %v41, 4294901760
    %995 = vmatmul.mubr.f32.gmra.mrb[0].mxu0 %v994
    %v996 = vpop.f32.mrb[0].mxu0
    %v997 = vadd.f32 %v860, %v996
    %v998 = vpop.f32.mrb[0].mxu0
    %v999 = vadd.f32 %v862, %v998
    %1000 = vmatprep.mubr.f32.mxu0 0.0
    %v1001 = vand.u32 %v44, 4294901760
    %1002 = vmatmul.mubr.f32.gmra.mrb[0].mxu0 %v1001
    %v1003 = vpop.f32.mrb[0].mxu0
    %v1004 = vadd.f32 %v871, %v1003
    %v1005 = vpop.f32.mrb[0].mxu0
    %v1006 = vadd.f32 %v873, %v1005
    %1007 = vdwg.mxu0
    %v1008 = vand.u32 %v745, 4294901760
    %v1009 = vsub.f32 %v745, %v1008
    %1010 = vmatprep.subr.mxu0 %v1009
    %v1011 = vand.u32 %v744, 4294901760
    %v1012 = vsub.f32 %v744, %v1011
    %1013 = vmatpush1.msra.mxu0 %v1012
    %v1014 = vand.u32 %v747, 4294901760
    %v1015 = vsub.f32 %v747, %v1014
    %1016 = vmatprep.subr.mxu0 %v1015
    %v1017 = vand.u32 %v746, 4294901760
    %v1018 = vsub.f32 %v746, %v1017
    %1019 = vmatpush1.msra.mxu0 %v1018
    %v1020 = vand.u32 %v749, 4294901760
    %v1021 = vsub.f32 %v749, %v1020
    %1022 = vmatprep.subr.mxu0 %v1021
    %v1023 = vand.u32 %v748, 4294901760
    %v1024 = vsub.f32 %v748, %v1023
    %1025 = vmatpush1.msra.mxu0 %v1024
    %v1026 = vand.u32 %v756, 4294901760
    %v1027 = vsub.f32 %v756, %v1026
    %1028 = vmatprep.subr.mxu0 %v1027
    %v1029 = vand.u32 %v753, 4294901760
    %v1030 = vsub.f32 %v753, %v1029
    %1031 = vmatpush1.msra.mxu0 %v1030
    %1032 = vmatprep.subr.mxu0 0.0
    %1033 = vmatpush1.msra.mxu0 0.0
    %1034 = vmatprep.subr.mxu0 0.0
    %1035 = vmatpush1.msra.mxu0 0.0
    %1036 = vmatprep.subr.mxu0 0.0
    %1037 = vmatpush1.msra.mxu0 0.0
    %1038 = vmatprep.subr.mxu0 0.0
    %1039 = vmatpush1.msra.mxu0 0.0
    %1040 = vmatprep.subr.mxu0 0.0
    %1041 = vmatpush1.msra.mxu0 0.0
    %1042 = vmatprep.subr.mxu0 0.0
    %1043 = vmatpush1.msra.mxu0 0.0
    %1044 = vmatprep.subr.mxu0 0.0
    %1045 = vmatpush1.msra.mxu0 0.0
    %1046 = vmatprep.subr.mxu0 0.0
    %1047 = vmatpush1.msra.mxu0 0.0
    %1048 = vmatprep.subr.mxu0 0.0
    %1049 = vmatpush1.msra.mxu0 0.0
    %1050 = vmatprep.subr.mxu0 0.0
    %1051 = vmatpush1.msra.mxu0 0.0
    %1052 = vmatprep.subr.mxu0 0.0
    %1053 = vmatpush1.msra.mxu0 0.0
    %1054 = vmatprep.subr.mxu0 0.0
    %1055 = vmatpush1.msra.mxu0 0.0
    %1056 = vmatprep.subr.mxu0 0.0
    %1057 = vmatpush1.msra.mxu0 0.0
    %1058 = vmatprep.subr.mxu0 0.0
    %1059 = vmatpush1.msra.mxu0 0.0
    %1060 = vmatprep.subr.mxu0 0.0
    %1061 = vmatpush1.msra.mxu0 0.0
    %1062 = vmatprep.subr.mxu0 0.0
    %1063 = vmatpush1.msra.mxu0 0.0
    %1064 = vmatprep.subr.mxu0 0.0
    %1065 = vmatpush1.msra.mxu0 0.0
    %1066 = vmatprep.subr.mxu0 0.0
    %1067 = vmatpush1.msra.mxu0 0.0
    %1068 = vmatprep.subr.mxu0 0.0
    %1069 = vmatpush1.msra.mxu0 0.0
    %1070 = vmatprep.subr.mxu0 0.0
    %1071 = vmatpush1.msra.mxu0 0.0
    %1072 = vmatprep.subr.mxu0 0.0
    %1073 = vmatpush1.msra.mxu0 0.0
    %1074 = vmatprep.subr.mxu0 0.0
    %1075 = vmatpush1.msra.mxu0 0.0
    %1076 = vmatprep.subr.mxu0 0.0
    %1077 = vmatpush1.msra.mxu0 0.0
    %1078 = vmatprep.subr.mxu0 0.0
    %1079 = vmatpush1.msra.mxu0 0.0
    %1080 = vmatprep.subr.mxu0 0.0
    %1081 = vmatpush1.msra.mxu0 0.0
    %1082 = vmatprep.subr.mxu0 0.0
    %1083 = vmatpush1.msra.mxu0 0.0
    %1084 = vmatprep.subr.mxu0 0.0
    %1085 = vmatpush1.msra.mxu0 0.0
    %1086 = vmatprep.subr.mxu0 0.0
    %1087 = vmatpush1.msra.mxu0 0.0
    %1088 = vmatprep.mubr.f32.mxu0 0.0
    %v1089 = vand.u32 %v35, 4294901760
    %v1090 = vsub.f32 %v35, %v1089
    %1091 = vmatmul.mubr.f32.gmra.mrb[0].mxu0 %v1090
    %v1092 = vpop.f32.mrb[0].mxu0
    %v1093 = vadd.f32 %v983, %v1092
    %v1094 = vpop.f32.mrb[0].mxu0
    %v1095 = vadd.f32 %v985, %v1094
    %1096 = vmatprep.mubr.f32.mxu0 0.0
    %v1097 = vand.u32 %v38, 4294901760
    %v1098 = vsub.f32 %v38, %v1097
    %1099 = vmatmul.mubr.f32.gmra.mrb[0].mxu0 %v1098
    %v1100 = vpop.f32.mrb[0].mxu0
    %v1101 = vadd.f32 %v990, %v1100
    %v1102 = vpop.f32.mrb[0].mxu0
    %v1103 = vadd.f32 %v992, %v1102
    %1104 = vmatprep.mubr.f32.mxu0 0.0
    %v1105 = vand.u32 %v41, 4294901760
    %v1106 = vsub.f32 %v41, %v1105
    %1107 = vmatmul.mubr.f32.gmra.mrb[0].mxu0 %v1106
    %v1108 = vpop.f32.mrb[0].mxu0
    %v1109 = vadd.f32 %v997, %v1108
    %v1110 = vpop.f32.mrb[0].mxu0
    %v1111 = vadd.f32 %v999, %v1110
    %1112 = vmatprep.mubr.f32.mxu0 0.0
    %v1113 = vand.u32 %v44, 4294901760
    %v1114 = vsub.f32 %v44, %v1113
    %1115 = vmatmul.mubr.f32.gmra.mrb[0].mxu0 %v1114
    %v1116 = vpop.f32.mrb[0].mxu0
    %v1117 = vadd.f32 %v1004, %v1116
    %v1118 = vpop.f32.mrb[0].mxu0
    %v1119 = vadd.f32 %v1006, %v1118
    %1120 = vdwg.mxu0
    %v1121 = vand.u32 %v745, 4294901760
    %1122 = vmatprep.subr.mxu0 %v1121
    %v1123 = vand.u32 %v744, 4294901760
    %1124 = vmatpush1.msra.mxu0 %v1123
    %v1125 = vand.u32 %v747, 4294901760
    %1126 = vmatprep.subr.mxu0 %v1125
    %v1127 = vand.u32 %v746, 4294901760
    %1128 = vmatpush1.msra.mxu0 %v1127
    %v1129 = vand.u32 %v749, 4294901760
    %1130 = vmatprep.subr.mxu0 %v1129
    %v1131 = vand.u32 %v748, 4294901760
    %1132 = vmatpush1.msra.mxu0 %v1131
    %v1133 = vand.u32 %v756, 4294901760
    %1134 = vmatprep.subr.mxu0 %v1133
    %v1135 = vand.u32 %v753, 4294901760
    %1136 = vmatpush1.msra.mxu0 %v1135
    %1137 = vmatprep.subr.mxu0 0.0
    %1138 = vmatpush1.msra.mxu0 0.0
    %1139 = vmatprep.subr.mxu0 0.0
    %1140 = vmatpush1.msra.mxu0 0.0
    %1141 = vmatprep.subr.mxu0 0.0
    %1142 = vmatpush1.msra.mxu0 0.0
    %1143 = vmatprep.subr.mxu0 0.0
    %1144 = vmatpush1.msra.mxu0 0.0
    %1145 = vmatprep.subr.mxu0 0.0
    %1146 = vmatpush1.msra.mxu0 0.0
    %1147 = vmatprep.subr.mxu0 0.0
    %1148 = vmatpush1.msra.mxu0 0.0
    %1149 = vmatprep.subr.mxu0 0.0
    %1150 = vmatpush1.msra.mxu0 0.0
    %1151 = vmatprep.subr.mxu0 0.0
    %1152 = vmatpush1.msra.mxu0 0.0
    %1153 = vmatprep.subr.mxu0 0.0
    %1154 = vmatpush1.msra.mxu0 0.0
    %1155 = vmatprep.subr.mxu0 0.0
    %1156 = vmatpush1.msra.mxu0 0.0
    %1157 = vmatprep.subr.mxu0 0.0
    %1158 = vmatpush1.msra.mxu0 0.0
    %1159 = vmatprep.subr.mxu0 0.0
    %1160 = vmatpush1.msra.mxu0 0.0
    %1161 = vmatprep.subr.mxu0 0.0
    %1162 = vmatpush1.msra.mxu0 0.0
    %1163 = vmatprep.subr.mxu0 0.0
    %1164 = vmatpush1.msra.mxu0 0.0
    %1165 = vmatprep.subr.mxu0 0.0
    %1166 = vmatpush1.msra.mxu0 0.0
    %1167 = vmatprep.subr.mxu0 0.0
    %1168 = vmatpush1.msra.mxu0 0.0
    %1169 = vmatprep.subr.mxu0 0.0
    %1170 = vmatpush1.msra.mxu0 0.0
    %1171 = vmatprep.subr.mxu0 0.0
    %1172 = vmatpush1.msra.mxu0 0.0
    %1173 = vmatprep.subr.mxu0 0.0
    %1174 = vmatpush1.msra.mxu0 0.0
    %1175 = vmatprep.subr.mxu0 0.0
    %1176 = vmatpush1.msra.mxu0 0.0
    %1177 = vmatprep.subr.mxu0 0.0
    %1178 = vmatpush1.msra.mxu0 0.0
    %1179 = vmatprep.subr.mxu0 0.0
    %1180 = vmatpush1.msra.mxu0 0.0
    %1181 = vmatprep.subr.mxu0 0.0
    %1182 = vmatpush1.msra.mxu0 0.0
    %1183 = vmatprep.subr.mxu0 0.0
    %1184 = vmatpush1.msra.mxu0 0.0
    %1185 = vmatprep.subr.mxu0 0.0
    %1186 = vmatpush1.msra.mxu0 0.0
    %1187 = vmatprep.subr.mxu0 0.0
    %1188 = vmatpush1.msra.mxu0 0.0
    %1189 = vmatprep.subr.mxu0 0.0
    %1190 = vmatpush1.msra.mxu0 0.0
    %1191 = vmatprep.subr.mxu0 0.0
    %1192 = vmatpush1.msra.mxu0 0.0
    %1193 = vmatprep.mubr.f32.mxu0 0.0
    %v1194 = vand.u32 %v35, 4294901760
    %v1195 = vsub.f32 %v35, %v1194
    %v1196 = vand.u32 %v1195, 4294901760
    %1197 = vmatmul.mubr.f32.gmra.mrb[0].mxu0 %v1196
    %v1198 = vpop.f32.mrb[0].mxu0
    %v1199 = vadd.f32 %v1093, %v1198
    %v1200 = vpop.f32.mrb[0].mxu0
    %v1201 = vadd.f32 %v1095, %v1200
    %1202 = vmatprep.mubr.f32.mxu0 0.0
    %v1203 = vand.u32 %v38, 4294901760
    %v1204 = vsub.f32 %v38, %v1203
    %v1205 = vand.u32 %v1204, 4294901760
    %1206 = vmatmul.mubr.f32.gmra.mrb[0].mxu0 %v1205
    %v1207 = vpop.f32.mrb[0].mxu0
    %v1208 = vadd.f32 %v1101, %v1207
    %v1209 = vpop.f32.mrb[0].mxu0
    %v1210 = vadd.f32 %v1103, %v1209
    %1211 = vmatprep.mubr.f32.mxu0 0.0
    %v1212 = vand.u32 %v41, 4294901760
    %v1213 = vsub.f32 %v41, %v1212
    %v1214 = vand.u32 %v1213, 4294901760
    %1215 = vmatmul.mubr.f32.gmra.mrb[0].mxu0 %v1214
    %v1216 = vpop.f32.mrb[0].mxu0
    %v1217 = vadd.f32 %v1109, %v1216
    %v1218 = vpop.f32.mrb[0].mxu0
    %v1219 = vadd.f32 %v1111, %v1218
    %1220 = vmatprep.mubr.f32.mxu0 0.0
    %v1221 = vand.u32 %v44, 4294901760
    %v1222 = vsub.f32 %v44, %v1221
    %v1223 = vand.u32 %v1222, 4294901760
    %1224 = vmatmul.mubr.f32.gmra.mrb[0].mxu0 %v1223
    %v1225 = vpop.f32.mrb[0].mxu0
    %v1226 = vadd.f32 %v1117, %v1225
    %v1227 = vpop.f32.mrb[0].mxu0
    %v1228 = vadd.f32 %v1119, %v1227
    %1229 = vdwg.mxu0
    %v1230 = vand.u32 %v745, 4294901760
    %v1231 = vsub.f32 %v745, %v1230
    %v1232 = vand.u32 %v1231, 4294901760
    %1233 = vmatprep.subr.mxu0 %v1232
    %v1234 = vand.u32 %v744, 4294901760
    %v1235 = vsub.f32 %v744, %v1234
    %v1236 = vand.u32 %v1235, 4294901760
    %1237 = vmatpush1.msra.mxu0 %v1236
    %v1238 = vand.u32 %v747, 4294901760
    %v1239 = vsub.f32 %v747, %v1238
    %v1240 = vand.u32 %v1239, 4294901760
    %1241 = vmatprep.subr.mxu0 %v1240
    %v1242 = vand.u32 %v746, 4294901760
    %v1243 = vsub.f32 %v746, %v1242
    %v1244 = vand.u32 %v1243, 4294901760
    %1245 = vmatpush1.msra.mxu0 %v1244
    %v1246 = vand.u32 %v749, 4294901760
    %v1247 = vsub.f32 %v749, %v1246
    %v1248 = vand.u32 %v1247, 4294901760
    %1249 = vmatprep.subr.mxu0 %v1248
    %v1250 = vand.u32 %v748, 4294901760
    %v1251 = vsub.f32 %v748, %v1250
    %v1252 = vand.u32 %v1251, 4294901760
    %1253 = vmatpush1.msra.mxu0 %v1252
    %v1254 = vand.u32 %v756, 4294901760
    %v1255 = vsub.f32 %v756, %v1254
    %v1256 = vand.u32 %v1255, 4294901760
    %1257 = vmatprep.subr.mxu0 %v1256
    %v1258 = vand.u32 %v753, 4294901760
    %v1259 = vsub.f32 %v753, %v1258
    %v1260 = vand.u32 %v1259, 4294901760
    %1261 = vmatpush1.msra.mxu0 %v1260
    %1262 = vmatprep.subr.mxu0 0.0
    %1263 = vmatpush1.msra.mxu0 0.0
    %1264 = vmatprep.subr.mxu0 0.0
    %1265 = vmatpush1.msra.mxu0 0.0
    %1266 = vmatprep.subr.mxu0 0.0
    %1267 = vmatpush1.msra.mxu0 0.0
    %1268 = vmatprep.subr.mxu0 0.0
    %1269 = vmatpush1.msra.mxu0 0.0
    %1270 = vmatprep.subr.mxu0 0.0
    %1271 = vmatpush1.msra.mxu0 0.0
    %1272 = vmatprep.subr.mxu0 0.0
    %1273 = vmatpush1.msra.mxu0 0.0
    %1274 = vmatprep.subr.mxu0 0.0
    %1275 = vmatpush1.msra.mxu0 0.0
    %1276 = vmatprep.subr.mxu0 0.0
    %1277 = vmatpush1.msra.mxu0 0.0
    %1278 = vmatprep.subr.mxu0 0.0
    %1279 = vmatpush1.msra.mxu0 0.0
    %1280 = vmatprep.subr.mxu0 0.0
    %1281 = vmatpush1.msra.mxu0 0.0
    %1282 = vmatprep.subr.mxu0 0.0
    %1283 = vmatpush1.msra.mxu0 0.0
    %1284 = vmatprep.subr.mxu0 0.0
    %1285 = vmatpush1.msra.mxu0 0.0
    %1286 = vmatprep.subr.mxu0 0.0
    %1287 = vmatpush1.msra.mxu0 0.0
    %1288 = vmatprep.subr.mxu0 0.0
    %1289 = vmatpush1.msra.mxu0 0.0
    %1290 = vmatprep.subr.mxu0 0.0
    %1291 = vmatpush1.msra.mxu0 0.0
    %1292 = vmatprep.subr.mxu0 0.0
    %1293 = vmatpush1.msra.mxu0 0.0
    %1294 = vmatprep.subr.mxu0 0.0
    %1295 = vmatpush1.msra.mxu0 0.0
    %1296 = vmatprep.subr.mxu0 0.0
    %1297 = vmatpush1.msra.mxu0 0.0
    %1298 = vmatprep.subr.mxu0 0.0
    %1299 = vmatpush1.msra.mxu0 0.0
    %1300 = vmatprep.subr.mxu0 0.0
    %1301 = vmatpush1.msra.mxu0 0.0
    %1302 = vmatprep.subr.mxu0 0.0
    %1303 = vmatpush1.msra.mxu0 0.0
    %1304 = vmatprep.subr.mxu0 0.0
    %1305 = vmatpush1.msra.mxu0 0.0
    %1306 = vmatprep.subr.mxu0 0.0
    %1307 = vmatpush1.msra.mxu0 0.0
    %1308 = vmatprep.subr.mxu0 0.0
    %1309 = vmatpush1.msra.mxu0 0.0
    %1310 = vmatprep.subr.mxu0 0.0
    %1311 = vmatpush1.msra.mxu0 0.0
    %1312 = vmatprep.subr.mxu0 0.0
    %1313 = vmatpush1.msra.mxu0 0.0
    %1314 = vmatprep.subr.mxu0 0.0
    %1315 = vmatpush1.msra.mxu0 0.0
    %1316 = vmatprep.subr.mxu0 0.0
    %1317 = vmatpush1.msra.mxu0 0.0
    %1318 = vmatprep.mubr.f32.mxu0 0.0
    %v1319 = vand.u32 %v35, 4294901760
    %1320 = vmatmul.mubr.f32.gmra.mrb[0].mxu0 %v1319
    %v1321 = vpop.f32.mrb[0].mxu0
    %v1322 = vadd.f32 %v1199, %v1321
    %v1323 = vpop.f32.mrb[0].mxu0
    %v1324 = vadd.f32 %v1201, %v1323
    %1325 = vmatprep.mubr.f32.mxu0 0.0
    %v1326 = vand.u32 %v38, 4294901760
    %1327 = vmatmul.mubr.f32.gmra.mrb[0].mxu0 %v1326
    %v1328 = vpop.f32.mrb[0].mxu0
    %v1329 = vadd.f32 %v1208, %v1328
    %v1330 = vpop.f32.mrb[0].mxu0
    %v1331 = vadd.f32 %v1210, %v1330
    %1332 = vmatprep.mubr.f32.mxu0 0.0
    %v1333 = vand.u32 %v41, 4294901760
    %1334 = vmatmul.mubr.f32.gmra.mrb[0].mxu0 %v1333
    %v1335 = vpop.f32.mrb[0].mxu0
    %v1336 = vadd.f32 %v1217, %v1335
    %v1337 = vpop.f32.mrb[0].mxu0
    %v1338 = vadd.f32 %v1219, %v1337
    %1339 = vmatprep.mubr.f32.mxu0 0.0
    %v1340 = vand.u32 %v44, 4294901760
    %1341 = vmatmul.mubr.f32.gmra.mrb[0].mxu0 %v1340
    %v1342 = vpop.f32.mrb[0].mxu0
    %v1343 = vadd.f32 %v1226, %v1342
    %v1344 = vpop.f32.mrb[0].mxu0
    %v1345 = vadd.f32 %v1228, %v1344
    %1346 = vdwg.mxu0
    %v1347 = vand.u32 %v745, 4294901760
    %1348 = vmatprep.subr.mxu0 %v1347
    %v1349 = vand.u32 %v744, 4294901760
    %1350 = vmatpush1.msra.mxu0 %v1349
    %v1351 = vand.u32 %v747, 4294901760
    %1352 = vmatprep.subr.mxu0 %v1351
    %v1353 = vand.u32 %v746, 4294901760
    %1354 = vmatpush1.msra.mxu0 %v1353
    %v1355 = vand.u32 %v749, 4294901760
    %1356 = vmatprep.subr.mxu0 %v1355
    %v1357 = vand.u32 %v748, 4294901760
    %1358 = vmatpush1.msra.mxu0 %v1357
    %v1359 = vand.u32 %v756, 4294901760
    %1360 = vmatprep.subr.mxu0 %v1359
    %v1361 = vand.u32 %v753, 4294901760
    %1362 = vmatpush1.msra.mxu0 %v1361
    %1363 = vmatprep.subr.mxu0 0.0
    %1364 = vmatpush1.msra.mxu0 0.0
    %1365 = vmatprep.subr.mxu0 0.0
    %1366 = vmatpush1.msra.mxu0 0.0
    %1367 = vmatprep.subr.mxu0 0.0
    %1368 = vmatpush1.msra.mxu0 0.0
    %1369 = vmatprep.subr.mxu0 0.0
    %1370 = vmatpush1.msra.mxu0 0.0
    %1371 = vmatprep.subr.mxu0 0.0
    %1372 = vmatpush1.msra.mxu0 0.0
    %1373 = vmatprep.subr.mxu0 0.0
    %1374 = vmatpush1.msra.mxu0 0.0
    %1375 = vmatprep.subr.mxu0 0.0
    %1376 = vmatpush1.msra.mxu0 0.0
    %1377 = vmatprep.subr.mxu0 0.0
    %1378 = vmatpush1.msra.mxu0 0.0
    %1379 = vmatprep.subr.mxu0 0.0
    %1380 = vmatpush1.msra.mxu0 0.0
    %1381 = vmatprep.subr.mxu0 0.0
    %1382 = vmatpush1.msra.mxu0 0.0
    %1383 = vmatprep.subr.mxu0 0.0
    %1384 = vmatpush1.msra.mxu0 0.0
    %1385 = vmatprep.subr.mxu0 0.0
    %1386 = vmatpush1.msra.mxu0 0.0
    %1387 = vmatprep.subr.mxu0 0.0
    %1388 = vmatpush1.msra.mxu0 0.0
    %1389 = vmatprep.subr.mxu0 0.0
    %1390 = vmatpush1.msra.mxu0 0.0
    %1391 = vmatprep.subr.mxu0 0.0
    %1392 = vmatpush1.msra.mxu0 0.0
    %1393 = vmatprep.subr.mxu0 0.0
    %1394 = vmatpush1.msra.mxu0 0.0
    %1395 = vmatprep.subr.mxu0 0.0
    %1396 = vmatpush1.msra.mxu0 0.0
    %1397 = vmatprep.subr.mxu0 0.0
    %1398 = vmatpush1.msra.mxu0 0.0
    %1399 = vmatprep.subr.mxu0 0.0
    %1400 = vmatpush1.msra.mxu0 0.0
    %1401 = vmatprep.subr.mxu0 0.0
    %1402 = vmatpush1.msra.mxu0 0.0
    %1403 = vmatprep.subr.mxu0 0.0
    %1404 = vmatpush1.msra.mxu0 0.0
    %1405 = vmatprep.subr.mxu0 0.0
    %1406 = vmatpush1.msra.mxu0 0.0
    %1407 = vmatprep.subr.mxu0 0.0
    %1408 = vmatpush1.msra.mxu0 0.0
    %1409 = vmatprep.subr.mxu0 0.0
    %1410 = vmatpush1.msra.mxu0 0.0
    %1411 = vmatprep.subr.mxu0 0.0
    %1412 = vmatpush1.msra.mxu0 0.0
    %1413 = vmatprep.subr.mxu0 0.0
    %1414 = vmatpush1.msra.mxu0 0.0
    %1415 = vmatprep.subr.mxu0 0.0
    %1416 = vmatpush1.msra.mxu0 0.0
    %1417 = vmatprep.subr.mxu0 0.0
    %1418 = vmatpush1.msra.mxu0 0.0
    %1419 = vmatprep.mubr.f32.mxu0 0.0
    %v1420 = vand.u32 %v35, 4294901760
    %1421 = vmatmul.mubr.f32.gmra.mrb[0].mxu0 %v1420
    %v1422 = vpop.f32.mrb[0].mxu0
    %v1423 = vadd.f32 %v1322, %v1422
    %v1424 = vpop.f32.mrb[0].mxu0
    %v1425 = vadd.f32 %v1324, %v1424
    %1426 = vmatprep.mubr.f32.mxu0 0.0
    %v1427 = vand.u32 %v38, 4294901760
    %1428 = vmatmul.mubr.f32.gmra.mrb[0].mxu0 %v1427
    %v1429 = vpop.f32.mrb[0].mxu0
    %v1430 = vadd.f32 %v1329, %v1429
    %v1431 = vpop.f32.mrb[0].mxu0
    %v1432 = vadd.f32 %v1331, %v1431
    %1433 = vmatprep.mubr.f32.mxu0 0.0
    %v1434 = vand.u32 %v41, 4294901760
    %1435 = vmatmul.mubr.f32.gmra.mrb[0].mxu0 %v1434
    %v1436 = vpop.f32.mrb[0].mxu0
    %v1437 = vadd.f32 %v1336, %v1436
    %v1438 = vpop.f32.mrb[0].mxu0
    %v1439 = vadd.f32 %v1338, %v1438
    %1440 = vmatprep.mubr.f32.mxu0 0.0
    %v1441 = vand.u32 %v44, 4294901760
    %1442 = vmatmul.mubr.f32.gmra.mrb[0].mxu0 %v1441
    %v1443 = vpop.f32.mrb[0].mxu0
    %v1444 = vadd.f32 %v1343, %v1443
    %v1445 = vpop.f32.mrb[0].mxu0
    %v1446 = vadd.f32 %v1345, %v1445
    %1447 = vdwg.mxu0
    %vm1456 = vcmask 1046528
    %v1457 = vrot.slane %v1423, 1
    %v1458 = vrot.slane %v1430, 1
    %v1459 = vsel %vm1456, %v1457, %v1458
    %v1460 = vrot.slane %v1425, 1
    %v1461 = vrot.slane %v1432, 1
    %v1462 = vsel %vm1456, %v1460, %v1461
    %v1463 = vrot.slane %v1437, 1
    %v1464 = vsel %vm1456, %v1458, %v1463
    %v1465 = vrot.slane %v1439, 1
    %v1466 = vsel %vm1456, %v1461, %v1465
    %v1467 = vrot.slane %v1444, 1
    %v1468 = vsel %vm1456, %v1463, %v1467
    %v1469 = vrot.slane %v1446, 1
    %v1470 = vsel %vm1456, %v1465, %v1469
    %v1479 = vadd.f32 %v718, %v1459
    %v1480 = vadd.f32 %v720, %v1462
    %v1481 = vadd.f32 %v725, %v1464
    %v1482 = vadd.f32 %v727, %v1466
    %v1483 = vadd.f32 %v732, %v1468
    %v1484 = vadd.f32 %v734, %v1470
    %v1485 = vadd.f32 %v739, %v1467
    %v1486 = vadd.f32 %v741, %v1469
    %s1487 = scalar_lea.vmem %s1, 128
    %v1488 = vld [vmem:[%s1487] sm:$0xff]
    %v1489 = vld [vmem:[%s1487 + $0x8] sm:$0xff]
    %v1490 = vld [vmem:[%s1487 + $0x10] sm:$0xff]
    %v1491 = vld [vmem:[%s1487 + $0x18] sm:$0xff]
    %v1492 = vld [vmem:[%s1487 + $0x20] sm:$0xff]
    %v1493 = vld [vmem:[%s1487 + $0x28] sm:$0xff]
    %v1494 = vld [vmem:[%s1487 + $0x30] sm:$0xf]
    %v1495 = vld [vmem:[%s1487 + $0x38] sm:$0xf]
    %v1497 = vsel %vm46, %v1494, 0
    %v1500 = vsel %vm46, %v1495, 0
    %v1502 = vand.u32 %v1489, 4294901760
    %1503 = vmatprep.subr.mxu0 %v1502
    %v1504 = vand.u32 %v1488, 4294901760
    %1505 = vmatpush1.msra.mxu0 %v1504
    %v1506 = vand.u32 %v1491, 4294901760
    %1507 = vmatprep.subr.mxu0 %v1506
    %v1508 = vand.u32 %v1490, 4294901760
    %1509 = vmatpush1.msra.mxu0 %v1508
    %v1510 = vand.u32 %v1493, 4294901760
    %1511 = vmatprep.subr.mxu0 %v1510
    %v1512 = vand.u32 %v1492, 4294901760
    %1513 = vmatpush1.msra.mxu0 %v1512
    %v1514 = vand.u32 %v1500, 4294901760
    %1515 = vmatprep.subr.mxu0 %v1514
    %v1516 = vand.u32 %v1497, 4294901760
    %1517 = vmatpush1.msra.mxu0 %v1516
    %1518 = vmatprep.subr.mxu0 0.0
    %1519 = vmatpush1.msra.mxu0 0.0
    %1520 = vmatprep.subr.mxu0 0.0
    %1521 = vmatpush1.msra.mxu0 0.0
    %1522 = vmatprep.subr.mxu0 0.0
    %1523 = vmatpush1.msra.mxu0 0.0
    %1524 = vmatprep.subr.mxu0 0.0
    %1525 = vmatpush1.msra.mxu0 0.0
    %1526 = vmatprep.subr.mxu0 0.0
    %1527 = vmatpush1.msra.mxu0 0.0
    %1528 = vmatprep.subr.mxu0 0.0
    %1529 = vmatpush1.msra.mxu0 0.0
    %1530 = vmatprep.subr.mxu0 0.0
    %1531 = vmatpush1.msra.mxu0 0.0
    %1532 = vmatprep.subr.mxu0 0.0
    %1533 = vmatpush1.msra.mxu0 0.0
    %1534 = vmatprep.subr.mxu0 0.0
    %1535 = vmatpush1.msra.mxu0 0.0
    %1536 = vmatprep.subr.mxu0 0.0
    %1537 = vmatpush1.msra.mxu0 0.0
    %1538 = vmatprep.subr.mxu0 0.0
    %1539 = vmatpush1.msra.mxu0 0.0
    %1540 = vmatprep.subr.mxu0 0.0
    %1541 = vmatpush1.msra.mxu0 0.0
    %1542 = vmatprep.subr.mxu0 0.0
    %1543 = vmatpush1.msra.mxu0 0.0
    %1544 = vmatprep.subr.mxu0 0.0
    %1545 = vmatpush1.msra.mxu0 0.0
    %1546 = vmatprep.subr.mxu0 0.0
    %1547 = vmatpush1.msra.mxu0 0.0
    %1548 = vmatprep.subr.mxu0 0.0
    %1549 = vmatpush1.msra.mxu0 0.0
    %1550 = vmatprep.subr.mxu0 0.0
    %1551 = vmatpush1.msra.mxu0 0.0
    %1552 = vmatprep.subr.mxu0 0.0
    %1553 = vmatpush1.msra.mxu0 0.0
    %1554 = vmatprep.subr.mxu0 0.0
    %1555 = vmatpush1.msra.mxu0 0.0
    %1556 = vmatprep.subr.mxu0 0.0
    %1557 = vmatpush1.msra.mxu0 0.0
    %1558 = vmatprep.subr.mxu0 0.0
    %1559 = vmatpush1.msra.mxu0 0.0
    %1560 = vmatprep.subr.mxu0 0.0
    %1561 = vmatpush1.msra.mxu0 0.0
    %1562 = vmatprep.subr.mxu0 0.0
    %1563 = vmatpush1.msra.mxu0 0.0
    %1564 = vmatprep.subr.mxu0 0.0
    %1565 = vmatpush1.msra.mxu0 0.0
    %1566 = vmatprep.subr.mxu0 0.0
    %1567 = vmatpush1.msra.mxu0 0.0
    %1568 = vmatprep.subr.mxu0 0.0
    %1569 = vmatpush1.msra.mxu0 0.0
    %1570 = vmatprep.subr.mxu0 0.0
    %1571 = vmatpush1.msra.mxu0 0.0
    %1572 = vmatprep.subr.mxu0 0.0
    %1573 = vmatpush1.msra.mxu0 0.0
    %1574 = vmatprep.mubr.f32.mxu0 0.0
    %v1575 = vand.u32 %v35, 4294901760
    %v1576 = vsub.f32 %v35, %v1575
    %v1577 = vand.u32 %v1576, 4294901760
    %v1578 = vsub.f32 %v1576, %v1577
    %v1579 = vand.u32 %v1578, 4294901760
    %1580 = vmatmul.mubr.f32.gmra.mrb[0].mxu0 %v1579
    %v1581 = vpop.f32.mrb[0].mxu0
    %v1582 = vadd.f32 0.0, %v1581
    %v1583 = vpop.f32.mrb[0].mxu0
    %v1584 = vadd.f32 0.0, %v1583
    %1585 = vmatprep.mubr.f32.mxu0 0.0
    %v1586 = vand.u32 %v38, 4294901760
    %v1587 = vsub.f32 %v38, %v1586
    %v1588 = vand.u32 %v1587, 4294901760
    %v1589 = vsub.f32 %v1587, %v1588
    %v1590 = vand.u32 %v1589, 4294901760
    %1591 = vmatmul.mubr.f32.gmra.mrb[0].mxu0 %v1590
    %v1592 = vpop.f32.mrb[0].mxu0
    %v1593 = vadd.f32 0.0, %v1592
    %v1594 = vpop.f32.mrb[0].mxu0
    %v1595 = vadd.f32 0.0, %v1594
    %1596 = vmatprep.mubr.f32.mxu0 0.0
    %v1597 = vand.u32 %v41, 4294901760
    %v1598 = vsub.f32 %v41, %v1597
    %v1599 = vand.u32 %v1598, 4294901760
    %v1600 = vsub.f32 %v1598, %v1599
    %v1601 = vand.u32 %v1600, 4294901760
    %1602 = vmatmul.mubr.f32.gmra.mrb[0].mxu0 %v1601
    %v1603 = vpop.f32.mrb[0].mxu0
    %v1604 = vadd.f32 0.0, %v1603
    %v1605 = vpop.f32.mrb[0].mxu0
    %v1606 = vadd.f32 0.0, %v1605
    %1607 = vmatprep.mubr.f32.mxu0 0.0
    %v1608 = vand.u32 %v44, 4294901760
    %v1609 = vsub.f32 %v44, %v1608
    %v1610 = vand.u32 %v1609, 4294901760
    %v1611 = vsub.f32 %v1609, %v1610
    %v1612 = vand.u32 %v1611, 4294901760
    %1613 = vmatmul.mubr.f32.gmra.mrb[0].mxu0 %v1612
    %v1614 = vpop.f32.mrb[0].mxu0
    %v1615 = vadd.f32 0.0, %v1614
    %v1616 = vpop.f32.mrb[0].mxu0
    %v1617 = vadd.f32 0.0, %v1616
    %1618 = vdwg.mxu0
    %v1619 = vand.u32 %v1489, 4294901760
    %v1620 = vsub.f32 %v1489, %v1619
    %v1621 = vand.u32 %v1620, 4294901760
    %v1622 = vsub.f32 %v1620, %v1621
    %v1623 = vand.u32 %v1622, 4294901760
    %1624 = vmatprep.subr.mxu0 %v1623
    %v1625 = vand.u32 %v1488, 4294901760
    %v1626 = vsub.f32 %v1488, %v1625
    %v1627 = vand.u32 %v1626, 4294901760
    %v1628 = vsub.f32 %v1626, %v1627
    %v1629 = vand.u32 %v1628, 4294901760
    %1630 = vmatpush1.msra.mxu0 %v1629
    %v1631 = vand.u32 %v1491, 4294901760
    %v1632 = vsub.f32 %v1491, %v1631
    %v1633 = vand.u32 %v1632, 4294901760
    %v1634 = vsub.f32 %v1632, %v1633
    %v1635 = vand.u32 %v1634, 4294901760
    %1636 = vmatprep.subr.mxu0 %v1635
    %v1637 = vand.u32 %v1490, 4294901760
    %v1638 = vsub.f32 %v1490, %v1637
    %v1639 = vand.u32 %v1638, 4294901760
    %v1640 = vsub.f32 %v1638, %v1639
    %v1641 = vand.u32 %v1640, 4294901760
    %1642 = vmatpush1.msra.mxu0 %v1641
    %v1643 = vand.u32 %v1493, 4294901760
    %v1644 = vsub.f32 %v1493, %v1643
    %v1645 = vand.u32 %v1644, 4294901760
    %v1646 = vsub.f32 %v1644, %v1645
    %v1647 = vand.u32 %v1646, 4294901760
    %1648 = vmatprep.subr.mxu0 %v1647
    %v1649 = vand.u32 %v1492, 4294901760
    %v1650 = vsub.f32 %v1492, %v1649
    %v1651 = vand.u32 %v1650, 4294901760
    %v1652 = vsub.f32 %v1650, %v1651
    %v1653 = vand.u32 %v1652, 4294901760
    %1654 = vmatpush1.msra.mxu0 %v1653
    %v1655 = vand.u32 %v1500, 4294901760
    %v1656 = vsub.f32 %v1500, %v1655
    %v1657 = vand.u32 %v1656, 4294901760
    %v1658 = vsub.f32 %v1656, %v1657
    %v1659 = vand.u32 %v1658, 4294901760
    %1660 = vmatprep.subr.mxu0 %v1659
    %v1661 = vand.u32 %v1497, 4294901760
    %v1662 = vsub.f32 %v1497, %v1661
    %v1663 = vand.u32 %v1662, 4294901760
    %v1664 = vsub.f32 %v1662, %v1663
    %v1665 = vand.u32 %v1664, 4294901760
    %1666 = vmatpush1.msra.mxu0 %v1665
    %1667 = vmatprep.subr.mxu0 0.0
    %1668 = vmatpush1.msra.mxu0 0.0
    %1669 = vmatprep.subr.mxu0 0.0
    %1670 = vmatpush1.msra.mxu0 0.0
    %1671 = vmatprep.subr.mxu0 0.0
    %1672 = vmatpush1.msra.mxu0 0.0
    %1673 = vmatprep.subr.mxu0 0.0
    %1674 = vmatpush1.msra.mxu0 0.0
    %1675 = vmatprep.subr.mxu0 0.0
    %1676 = vmatpush1.msra.mxu0 0.0
    %1677 = vmatprep.subr.mxu0 0.0
    %1678 = vmatpush1.msra.mxu0 0.0
    %1679 = vmatprep.subr.mxu0 0.0
    %1680 = vmatpush1.msra.mxu0 0.0
    %1681 = vmatprep.subr.mxu0 0.0
    %1682 = vmatpush1.msra.mxu0 0.0
    %1683 = vmatprep.subr.mxu0 0.0
    %1684 = vmatpush1.msra.mxu0 0.0
    %1685 = vmatprep.subr.mxu0 0.0
    %1686 = vmatpush1.msra.mxu0 0.0
    %1687 = vmatprep.subr.mxu0 0.0
    %1688 = vmatpush1.msra.mxu0 0.0
    %1689 = vmatprep.subr.mxu0 0.0
    %1690 = vmatpush1.msra.mxu0 0.0
    %1691 = vmatprep.subr.mxu0 0.0
    %1692 = vmatpush1.msra.mxu0 0.0
    %1693 = vmatprep.subr.mxu0 0.0
    %1694 = vmatpush1.msra.mxu0 0.0
    %1695 = vmatprep.subr.mxu0 0.0
    %1696 = vmatpush1.msra.mxu0 0.0
    %1697 = vmatprep.subr.mxu0 0.0
    %1698 = vmatpush1.msra.mxu0 0.0
    %1699 = vmatprep.subr.mxu0 0.0
    %1700 = vmatpush1.msra.mxu0 0.0
    %1701 = vmatprep.subr.mxu0 0.0
    %1702 = vmatpush1.msra.mxu0 0.0
    %1703 = vmatprep.subr.mxu0 0.0
    %1704 = vmatpush1.msra.mxu0 0.0
    %1705 = vmatprep.subr.mxu0 0.0
    %1706 = vmatpush1.msra.mxu0 0.0
    %1707 = vmatprep.subr.mxu0 0.0
    %1708 = vmatpush1.msra.mxu0 0.0
    %1709 = vmatprep.subr.mxu0 0.0
    %1710 = vmatpush1.msra.mxu0 0.0
    %1711 = vmatprep.subr.mxu0 0.0
    %1712 = vmatpush1.msra.mxu0 0.0
    %1713 = vmatprep.subr.mxu0 0.0
    %1714 = vmatpush1.msra.mxu0 0.0
    %1715 = vmatprep.subr.mxu0 0.0
    %1716 = vmatpush1.msra.mxu0 0.0
    %1717 = vmatprep.subr.mxu0 0.0
    %1718 = vmatpush1.msra.mxu0 0.0
    %1719 = vmatprep.subr.mxu0 0.0
    %1720 = vmatpush1.msra.mxu0 0.0
    %1721 = vmatprep.subr.mxu0 0.0
    %1722 = vmatpush1.msra.mxu0 0.0
    %1723 = vmatprep.mubr.f32.mxu0 0.0
    %v1724 = vand.u32 %v35, 4294901760
    %1725 = vmatmul.mubr.f32.gmra.mrb[0].mxu0 %v1724
    %v1726 = vpop.f32.mrb[0].mxu0
    %v1727 = vadd.f32 %v1582, %v1726
    %v1728 = vpop.f32.mrb[0].mxu0
    %v1729 = vadd.f32 %v1584, %v1728
    %1730 = vmatprep.mubr.f32.mxu0 0.0
    %v1731 = vand.u32 %v38, 4294901760
    %1732 = vmatmul.mubr.f32.gmra.mrb[0].mxu0 %v1731
    %v1733 = vpop.f32.mrb[0].mxu0
    %v1734 = vadd.f32 %v1593, %v1733
    %v1735 = vpop.f32.mrb[0].mxu0
    %v1736 = vadd.f32 %v1595, %v1735
    %1737 = vmatprep.mubr.f32.mxu0 0.0
    %v1738 = vand.u32 %v41, 4294901760
    %1739 = vmatmul.mubr.f32.gmra.mrb[0].mxu0 %v1738
    %v1740 = vpop.f32.mrb[0].mxu0
    %v1741 = vadd.f32 %v1604, %v1740
    %v1742 = vpop.f32.mrb[0].mxu0
    %v1743 = vadd.f32 %v1606, %v1742
    %1744 = vmatprep.mubr.f32.mxu0 0.0
    %v1745 = vand.u32 %v44, 4294901760
    %1746 = vmatmul.mubr.f32.gmra.mrb[0].mxu0 %v1745
    %v1747 = vpop.f32.mrb[0].mxu0
    %v1748 = vadd.f32 %v1615, %v1747
    %v1749 = vpop.f32.mrb[0].mxu0
    %v1750 = vadd.f32 %v1617, %v1749
    %1751 = vdwg.mxu0
    %v1752 = vand.u32 %v1489, 4294901760
    %v1753 = vsub.f32 %v1489, %v1752
    %1754 = vmatprep.subr.mxu0 %v1753
    %v1755 = vand.u32 %v1488, 4294901760
    %v1756 = vsub.f32 %v1488, %v1755
    %1757 = vmatpush1.msra.mxu0 %v1756
    %v1758 = vand.u32 %v1491, 4294901760
    %v1759 = vsub.f32 %v1491, %v1758
    %1760 = vmatprep.subr.mxu0 %v1759
    %v1761 = vand.u32 %v1490, 4294901760
    %v1762 = vsub.f32 %v1490, %v1761
    %1763 = vmatpush1.msra.mxu0 %v1762
    %v1764 = vand.u32 %v1493, 4294901760
    %v1765 = vsub.f32 %v1493, %v1764
    %1766 = vmatprep.subr.mxu0 %v1765
    %v1767 = vand.u32 %v1492, 4294901760
    %v1768 = vsub.f32 %v1492, %v1767
    %1769 = vmatpush1.msra.mxu0 %v1768
    %v1770 = vand.u32 %v1500, 4294901760
    %v1771 = vsub.f32 %v1500, %v1770
    %1772 = vmatprep.subr.mxu0 %v1771
    %v1773 = vand.u32 %v1497, 4294901760
    %v1774 = vsub.f32 %v1497, %v1773
    %1775 = vmatpush1.msra.mxu0 %v1774
    %1776 = vmatprep.subr.mxu0 0.0
    %1777 = vmatpush1.msra.mxu0 0.0
    %1778 = vmatprep.subr.mxu0 0.0
    %1779 = vmatpush1.msra.mxu0 0.0
    %1780 = vmatprep.subr.mxu0 0.0
    %1781 = vmatpush1.msra.mxu0 0.0
    %1782 = vmatprep.subr.mxu0 0.0
    %1783 = vmatpush1.msra.mxu0 0.0
    %1784 = vmatprep.subr.mxu0 0.0
    %1785 = vmatpush1.msra.mxu0 0.0
    %1786 = vmatprep.subr.mxu0 0.0
    %1787 = vmatpush1.msra.mxu0 0.0
    %1788 = vmatprep.subr.mxu0 0.0
    %1789 = vmatpush1.msra.mxu0 0.0
    %1790 = vmatprep.subr.mxu0 0.0
    %1791 = vmatpush1.msra.mxu0 0.0
    %1792 = vmatprep.subr.mxu0 0.0
    %1793 = vmatpush1.msra.mxu0 0.0
    %1794 = vmatprep.subr.mxu0 0.0
    %1795 = vmatpush1.msra.mxu0 0.0
    %1796 = vmatprep.subr.mxu0 0.0
    %1797 = vmatpush1.msra.mxu0 0.0
    %1798 = vmatprep.subr.mxu0 0.0
    %1799 = vmatpush1.msra.mxu0 0.0
    %1800 = vmatprep.subr.mxu0 0.0
    %1801 = vmatpush1.msra.mxu0 0.0
    %1802 = vmatprep.subr.mxu0 0.0
    %1803 = vmatpush1.msra.mxu0 0.0
    %1804 = vmatprep.subr.mxu0 0.0
    %1805 = vmatpush1.msra.mxu0 0.0
    %1806 = vmatprep.subr.mxu0 0.0
    %1807 = vmatpush1.msra.mxu0 0.0
    %1808 = vmatprep.subr.mxu0 0.0
    %1809 = vmatpush1.msra.mxu0 0.0
    %1810 = vmatprep.subr.mxu0 0.0
    %1811 = vmatpush1.msra.mxu0 0.0
    %1812 = vmatprep.subr.mxu0 0.0
    %1813 = vmatpush1.msra.mxu0 0.0
    %1814 = vmatprep.subr.mxu0 0.0
    %1815 = vmatpush1.msra.mxu0 0.0
    %1816 = vmatprep.subr.mxu0 0.0
    %1817 = vmatpush1.msra.mxu0 0.0
    %1818 = vmatprep.subr.mxu0 0.0
    %1819 = vmatpush1.msra.mxu0 0.0
    %1820 = vmatprep.subr.mxu0 0.0
    %1821 = vmatpush1.msra.mxu0 0.0
    %1822 = vmatprep.subr.mxu0 0.0
    %1823 = vmatpush1.msra.mxu0 0.0
    %1824 = vmatprep.subr.mxu0 0.0
    %1825 = vmatpush1.msra.mxu0 0.0
    %1826 = vmatprep.subr.mxu0 0.0
    %1827 = vmatpush1.msra.mxu0 0.0
    %1828 = vmatprep.subr.mxu0 0.0
    %1829 = vmatpush1.msra.mxu0 0.0
    %1830 = vmatprep.subr.mxu0 0.0
    %1831 = vmatpush1.msra.mxu0 0.0
    %1832 = vmatprep.mubr.f32.mxu0 0.0
    %v1833 = vand.u32 %v35, 4294901760
    %v1834 = vsub.f32 %v35, %v1833
    %1835 = vmatmul.mubr.f32.gmra.mrb[0].mxu0 %v1834
    %v1836 = vpop.f32.mrb[0].mxu0
    %v1837 = vadd.f32 %v1727, %v1836
    %v1838 = vpop.f32.mrb[0].mxu0
    %v1839 = vadd.f32 %v1729, %v1838
    %1840 = vmatprep.mubr.f32.mxu0 0.0
    %v1841 = vand.u32 %v38, 4294901760
    %v1842 = vsub.f32 %v38, %v1841
    %1843 = vmatmul.mubr.f32.gmra.mrb[0].mxu0 %v1842
    %v1844 = vpop.f32.mrb[0].mxu0
    %v1845 = vadd.f32 %v1734, %v1844
    %v1846 = vpop.f32.mrb[0].mxu0
    %v1847 = vadd.f32 %v1736, %v1846
    %1848 = vmatprep.mubr.f32.mxu0 0.0
    %v1849 = vand.u32 %v41, 4294901760
    %v1850 = vsub.f32 %v41, %v1849
    %1851 = vmatmul.mubr.f32.gmra.mrb[0].mxu0 %v1850
    %v1852 = vpop.f32.mrb[0].mxu0
    %v1853 = vadd.f32 %v1741, %v1852
    %v1854 = vpop.f32.mrb[0].mxu0
    %v1855 = vadd.f32 %v1743, %v1854
    %1856 = vmatprep.mubr.f32.mxu0 0.0
    %v1857 = vand.u32 %v44, 4294901760
    %v1858 = vsub.f32 %v44, %v1857
    %1859 = vmatmul.mubr.f32.gmra.mrb[0].mxu0 %v1858
    %v1860 = vpop.f32.mrb[0].mxu0
    %v1861 = vadd.f32 %v1748, %v1860
    %v1862 = vpop.f32.mrb[0].mxu0
    %v1863 = vadd.f32 %v1750, %v1862
    %1864 = vdwg.mxu0
    %v1865 = vand.u32 %v1489, 4294901760
    %1866 = vmatprep.subr.mxu0 %v1865
    %v1867 = vand.u32 %v1488, 4294901760
    %1868 = vmatpush1.msra.mxu0 %v1867
    %v1869 = vand.u32 %v1491, 4294901760
    %1870 = vmatprep.subr.mxu0 %v1869
    %v1871 = vand.u32 %v1490, 4294901760
    %1872 = vmatpush1.msra.mxu0 %v1871
    %v1873 = vand.u32 %v1493, 4294901760
    %1874 = vmatprep.subr.mxu0 %v1873
    %v1875 = vand.u32 %v1492, 4294901760
    %1876 = vmatpush1.msra.mxu0 %v1875
    %v1877 = vand.u32 %v1500, 4294901760
    %1878 = vmatprep.subr.mxu0 %v1877
    %v1879 = vand.u32 %v1497, 4294901760
    %1880 = vmatpush1.msra.mxu0 %v1879
    %1881 = vmatprep.subr.mxu0 0.0
    %1882 = vmatpush1.msra.mxu0 0.0
    %1883 = vmatprep.subr.mxu0 0.0
    %1884 = vmatpush1.msra.mxu0 0.0
    %1885 = vmatprep.subr.mxu0 0.0
    %1886 = vmatpush1.msra.mxu0 0.0
    %1887 = vmatprep.subr.mxu0 0.0
    %1888 = vmatpush1.msra.mxu0 0.0
    %1889 = vmatprep.subr.mxu0 0.0
    %1890 = vmatpush1.msra.mxu0 0.0
    %1891 = vmatprep.subr.mxu0 0.0
    %1892 = vmatpush1.msra.mxu0 0.0
    %1893 = vmatprep.subr.mxu0 0.0
    %1894 = vmatpush1.msra.mxu0 0.0
    %1895 = vmatprep.subr.mxu0 0.0
    %1896 = vmatpush1.msra.mxu0 0.0
    %1897 = vmatprep.subr.mxu0 0.0
    %1898 = vmatpush1.msra.mxu0 0.0
    %1899 = vmatprep.subr.mxu0 0.0
    %1900 = vmatpush1.msra.mxu0 0.0
    %1901 = vmatprep.subr.mxu0 0.0
    %1902 = vmatpush1.msra.mxu0 0.0
    %1903 = vmatprep.subr.mxu0 0.0
    %1904 = vmatpush1.msra.mxu0 0.0
    %1905 = vmatprep.subr.mxu0 0.0
    %1906 = vmatpush1.msra.mxu0 0.0
    %1907 = vmatprep.subr.mxu0 0.0
    %1908 = vmatpush1.msra.mxu0 0.0
    %1909 = vmatprep.subr.mxu0 0.0
    %1910 = vmatpush1.msra.mxu0 0.0
    %1911 = vmatprep.subr.mxu0 0.0
    %1912 = vmatpush1.msra.mxu0 0.0
    %1913 = vmatprep.subr.mxu0 0.0
    %1914 = vmatpush1.msra.mxu0 0.0
    %1915 = vmatprep.subr.mxu0 0.0
    %1916 = vmatpush1.msra.mxu0 0.0
    %1917 = vmatprep.subr.mxu0 0.0
    %1918 = vmatpush1.msra.mxu0 0.0
    %1919 = vmatprep.subr.mxu0 0.0
    %1920 = vmatpush1.msra.mxu0 0.0
    %1921 = vmatprep.subr.mxu0 0.0
    %1922 = vmatpush1.msra.mxu0 0.0
    %1923 = vmatprep.subr.mxu0 0.0
    %1924 = vmatpush1.msra.mxu0 0.0
    %1925 = vmatprep.subr.mxu0 0.0
    %1926 = vmatpush1.msra.mxu0 0.0
    %1927 = vmatprep.subr.mxu0 0.0
    %1928 = vmatpush1.msra.mxu0 0.0
    %1929 = vmatprep.subr.mxu0 0.0
    %1930 = vmatpush1.msra.mxu0 0.0
    %1931 = vmatprep.subr.mxu0 0.0
    %1932 = vmatpush1.msra.mxu0 0.0
    %1933 = vmatprep.subr.mxu0 0.0
    %1934 = vmatpush1.msra.mxu0 0.0
    %1935 = vmatprep.subr.mxu0 0.0
    %1936 = vmatpush1.msra.mxu0 0.0
    %1937 = vmatprep.mubr.f32.mxu0 0.0
    %v1938 = vand.u32 %v35, 4294901760
    %v1939 = vsub.f32 %v35, %v1938
    %v1940 = vand.u32 %v1939, 4294901760
    %1941 = vmatmul.mubr.f32.gmra.mrb[0].mxu0 %v1940
    %v1942 = vpop.f32.mrb[0].mxu0
    %v1943 = vadd.f32 %v1837, %v1942
    %v1944 = vpop.f32.mrb[0].mxu0
    %v1945 = vadd.f32 %v1839, %v1944
    %1946 = vmatprep.mubr.f32.mxu0 0.0
    %v1947 = vand.u32 %v38, 4294901760
    %v1948 = vsub.f32 %v38, %v1947
    %v1949 = vand.u32 %v1948, 4294901760
    %1950 = vmatmul.mubr.f32.gmra.mrb[0].mxu0 %v1949
    %v1951 = vpop.f32.mrb[0].mxu0
    %v1952 = vadd.f32 %v1845, %v1951
    %v1953 = vpop.f32.mrb[0].mxu0
    %v1954 = vadd.f32 %v1847, %v1953
    %1955 = vmatprep.mubr.f32.mxu0 0.0
    %v1956 = vand.u32 %v41, 4294901760
    %v1957 = vsub.f32 %v41, %v1956
    %v1958 = vand.u32 %v1957, 4294901760
    %1959 = vmatmul.mubr.f32.gmra.mrb[0].mxu0 %v1958
    %v1960 = vpop.f32.mrb[0].mxu0
    %v1961 = vadd.f32 %v1853, %v1960
    %v1962 = vpop.f32.mrb[0].mxu0
    %v1963 = vadd.f32 %v1855, %v1962
    %1964 = vmatprep.mubr.f32.mxu0 0.0
    %v1965 = vand.u32 %v44, 4294901760
    %v1966 = vsub.f32 %v44, %v1965
    %v1967 = vand.u32 %v1966, 4294901760
    %1968 = vmatmul.mubr.f32.gmra.mrb[0].mxu0 %v1967
    %v1969 = vpop.f32.mrb[0].mxu0
    %v1970 = vadd.f32 %v1861, %v1969
    %v1971 = vpop.f32.mrb[0].mxu0
    %v1972 = vadd.f32 %v1863, %v1971
    %1973 = vdwg.mxu0
    %v1974 = vand.u32 %v1489, 4294901760
    %v1975 = vsub.f32 %v1489, %v1974
    %v1976 = vand.u32 %v1975, 4294901760
    %1977 = vmatprep.subr.mxu0 %v1976
    %v1978 = vand.u32 %v1488, 4294901760
    %v1979 = vsub.f32 %v1488, %v1978
    %v1980 = vand.u32 %v1979, 4294901760
    %1981 = vmatpush1.msra.mxu0 %v1980
    %v1982 = vand.u32 %v1491, 4294901760
    %v1983 = vsub.f32 %v1491, %v1982
    %v1984 = vand.u32 %v1983, 4294901760
    %1985 = vmatprep.subr.mxu0 %v1984
    %v1986 = vand.u32 %v1490, 4294901760
    %v1987 = vsub.f32 %v1490, %v1986
    %v1988 = vand.u32 %v1987, 4294901760
    %1989 = vmatpush1.msra.mxu0 %v1988
    %v1990 = vand.u32 %v1493, 4294901760
    %v1991 = vsub.f32 %v1493, %v1990
    %v1992 = vand.u32 %v1991, 4294901760
    %1993 = vmatprep.subr.mxu0 %v1992
    %v1994 = vand.u32 %v1492, 4294901760
    %v1995 = vsub.f32 %v1492, %v1994
    %v1996 = vand.u32 %v1995, 4294901760
    %1997 = vmatpush1.msra.mxu0 %v1996
    %v1998 = vand.u32 %v1500, 4294901760
    %v1999 = vsub.f32 %v1500, %v1998
    %v2000 = vand.u32 %v1999, 4294901760
    %2001 = vmatprep.subr.mxu0 %v2000
    %v2002 = vand.u32 %v1497, 4294901760
    %v2003 = vsub.f32 %v1497, %v2002
    %v2004 = vand.u32 %v2003, 4294901760
    %2005 = vmatpush1.msra.mxu0 %v2004
    %2006 = vmatprep.subr.mxu0 0.0
    %2007 = vmatpush1.msra.mxu0 0.0
    %2008 = vmatprep.subr.mxu0 0.0
    %2009 = vmatpush1.msra.mxu0 0.0
    %2010 = vmatprep.subr.mxu0 0.0
    %2011 = vmatpush1.msra.mxu0 0.0
    %2012 = vmatprep.subr.mxu0 0.0
    %2013 = vmatpush1.msra.mxu0 0.0
    %2014 = vmatprep.subr.mxu0 0.0
    %2015 = vmatpush1.msra.mxu0 0.0
    %2016 = vmatprep.subr.mxu0 0.0
    %2017 = vmatpush1.msra.mxu0 0.0
    %2018 = vmatprep.subr.mxu0 0.0
    %2019 = vmatpush1.msra.mxu0 0.0
    %2020 = vmatprep.subr.mxu0 0.0
    %2021 = vmatpush1.msra.mxu0 0.0
    %2022 = vmatprep.subr.mxu0 0.0
    %2023 = vmatpush1.msra.mxu0 0.0
    %2024 = vmatprep.subr.mxu0 0.0
    %2025 = vmatpush1.msra.mxu0 0.0
    %2026 = vmatprep.subr.mxu0 0.0
    %2027 = vmatpush1.msra.mxu0 0.0
    %2028 = vmatprep.subr.mxu0 0.0
    %2029 = vmatpush1.msra.mxu0 0.0
    %2030 = vmatprep.subr.mxu0 0.0
    %2031 = vmatpush1.msra.mxu0 0.0
    %2032 = vmatprep.subr.mxu0 0.0
    %2033 = vmatpush1.msra.mxu0 0.0
    %2034 = vmatprep.subr.mxu0 0.0
    %2035 = vmatpush1.msra.mxu0 0.0
    %2036 = vmatprep.subr.mxu0 0.0
    %2037 = vmatpush1.msra.mxu0 0.0
    %2038 = vmatprep.subr.mxu0 0.0
    %2039 = vmatpush1.msra.mxu0 0.0
    %2040 = vmatprep.subr.mxu0 0.0
    %2041 = vmatpush1.msra.mxu0 0.0
    %2042 = vmatprep.subr.mxu0 0.0
    %2043 = vmatpush1.msra.mxu0 0.0
    %2044 = vmatprep.subr.mxu0 0.0
    %2045 = vmatpush1.msra.mxu0 0.0
    %2046 = vmatprep.subr.mxu0 0.0
    %2047 = vmatpush1.msra.mxu0 0.0
    %2048 = vmatprep.subr.mxu0 0.0
    %2049 = vmatpush1.msra.mxu0 0.0
    %2050 = vmatprep.subr.mxu0 0.0
    %2051 = vmatpush1.msra.mxu0 0.0
    %2052 = vmatprep.subr.mxu0 0.0
    %2053 = vmatpush1.msra.mxu0 0.0
    %2054 = vmatprep.subr.mxu0 0.0
    %2055 = vmatpush1.msra.mxu0 0.0
    %2056 = vmatprep.subr.mxu0 0.0
    %2057 = vmatpush1.msra.mxu0 0.0
    %2058 = vmatprep.subr.mxu0 0.0
    %2059 = vmatpush1.msra.mxu0 0.0
    %2060 = vmatprep.subr.mxu0 0.0
    %2061 = vmatpush1.msra.mxu0 0.0
    %2062 = vmatprep.mubr.f32.mxu0 0.0
    %v2063 = vand.u32 %v35, 4294901760
    %2064 = vmatmul.mubr.f32.gmra.mrb[0].mxu0 %v2063
    %v2065 = vpop.f32.mrb[0].mxu0
    %v2066 = vadd.f32 %v1943, %v2065
    %v2067 = vpop.f32.mrb[0].mxu0
    %v2068 = vadd.f32 %v1945, %v2067
    %2069 = vmatprep.mubr.f32.mxu0 0.0
    %v2070 = vand.u32 %v38, 4294901760
    %2071 = vmatmul.mubr.f32.gmra.mrb[0].mxu0 %v2070
    %v2072 = vpop.f32.mrb[0].mxu0
    %v2073 = vadd.f32 %v1952, %v2072
    %v2074 = vpop.f32.mrb[0].mxu0
    %v2075 = vadd.f32 %v1954, %v2074
    %2076 = vmatprep.mubr.f32.mxu0 0.0
    %v2077 = vand.u32 %v41, 4294901760
    %2078 = vmatmul.mubr.f32.gmra.mrb[0].mxu0 %v2077
    %v2079 = vpop.f32.mrb[0].mxu0
    %v2080 = vadd.f32 %v1961, %v2079
    %v2081 = vpop.f32.mrb[0].mxu0
    %v2082 = vadd.f32 %v1963, %v2081
    %2083 = vmatprep.mubr.f32.mxu0 0.0
    %v2084 = vand.u32 %v44, 4294901760
    %2085 = vmatmul.mubr.f32.gmra.mrb[0].mxu0 %v2084
    %v2086 = vpop.f32.mrb[0].mxu0
    %v2087 = vadd.f32 %v1970, %v2086
    %v2088 = vpop.f32.mrb[0].mxu0
    %v2089 = vadd.f32 %v1972, %v2088
    %2090 = vdwg.mxu0
    %v2091 = vand.u32 %v1489, 4294901760
    %2092 = vmatprep.subr.mxu0 %v2091
    %v2093 = vand.u32 %v1488, 4294901760
    %2094 = vmatpush1.msra.mxu0 %v2093
    %v2095 = vand.u32 %v1491, 4294901760
    %2096 = vmatprep.subr.mxu0 %v2095
    %v2097 = vand.u32 %v1490, 4294901760
    %2098 = vmatpush1.msra.mxu0 %v2097
    %v2099 = vand.u32 %v1493, 4294901760
    %2100 = vmatprep.subr.mxu0 %v2099
    %v2101 = vand.u32 %v1492, 4294901760
    %2102 = vmatpush1.msra.mxu0 %v2101
    %v2103 = vand.u32 %v1500, 4294901760
    %2104 = vmatprep.subr.mxu0 %v2103
    %v2105 = vand.u32 %v1497, 4294901760
    %2106 = vmatpush1.msra.mxu0 %v2105
    %2107 = vmatprep.subr.mxu0 0.0
    %2108 = vmatpush1.msra.mxu0 0.0
    %2109 = vmatprep.subr.mxu0 0.0
    %2110 = vmatpush1.msra.mxu0 0.0
    %2111 = vmatprep.subr.mxu0 0.0
    %2112 = vmatpush1.msra.mxu0 0.0
    %2113 = vmatprep.subr.mxu0 0.0
    %2114 = vmatpush1.msra.mxu0 0.0
    %2115 = vmatprep.subr.mxu0 0.0
    %2116 = vmatpush1.msra.mxu0 0.0
    %2117 = vmatprep.subr.mxu0 0.0
    %2118 = vmatpush1.msra.mxu0 0.0
    %2119 = vmatprep.subr.mxu0 0.0
    %2120 = vmatpush1.msra.mxu0 0.0
    %2121 = vmatprep.subr.mxu0 0.0
    %2122 = vmatpush1.msra.mxu0 0.0
    %2123 = vmatprep.subr.mxu0 0.0
    %2124 = vmatpush1.msra.mxu0 0.0
    %2125 = vmatprep.subr.mxu0 0.0
    %2126 = vmatpush1.msra.mxu0 0.0
    %2127 = vmatprep.subr.mxu0 0.0
    %2128 = vmatpush1.msra.mxu0 0.0
    %2129 = vmatprep.subr.mxu0 0.0
    %2130 = vmatpush1.msra.mxu0 0.0
    %2131 = vmatprep.subr.mxu0 0.0
    %2132 = vmatpush1.msra.mxu0 0.0
    %2133 = vmatprep.subr.mxu0 0.0
    %2134 = vmatpush1.msra.mxu0 0.0
    %2135 = vmatprep.subr.mxu0 0.0
    %2136 = vmatpush1.msra.mxu0 0.0
    %2137 = vmatprep.subr.mxu0 0.0
    %2138 = vmatpush1.msra.mxu0 0.0
    %2139 = vmatprep.subr.mxu0 0.0
    %2140 = vmatpush1.msra.mxu0 0.0
    %2141 = vmatprep.subr.mxu0 0.0
    %2142 = vmatpush1.msra.mxu0 0.0
    %2143 = vmatprep.subr.mxu0 0.0
    %2144 = vmatpush1.msra.mxu0 0.0
    %2145 = vmatprep.subr.mxu0 0.0
    %2146 = vmatpush1.msra.mxu0 0.0
    %2147 = vmatprep.subr.mxu0 0.0
    %2148 = vmatpush1.msra.mxu0 0.0
    %2149 = vmatprep.subr.mxu0 0.0
    %2150 = vmatpush1.msra.mxu0 0.0
    %2151 = vmatprep.subr.mxu0 0.0
    %2152 = vmatpush1.msra.mxu0 0.0
    %2153 = vmatprep.subr.mxu0 0.0
    %2154 = vmatpush1.msra.mxu0 0.0
    %2155 = vmatprep.subr.mxu0 0.0
    %2156 = vmatpush1.msra.mxu0 0.0
    %2157 = vmatprep.subr.mxu0 0.0
    %2158 = vmatpush1.msra.mxu0 0.0
    %2159 = vmatprep.subr.mxu0 0.0
    %2160 = vmatpush1.msra.mxu0 0.0
    %2161 = vmatprep.subr.mxu0 0.0
    %2162 = vmatpush1.msra.mxu0 0.0
    %2163 = vmatprep.mubr.f32.mxu0 0.0
    %v2164 = vand.u32 %v35, 4294901760
    %2165 = vmatmul.mubr.f32.gmra.mrb[0].mxu0 %v2164
    %v2166 = vpop.f32.mrb[0].mxu0
    %v2167 = vadd.f32 %v2066, %v2166
    %v2168 = vpop.f32.mrb[0].mxu0
    %v2169 = vadd.f32 %v2068, %v2168
    %2170 = vmatprep.mubr.f32.mxu0 0.0
    %v2171 = vand.u32 %v38, 4294901760
    %2172 = vmatmul.mubr.f32.gmra.mrb[0].mxu0 %v2171
    %v2173 = vpop.f32.mrb[0].mxu0
    %v2174 = vadd.f32 %v2073, %v2173
    %v2175 = vpop.f32.mrb[0].mxu0
    %v2176 = vadd.f32 %v2075, %v2175
    %2177 = vmatprep.mubr.f32.mxu0 0.0
    %v2178 = vand.u32 %v41, 4294901760
    %2179 = vmatmul.mubr.f32.gmra.mrb[0].mxu0 %v2178
    %v2180 = vpop.f32.mrb[0].mxu0
    %v2181 = vadd.f32 %v2080, %v2180
    %v2182 = vpop.f32.mrb[0].mxu0
    %v2183 = vadd.f32 %v2082, %v2182
    %2184 = vmatprep.mubr.f32.mxu0 0.0
    %v2185 = vand.u32 %v44, 4294901760
    %2186 = vmatmul.mubr.f32.gmra.mrb[0].mxu0 %v2185
    %v2187 = vpop.f32.mrb[0].mxu0
    %v2188 = vadd.f32 %v2087, %v2187
    %v2189 = vpop.f32.mrb[0].mxu0
    %v2190 = vadd.f32 %v2089, %v2189
    %2191 = vdwg.mxu0
    %vm2200 = vcmask 1045504
    %v2201 = vrot.slane %v2167, 2
    %v2202 = vrot.slane %v2174, 2
    %v2203 = vsel %vm2200, %v2201, %v2202
    %v2204 = vrot.slane %v2169, 2
    %v2205 = vrot.slane %v2176, 2
    %v2206 = vsel %vm2200, %v2204, %v2205
    %v2207 = vrot.slane %v2181, 2
    %v2208 = vsel %vm2200, %v2202, %v2207
    %v2209 = vrot.slane %v2183, 2
    %v2210 = vsel %vm2200, %v2205, %v2209
    %v2211 = vrot.slane %v2188, 2
    %v2212 = vsel %vm2200, %v2207, %v2211
    %v2213 = vrot.slane %v2190, 2
    %v2214 = vsel %vm2200, %v2209, %v2213
    %v2223 = vadd.f32 %v1479, %v2203
    %v2224 = vadd.f32 %v1480, %v2206
    %v2225 = vadd.f32 %v1481, %v2208
    %v2226 = vadd.f32 %v1482, %v2210
    %v2227 = vadd.f32 %v1483, %v2212
    %v2228 = vadd.f32 %v1484, %v2214
    %v2229 = vadd.f32 %v1485, %v2211
    %v2230 = vadd.f32 %v1486, %v2213
    %s2231 = scalar_lea.vmem %s1, 192
    %v2232 = vld [vmem:[%s2231] sm:$0xff]
    %v2233 = vld [vmem:[%s2231 + $0x8] sm:$0xff]
    %v2234 = vld [vmem:[%s2231 + $0x10] sm:$0xff]
    %v2235 = vld [vmem:[%s2231 + $0x18] sm:$0xff]
    %v2236 = vld [vmem:[%s2231 + $0x20] sm:$0xff]
    %v2237 = vld [vmem:[%s2231 + $0x28] sm:$0xff]
    %v2238 = vld [vmem:[%s2231 + $0x30] sm:$0xf]
    %v2239 = vld [vmem:[%s2231 + $0x38] sm:$0xf]
    %v2241 = vsel %vm46, %v2238, 0
    %v2244 = vsel %vm46, %v2239, 0
    %v2246 = vand.u32 %v2233, 4294901760
    %2247 = vmatprep.subr.mxu0 %v2246
    %v2248 = vand.u32 %v2232, 4294901760
    %2249 = vmatpush1.msra.mxu0 %v2248
    %v2250 = vand.u32 %v2235, 4294901760
    %2251 = vmatprep.subr.mxu0 %v2250
    %v2252 = vand.u32 %v2234, 4294901760
    %2253 = vmatpush1.msra.mxu0 %v2252
    %v2254 = vand.u32 %v2237, 4294901760
    %2255 = vmatprep.subr.mxu0 %v2254
    %v2256 = vand.u32 %v2236, 4294901760
    %2257 = vmatpush1.msra.mxu0 %v2256
    %v2258 = vand.u32 %v2244, 4294901760
    %2259 = vmatprep.subr.mxu0 %v2258
    %v2260 = vand.u32 %v2241, 4294901760
    %2261 = vmatpush1.msra.mxu0 %v2260
    %2262 = vmatprep.subr.mxu0 0.0
    %2263 = vmatpush1.msra.mxu0 0.0
    %2264 = vmatprep.subr.mxu0 0.0
    %2265 = vmatpush1.msra.mxu0 0.0
    %2266 = vmatprep.subr.mxu0 0.0
    %2267 = vmatpush1.msra.mxu0 0.0
    %2268 = vmatprep.subr.mxu0 0.0
    %2269 = vmatpush1.msra.mxu0 0.0
    %2270 = vmatprep.subr.mxu0 0.0
    %2271 = vmatpush1.msra.mxu0 0.0
    %2272 = vmatprep.subr.mxu0 0.0
    %2273 = vmatpush1.msra.mxu0 0.0
    %2274 = vmatprep.subr.mxu0 0.0
    %2275 = vmatpush1.msra.mxu0 0.0
    %2276 = vmatprep.subr.mxu0 0.0
    %2277 = vmatpush1.msra.mxu0 0.0
    %2278 = vmatprep.subr.mxu0 0.0
    %2279 = vmatpush1.msra.mxu0 0.0
    %2280 = vmatprep.subr.mxu0 0.0
    %2281 = vmatpush1.msra.mxu0 0.0
    %2282 = vmatprep.subr.mxu0 0.0
    %2283 = vmatpush1.msra.mxu0 0.0
    %2284 = vmatprep.subr.mxu0 0.0
    %2285 = vmatpush1.msra.mxu0 0.0
    %2286 = vmatprep.subr.mxu0 0.0
    %2287 = vmatpush1.msra.mxu0 0.0
    %2288 = vmatprep.subr.mxu0 0.0
    %2289 = vmatpush1.msra.mxu0 0.0
    %2290 = vmatprep.subr.mxu0 0.0
    %2291 = vmatpush1.msra.mxu0 0.0
    %2292 = vmatprep.subr.mxu0 0.0
    %2293 = vmatpush1.msra.mxu0 0.0
    %2294 = vmatprep.subr.mxu0 0.0
    %2295 = vmatpush1.msra.mxu0 0.0
    %2296 = vmatprep.subr.mxu0 0.0
    %2297 = vmatpush1.msra.mxu0 0.0
    %2298 = vmatprep.subr.mxu0 0.0
    %2299 = vmatpush1.msra.mxu0 0.0
    %2300 = vmatprep.subr.mxu0 0.0
    %2301 = vmatpush1.msra.mxu0 0.0
    %2302 = vmatprep.subr.mxu0 0.0
    %2303 = vmatpush1.msra.mxu0 0.0
    %2304 = vmatprep.subr.mxu0 0.0
    %2305 = vmatpush1.msra.mxu0 0.0
    %2306 = vmatprep.subr.mxu0 0.0
    %2307 = vmatpush1.msra.mxu0 0.0
    %2308 = vmatprep.subr.mxu0 0.0
    %2309 = vmatpush1.msra.mxu0 0.0
    %2310 = vmatprep.subr.mxu0 0.0
    %2311 = vmatpush1.msra.mxu0 0.0
    %2312 = vmatprep.subr.mxu0 0.0
    %2313 = vmatpush1.msra.mxu0 0.0
    %2314 = vmatprep.subr.mxu0 0.0
    %2315 = vmatpush1.msra.mxu0 0.0
    %2316 = vmatprep.subr.mxu0 0.0
    %2317 = vmatpush1.msra.mxu0 0.0
    %2318 = vmatprep.mubr.f32.mxu0 0.0
    %v2319 = vand.u32 %v35, 4294901760
    %v2320 = vsub.f32 %v35, %v2319
    %v2321 = vand.u32 %v2320, 4294901760
    %v2322 = vsub.f32 %v2320, %v2321
    %v2323 = vand.u32 %v2322, 4294901760
    %2324 = vmatmul.mubr.f32.gmra.mrb[0].mxu0 %v2323
    %v2325 = vpop.f32.mrb[0].mxu0
    %v2326 = vadd.f32 0.0, %v2325
    %v2327 = vpop.f32.mrb[0].mxu0
    %v2328 = vadd.f32 0.0, %v2327
    %2329 = vmatprep.mubr.f32.mxu0 0.0
    %v2330 = vand.u32 %v38, 4294901760
    %v2331 = vsub.f32 %v38, %v2330
    %v2332 = vand.u32 %v2331, 4294901760
    %v2333 = vsub.f32 %v2331, %v2332
    %v2334 = vand.u32 %v2333, 4294901760
    %2335 = vmatmul.mubr.f32.gmra.mrb[0].mxu0 %v2334
    %v2336 = vpop.f32.mrb[0].mxu0
    %v2337 = vadd.f32 0.0, %v2336
    %v2338 = vpop.f32.mrb[0].mxu0
    %v2339 = vadd.f32 0.0, %v2338
    %2340 = vmatprep.mubr.f32.mxu0 0.0
    %v2341 = vand.u32 %v41, 4294901760
    %v2342 = vsub.f32 %v41, %v2341
    %v2343 = vand.u32 %v2342, 4294901760
    %v2344 = vsub.f32 %v2342, %v2343
    %v2345 = vand.u32 %v2344, 4294901760
    %2346 = vmatmul.mubr.f32.gmra.mrb[0].mxu0 %v2345
    %v2347 = vpop.f32.mrb[0].mxu0
    %v2348 = vadd.f32 0.0, %v2347
    %v2349 = vpop.f32.mrb[0].mxu0
    %v2350 = vadd.f32 0.0, %v2349
    %2351 = vmatprep.mubr.f32.mxu0 0.0
    %v2352 = vand.u32 %v44, 4294901760
    %v2353 = vsub.f32 %v44, %v2352
    %v2354 = vand.u32 %v2353, 4294901760
    %v2355 = vsub.f32 %v2353, %v2354
    %v2356 = vand.u32 %v2355, 4294901760
    %2357 = vmatmul.mubr.f32.gmra.mrb[0].mxu0 %v2356
    %v2358 = vpop.f32.mrb[0].mxu0
    %v2359 = vadd.f32 0.0, %v2358
    %v2360 = vpop.f32.mrb[0].mxu0
    %v2361 = vadd.f32 0.0, %v2360
    %2362 = vdwg.mxu0
    %v2363 = vand.u32 %v2233, 4294901760
    %v2364 = vsub.f32 %v2233, %v2363
    %v2365 = vand.u32 %v2364, 4294901760
    %v2366 = vsub.f32 %v2364, %v2365
    %v2367 = vand.u32 %v2366, 4294901760
    %2368 = vmatprep.subr.mxu0 %v2367
    %v2369 = vand.u32 %v2232, 4294901760
    %v2370 = vsub.f32 %v2232, %v2369
    %v2371 = vand.u32 %v2370, 4294901760
    %v2372 = vsub.f32 %v2370, %v2371
    %v2373 = vand.u32 %v2372, 4294901760
    %2374 = vmatpush1.msra.mxu0 %v2373
    %v2375 = vand.u32 %v2235, 4294901760
    %v2376 = vsub.f32 %v2235, %v2375
    %v2377 = vand.u32 %v2376, 4294901760
    %v2378 = vsub.f32 %v2376, %v2377
    %v2379 = vand.u32 %v2378, 4294901760
    %2380 = vmatprep.subr.mxu0 %v2379
    %v2381 = vand.u32 %v2234, 4294901760
    %v2382 = vsub.f32 %v2234, %v2381
    %v2383 = vand.u32 %v2382, 4294901760
    %v2384 = vsub.f32 %v2382, %v2383
    %v2385 = vand.u32 %v2384, 4294901760
    %2386 = vmatpush1.msra.mxu0 %v2385
    %v2387 = vand.u32 %v2237, 4294901760
    %v2388 = vsub.f32 %v2237, %v2387
    %v2389 = vand.u32 %v2388, 4294901760
    %v2390 = vsub.f32 %v2388, %v2389
    %v2391 = vand.u32 %v2390, 4294901760
    %2392 = vmatprep.subr.mxu0 %v2391
    %v2393 = vand.u32 %v2236, 4294901760
    %v2394 = vsub.f32 %v2236, %v2393
    %v2395 = vand.u32 %v2394, 4294901760
    %v2396 = vsub.f32 %v2394, %v2395
    %v2397 = vand.u32 %v2396, 4294901760
    %2398 = vmatpush1.msra.mxu0 %v2397
    %v2399 = vand.u32 %v2244, 4294901760
    %v2400 = vsub.f32 %v2244, %v2399
    %v2401 = vand.u32 %v2400, 4294901760
    %v2402 = vsub.f32 %v2400, %v2401
    %v2403 = vand.u32 %v2402, 4294901760
    %2404 = vmatprep.subr.mxu0 %v2403
    %v2405 = vand.u32 %v2241, 4294901760
    %v2406 = vsub.f32 %v2241, %v2405
    %v2407 = vand.u32 %v2406, 4294901760
    %v2408 = vsub.f32 %v2406, %v2407
    %v2409 = vand.u32 %v2408, 4294901760
    %2410 = vmatpush1.msra.mxu0 %v2409
    %2411 = vmatprep.subr.mxu0 0.0
    %2412 = vmatpush1.msra.mxu0 0.0
    %2413 = vmatprep.subr.mxu0 0.0
    %2414 = vmatpush1.msra.mxu0 0.0
    %2415 = vmatprep.subr.mxu0 0.0
    %2416 = vmatpush1.msra.mxu0 0.0
    %2417 = vmatprep.subr.mxu0 0.0
    %2418 = vmatpush1.msra.mxu0 0.0
    %2419 = vmatprep.subr.mxu0 0.0
    %2420 = vmatpush1.msra.mxu0 0.0
    %2421 = vmatprep.subr.mxu0 0.0
    %2422 = vmatpush1.msra.mxu0 0.0
    %2423 = vmatprep.subr.mxu0 0.0
    %2424 = vmatpush1.msra.mxu0 0.0
    %2425 = vmatprep.subr.mxu0 0.0
    %2426 = vmatpush1.msra.mxu0 0.0
    %2427 = vmatprep.subr.mxu0 0.0
    %2428 = vmatpush1.msra.mxu0 0.0
    %2429 = vmatprep.subr.mxu0 0.0
    %2430 = vmatpush1.msra.mxu0 0.0
    %2431 = vmatprep.subr.mxu0 0.0
    %2432 = vmatpush1.msra.mxu0 0.0
    %2433 = vmatprep.subr.mxu0 0.0
    %2434 = vmatpush1.msra.mxu0 0.0
    %2435 = vmatprep.subr.mxu0 0.0
    %2436 = vmatpush1.msra.mxu0 0.0
    %2437 = vmatprep.subr.mxu0 0.0
    %2438 = vmatpush1.msra.mxu0 0.0
    %2439 = vmatprep.subr.mxu0 0.0
    %2440 = vmatpush1.msra.mxu0 0.0
    %2441 = vmatprep.subr.mxu0 0.0
    %2442 = vmatpush1.msra.mxu0 0.0
    %2443 = vmatprep.subr.mxu0 0.0
    %2444 = vmatpush1.msra.mxu0 0.0
    %2445 = vmatprep.subr.mxu0 0.0
    %2446 = vmatpush1.msra.mxu0 0.0
    %2447 = vmatprep.subr.mxu0 0.0
    %2448 = vmatpush1.msra.mxu0 0.0
    %2449 = vmatprep.subr.mxu0 0.0
    %2450 = vmatpush1.msra.mxu0 0.0
    %2451 = vmatprep.subr.mxu0 0.0
    %2452 = vmatpush1.msra.mxu0 0.0
    %2453 = vmatprep.subr.mxu0 0.0
    %2454 = vmatpush1.msra.mxu0 0.0
    %2455 = vmatprep.subr.mxu0 0.0
    %2456 = vmatpush1.msra.mxu0 0.0
    %2457 = vmatprep.subr.mxu0 0.0
    %2458 = vmatpush1.msra.mxu0 0.0
    %2459 = vmatprep.subr.mxu0 0.0
    %2460 = vmatpush1.msra.mxu0 0.0
    %2461 = vmatprep.subr.mxu0 0.0
    %2462 = vmatpush1.msra.mxu0 0.0
    %2463 = vmatprep.subr.mxu0 0.0
    %2464 = vmatpush1.msra.mxu0 0.0
    %2465 = vmatprep.subr.mxu0 0.0
    %2466 = vmatpush1.msra.mxu0 0.0
    %2467 = vmatprep.mubr.f32.mxu0 0.0
    %v2468 = vand.u32 %v35, 4294901760
    %2469 = vmatmul.mubr.f32.gmra.mrb[0].mxu0 %v2468
    %v2470 = vpop.f32.mrb[0].mxu0
    %v2471 = vadd.f32 %v2326, %v2470
    %v2472 = vpop.f32.mrb[0].mxu0
    %v2473 = vadd.f32 %v2328, %v2472
    %2474 = vmatprep.mubr.f32.mxu0 0.0
    %v2475 = vand.u32 %v38, 4294901760
    %2476 = vmatmul.mubr.f32.gmra.mrb[0].mxu0 %v2475
    %v2477 = vpop.f32.mrb[0].mxu0
    %v2478 = vadd.f32 %v2337, %v2477
    %v2479 = vpop.f32.mrb[0].mxu0
    %v2480 = vadd.f32 %v2339, %v2479
    %2481 = vmatprep.mubr.f32.mxu0 0.0
    %v2482 = vand.u32 %v41, 4294901760
    %2483 = vmatmul.mubr.f32.gmra.mrb[0].mxu0 %v2482
    %v2484 = vpop.f32.mrb[0].mxu0
    %v2485 = vadd.f32 %v2348, %v2484
    %v2486 = vpop.f32.mrb[0].mxu0
    %v2487 = vadd.f32 %v2350, %v2486
    %2488 = vmatprep.mubr.f32.mxu0 0.0
    %v2489 = vand.u32 %v44, 4294901760
    %2490 = vmatmul.mubr.f32.gmra.mrb[0].mxu0 %v2489
    %v2491 = vpop.f32.mrb[0].mxu0
    %v2492 = vadd.f32 %v2359, %v2491
    %v2493 = vpop.f32.mrb[0].mxu0
    %v2494 = vadd.f32 %v2361, %v2493
    %2495 = vdwg.mxu0
    %v2496 = vand.u32 %v2233, 4294901760
    %v2497 = vsub.f32 %v2233, %v2496
    %2498 = vmatprep.subr.mxu0 %v2497
    %v2499 = vand.u32 %v2232, 4294901760
    %v2500 = vsub.f32 %v2232, %v2499
    %2501 = vmatpush1.msra.mxu0 %v2500
    %v2502 = vand.u32 %v2235, 4294901760
    %v2503 = vsub.f32 %v2235, %v2502
    %2504 = vmatprep.subr.mxu0 %v2503
    %v2505 = vand.u32 %v2234, 4294901760
    %v2506 = vsub.f32 %v2234, %v2505
    %2507 = vmatpush1.msra.mxu0 %v2506
    %v2508 = vand.u32 %v2237, 4294901760
    %v2509 = vsub.f32 %v2237, %v2508
    %2510 = vmatprep.subr.mxu0 %v2509
    %v2511 = vand.u32 %v2236, 4294901760
    %v2512 = vsub.f32 %v2236, %v2511
    %2513 = vmatpush1.msra.mxu0 %v2512
    %v2514 = vand.u32 %v2244, 4294901760
    %v2515 = vsub.f32 %v2244, %v2514
    %2516 = vmatprep.subr.mxu0 %v2515
    %v2517 = vand.u32 %v2241, 4294901760
    %v2518 = vsub.f32 %v2241, %v2517
    %2519 = vmatpush1.msra.mxu0 %v2518
    %2520 = vmatprep.subr.mxu0 0.0
    %2521 = vmatpush1.msra.mxu0 0.0
    %2522 = vmatprep.subr.mxu0 0.0
    %2523 = vmatpush1.msra.mxu0 0.0
    %2524 = vmatprep.subr.mxu0 0.0
    %2525 = vmatpush1.msra.mxu0 0.0
    %2526 = vmatprep.subr.mxu0 0.0
    %2527 = vmatpush1.msra.mxu0 0.0
    %2528 = vmatprep.subr.mxu0 0.0
    %2529 = vmatpush1.msra.mxu0 0.0
    %2530 = vmatprep.subr.mxu0 0.0
    %2531 = vmatpush1.msra.mxu0 0.0
    %2532 = vmatprep.subr.mxu0 0.0
    %2533 = vmatpush1.msra.mxu0 0.0
    %2534 = vmatprep.subr.mxu0 0.0
    %2535 = vmatpush1.msra.mxu0 0.0
    %2536 = vmatprep.subr.mxu0 0.0
    %2537 = vmatpush1.msra.mxu0 0.0
    %2538 = vmatprep.subr.mxu0 0.0
    %2539 = vmatpush1.msra.mxu0 0.0
    %2540 = vmatprep.subr.mxu0 0.0
    %2541 = vmatpush1.msra.mxu0 0.0
    %2542 = vmatprep.subr.mxu0 0.0
    %2543 = vmatpush1.msra.mxu0 0.0
    %2544 = vmatprep.subr.mxu0 0.0
    %2545 = vmatpush1.msra.mxu0 0.0
    %2546 = vmatprep.subr.mxu0 0.0
    %2547 = vmatpush1.msra.mxu0 0.0
    %2548 = vmatprep.subr.mxu0 0.0
    %2549 = vmatpush1.msra.mxu0 0.0
    %2550 = vmatprep.subr.mxu0 0.0
    %2551 = vmatpush1.msra.mxu0 0.0
    %2552 = vmatprep.subr.mxu0 0.0
    %2553 = vmatpush1.msra.mxu0 0.0
    %2554 = vmatprep.subr.mxu0 0.0
    %2555 = vmatpush1.msra.mxu0 0.0
    %2556 = vmatprep.subr.mxu0 0.0
    %2557 = vmatpush1.msra.mxu0 0.0
    %2558 = vmatprep.subr.mxu0 0.0
    %2559 = vmatpush1.msra.mxu0 0.0
    %2560 = vmatprep.subr.mxu0 0.0
    %2561 = vmatpush1.msra.mxu0 0.0
    %2562 = vmatprep.subr.mxu0 0.0
    %2563 = vmatpush1.msra.mxu0 0.0
    %2564 = vmatprep.subr.mxu0 0.0
    %2565 = vmatpush1.msra.mxu0 0.0
    %2566 = vmatprep.subr.mxu0 0.0
    %2567 = vmatpush1.msra.mxu0 0.0
    %2568 = vmatprep.subr.mxu0 0.0
    %2569 = vmatpush1.msra.mxu0 0.0
    %2570 = vmatprep.subr.mxu0 0.0
    %2571 = vmatpush1.msra.mxu0 0.0
    %2572 = vmatprep.subr.mxu0 0.0
    %2573 = vmatpush1.msra.mxu0 0.0
    %2574 = vmatprep.subr.mxu0 0.0
    %2575 = vmatpush1.msra.mxu0 0.0
    %2576 = vmatprep.mubr.f32.mxu0 0.0
    %v2577 = vand.u32 %v35, 4294901760
    %v2578 = vsub.f32 %v35, %v2577
    %2579 = vmatmul.mubr.f32.gmra.mrb[0].mxu0 %v2578
    %v2580 = vpop.f32.mrb[0].mxu0
    %v2581 = vadd.f32 %v2471, %v2580
    %v2582 = vpop.f32.mrb[0].mxu0
    %v2583 = vadd.f32 %v2473, %v2582
    %2584 = vmatprep.mubr.f32.mxu0 0.0
    %v2585 = vand.u32 %v38, 4294901760
    %v2586 = vsub.f32 %v38, %v2585
    %2587 = vmatmul.mubr.f32.gmra.mrb[0].mxu0 %v2586
    %v2588 = vpop.f32.mrb[0].mxu0
    %v2589 = vadd.f32 %v2478, %v2588
    %v2590 = vpop.f32.mrb[0].mxu0
    %v2591 = vadd.f32 %v2480, %v2590
    %2592 = vmatprep.mubr.f32.mxu0 0.0
    %v2593 = vand.u32 %v41, 4294901760
    %v2594 = vsub.f32 %v41, %v2593
    %2595 = vmatmul.mubr.f32.gmra.mrb[0].mxu0 %v2594
    %v2596 = vpop.f32.mrb[0].mxu0
    %v2597 = vadd.f32 %v2485, %v2596
    %v2598 = vpop.f32.mrb[0].mxu0
    %v2599 = vadd.f32 %v2487, %v2598
    %2600 = vmatprep.mubr.f32.mxu0 0.0
    %v2601 = vand.u32 %v44, 4294901760
    %v2602 = vsub.f32 %v44, %v2601
    %2603 = vmatmul.mubr.f32.gmra.mrb[0].mxu0 %v2602
    %v2604 = vpop.f32.mrb[0].mxu0
    %v2605 = vadd.f32 %v2492, %v2604
    %v2606 = vpop.f32.mrb[0].mxu0
    %v2607 = vadd.f32 %v2494, %v2606
    %2608 = vdwg.mxu0
    %v2609 = vand.u32 %v2233, 4294901760
    %2610 = vmatprep.subr.mxu0 %v2609
    %v2611 = vand.u32 %v2232, 4294901760
    %2612 = vmatpush1.msra.mxu0 %v2611
    %v2613 = vand.u32 %v2235, 4294901760
    %2614 = vmatprep.subr.mxu0 %v2613
    %v2615 = vand.u32 %v2234, 4294901760
    %2616 = vmatpush1.msra.mxu0 %v2615
    %v2617 = vand.u32 %v2237, 4294901760
    %2618 = vmatprep.subr.mxu0 %v2617
    %v2619 = vand.u32 %v2236, 4294901760
    %2620 = vmatpush1.msra.mxu0 %v2619
    %v2621 = vand.u32 %v2244, 4294901760
    %2622 = vmatprep.subr.mxu0 %v2621
    %v2623 = vand.u32 %v2241, 4294901760
    %2624 = vmatpush1.msra.mxu0 %v2623
    %2625 = vmatprep.subr.mxu0 0.0
    %2626 = vmatpush1.msra.mxu0 0.0
    %2627 = vmatprep.subr.mxu0 0.0
    %2628 = vmatpush1.msra.mxu0 0.0
    %2629 = vmatprep.subr.mxu0 0.0
    %2630 = vmatpush1.msra.mxu0 0.0
    %2631 = vmatprep.subr.mxu0 0.0
    %2632 = vmatpush1.msra.mxu0 0.0
    %2633 = vmatprep.subr.mxu0 0.0
    %2634 = vmatpush1.msra.mxu0 0.0
    %2635 = vmatprep.subr.mxu0 0.0
    %2636 = vmatpush1.msra.mxu0 0.0
    %2637 = vmatprep.subr.mxu0 0.0
    %2638 = vmatpush1.msra.mxu0 0.0
    %2639 = vmatprep.subr.mxu0 0.0
    %2640 = vmatpush1.msra.mxu0 0.0
    %2641 = vmatprep.subr.mxu0 0.0
    %2642 = vmatpush1.msra.mxu0 0.0
    %2643 = vmatprep.subr.mxu0 0.0
    %2644 = vmatpush1.msra.mxu0 0.0
    %2645 = vmatprep.subr.mxu0 0.0
    %2646 = vmatpush1.msra.mxu0 0.0
    %2647 = vmatprep.subr.mxu0 0.0
    %2648 = vmatpush1.msra.mxu0 0.0
    %2649 = vmatprep.subr.mxu0 0.0
    %2650 = vmatpush1.msra.mxu0 0.0
    %2651 = vmatprep.subr.mxu0 0.0
    %2652 = vmatpush1.msra.mxu0 0.0
    %2653 = vmatprep.subr.mxu0 0.0
    %2654 = vmatpush1.msra.mxu0 0.0
    %2655 = vmatprep.subr.mxu0 0.0
    %2656 = vmatpush1.msra.mxu0 0.0
    %2657 = vmatprep.subr.mxu0 0.0
    %2658 = vmatpush1.msra.mxu0 0.0
    %2659 = vmatprep.subr.mxu0 0.0
    %2660 = vmatpush1.msra.mxu0 0.0
    %2661 = vmatprep.subr.mxu0 0.0
    %2662 = vmatpush1.msra.mxu0 0.0
    %2663 = vmatprep.subr.mxu0 0.0
    %2664 = vmatpush1.msra.mxu0 0.0
    %2665 = vmatprep.subr.mxu0 0.0
    %2666 = vmatpush1.msra.mxu0 0.0
    %2667 = vmatprep.subr.mxu0 0.0
    %2668 = vmatpush1.msra.mxu0 0.0
    %2669 = vmatprep.subr.mxu0 0.0
    %2670 = vmatpush1.msra.mxu0 0.0
    %2671 = vmatprep.subr.mxu0 0.0
    %2672 = vmatpush1.msra.mxu0 0.0
    %2673 = vmatprep.subr.mxu0 0.0
    %2674 = vmatpush1.msra.mxu0 0.0
    %2675 = vmatprep.subr.mxu0 0.0
    %2676 = vmatpush1.msra.mxu0 0.0
    %2677 = vmatprep.subr.mxu0 0.0
    %2678 = vmatpush1.msra.mxu0 0.0
    %2679 = vmatprep.subr.mxu0 0.0
    %2680 = vmatpush1.msra.mxu0 0.0
    %2681 = vmatprep.mubr.f32.mxu0 0.0
    %v2682 = vand.u32 %v35, 4294901760
    %v2683 = vsub.f32 %v35, %v2682
    %v2684 = vand.u32 %v2683, 4294901760
    %2685 = vmatmul.mubr.f32.gmra.mrb[0].mxu0 %v2684
    %v2686 = vpop.f32.mrb[0].mxu0
    %v2687 = vadd.f32 %v2581, %v2686
    %v2688 = vpop.f32.mrb[0].mxu0
    %v2689 = vadd.f32 %v2583, %v2688
    %2690 = vmatprep.mubr.f32.mxu0 0.0
    %v2691 = vand.u32 %v38, 4294901760
    %v2692 = vsub.f32 %v38, %v2691
    %v2693 = vand.u32 %v2692, 4294901760
    %2694 = vmatmul.mubr.f32.gmra.mrb[0].mxu0 %v2693
    %v2695 = vpop.f32.mrb[0].mxu0
    %v2696 = vadd.f32 %v2589, %v2695
    %v2697 = vpop.f32.mrb[0].mxu0
    %v2698 = vadd.f32 %v2591, %v2697
    %2699 = vmatprep.mubr.f32.mxu0 0.0
    %v2700 = vand.u32 %v41, 4294901760
    %v2701 = vsub.f32 %v41, %v2700
    %v2702 = vand.u32 %v2701, 4294901760
    %2703 = vmatmul.mubr.f32.gmra.mrb[0].mxu0 %v2702
    %v2704 = vpop.f32.mrb[0].mxu0
    %v2705 = vadd.f32 %v2597, %v2704
    %v2706 = vpop.f32.mrb[0].mxu0
    %v2707 = vadd.f32 %v2599, %v2706
    %2708 = vmatprep.mubr.f32.mxu0 0.0
    %v2709 = vand.u32 %v44, 4294901760
    %v2710 = vsub.f32 %v44, %v2709
    %v2711 = vand.u32 %v2710, 4294901760
    %2712 = vmatmul.mubr.f32.gmra.mrb[0].mxu0 %v2711
    %v2713 = vpop.f32.mrb[0].mxu0
    %v2714 = vadd.f32 %v2605, %v2713
    %v2715 = vpop.f32.mrb[0].mxu0
    %v2716 = vadd.f32 %v2607, %v2715
    %2717 = vdwg.mxu0
    %v2718 = vand.u32 %v2233, 4294901760
    %v2719 = vsub.f32 %v2233, %v2718
    %v2720 = vand.u32 %v2719, 4294901760
    %2721 = vmatprep.subr.mxu0 %v2720
    %v2722 = vand.u32 %v2232, 4294901760
    %v2723 = vsub.f32 %v2232, %v2722
    %v2724 = vand.u32 %v2723, 4294901760
    %2725 = vmatpush1.msra.mxu0 %v2724
    %v2726 = vand.u32 %v2235, 4294901760
    %v2727 = vsub.f32 %v2235, %v2726
    %v2728 = vand.u32 %v2727, 4294901760
    %2729 = vmatprep.subr.mxu0 %v2728
    %v2730 = vand.u32 %v2234, 4294901760
    %v2731 = vsub.f32 %v2234, %v2730
    %v2732 = vand.u32 %v2731, 4294901760
    %2733 = vmatpush1.msra.mxu0 %v2732
    %v2734 = vand.u32 %v2237, 4294901760
    %v2735 = vsub.f32 %v2237, %v2734
    %v2736 = vand.u32 %v2735, 4294901760
    %2737 = vmatprep.subr.mxu0 %v2736
    %v2738 = vand.u32 %v2236, 4294901760
    %v2739 = vsub.f32 %v2236, %v2738
    %v2740 = vand.u32 %v2739, 4294901760
    %2741 = vmatpush1.msra.mxu0 %v2740
    %v2742 = vand.u32 %v2244, 4294901760
    %v2743 = vsub.f32 %v2244, %v2742
    %v2744 = vand.u32 %v2743, 4294901760
    %2745 = vmatprep.subr.mxu0 %v2744
    %v2746 = vand.u32 %v2241, 4294901760
    %v2747 = vsub.f32 %v2241, %v2746
    %v2748 = vand.u32 %v2747, 4294901760
    %2749 = vmatpush1.msra.mxu0 %v2748
    %2750 = vmatprep.subr.mxu0 0.0
    %2751 = vmatpush1.msra.mxu0 0.0
    %2752 = vmatprep.subr.mxu0 0.0
    %2753 = vmatpush1.msra.mxu0 0.0
    %2754 = vmatprep.subr.mxu0 0.0
    %2755 = vmatpush1.msra.mxu0 0.0
    %2756 = vmatprep.subr.mxu0 0.0
    %2757 = vmatpush1.msra.mxu0 0.0
    %2758 = vmatprep.subr.mxu0 0.0
    %2759 = vmatpush1.msra.mxu0 0.0
    %2760 = vmatprep.subr.mxu0 0.0
    %2761 = vmatpush1.msra.mxu0 0.0
    %2762 = vmatprep.subr.mxu0 0.0
    %2763 = vmatpush1.msra.mxu0 0.0
    %2764 = vmatprep.subr.mxu0 0.0
    %2765 = vmatpush1.msra.mxu0 0.0
    %2766 = vmatprep.subr.mxu0 0.0
    %2767 = vmatpush1.msra.mxu0 0.0
    %2768 = vmatprep.subr.mxu0 0.0
    %2769 = vmatpush1.msra.mxu0 0.0
    %2770 = vmatprep.subr.mxu0 0.0
    %2771 = vmatpush1.msra.mxu0 0.0
    %2772 = vmatprep.subr.mxu0 0.0
    %2773 = vmatpush1.msra.mxu0 0.0
    %2774 = vmatprep.subr.mxu0 0.0
    %2775 = vmatpush1.msra.mxu0 0.0
    %2776 = vmatprep.subr.mxu0 0.0
    %2777 = vmatpush1.msra.mxu0 0.0
    %2778 = vmatprep.subr.mxu0 0.0
    %2779 = vmatpush1.msra.mxu0 0.0
    %2780 = vmatprep.subr.mxu0 0.0
    %2781 = vmatpush1.msra.mxu0 0.0
    %2782 = vmatprep.subr.mxu0 0.0
    %2783 = vmatpush1.msra.mxu0 0.0
    %2784 = vmatprep.subr.mxu0 0.0
    %2785 = vmatpush1.msra.mxu0 0.0
    %2786 = vmatprep.subr.mxu0 0.0
    %2787 = vmatpush1.msra.mxu0 0.0
    %2788 = vmatprep.subr.mxu0 0.0
    %2789 = vmatpush1.msra.mxu0 0.0
    %2790 = vmatprep.subr.mxu0 0.0
    %2791 = vmatpush1.msra.mxu0 0.0
    %2792 = vmatprep.subr.mxu0 0.0
    %2793 = vmatpush1.msra.mxu0 0.0
    %2794 = vmatprep.subr.mxu0 0.0
    %2795 = vmatpush1.msra.mxu0 0.0
    %2796 = vmatprep.subr.mxu0 0.0
    %2797 = vmatpush1.msra.mxu0 0.0
    %2798 = vmatprep.subr.mxu0 0.0
    %2799 = vmatpush1.msra.mxu0 0.0
    %2800 = vmatprep.subr.mxu0 0.0
    %2801 = vmatpush1.msra.mxu0 0.0
    %2802 = vmatprep.subr.mxu0 0.0
    %2803 = vmatpush1.msra.mxu0 0.0
    %2804 = vmatprep.subr.mxu0 0.0
    %2805 = vmatpush1.msra.mxu0 0.0
    %2806 = vmatprep.mubr.f32.mxu0 0.0
    %v2807 = vand.u32 %v35, 4294901760
    %2808 = vmatmul.mubr.f32.gmra.mrb[0].mxu0 %v2807
    %v2809 = vpop.f32.mrb[0].mxu0
    %v2810 = vadd.f32 %v2687, %v2809
    %v2811 = vpop.f32.mrb[0].mxu0
    %v2812 = vadd.f32 %v2689, %v2811
    %2813 = vmatprep.mubr.f32.mxu0 0.0
    %v2814 = vand.u32 %v38, 4294901760
    %2815 = vmatmul.mubr.f32.gmra.mrb[0].mxu0 %v2814
    %v2816 = vpop.f32.mrb[0].mxu0
    %v2817 = vadd.f32 %v2696, %v2816
    %v2818 = vpop.f32.mrb[0].mxu0
    %v2819 = vadd.f32 %v2698, %v2818
    %2820 = vmatprep.mubr.f32.mxu0 0.0
    %v2821 = vand.u32 %v41, 4294901760
    %2822 = vmatmul.mubr.f32.gmra.mrb[0].mxu0 %v2821
    %v2823 = vpop.f32.mrb[0].mxu0
    %v2824 = vadd.f32 %v2705, %v2823
    %v2825 = vpop.f32.mrb[0].mxu0
    %v2826 = vadd.f32 %v2707, %v2825
    %2827 = vmatprep.mubr.f32.mxu0 0.0
    %v2828 = vand.u32 %v44, 4294901760
    %2829 = vmatmul.mubr.f32.gmra.mrb[0].mxu0 %v2828
    %v2830 = vpop.f32.mrb[0].mxu0
    %v2831 = vadd.f32 %v2714, %v2830
    %v2832 = vpop.f32.mrb[0].mxu0
    %v2833 = vadd.f32 %v2716, %v2832
    %2834 = vdwg.mxu0
    %v2835 = vand.u32 %v2233, 4294901760
    %2836 = vmatprep.subr.mxu0 %v2835
    %v2837 = vand.u32 %v2232, 4294901760
    %2838 = vmatpush1.msra.mxu0 %v2837
    %v2839 = vand.u32 %v2235, 4294901760
    %2840 = vmatprep.subr.mxu0 %v2839
    %v2841 = vand.u32 %v2234, 4294901760
    %2842 = vmatpush1.msra.mxu0 %v2841
    %v2843 = vand.u32 %v2237, 4294901760
    %2844 = vmatprep.subr.mxu0 %v2843
    %v2845 = vand.u32 %v2236, 4294901760
    %2846 = vmatpush1.msra.mxu0 %v2845
    %v2847 = vand.u32 %v2244, 4294901760
    %2848 = vmatprep.subr.mxu0 %v2847
    %v2849 = vand.u32 %v2241, 4294901760
    %2850 = vmatpush1.msra.mxu0 %v2849
    %2851 = vmatprep.subr.mxu0 0.0
    %2852 = vmatpush1.msra.mxu0 0.0
    %2853 = vmatprep.subr.mxu0 0.0
    %2854 = vmatpush1.msra.mxu0 0.0
    %2855 = vmatprep.subr.mxu0 0.0
    %2856 = vmatpush1.msra.mxu0 0.0
    %2857 = vmatprep.subr.mxu0 0.0
    %2858 = vmatpush1.msra.mxu0 0.0
    %2859 = vmatprep.subr.mxu0 0.0
    %2860 = vmatpush1.msra.mxu0 0.0
    %2861 = vmatprep.subr.mxu0 0.0
    %2862 = vmatpush1.msra.mxu0 0.0
    %2863 = vmatprep.subr.mxu0 0.0
    %2864 = vmatpush1.msra.mxu0 0.0
    %2865 = vmatprep.subr.mxu0 0.0
    %2866 = vmatpush1.msra.mxu0 0.0
    %2867 = vmatprep.subr.mxu0 0.0
    %2868 = vmatpush1.msra.mxu0 0.0
    %2869 = vmatprep.subr.mxu0 0.0
    %2870 = vmatpush1.msra.mxu0 0.0
    %2871 = vmatprep.subr.mxu0 0.0
    %2872 = vmatpush1.msra.mxu0 0.0
    %2873 = vmatprep.subr.mxu0 0.0
    %2874 = vmatpush1.msra.mxu0 0.0
    %2875 = vmatprep.subr.mxu0 0.0
    %2876 = vmatpush1.msra.mxu0 0.0
    %2877 = vmatprep.subr.mxu0 0.0
    %2878 = vmatpush1.msra.mxu0 0.0
    %2879 = vmatprep.subr.mxu0 0.0
    %2880 = vmatpush1.msra.mxu0 0.0
    %2881 = vmatprep.subr.mxu0 0.0
    %2882 = vmatpush1.msra.mxu0 0.0
    %2883 = vmatprep.subr.mxu0 0.0
    %2884 = vmatpush1.msra.mxu0 0.0
    %2885 = vmatprep.subr.mxu0 0.0
    %2886 = vmatpush1.msra.mxu0 0.0
    %2887 = vmatprep.subr.mxu0 0.0
    %2888 = vmatpush1.msra.mxu0 0.0
    %2889 = vmatprep.subr.mxu0 0.0
    %2890 = vmatpush1.msra.mxu0 0.0
    %2891 = vmatprep.subr.mxu0 0.0
    %2892 = vmatpush1.msra.mxu0 0.0
    %2893 = vmatprep.subr.mxu0 0.0
    %2894 = vmatpush1.msra.mxu0 0.0
    %2895 = vmatprep.subr.mxu0 0.0
    %2896 = vmatpush1.msra.mxu0 0.0
    %2897 = vmatprep.subr.mxu0 0.0
    %2898 = vmatpush1.msra.mxu0 0.0
    %2899 = vmatprep.subr.mxu0 0.0
    %2900 = vmatpush1.msra.mxu0 0.0
    %2901 = vmatprep.subr.mxu0 0.0
    %2902 = vmatpush1.msra.mxu0 0.0
    %2903 = vmatprep.subr.mxu0 0.0
    %2904 = vmatpush1.msra.mxu0 0.0
    %2905 = vmatprep.subr.mxu0 0.0
    %2906 = vmatpush1.msra.mxu0 0.0
    %2907 = vmatprep.mubr.f32.mxu0 0.0
    %v2908 = vand.u32 %v35, 4294901760
    %2909 = vmatmul.mubr.f32.gmra.mrb[0].mxu0 %v2908
    %v2910 = vpop.f32.mrb[0].mxu0
    %v2911 = vadd.f32 %v2810, %v2910
    %v2912 = vpop.f32.mrb[0].mxu0
    %v2913 = vadd.f32 %v2812, %v2912
    %2914 = vmatprep.mubr.f32.mxu0 0.0
    %v2915 = vand.u32 %v38, 4294901760
    %2916 = vmatmul.mubr.f32.gmra.mrb[0].mxu0 %v2915
    %v2917 = vpop.f32.mrb[0].mxu0
    %v2918 = vadd.f32 %v2817, %v2917
    %v2919 = vpop.f32.mrb[0].mxu0
    %v2920 = vadd.f32 %v2819, %v2919
    %2921 = vmatprep.mubr.f32.mxu0 0.0
    %v2922 = vand.u32 %v41, 4294901760
    %2923 = vmatmul.mubr.f32.gmra.mrb[0].mxu0 %v2922
    %v2924 = vpop.f32.mrb[0].mxu0
    %v2925 = vadd.f32 %v2824, %v2924
    %v2926 = vpop.f32.mrb[0].mxu0
    %v2927 = vadd.f32 %v2826, %v2926
    %2928 = vmatprep.mubr.f32.mxu0 0.0
    %v2929 = vand.u32 %v44, 4294901760
    %2930 = vmatmul.mubr.f32.gmra.mrb[0].mxu0 %v2929
    %v2931 = vpop.f32.mrb[0].mxu0
    %v2932 = vadd.f32 %v2831, %v2931
    %v2933 = vpop.f32.mrb[0].mxu0
    %v2934 = vadd.f32 %v2833, %v2933
    %2935 = vdwg.mxu0
    %s2936 = scalar_lea.vmem %s1, 256
    %v2937 = vld [vmem:[%s2936] sm:$0xff]
    %v2938 = vld [vmem:[%s2936 + $0x8] sm:$0xff]
    %v2939 = vld [vmem:[%s2936 + $0x10] sm:$0xff]
    %v2940 = vld [vmem:[%s2936 + $0x18] sm:$0xff]
    %v2941 = vld [vmem:[%s2936 + $0x20] sm:$0xff]
    %v2942 = vld [vmem:[%s2936 + $0x28] sm:$0xff]
    %v2943 = vld [vmem:[%s2936 + $0x30] sm:$0xf]
    %v2944 = vld [vmem:[%s2936 + $0x38] sm:$0xf]
    %v2946 = vsel %vm46, %v2943, 0
    %v2949 = vsel %vm46, %v2944, 0
    %v2951 = vand.u32 %v2938, 4294901760
    %2952 = vmatprep.subr.mxu0 %v2951
    %v2953 = vand.u32 %v2937, 4294901760
    %2954 = vmatpush1.msra.mxu0 %v2953
    %v2955 = vand.u32 %v2940, 4294901760
    %2956 = vmatprep.subr.mxu0 %v2955
    %v2957 = vand.u32 %v2939, 4294901760
    %2958 = vmatpush1.msra.mxu0 %v2957
    %v2959 = vand.u32 %v2942, 4294901760
    %2960 = vmatprep.subr.mxu0 %v2959
    %v2961 = vand.u32 %v2941, 4294901760
    %2962 = vmatpush1.msra.mxu0 %v2961
    %v2963 = vand.u32 %v2949, 4294901760
    %2964 = vmatprep.subr.mxu0 %v2963
    %v2965 = vand.u32 %v2946, 4294901760
    %2966 = vmatpush1.msra.mxu0 %v2965
    %2967 = vmatprep.subr.mxu0 0.0
    %2968 = vmatpush1.msra.mxu0 0.0
    %2969 = vmatprep.subr.mxu0 0.0
    %2970 = vmatpush1.msra.mxu0 0.0
    %2971 = vmatprep.subr.mxu0 0.0
    %2972 = vmatpush1.msra.mxu0 0.0
    %2973 = vmatprep.subr.mxu0 0.0
    %2974 = vmatpush1.msra.mxu0 0.0
    %2975 = vmatprep.subr.mxu0 0.0
    %2976 = vmatpush1.msra.mxu0 0.0
    %2977 = vmatprep.subr.mxu0 0.0
    %2978 = vmatpush1.msra.mxu0 0.0
    %2979 = vmatprep.subr.mxu0 0.0
    %2980 = vmatpush1.msra.mxu0 0.0
    %2981 = vmatprep.subr.mxu0 0.0
    %2982 = vmatpush1.msra.mxu0 0.0
    %2983 = vmatprep.subr.mxu0 0.0
    %2984 = vmatpush1.msra.mxu0 0.0
    %2985 = vmatprep.subr.mxu0 0.0
    %2986 = vmatpush1.msra.mxu0 0.0
    %2987 = vmatprep.subr.mxu0 0.0
    %2988 = vmatpush1.msra.mxu0 0.0
    %2989 = vmatprep.subr.mxu0 0.0
    %2990 = vmatpush1.msra.mxu0 0.0
    %2991 = vmatprep.subr.mxu0 0.0
    %2992 = vmatpush1.msra.mxu0 0.0
    %2993 = vmatprep.subr.mxu0 0.0
    %2994 = vmatpush1.msra.mxu0 0.0
    %2995 = vmatprep.subr.mxu0 0.0
    %2996 = vmatpush1.msra.mxu0 0.0
    %2997 = vmatprep.subr.mxu0 0.0
    %2998 = vmatpush1.msra.mxu0 0.0
    %2999 = vmatprep.subr.mxu0 0.0
    %3000 = vmatpush1.msra.mxu0 0.0
    %3001 = vmatprep.subr.mxu0 0.0
    %3002 = vmatpush1.msra.mxu0 0.0
    %3003 = vmatprep.subr.mxu0 0.0
    %3004 = vmatpush1.msra.mxu0 0.0
    %3005 = vmatprep.subr.mxu0 0.0
    %3006 = vmatpush1.msra.mxu0 0.0
    %3007 = vmatprep.subr.mxu0 0.0
    %3008 = vmatpush1.msra.mxu0 0.0
    %3009 = vmatprep.subr.mxu0 0.0
    %3010 = vmatpush1.msra.mxu0 0.0
    %3011 = vmatprep.subr.mxu0 0.0
    %3012 = vmatpush1.msra.mxu0 0.0
    %3013 = vmatprep.subr.mxu0 0.0
    %3014 = vmatpush1.msra.mxu0 0.0
    %3015 = vmatprep.subr.mxu0 0.0
    %3016 = vmatpush1.msra.mxu0 0.0
    %3017 = vmatprep.subr.mxu0 0.0
    %3018 = vmatpush1.msra.mxu0 0.0
    %3019 = vmatprep.subr.mxu0 0.0
    %3020 = vmatpush1.msra.mxu0 0.0
    %3021 = vmatprep.subr.mxu0 0.0
    %3022 = vmatpush1.msra.mxu0 0.0
    %3023 = vmatprep.mubr.f32.mxu0 0.0
    %v3024 = vand.u32 %v35, 4294901760
    %v3025 = vsub.f32 %v35, %v3024
    %v3026 = vand.u32 %v3025, 4294901760
    %v3027 = vsub.f32 %v3025, %v3026
    %v3028 = vand.u32 %v3027, 4294901760
    %3029 = vmatmul.mubr.f32.gmra.mrb[0].mxu0 %v3028
    %v3030 = vpop.f32.mrb[0].mxu0
    %v3031 = vadd.f32 0.0, %v3030
    %v3032 = vpop.f32.mrb[0].mxu0
    %v3033 = vadd.f32 0.0, %v3032
    %3034 = vmatprep.mubr.f32.mxu0 0.0
    %v3035 = vand.u32 %v38, 4294901760
    %v3036 = vsub.f32 %v38, %v3035
    %v3037 = vand.u32 %v3036, 4294901760
    %v3038 = vsub.f32 %v3036, %v3037
    %v3039 = vand.u32 %v3038, 4294901760
    %3040 = vmatmul.mubr.f32.gmra.mrb[0].mxu0 %v3039
    %v3041 = vpop.f32.mrb[0].mxu0
    %v3042 = vadd.f32 0.0, %v3041
    %v3043 = vpop.f32.mrb[0].mxu0
    %v3044 = vadd.f32 0.0, %v3043
    %3045 = vmatprep.mubr.f32.mxu0 0.0
    %v3046 = vand.u32 %v41, 4294901760
    %v3047 = vsub.f32 %v41, %v3046
    %v3048 = vand.u32 %v3047, 4294901760
    %v3049 = vsub.f32 %v3047, %v3048
    %v3050 = vand.u32 %v3049, 4294901760
    %3051 = vmatmul.mubr.f32.gmra.mrb[0].mxu0 %v3050
    %v3052 = vpop.f32.mrb[0].mxu0
    %v3053 = vadd.f32 0.0, %v3052
    %v3054 = vpop.f32.mrb[0].mxu0
    %v3055 = vadd.f32 0.0, %v3054
    %3056 = vmatprep.mubr.f32.mxu0 0.0
    %v3057 = vand.u32 %v44, 4294901760
    %v3058 = vsub.f32 %v44, %v3057
    %v3059 = vand.u32 %v3058, 4294901760
    %v3060 = vsub.f32 %v3058, %v3059
    %v3061 = vand.u32 %v3060, 4294901760
    %3062 = vmatmul.mubr.f32.gmra.mrb[0].mxu0 %v3061
    %v3063 = vpop.f32.mrb[0].mxu0
    %v3064 = vadd.f32 0.0, %v3063
    %v3065 = vpop.f32.mrb[0].mxu0
    %v3066 = vadd.f32 0.0, %v3065
    %3067 = vdwg.mxu0
    %v3068 = vand.u32 %v2938, 4294901760
    %v3069 = vsub.f32 %v2938, %v3068
    %v3070 = vand.u32 %v3069, 4294901760
    %v3071 = vsub.f32 %v3069, %v3070
    %v3072 = vand.u32 %v3071, 4294901760
    %3073 = vmatprep.subr.mxu0 %v3072
    %v3074 = vand.u32 %v2937, 4294901760
    %v3075 = vsub.f32 %v2937, %v3074
    %v3076 = vand.u32 %v3075, 4294901760
    %v3077 = vsub.f32 %v3075, %v3076
    %v3078 = vand.u32 %v3077, 4294901760
    %3079 = vmatpush1.msra.mxu0 %v3078
    %v3080 = vand.u32 %v2940, 4294901760
    %v3081 = vsub.f32 %v2940, %v3080
    %v3082 = vand.u32 %v3081, 4294901760
    %v3083 = vsub.f32 %v3081, %v3082
    %v3084 = vand.u32 %v3083, 4294901760
    %3085 = vmatprep.subr.mxu0 %v3084
    %v3086 = vand.u32 %v2939, 4294901760
    %v3087 = vsub.f32 %v2939, %v3086
    %v3088 = vand.u32 %v3087, 4294901760
    %v3089 = vsub.f32 %v3087, %v3088
    %v3090 = vand.u32 %v3089, 4294901760
    %3091 = vmatpush1.msra.mxu0 %v3090
    %v3092 = vand.u32 %v2942, 4294901760
    %v3093 = vsub.f32 %v2942, %v3092
    %v3094 = vand.u32 %v3093, 4294901760
    %v3095 = vsub.f32 %v3093, %v3094
    %v3096 = vand.u32 %v3095, 4294901760
    %3097 = vmatprep.subr.mxu0 %v3096
    %v3098 = vand.u32 %v2941, 4294901760
    %v3099 = vsub.f32 %v2941, %v3098
    %v3100 = vand.u32 %v3099, 4294901760
    %v3101 = vsub.f32 %v3099, %v3100
    %v3102 = vand.u32 %v3101, 4294901760
    %3103 = vmatpush1.msra.mxu0 %v3102
    %v3104 = vand.u32 %v2949, 4294901760
    %v3105 = vsub.f32 %v2949, %v3104
    %v3106 = vand.u32 %v3105, 4294901760
    %v3107 = vsub.f32 %v3105, %v3106
    %v3108 = vand.u32 %v3107, 4294901760
    %3109 = vmatprep.subr.mxu0 %v3108
    %v3110 = vand.u32 %v2946, 4294901760
    %v3111 = vsub.f32 %v2946, %v3110
    %v3112 = vand.u32 %v3111, 4294901760
    %v3113 = vsub.f32 %v3111, %v3112
    %v3114 = vand.u32 %v3113, 4294901760
    %3115 = vmatpush1.msra.mxu0 %v3114
    %3116 = vmatprep.subr.mxu0 0.0
    %3117 = vmatpush1.msra.mxu0 0.0
    %3118 = vmatprep.subr.mxu0 0.0
    %3119 = vmatpush1.msra.mxu0 0.0
    %3120 = vmatprep.subr.mxu0 0.0
    %3121 = vmatpush1.msra.mxu0 0.0
    %3122 = vmatprep.subr.mxu0 0.0
    %3123 = vmatpush1.msra.mxu0 0.0
    %3124 = vmatprep.subr.mxu0 0.0
    %3125 = vmatpush1.msra.mxu0 0.0
    %3126 = vmatprep.subr.mxu0 0.0
    %3127 = vmatpush1.msra.mxu0 0.0
    %3128 = vmatprep.subr.mxu0 0.0
    %3129 = vmatpush1.msra.mxu0 0.0
    %3130 = vmatprep.subr.mxu0 0.0
    %3131 = vmatpush1.msra.mxu0 0.0
    %3132 = vmatprep.subr.mxu0 0.0
    %3133 = vmatpush1.msra.mxu0 0.0
    %3134 = vmatprep.subr.mxu0 0.0
    %3135 = vmatpush1.msra.mxu0 0.0
    %3136 = vmatprep.subr.mxu0 0.0
    %3137 = vmatpush1.msra.mxu0 0.0
    %3138 = vmatprep.subr.mxu0 0.0
    %3139 = vmatpush1.msra.mxu0 0.0
    %3140 = vmatprep.subr.mxu0 0.0
    %3141 = vmatpush1.msra.mxu0 0.0
    %3142 = vmatprep.subr.mxu0 0.0
    %3143 = vmatpush1.msra.mxu0 0.0
    %3144 = vmatprep.subr.mxu0 0.0
    %3145 = vmatpush1.msra.mxu0 0.0
    %3146 = vmatprep.subr.mxu0 0.0
    %3147 = vmatpush1.msra.mxu0 0.0
    %3148 = vmatprep.subr.mxu0 0.0
    %3149 = vmatpush1.msra.mxu0 0.0
    %3150 = vmatprep.subr.mxu0 0.0
    %3151 = vmatpush1.msra.mxu0 0.0
    %3152 = vmatprep.subr.mxu0 0.0
    %3153 = vmatpush1.msra.mxu0 0.0
    %3154 = vmatprep.subr.mxu0 0.0
    %3155 = vmatpush1.msra.mxu0 0.0
    %3156 = vmatprep.subr.mxu0 0.0
    %3157 = vmatpush1.msra.mxu0 0.0
    %3158 = vmatprep.subr.mxu0 0.0
    %3159 = vmatpush1.msra.mxu0 0.0
    %3160 = vmatprep.subr.mxu0 0.0
    %3161 = vmatpush1.msra.mxu0 0.0
    %3162 = vmatprep.subr.mxu0 0.0
    %3163 = vmatpush1.msra.mxu0 0.0
    %3164 = vmatprep.subr.mxu0 0.0
    %3165 = vmatpush1.msra.mxu0 0.0
    %3166 = vmatprep.subr.mxu0 0.0
    %3167 = vmatpush1.msra.mxu0 0.0
    %3168 = vmatprep.subr.mxu0 0.0
    %3169 = vmatpush1.msra.mxu0 0.0
    %3170 = vmatprep.subr.mxu0 0.0
    %3171 = vmatpush1.msra.mxu0 0.0
    %3172 = vmatprep.mubr.f32.mxu0 0.0
    %v3173 = vand.u32 %v35, 4294901760
    %3174 = vmatmul.mubr.f32.gmra.mrb[0].mxu0 %v3173
    %v3175 = vpop.f32.mrb[0].mxu0
    %v3176 = vadd.f32 %v3031, %v3175
    %v3177 = vpop.f32.mrb[0].mxu0
    %v3178 = vadd.f32 %v3033, %v3177
    %3179 = vmatprep.mubr.f32.mxu0 0.0
    %v3180 = vand.u32 %v38, 4294901760
    %3181 = vmatmul.mubr.f32.gmra.mrb[0].mxu0 %v3180
    %v3182 = vpop.f32.mrb[0].mxu0
    %v3183 = vadd.f32 %v3042, %v3182
    %v3184 = vpop.f32.mrb[0].mxu0
    %v3185 = vadd.f32 %v3044, %v3184
    %3186 = vmatprep.mubr.f32.mxu0 0.0
    %v3187 = vand.u32 %v41, 4294901760
    %3188 = vmatmul.mubr.f32.gmra.mrb[0].mxu0 %v3187
    %v3189 = vpop.f32.mrb[0].mxu0
    %v3190 = vadd.f32 %v3053, %v3189
    %v3191 = vpop.f32.mrb[0].mxu0
    %v3192 = vadd.f32 %v3055, %v3191
    %3193 = vmatprep.mubr.f32.mxu0 0.0
    %v3194 = vand.u32 %v44, 4294901760
    %3195 = vmatmul.mubr.f32.gmra.mrb[0].mxu0 %v3194
    %v3196 = vpop.f32.mrb[0].mxu0
    %v3197 = vadd.f32 %v3064, %v3196
    %v3198 = vpop.f32.mrb[0].mxu0
    %v3199 = vadd.f32 %v3066, %v3198
    %3200 = vdwg.mxu0
    %v3201 = vand.u32 %v2938, 4294901760
    %v3202 = vsub.f32 %v2938, %v3201
    %3203 = vmatprep.subr.mxu0 %v3202
    %v3204 = vand.u32 %v2937, 4294901760
    %v3205 = vsub.f32 %v2937, %v3204
    %3206 = vmatpush1.msra.mxu0 %v3205
    %v3207 = vand.u32 %v2940, 4294901760
    %v3208 = vsub.f32 %v2940, %v3207
    %3209 = vmatprep.subr.mxu0 %v3208
    %v3210 = vand.u32 %v2939, 4294901760
    %v3211 = vsub.f32 %v2939, %v3210
    %3212 = vmatpush1.msra.mxu0 %v3211
    %v3213 = vand.u32 %v2942, 4294901760
    %v3214 = vsub.f32 %v2942, %v3213
    %3215 = vmatprep.subr.mxu0 %v3214
    %v3216 = vand.u32 %v2941, 4294901760
    %v3217 = vsub.f32 %v2941, %v3216
    %3218 = vmatpush1.msra.mxu0 %v3217
    %v3219 = vand.u32 %v2949, 4294901760
    %v3220 = vsub.f32 %v2949, %v3219
    %3221 = vmatprep.subr.mxu0 %v3220
    %v3222 = vand.u32 %v2946, 4294901760
    %v3223 = vsub.f32 %v2946, %v3222
    %3224 = vmatpush1.msra.mxu0 %v3223
    %3225 = vmatprep.subr.mxu0 0.0
    %3226 = vmatpush1.msra.mxu0 0.0
    %3227 = vmatprep.subr.mxu0 0.0
    %3228 = vmatpush1.msra.mxu0 0.0
    %3229 = vmatprep.subr.mxu0 0.0
    %3230 = vmatpush1.msra.mxu0 0.0
    %3231 = vmatprep.subr.mxu0 0.0
    %3232 = vmatpush1.msra.mxu0 0.0
    %3233 = vmatprep.subr.mxu0 0.0
    %3234 = vmatpush1.msra.mxu0 0.0
    %3235 = vmatprep.subr.mxu0 0.0
    %3236 = vmatpush1.msra.mxu0 0.0
    %3237 = vmatprep.subr.mxu0 0.0
    %3238 = vmatpush1.msra.mxu0 0.0
    %3239 = vmatprep.subr.mxu0 0.0
    %3240 = vmatpush1.msra.mxu0 0.0
    %3241 = vmatprep.subr.mxu0 0.0
    %3242 = vmatpush1.msra.mxu0 0.0
    %3243 = vmatprep.subr.mxu0 0.0
    %3244 = vmatpush1.msra.mxu0 0.0
    %3245 = vmatprep.subr.mxu0 0.0
    %3246 = vmatpush1.msra.mxu0 0.0
    %3247 = vmatprep.subr.mxu0 0.0
    %3248 = vmatpush1.msra.mxu0 0.0
    %3249 = vmatprep.subr.mxu0 0.0
    %3250 = vmatpush1.msra.mxu0 0.0
    %3251 = vmatprep.subr.mxu0 0.0
    %3252 = vmatpush1.msra.mxu0 0.0
    %3253 = vmatprep.subr.mxu0 0.0
    %3254 = vmatpush1.msra.mxu0 0.0
    %3255 = vmatprep.subr.mxu0 0.0
    %3256 = vmatpush1.msra.mxu0 0.0
    %3257 = vmatprep.subr.mxu0 0.0
    %3258 = vmatpush1.msra.mxu0 0.0
    %3259 = vmatprep.subr.mxu0 0.0
    %3260 = vmatpush1.msra.mxu0 0.0
    %3261 = vmatprep.subr.mxu0 0.0
    %3262 = vmatpush1.msra.mxu0 0.0
    %3263 = vmatprep.subr.mxu0 0.0
    %3264 = vmatpush1.msra.mxu0 0.0
    %3265 = vmatprep.subr.mxu0 0.0
    %3266 = vmatpush1.msra.mxu0 0.0
    %3267 = vmatprep.subr.mxu0 0.0
    %3268 = vmatpush1.msra.mxu0 0.0
    %3269 = vmatprep.subr.mxu0 0.0
    %3270 = vmatpush1.msra.mxu0 0.0
    %3271 = vmatprep.subr.mxu0 0.0
    %3272 = vmatpush1.msra.mxu0 0.0
    %3273 = vmatprep.subr.mxu0 0.0
    %3274 = vmatpush1.msra.mxu0 0.0
    %3275 = vmatprep.subr.mxu0 0.0
    %3276 = vmatpush1.msra.mxu0 0.0
    %3277 = vmatprep.subr.mxu0 0.0
    %3278 = vmatpush1.msra.mxu0 0.0
    %3279 = vmatprep.subr.mxu0 0.0
    %3280 = vmatpush1.msra.mxu0 0.0
    %3281 = vmatprep.mubr.f32.mxu0 0.0
    %v3282 = vand.u32 %v35, 4294901760
    %v3283 = vsub.f32 %v35, %v3282
    %3284 = vmatmul.mubr.f32.gmra.mrb[0].mxu0 %v3283
    %v3285 = vpop.f32.mrb[0].mxu0
    %v3286 = vadd.f32 %v3176, %v3285
    %v3287 = vpop.f32.mrb[0].mxu0
    %v3288 = vadd.f32 %v3178, %v3287
    %3289 = vmatprep.mubr.f32.mxu0 0.0
    %v3290 = vand.u32 %v38, 4294901760
    %v3291 = vsub.f32 %v38, %v3290
    %3292 = vmatmul.mubr.f32.gmra.mrb[0].mxu0 %v3291
    %v3293 = vpop.f32.mrb[0].mxu0
    %v3294 = vadd.f32 %v3183, %v3293
    %v3295 = vpop.f32.mrb[0].mxu0
    %v3296 = vadd.f32 %v3185, %v3295
    %3297 = vmatprep.mubr.f32.mxu0 0.0
    %v3298 = vand.u32 %v41, 4294901760
    %v3299 = vsub.f32 %v41, %v3298
    %3300 = vmatmul.mubr.f32.gmra.mrb[0].mxu0 %v3299
    %v3301 = vpop.f32.mrb[0].mxu0
    %v3302 = vadd.f32 %v3190, %v3301
    %v3303 = vpop.f32.mrb[0].mxu0
    %v3304 = vadd.f32 %v3192, %v3303
    %3305 = vmatprep.mubr.f32.mxu0 0.0
    %v3306 = vand.u32 %v44, 4294901760
    %v3307 = vsub.f32 %v44, %v3306
    %3308 = vmatmul.mubr.f32.gmra.mrb[0].mxu0 %v3307
    %v3309 = vpop.f32.mrb[0].mxu0
    %v3310 = vadd.f32 %v3197, %v3309
    %v3311 = vpop.f32.mrb[0].mxu0
    %v3312 = vadd.f32 %v3199, %v3311
    %3313 = vdwg.mxu0
    %v3314 = vand.u32 %v2938, 4294901760
    %3315 = vmatprep.subr.mxu0 %v3314
    %v3316 = vand.u32 %v2937, 4294901760
    %3317 = vmatpush1.msra.mxu0 %v3316
    %v3318 = vand.u32 %v2940, 4294901760
    %3319 = vmatprep.subr.mxu0 %v3318
    %v3320 = vand.u32 %v2939, 4294901760
    %3321 = vmatpush1.msra.mxu0 %v3320
    %v3322 = vand.u32 %v2942, 4294901760
    %3323 = vmatprep.subr.mxu0 %v3322
    %v3324 = vand.u32 %v2941, 4294901760
    %3325 = vmatpush1.msra.mxu0 %v3324
    %v3326 = vand.u32 %v2949, 4294901760
    %3327 = vmatprep.subr.mxu0 %v3326
    %v3328 = vand.u32 %v2946, 4294901760
    %3329 = vmatpush1.msra.mxu0 %v3328
    %3330 = vmatprep.subr.mxu0 0.0
    %3331 = vmatpush1.msra.mxu0 0.0
    %3332 = vmatprep.subr.mxu0 0.0
    %3333 = vmatpush1.msra.mxu0 0.0
    %3334 = vmatprep.subr.mxu0 0.0
    %3335 = vmatpush1.msra.mxu0 0.0
    %3336 = vmatprep.subr.mxu0 0.0
    %3337 = vmatpush1.msra.mxu0 0.0
    %3338 = vmatprep.subr.mxu0 0.0
    %3339 = vmatpush1.msra.mxu0 0.0
    %3340 = vmatprep.subr.mxu0 0.0
    %3341 = vmatpush1.msra.mxu0 0.0
    %3342 = vmatprep.subr.mxu0 0.0
    %3343 = vmatpush1.msra.mxu0 0.0
    %3344 = vmatprep.subr.mxu0 0.0
    %3345 = vmatpush1.msra.mxu0 0.0
    %3346 = vmatprep.subr.mxu0 0.0
    %3347 = vmatpush1.msra.mxu0 0.0
    %3348 = vmatprep.subr.mxu0 0.0
    %3349 = vmatpush1.msra.mxu0 0.0
    %3350 = vmatprep.subr.mxu0 0.0
    %3351 = vmatpush1.msra.mxu0 0.0
    %3352 = vmatprep.subr.mxu0 0.0
    %3353 = vmatpush1.msra.mxu0 0.0
    %3354 = vmatprep.subr.mxu0 0.0
    %3355 = vmatpush1.msra.mxu0 0.0
    %3356 = vmatprep.subr.mxu0 0.0
    %3357 = vmatpush1.msra.mxu0 0.0
    %3358 = vmatprep.subr.mxu0 0.0
    %3359 = vmatpush1.msra.mxu0 0.0
    %3360 = vmatprep.subr.mxu0 0.0
    %3361 = vmatpush1.msra.mxu0 0.0
    %3362 = vmatprep.subr.mxu0 0.0
    %3363 = vmatpush1.msra.mxu0 0.0
    %3364 = vmatprep.subr.mxu0 0.0
    %3365 = vmatpush1.msra.mxu0 0.0
    %3366 = vmatprep.subr.mxu0 0.0
    %3367 = vmatpush1.msra.mxu0 0.0
    %3368 = vmatprep.subr.mxu0 0.0
    %3369 = vmatpush1.msra.mxu0 0.0
    %3370 = vmatprep.subr.mxu0 0.0
    %3371 = vmatpush1.msra.mxu0 0.0
    %3372 = vmatprep.subr.mxu0 0.0
    %3373 = vmatpush1.msra.mxu0 0.0
    %3374 = vmatprep.subr.mxu0 0.0
    %3375 = vmatpush1.msra.mxu0 0.0
    %3376 = vmatprep.subr.mxu0 0.0
    %3377 = vmatpush1.msra.mxu0 0.0
    %3378 = vmatprep.subr.mxu0 0.0
    %3379 = vmatpush1.msra.mxu0 0.0
    %3380 = vmatprep.subr.mxu0 0.0
    %3381 = vmatpush1.msra.mxu0 0.0
    %3382 = vmatprep.subr.mxu0 0.0
    %3383 = vmatpush1.msra.mxu0 0.0
    %3384 = vmatprep.subr.mxu0 0.0
    %3385 = vmatpush1.msra.mxu0 0.0
    %3386 = vmatprep.mubr.f32.mxu0 0.0
    %v3387 = vand.u32 %v35, 4294901760
    %v3388 = vsub.f32 %v35, %v3387
    %v3389 = vand.u32 %v3388, 4294901760
    %3390 = vmatmul.mubr.f32.gmra.mrb[0].mxu0 %v3389
    %v3391 = vpop.f32.mrb[0].mxu0
    %v3392 = vadd.f32 %v3286, %v3391
    %v3393 = vpop.f32.mrb[0].mxu0
    %v3394 = vadd.f32 %v3288, %v3393
    %3395 = vmatprep.mubr.f32.mxu0 0.0
    %v3396 = vand.u32 %v38, 4294901760
    %v3397 = vsub.f32 %v38, %v3396
    %v3398 = vand.u32 %v3397, 4294901760
    %3399 = vmatmul.mubr.f32.gmra.mrb[0].mxu0 %v3398
    %v3400 = vpop.f32.mrb[0].mxu0
    %v3401 = vadd.f32 %v3294, %v3400
    %v3402 = vpop.f32.mrb[0].mxu0
    %v3403 = vadd.f32 %v3296, %v3402
    %3404 = vmatprep.mubr.f32.mxu0 0.0
    %v3405 = vand.u32 %v41, 4294901760
    %v3406 = vsub.f32 %v41, %v3405
    %v3407 = vand.u32 %v3406, 4294901760
    %3408 = vmatmul.mubr.f32.gmra.mrb[0].mxu0 %v3407
    %v3409 = vpop.f32.mrb[0].mxu0
    %v3410 = vadd.f32 %v3302, %v3409
    %v3411 = vpop.f32.mrb[0].mxu0
    %v3412 = vadd.f32 %v3304, %v3411
    %3413 = vmatprep.mubr.f32.mxu0 0.0
    %v3414 = vand.u32 %v44, 4294901760
    %v3415 = vsub.f32 %v44, %v3414
    %v3416 = vand.u32 %v3415, 4294901760
    %3417 = vmatmul.mubr.f32.gmra.mrb[0].mxu0 %v3416
    %v3418 = vpop.f32.mrb[0].mxu0
    %v3419 = vadd.f32 %v3310, %v3418
    %v3420 = vpop.f32.mrb[0].mxu0
    %v3421 = vadd.f32 %v3312, %v3420
    %3422 = vdwg.mxu0
    %v3423 = vand.u32 %v2938, 4294901760
    %v3424 = vsub.f32 %v2938, %v3423
    %v3425 = vand.u32 %v3424, 4294901760
    %3426 = vmatprep.subr.mxu0 %v3425
    %v3427 = vand.u32 %v2937, 4294901760
    %v3428 = vsub.f32 %v2937, %v3427
    %v3429 = vand.u32 %v3428, 4294901760
    %3430 = vmatpush1.msra.mxu0 %v3429
    %v3431 = vand.u32 %v2940, 4294901760
    %v3432 = vsub.f32 %v2940, %v3431
    %v3433 = vand.u32 %v3432, 4294901760
    %3434 = vmatprep.subr.mxu0 %v3433
    %v3435 = vand.u32 %v2939, 4294901760
    %v3436 = vsub.f32 %v2939, %v3435
    %v3437 = vand.u32 %v3436, 4294901760
    %3438 = vmatpush1.msra.mxu0 %v3437
    %v3439 = vand.u32 %v2942, 4294901760
    %v3440 = vsub.f32 %v2942, %v3439
    %v3441 = vand.u32 %v3440, 4294901760
    %3442 = vmatprep.subr.mxu0 %v3441
    %v3443 = vand.u32 %v2941, 4294901760
    %v3444 = vsub.f32 %v2941, %v3443
    %v3445 = vand.u32 %v3444, 4294901760
    %3446 = vmatpush1.msra.mxu0 %v3445
    %v3447 = vand.u32 %v2949, 4294901760
    %v3448 = vsub.f32 %v2949, %v3447
    %v3449 = vand.u32 %v3448, 4294901760
    %3450 = vmatprep.subr.mxu0 %v3449
    %v3451 = vand.u32 %v2946, 4294901760
    %v3452 = vsub.f32 %v2946, %v3451
    %v3453 = vand.u32 %v3452, 4294901760
    %3454 = vmatpush1.msra.mxu0 %v3453
    %3455 = vmatprep.subr.mxu0 0.0
    %3456 = vmatpush1.msra.mxu0 0.0
    %3457 = vmatprep.subr.mxu0 0.0
    %3458 = vmatpush1.msra.mxu0 0.0
    %3459 = vmatprep.subr.mxu0 0.0
    %3460 = vmatpush1.msra.mxu0 0.0
    %3461 = vmatprep.subr.mxu0 0.0
    %3462 = vmatpush1.msra.mxu0 0.0
    %3463 = vmatprep.subr.mxu0 0.0
    %3464 = vmatpush1.msra.mxu0 0.0
    %3465 = vmatprep.subr.mxu0 0.0
    %3466 = vmatpush1.msra.mxu0 0.0
    %3467 = vmatprep.subr.mxu0 0.0
    %3468 = vmatpush1.msra.mxu0 0.0
    %3469 = vmatprep.subr.mxu0 0.0
    %3470 = vmatpush1.msra.mxu0 0.0
    %3471 = vmatprep.subr.mxu0 0.0
    %3472 = vmatpush1.msra.mxu0 0.0
    %3473 = vmatprep.subr.mxu0 0.0
    %3474 = vmatpush1.msra.mxu0 0.0
    %3475 = vmatprep.subr.mxu0 0.0
    %3476 = vmatpush1.msra.mxu0 0.0
    %3477 = vmatprep.subr.mxu0 0.0
    %3478 = vmatpush1.msra.mxu0 0.0
    %3479 = vmatprep.subr.mxu0 0.0
    %3480 = vmatpush1.msra.mxu0 0.0
    %3481 = vmatprep.subr.mxu0 0.0
    %3482 = vmatpush1.msra.mxu0 0.0
    %3483 = vmatprep.subr.mxu0 0.0
    %3484 = vmatpush1.msra.mxu0 0.0
    %3485 = vmatprep.subr.mxu0 0.0
    %3486 = vmatpush1.msra.mxu0 0.0
    %3487 = vmatprep.subr.mxu0 0.0
    %3488 = vmatpush1.msra.mxu0 0.0
    %3489 = vmatprep.subr.mxu0 0.0
    %3490 = vmatpush1.msra.mxu0 0.0
    %3491 = vmatprep.subr.mxu0 0.0
    %3492 = vmatpush1.msra.mxu0 0.0
    %3493 = vmatprep.subr.mxu0 0.0
    %3494 = vmatpush1.msra.mxu0 0.0
    %3495 = vmatprep.subr.mxu0 0.0
    %3496 = vmatpush1.msra.mxu0 0.0
    %3497 = vmatprep.subr.mxu0 0.0
    %3498 = vmatpush1.msra.mxu0 0.0
    %3499 = vmatprep.subr.mxu0 0.0
    %3500 = vmatpush1.msra.mxu0 0.0
    %3501 = vmatprep.subr.mxu0 0.0
    %3502 = vmatpush1.msra.mxu0 0.0
    %3503 = vmatprep.subr.mxu0 0.0
    %3504 = vmatpush1.msra.mxu0 0.0
    %3505 = vmatprep.subr.mxu0 0.0
    %3506 = vmatpush1.msra.mxu0 0.0
    %3507 = vmatprep.subr.mxu0 0.0
    %3508 = vmatpush1.msra.mxu0 0.0
    %3509 = vmatprep.subr.mxu0 0.0
    %3510 = vmatpush1.msra.mxu0 0.0
    %3511 = vmatprep.mubr.f32.mxu0 0.0
    %v3512 = vand.u32 %v35, 4294901760
    %3513 = vmatmul.mubr.f32.gmra.mrb[0].mxu0 %v3512
    %v3514 = vpop.f32.mrb[0].mxu0
    %v3515 = vadd.f32 %v3392, %v3514
    %v3516 = vpop.f32.mrb[0].mxu0
    %v3517 = vadd.f32 %v3394, %v3516
    %3518 = vmatprep.mubr.f32.mxu0 0.0
    %v3519 = vand.u32 %v38, 4294901760
    %3520 = vmatmul.mubr.f32.gmra.mrb[0].mxu0 %v3519
    %v3521 = vpop.f32.mrb[0].mxu0
    %v3522 = vadd.f32 %v3401, %v3521
    %v3523 = vpop.f32.mrb[0].mxu0
    %v3524 = vadd.f32 %v3403, %v3523
    %3525 = vmatprep.mubr.f32.mxu0 0.0
    %v3526 = vand.u32 %v41, 4294901760
    %3527 = vmatmul.mubr.f32.gmra.mrb[0].mxu0 %v3526
    %v3528 = vpop.f32.mrb[0].mxu0
    %v3529 = vadd.f32 %v3410, %v3528
    %v3530 = vpop.f32.mrb[0].mxu0
    %v3531 = vadd.f32 %v3412, %v3530
    %3532 = vmatprep.mubr.f32.mxu0 0.0
    %v3533 = vand.u32 %v44, 4294901760
    %3534 = vmatmul.mubr.f32.gmra.mrb[0].mxu0 %v3533
    %v3535 = vpop.f32.mrb[0].mxu0
    %v3536 = vadd.f32 %v3419, %v3535
    %v3537 = vpop.f32.mrb[0].mxu0
    %v3538 = vadd.f32 %v3421, %v3537
    %3539 = vdwg.mxu0
    %v3540 = vand.u32 %v2938, 4294901760
    %3541 = vmatprep.subr.mxu0 %v3540
    %v3542 = vand.u32 %v2937, 4294901760
    %3543 = vmatpush1.msra.mxu0 %v3542
    %v3544 = vand.u32 %v2940, 4294901760
    %3545 = vmatprep.subr.mxu0 %v3544
    %v3546 = vand.u32 %v2939, 4294901760
    %3547 = vmatpush1.msra.mxu0 %v3546
    %v3548 = vand.u32 %v2942, 4294901760
    %3549 = vmatprep.subr.mxu0 %v3548
    %v3550 = vand.u32 %v2941, 4294901760
    %3551 = vmatpush1.msra.mxu0 %v3550
    %v3552 = vand.u32 %v2949, 4294901760
    %3553 = vmatprep.subr.mxu0 %v3552
    %v3554 = vand.u32 %v2946, 4294901760
    %3555 = vmatpush1.msra.mxu0 %v3554
    %3556 = vmatprep.subr.mxu0 0.0
    %3557 = vmatpush1.msra.mxu0 0.0
    %3558 = vmatprep.subr.mxu0 0.0
    %3559 = vmatpush1.msra.mxu0 0.0
    %3560 = vmatprep.subr.mxu0 0.0
    %3561 = vmatpush1.msra.mxu0 0.0
    %3562 = vmatprep.subr.mxu0 0.0
    %3563 = vmatpush1.msra.mxu0 0.0
    %3564 = vmatprep.subr.mxu0 0.0
    %3565 = vmatpush1.msra.mxu0 0.0
    %3566 = vmatprep.subr.mxu0 0.0
    %3567 = vmatpush1.msra.mxu0 0.0
    %3568 = vmatprep.subr.mxu0 0.0
    %3569 = vmatpush1.msra.mxu0 0.0
    %3570 = vmatprep.subr.mxu0 0.0
    %3571 = vmatpush1.msra.mxu0 0.0
    %3572 = vmatprep.subr.mxu0 0.0
    %3573 = vmatpush1.msra.mxu0 0.0
    %3574 = vmatprep.subr.mxu0 0.0
    %3575 = vmatpush1.msra.mxu0 0.0
    %3576 = vmatprep.subr.mxu0 0.0
    %3577 = vmatpush1.msra.mxu0 0.0
    %3578 = vmatprep.subr.mxu0 0.0
    %3579 = vmatpush1.msra.mxu0 0.0
    %3580 = vmatprep.subr.mxu0 0.0
    %3581 = vmatpush1.msra.mxu0 0.0
    %3582 = vmatprep.subr.mxu0 0.0
    %3583 = vmatpush1.msra.mxu0 0.0
    %3584 = vmatprep.subr.mxu0 0.0
    %3585 = vmatpush1.msra.mxu0 0.0
    %3586 = vmatprep.subr.mxu0 0.0
    %3587 = vmatpush1.msra.mxu0 0.0
    %3588 = vmatprep.subr.mxu0 0.0
    %3589 = vmatpush1.msra.mxu0 0.0
    %3590 = vmatprep.subr.mxu0 0.0
    %3591 = vmatpush1.msra.mxu0 0.0
    %3592 = vmatprep.subr.mxu0 0.0
    %3593 = vmatpush1.msra.mxu0 0.0
    %3594 = vmatprep.subr.mxu0 0.0
    %3595 = vmatpush1.msra.mxu0 0.0
    %3596 = vmatprep.subr.mxu0 0.0
    %3597 = vmatpush1.msra.mxu0 0.0
    %3598 = vmatprep.subr.mxu0 0.0
    %3599 = vmatpush1.msra.mxu0 0.0
    %3600 = vmatprep.subr.mxu0 0.0
    %3601 = vmatpush1.msra.mxu0 0.0
    %3602 = vmatprep.subr.mxu0 0.0
    %3603 = vmatpush1.msra.mxu0 0.0
    %3604 = vmatprep.subr.mxu0 0.0
    %3605 = vmatpush1.msra.mxu0 0.0
    %3606 = vmatprep.subr.mxu0 0.0
    %3607 = vmatpush1.msra.mxu0 0.0
    %3608 = vmatprep.subr.mxu0 0.0
    %3609 = vmatpush1.msra.mxu0 0.0
    %3610 = vmatprep.subr.mxu0 0.0
    %3611 = vmatpush1.msra.mxu0 0.0
    %3612 = vmatprep.mubr.f32.mxu0 0.0
    %v3613 = vand.u32 %v35, 4294901760
    %3614 = vmatmul.mubr.f32.gmra.mrb[0].mxu0 %v3613
    %v3615 = vpop.f32.mrb[0].mxu0
    %v3616 = vadd.f32 %v3515, %v3615
    %v3617 = vpop.f32.mrb[0].mxu0
    %v3618 = vadd.f32 %v3517, %v3617
    %3619 = vmatprep.mubr.f32.mxu0 0.0
    %v3620 = vand.u32 %v38, 4294901760
    %3621 = vmatmul.mubr.f32.gmra.mrb[0].mxu0 %v3620
    %v3622 = vpop.f32.mrb[0].mxu0
    %v3623 = vadd.f32 %v3522, %v3622
    %v3624 = vpop.f32.mrb[0].mxu0
    %v3625 = vadd.f32 %v3524, %v3624
    %3626 = vmatprep.mubr.f32.mxu0 0.0
    %v3627 = vand.u32 %v41, 4294901760
    %3628 = vmatmul.mubr.f32.gmra.mrb[0].mxu0 %v3627
    %v3629 = vpop.f32.mrb[0].mxu0
    %v3630 = vadd.f32 %v3529, %v3629
    %v3631 = vpop.f32.mrb[0].mxu0
    %v3632 = vadd.f32 %v3531, %v3631
    %3633 = vmatprep.mubr.f32.mxu0 0.0
    %v3634 = vand.u32 %v44, 4294901760
    %3635 = vmatmul.mubr.f32.gmra.mrb[0].mxu0 %v3634
    %v3636 = vpop.f32.mrb[0].mxu0
    %v3637 = vadd.f32 %v3536, %v3636
    %v3638 = vpop.f32.mrb[0].mxu0
    %v3639 = vadd.f32 %v3538, %v3638
    %3640 = vdwg.mxu0
    %v3649 = vrot.slane %v3616, 1
    %v3650 = vrot.slane %v3623, 1
    %v3651 = vsel %vm1456, %v3649, %v3650
    %v3652 = vrot.slane %v3618, 1
    %v3653 = vrot.slane %v3625, 1
    %v3654 = vsel %vm1456, %v3652, %v3653
    %v3655 = vrot.slane %v3630, 1
    %v3656 = vsel %vm1456, %v3650, %v3655
    %v3657 = vrot.slane %v3632, 1
    %v3658 = vsel %vm1456, %v3653, %v3657
    %v3659 = vrot.slane %v3637, 1
    %v3660 = vsel %vm1456, %v3655, %v3659
    %v3661 = vrot.slane %v3639, 1
    %v3662 = vsel %vm1456, %v3657, %v3661
    %v3671 = vadd.f32 %v2911, %v3651
    %v3672 = vadd.f32 %v2913, %v3654
    %v3673 = vadd.f32 %v2918, %v3656
    %v3674 = vadd.f32 %v2920, %v3658
    %v3675 = vadd.f32 %v2925, %v3660
    %v3676 = vadd.f32 %v2927, %v3662
    %v3677 = vadd.f32 %v2932, %v3659
    %v3678 = vadd.f32 %v2934, %v3661
    %s3679 = scalar_lea.vmem %s1, 320
    %v3680 = vld [vmem:[%s3679] sm:$0xff]
    %v3681 = vld [vmem:[%s3679 + $0x8] sm:$0xff]
    %v3682 = vld [vmem:[%s3679 + $0x10] sm:$0xff]
    %v3683 = vld [vmem:[%s3679 + $0x18] sm:$0xff]
    %v3684 = vld [vmem:[%s3679 + $0x20] sm:$0xff]
    %v3685 = vld [vmem:[%s3679 + $0x28] sm:$0xff]
    %v3686 = vld [vmem:[%s3679 + $0x30] sm:$0xf]
    %v3687 = vld [vmem:[%s3679 + $0x38] sm:$0xf]
    %v3689 = vsel %vm46, %v3686, 0
    %v3692 = vsel %vm46, %v3687, 0
    %v3694 = vand.u32 %v3681, 4294901760
    %3695 = vmatprep.subr.mxu0 %v3694
    %v3696 = vand.u32 %v3680, 4294901760
    %3697 = vmatpush1.msra.mxu0 %v3696
    %v3698 = vand.u32 %v3683, 4294901760
    %3699 = vmatprep.subr.mxu0 %v3698
    %v3700 = vand.u32 %v3682, 4294901760
    %3701 = vmatpush1.msra.mxu0 %v3700
    %v3702 = vand.u32 %v3685, 4294901760
    %3703 = vmatprep.subr.mxu0 %v3702
    %v3704 = vand.u32 %v3684, 4294901760
    %3705 = vmatpush1.msra.mxu0 %v3704
    %v3706 = vand.u32 %v3692, 4294901760
    %3707 = vmatprep.subr.mxu0 %v3706
    %v3708 = vand.u32 %v3689, 4294901760
    %3709 = vmatpush1.msra.mxu0 %v3708
    %3710 = vmatprep.subr.mxu0 0.0
    %3711 = vmatpush1.msra.mxu0 0.0
    %3712 = vmatprep.subr.mxu0 0.0
    %3713 = vmatpush1.msra.mxu0 0.0
    %3714 = vmatprep.subr.mxu0 0.0
    %3715 = vmatpush1.msra.mxu0 0.0
    %3716 = vmatprep.subr.mxu0 0.0
    %3717 = vmatpush1.msra.mxu0 0.0
    %3718 = vmatprep.subr.mxu0 0.0
    %3719 = vmatpush1.msra.mxu0 0.0
    %3720 = vmatprep.subr.mxu0 0.0
    %3721 = vmatpush1.msra.mxu0 0.0
    %3722 = vmatprep.subr.mxu0 0.0
    %3723 = vmatpush1.msra.mxu0 0.0
    %3724 = vmatprep.subr.mxu0 0.0
    %3725 = vmatpush1.msra.mxu0 0.0
    %3726 = vmatprep.subr.mxu0 0.0
    %3727 = vmatpush1.msra.mxu0 0.0
    %3728 = vmatprep.subr.mxu0 0.0
    %3729 = vmatpush1.msra.mxu0 0.0
    %3730 = vmatprep.subr.mxu0 0.0
    %3731 = vmatpush1.msra.mxu0 0.0
    %3732 = vmatprep.subr.mxu0 0.0
    %3733 = vmatpush1.msra.mxu0 0.0
    %3734 = vmatprep.subr.mxu0 0.0
    %3735 = vmatpush1.msra.mxu0 0.0
    %3736 = vmatprep.subr.mxu0 0.0
    %3737 = vmatpush1.msra.mxu0 0.0
    %3738 = vmatprep.subr.mxu0 0.0
    %3739 = vmatpush1.msra.mxu0 0.0
    %3740 = vmatprep.subr.mxu0 0.0
    %3741 = vmatpush1.msra.mxu0 0.0
    %3742 = vmatprep.subr.mxu0 0.0
    %3743 = vmatpush1.msra.mxu0 0.0
    %3744 = vmatprep.subr.mxu0 0.0
    %3745 = vmatpush1.msra.mxu0 0.0
    %3746 = vmatprep.subr.mxu0 0.0
    %3747 = vmatpush1.msra.mxu0 0.0
    %3748 = vmatprep.subr.mxu0 0.0
    %3749 = vmatpush1.msra.mxu0 0.0
    %3750 = vmatprep.subr.mxu0 0.0
    %3751 = vmatpush1.msra.mxu0 0.0
    %3752 = vmatprep.subr.mxu0 0.0
    %3753 = vmatpush1.msra.mxu0 0.0
    %3754 = vmatprep.subr.mxu0 0.0
    %3755 = vmatpush1.msra.mxu0 0.0
    %3756 = vmatprep.subr.mxu0 0.0
    %3757 = vmatpush1.msra.mxu0 0.0
    %3758 = vmatprep.subr.mxu0 0.0
    %3759 = vmatpush1.msra.mxu0 0.0
    %3760 = vmatprep.subr.mxu0 0.0
    %3761 = vmatpush1.msra.mxu0 0.0
    %3762 = vmatprep.subr.mxu0 0.0
    %3763 = vmatpush1.msra.mxu0 0.0
    %3764 = vmatprep.subr.mxu0 0.0
    %3765 = vmatpush1.msra.mxu0 0.0
    %3766 = vmatprep.mubr.f32.mxu0 0.0
    %v3767 = vand.u32 %v35, 4294901760
    %v3768 = vsub.f32 %v35, %v3767
    %v3769 = vand.u32 %v3768, 4294901760
    %v3770 = vsub.f32 %v3768, %v3769
    %v3771 = vand.u32 %v3770, 4294901760
    %3772 = vmatmul.mubr.f32.gmra.mrb[0].mxu0 %v3771
    %v3773 = vpop.f32.mrb[0].mxu0
    %v3774 = vadd.f32 0.0, %v3773
    %v3775 = vpop.f32.mrb[0].mxu0
    %v3776 = vadd.f32 0.0, %v3775
    %3777 = vmatprep.mubr.f32.mxu0 0.0
    %v3778 = vand.u32 %v38, 4294901760
    %v3779 = vsub.f32 %v38, %v3778
    %v3780 = vand.u32 %v3779, 4294901760
    %v3781 = vsub.f32 %v3779, %v3780
    %v3782 = vand.u32 %v3781, 4294901760
    %3783 = vmatmul.mubr.f32.gmra.mrb[0].mxu0 %v3782
    %v3784 = vpop.f32.mrb[0].mxu0
    %v3785 = vadd.f32 0.0, %v3784
    %v3786 = vpop.f32.mrb[0].mxu0
    %v3787 = vadd.f32 0.0, %v3786
    %3788 = vmatprep.mubr.f32.mxu0 0.0
    %v3789 = vand.u32 %v41, 4294901760
    %v3790 = vsub.f32 %v41, %v3789
    %v3791 = vand.u32 %v3790, 4294901760
    %v3792 = vsub.f32 %v3790, %v3791
    %v3793 = vand.u32 %v3792, 4294901760
    %3794 = vmatmul.mubr.f32.gmra.mrb[0].mxu0 %v3793
    %v3795 = vpop.f32.mrb[0].mxu0
    %v3796 = vadd.f32 0.0, %v3795
    %v3797 = vpop.f32.mrb[0].mxu0
    %v3798 = vadd.f32 0.0, %v3797
    %3799 = vmatprep.mubr.f32.mxu0 0.0
    %v3800 = vand.u32 %v44, 4294901760
    %v3801 = vsub.f32 %v44, %v3800
    %v3802 = vand.u32 %v3801, 4294901760
    %v3803 = vsub.f32 %v3801, %v3802
    %v3804 = vand.u32 %v3803, 4294901760
    %3805 = vmatmul.mubr.f32.gmra.mrb[0].mxu0 %v3804
    %v3806 = vpop.f32.mrb[0].mxu0
    %v3807 = vadd.f32 0.0, %v3806
    %v3808 = vpop.f32.mrb[0].mxu0
    %v3809 = vadd.f32 0.0, %v3808
    %3810 = vdwg.mxu0
    %v3811 = vand.u32 %v3681, 4294901760
    %v3812 = vsub.f32 %v3681, %v3811
    %v3813 = vand.u32 %v3812, 4294901760
    %v3814 = vsub.f32 %v3812, %v3813
    %v3815 = vand.u32 %v3814, 4294901760
    %3816 = vmatprep.subr.mxu0 %v3815
    %v3817 = vand.u32 %v3680, 4294901760
    %v3818 = vsub.f32 %v3680, %v3817
    %v3819 = vand.u32 %v3818, 4294901760
    %v3820 = vsub.f32 %v3818, %v3819
    %v3821 = vand.u32 %v3820, 4294901760
    %3822 = vmatpush1.msra.mxu0 %v3821
    %v3823 = vand.u32 %v3683, 4294901760
    %v3824 = vsub.f32 %v3683, %v3823
    %v3825 = vand.u32 %v3824, 4294901760
    %v3826 = vsub.f32 %v3824, %v3825
    %v3827 = vand.u32 %v3826, 4294901760
    %3828 = vmatprep.subr.mxu0 %v3827
    %v3829 = vand.u32 %v3682, 4294901760
    %v3830 = vsub.f32 %v3682, %v3829
    %v3831 = vand.u32 %v3830, 4294901760
    %v3832 = vsub.f32 %v3830, %v3831
    %v3833 = vand.u32 %v3832, 4294901760
    %3834 = vmatpush1.msra.mxu0 %v3833
    %v3835 = vand.u32 %v3685, 4294901760
    %v3836 = vsub.f32 %v3685, %v3835
    %v3837 = vand.u32 %v3836, 4294901760
    %v3838 = vsub.f32 %v3836, %v3837
    %v3839 = vand.u32 %v3838, 4294901760
    %3840 = vmatprep.subr.mxu0 %v3839
    %v3841 = vand.u32 %v3684, 4294901760
    %v3842 = vsub.f32 %v3684, %v3841
    %v3843 = vand.u32 %v3842, 4294901760
    %v3844 = vsub.f32 %v3842, %v3843
    %v3845 = vand.u32 %v3844, 4294901760
    %3846 = vmatpush1.msra.mxu0 %v3845
    %v3847 = vand.u32 %v3692, 4294901760
    %v3848 = vsub.f32 %v3692, %v3847
    %v3849 = vand.u32 %v3848, 4294901760
    %v3850 = vsub.f32 %v3848, %v3849
    %v3851 = vand.u32 %v3850, 4294901760
    %3852 = vmatprep.subr.mxu0 %v3851
    %v3853 = vand.u32 %v3689, 4294901760
    %v3854 = vsub.f32 %v3689, %v3853
    %v3855 = vand.u32 %v3854, 4294901760
    %v3856 = vsub.f32 %v3854, %v3855
    %v3857 = vand.u32 %v3856, 4294901760
    %3858 = vmatpush1.msra.mxu0 %v3857
    %3859 = vmatprep.subr.mxu0 0.0
    %3860 = vmatpush1.msra.mxu0 0.0
    %3861 = vmatprep.subr.mxu0 0.0
    %3862 = vmatpush1.msra.mxu0 0.0
    %3863 = vmatprep.subr.mxu0 0.0
    %3864 = vmatpush1.msra.mxu0 0.0
    %3865 = vmatprep.subr.mxu0 0.0
    %3866 = vmatpush1.msra.mxu0 0.0
    %3867 = vmatprep.subr.mxu0 0.0
    %3868 = vmatpush1.msra.mxu0 0.0
    %3869 = vmatprep.subr.mxu0 0.0
    %3870 = vmatpush1.msra.mxu0 0.0
    %3871 = vmatprep.subr.mxu0 0.0
    %3872 = vmatpush1.msra.mxu0 0.0
    %3873 = vmatprep.subr.mxu0 0.0
    %3874 = vmatpush1.msra.mxu0 0.0
    %3875 = vmatprep.subr.mxu0 0.0
    %3876 = vmatpush1.msra.mxu0 0.0
    %3877 = vmatprep.subr.mxu0 0.0
    %3878 = vmatpush1.msra.mxu0 0.0
    %3879 = vmatprep.subr.mxu0 0.0
    %3880 = vmatpush1.msra.mxu0 0.0
    %3881 = vmatprep.subr.mxu0 0.0
    %3882 = vmatpush1.msra.mxu0 0.0
    %3883 = vmatprep.subr.mxu0 0.0
    %3884 = vmatpush1.msra.mxu0 0.0
    %3885 = vmatprep.subr.mxu0 0.0
    %3886 = vmatpush1.msra.mxu0 0.0
    %3887 = vmatprep.subr.mxu0 0.0
    %3888 = vmatpush1.msra.mxu0 0.0
    %3889 = vmatprep.subr.mxu0 0.0
    %3890 = vmatpush1.msra.mxu0 0.0
    %3891 = vmatprep.subr.mxu0 0.0
    %3892 = vmatpush1.msra.mxu0 0.0
    %3893 = vmatprep.subr.mxu0 0.0
    %3894 = vmatpush1.msra.mxu0 0.0
    %3895 = vmatprep.subr.mxu0 0.0
    %3896 = vmatpush1.msra.mxu0 0.0
    %3897 = vmatprep.subr.mxu0 0.0
    %3898 = vmatpush1.msra.mxu0 0.0
    %3899 = vmatprep.subr.mxu0 0.0
    %3900 = vmatpush1.msra.mxu0 0.0
    %3901 = vmatprep.subr.mxu0 0.0
    %3902 = vmatpush1.msra.mxu0 0.0
    %3903 = vmatprep.subr.mxu0 0.0
    %3904 = vmatpush1.msra.mxu0 0.0
    %3905 = vmatprep.subr.mxu0 0.0
    %3906 = vmatpush1.msra.mxu0 0.0
    %3907 = vmatprep.subr.mxu0 0.0
    %3908 = vmatpush1.msra.mxu0 0.0
    %3909 = vmatprep.subr.mxu0 0.0
    %3910 = vmatpush1.msra.mxu0 0.0
    %3911 = vmatprep.subr.mxu0 0.0
    %3912 = vmatpush1.msra.mxu0 0.0
    %3913 = vmatprep.subr.mxu0 0.0
    %3914 = vmatpush1.msra.mxu0 0.0
    %3915 = vmatprep.mubr.f32.mxu0 0.0
    %v3916 = vand.u32 %v35, 4294901760
    %3917 = vmatmul.mubr.f32.gmra.mrb[0].mxu0 %v3916
    %v3918 = vpop.f32.mrb[0].mxu0
    %v3919 = vadd.f32 %v3774, %v3918
    %v3920 = vpop.f32.mrb[0].mxu0
    %v3921 = vadd.f32 %v3776, %v3920
    %3922 = vmatprep.mubr.f32.mxu0 0.0
    %v3923 = vand.u32 %v38, 4294901760
    %3924 = vmatmul.mubr.f32.gmra.mrb[0].mxu0 %v3923
    %v3925 = vpop.f32.mrb[0].mxu0
    %v3926 = vadd.f32 %v3785, %v3925
    %v3927 = vpop.f32.mrb[0].mxu0
    %v3928 = vadd.f32 %v3787, %v3927
    %3929 = vmatprep.mubr.f32.mxu0 0.0
    %v3930 = vand.u32 %v41, 4294901760
    %3931 = vmatmul.mubr.f32.gmra.mrb[0].mxu0 %v3930
    %v3932 = vpop.f32.mrb[0].mxu0
    %v3933 = vadd.f32 %v3796, %v3932
    %v3934 = vpop.f32.mrb[0].mxu0
    %v3935 = vadd.f32 %v3798, %v3934
    %3936 = vmatprep.mubr.f32.mxu0 0.0
    %v3937 = vand.u32 %v44, 4294901760
    %3938 = vmatmul.mubr.f32.gmra.mrb[0].mxu0 %v3937
    %v3939 = vpop.f32.mrb[0].mxu0
    %v3940 = vadd.f32 %v3807, %v3939
    %v3941 = vpop.f32.mrb[0].mxu0
    %v3942 = vadd.f32 %v3809, %v3941
    %3943 = vdwg.mxu0
    %v3944 = vand.u32 %v3681, 4294901760
    %v3945 = vsub.f32 %v3681, %v3944
    %3946 = vmatprep.subr.mxu0 %v3945
    %v3947 = vand.u32 %v3680, 4294901760
    %v3948 = vsub.f32 %v3680, %v3947
    %3949 = vmatpush1.msra.mxu0 %v3948
    %v3950 = vand.u32 %v3683, 4294901760
    %v3951 = vsub.f32 %v3683, %v3950
    %3952 = vmatprep.subr.mxu0 %v3951
    %v3953 = vand.u32 %v3682, 4294901760
    %v3954 = vsub.f32 %v3682, %v3953
    %3955 = vmatpush1.msra.mxu0 %v3954
    %v3956 = vand.u32 %v3685, 4294901760
    %v3957 = vsub.f32 %v3685, %v3956
    %3958 = vmatprep.subr.mxu0 %v3957
    %v3959 = vand.u32 %v3684, 4294901760
    %v3960 = vsub.f32 %v3684, %v3959
    %3961 = vmatpush1.msra.mxu0 %v3960
    %v3962 = vand.u32 %v3692, 4294901760
    %v3963 = vsub.f32 %v3692, %v3962
    %3964 = vmatprep.subr.mxu0 %v3963
    %v3965 = vand.u32 %v3689, 4294901760
    %v3966 = vsub.f32 %v3689, %v3965
    %3967 = vmatpush1.msra.mxu0 %v3966
    %3968 = vmatprep.subr.mxu0 0.0
    %3969 = vmatpush1.msra.mxu0 0.0
    %3970 = vmatprep.subr.mxu0 0.0
    %3971 = vmatpush1.msra.mxu0 0.0
    %3972 = vmatprep.subr.mxu0 0.0
    %3973 = vmatpush1.msra.mxu0 0.0
    %3974 = vmatprep.subr.mxu0 0.0
    %3975 = vmatpush1.msra.mxu0 0.0
    %3976 = vmatprep.subr.mxu0 0.0
    %3977 = vmatpush1.msra.mxu0 0.0
    %3978 = vmatprep.subr.mxu0 0.0
    %3979 = vmatpush1.msra.mxu0 0.0
    %3980 = vmatprep.subr.mxu0 0.0
    %3981 = vmatpush1.msra.mxu0 0.0
    %3982 = vmatprep.subr.mxu0 0.0
    %3983 = vmatpush1.msra.mxu0 0.0
    %3984 = vmatprep.subr.mxu0 0.0
    %3985 = vmatpush1.msra.mxu0 0.0
    %3986 = vmatprep.subr.mxu0 0.0
    %3987 = vmatpush1.msra.mxu0 0.0
    %3988 = vmatprep.subr.mxu0 0.0
    %3989 = vmatpush1.msra.mxu0 0.0
    %3990 = vmatprep.subr.mxu0 0.0
    %3991 = vmatpush1.msra.mxu0 0.0
    %3992 = vmatprep.subr.mxu0 0.0
    %3993 = vmatpush1.msra.mxu0 0.0
    %3994 = vmatprep.subr.mxu0 0.0
    %3995 = vmatpush1.msra.mxu0 0.0
    %3996 = vmatprep.subr.mxu0 0.0
    %3997 = vmatpush1.msra.mxu0 0.0
    %3998 = vmatprep.subr.mxu0 0.0
    %3999 = vmatpush1.msra.mxu0 0.0
    %4000 = vmatprep.subr.mxu0 0.0
    %4001 = vmatpush1.msra.mxu0 0.0
    %4002 = vmatprep.subr.mxu0 0.0
    %4003 = vmatpush1.msra.mxu0 0.0
    %4004 = vmatprep.subr.mxu0 0.0
    %4005 = vmatpush1.msra.mxu0 0.0
    %4006 = vmatprep.subr.mxu0 0.0
    %4007 = vmatpush1.msra.mxu0 0.0
    %4008 = vmatprep.subr.mxu0 0.0
    %4009 = vmatpush1.msra.mxu0 0.0
    %4010 = vmatprep.subr.mxu0 0.0
    %4011 = vmatpush1.msra.mxu0 0.0
    %4012 = vmatprep.subr.mxu0 0.0
    %4013 = vmatpush1.msra.mxu0 0.0
    %4014 = vmatprep.subr.mxu0 0.0
    %4015 = vmatpush1.msra.mxu0 0.0
    %4016 = vmatprep.subr.mxu0 0.0
    %4017 = vmatpush1.msra.mxu0 0.0
    %4018 = vmatprep.subr.mxu0 0.0
    %4019 = vmatpush1.msra.mxu0 0.0
    %4020 = vmatprep.subr.mxu0 0.0
    %4021 = vmatpush1.msra.mxu0 0.0
    %4022 = vmatprep.subr.mxu0 0.0
    %4023 = vmatpush1.msra.mxu0 0.0
    %4024 = vmatprep.mubr.f32.mxu0 0.0
    %v4025 = vand.u32 %v35, 4294901760
    %v4026 = vsub.f32 %v35, %v4025
    %4027 = vmatmul.mubr.f32.gmra.mrb[0].mxu0 %v4026
    %v4028 = vpop.f32.mrb[0].mxu0
    %v4029 = vadd.f32 %v3919, %v4028
    %v4030 = vpop.f32.mrb[0].mxu0
    %v4031 = vadd.f32 %v3921, %v4030
    %4032 = vmatprep.mubr.f32.mxu0 0.0
    %v4033 = vand.u32 %v38, 4294901760
    %v4034 = vsub.f32 %v38, %v4033
    %4035 = vmatmul.mubr.f32.gmra.mrb[0].mxu0 %v4034
    %v4036 = vpop.f32.mrb[0].mxu0
    %v4037 = vadd.f32 %v3926, %v4036
    %v4038 = vpop.f32.mrb[0].mxu0
    %v4039 = vadd.f32 %v3928, %v4038
    %4040 = vmatprep.mubr.f32.mxu0 0.0
    %v4041 = vand.u32 %v41, 4294901760
    %v4042 = vsub.f32 %v41, %v4041
    %4043 = vmatmul.mubr.f32.gmra.mrb[0].mxu0 %v4042
    %v4044 = vpop.f32.mrb[0].mxu0
    %v4045 = vadd.f32 %v3933, %v4044
    %v4046 = vpop.f32.mrb[0].mxu0
    %v4047 = vadd.f32 %v3935, %v4046
    %4048 = vmatprep.mubr.f32.mxu0 0.0
    %v4049 = vand.u32 %v44, 4294901760
    %v4050 = vsub.f32 %v44, %v4049
    %4051 = vmatmul.mubr.f32.gmra.mrb[0].mxu0 %v4050
    %v4052 = vpop.f32.mrb[0].mxu0
    %v4053 = vadd.f32 %v3940, %v4052
    %v4054 = vpop.f32.mrb[0].mxu0
    %v4055 = vadd.f32 %v3942, %v4054
    %4056 = vdwg.mxu0
    %v4057 = vand.u32 %v3681, 4294901760
    %4058 = vmatprep.subr.mxu0 %v4057
    %v4059 = vand.u32 %v3680, 4294901760
    %4060 = vmatpush1.msra.mxu0 %v4059
    %v4061 = vand.u32 %v3683, 4294901760
    %4062 = vmatprep.subr.mxu0 %v4061
    %v4063 = vand.u32 %v3682, 4294901760
    %4064 = vmatpush1.msra.mxu0 %v4063
    %v4065 = vand.u32 %v3685, 4294901760
    %4066 = vmatprep.subr.mxu0 %v4065
    %v4067 = vand.u32 %v3684, 4294901760
    %4068 = vmatpush1.msra.mxu0 %v4067
    %v4069 = vand.u32 %v3692, 4294901760
    %4070 = vmatprep.subr.mxu0 %v4069
    %v4071 = vand.u32 %v3689, 4294901760
    %4072 = vmatpush1.msra.mxu0 %v4071
    %4073 = vmatprep.subr.mxu0 0.0
    %4074 = vmatpush1.msra.mxu0 0.0
    %4075 = vmatprep.subr.mxu0 0.0
    %4076 = vmatpush1.msra.mxu0 0.0
    %4077 = vmatprep.subr.mxu0 0.0
    %4078 = vmatpush1.msra.mxu0 0.0
    %4079 = vmatprep.subr.mxu0 0.0
    %4080 = vmatpush1.msra.mxu0 0.0
    %4081 = vmatprep.subr.mxu0 0.0
    %4082 = vmatpush1.msra.mxu0 0.0
    %4083 = vmatprep.subr.mxu0 0.0
    %4084 = vmatpush1.msra.mxu0 0.0
    %4085 = vmatprep.subr.mxu0 0.0
    %4086 = vmatpush1.msra.mxu0 0.0
    %4087 = vmatprep.subr.mxu0 0.0
    %4088 = vmatpush1.msra.mxu0 0.0
    %4089 = vmatprep.subr.mxu0 0.0
    %4090 = vmatpush1.msra.mxu0 0.0
    %4091 = vmatprep.subr.mxu0 0.0
    %4092 = vmatpush1.msra.mxu0 0.0
    %4093 = vmatprep.subr.mxu0 0.0
    %4094 = vmatpush1.msra.mxu0 0.0
    %4095 = vmatprep.subr.mxu0 0.0
    %4096 = vmatpush1.msra.mxu0 0.0
    %4097 = vmatprep.subr.mxu0 0.0
    %4098 = vmatpush1.msra.mxu0 0.0
    %4099 = vmatprep.subr.mxu0 0.0
    %4100 = vmatpush1.msra.mxu0 0.0
    %4101 = vmatprep.subr.mxu0 0.0
    %4102 = vmatpush1.msra.mxu0 0.0
    %4103 = vmatprep.subr.mxu0 0.0
    %4104 = vmatpush1.msra.mxu0 0.0
    %4105 = vmatprep.subr.mxu0 0.0
    %4106 = vmatpush1.msra.mxu0 0.0
    %4107 = vmatprep.subr.mxu0 0.0
    %4108 = vmatpush1.msra.mxu0 0.0
    %4109 = vmatprep.subr.mxu0 0.0
    %4110 = vmatpush1.msra.mxu0 0.0
    %4111 = vmatprep.subr.mxu0 0.0
    %4112 = vmatpush1.msra.mxu0 0.0
    %4113 = vmatprep.subr.mxu0 0.0
    %4114 = vmatpush1.msra.mxu0 0.0
    %4115 = vmatprep.subr.mxu0 0.0
    %4116 = vmatpush1.msra.mxu0 0.0
    %4117 = vmatprep.subr.mxu0 0.0
    %4118 = vmatpush1.msra.mxu0 0.0
    %4119 = vmatprep.subr.mxu0 0.0
    %4120 = vmatpush1.msra.mxu0 0.0
    %4121 = vmatprep.subr.mxu0 0.0
    %4122 = vmatpush1.msra.mxu0 0.0
    %4123 = vmatprep.subr.mxu0 0.0
    %4124 = vmatpush1.msra.mxu0 0.0
    %4125 = vmatprep.subr.mxu0 0.0
    %4126 = vmatpush1.msra.mxu0 0.0
    %4127 = vmatprep.subr.mxu0 0.0
    %4128 = vmatpush1.msra.mxu0 0.0
    %4129 = vmatprep.mubr.f32.mxu0 0.0
    %v4130 = vand.u32 %v35, 4294901760
    %v4131 = vsub.f32 %v35, %v4130
    %v4132 = vand.u32 %v4131, 4294901760
    %4133 = vmatmul.mubr.f32.gmra.mrb[0].mxu0 %v4132
    %v4134 = vpop.f32.mrb[0].mxu0
    %v4135 = vadd.f32 %v4029, %v4134
    %v4136 = vpop.f32.mrb[0].mxu0
    %v4137 = vadd.f32 %v4031, %v4136
    %4138 = vmatprep.mubr.f32.mxu0 0.0
    %v4139 = vand.u32 %v38, 4294901760
    %v4140 = vsub.f32 %v38, %v4139
    %v4141 = vand.u32 %v4140, 4294901760
    %4142 = vmatmul.mubr.f32.gmra.mrb[0].mxu0 %v4141
    %v4143 = vpop.f32.mrb[0].mxu0
    %v4144 = vadd.f32 %v4037, %v4143
    %v4145 = vpop.f32.mrb[0].mxu0
    %v4146 = vadd.f32 %v4039, %v4145
    %4147 = vmatprep.mubr.f32.mxu0 0.0
    %v4148 = vand.u32 %v41, 4294901760
    %v4149 = vsub.f32 %v41, %v4148
    %v4150 = vand.u32 %v4149, 4294901760
    %4151 = vmatmul.mubr.f32.gmra.mrb[0].mxu0 %v4150
    %v4152 = vpop.f32.mrb[0].mxu0
    %v4153 = vadd.f32 %v4045, %v4152
    %v4154 = vpop.f32.mrb[0].mxu0
    %v4155 = vadd.f32 %v4047, %v4154
    %4156 = vmatprep.mubr.f32.mxu0 0.0
    %v4157 = vand.u32 %v44, 4294901760
    %v4158 = vsub.f32 %v44, %v4157
    %v4159 = vand.u32 %v4158, 4294901760
    %4160 = vmatmul.mubr.f32.gmra.mrb[0].mxu0 %v4159
    %v4161 = vpop.f32.mrb[0].mxu0
    %v4162 = vadd.f32 %v4053, %v4161
    %v4163 = vpop.f32.mrb[0].mxu0
    %v4164 = vadd.f32 %v4055, %v4163
    %4165 = vdwg.mxu0
    %v4166 = vand.u32 %v3681, 4294901760
    %v4167 = vsub.f32 %v3681, %v4166
    %v4168 = vand.u32 %v4167, 4294901760
    %4169 = vmatprep.subr.mxu0 %v4168
    %v4170 = vand.u32 %v3680, 4294901760
    %v4171 = vsub.f32 %v3680, %v4170
    %v4172 = vand.u32 %v4171, 4294901760
    %4173 = vmatpush1.msra.mxu0 %v4172
    %v4174 = vand.u32 %v3683, 4294901760
    %v4175 = vsub.f32 %v3683, %v4174
    %v4176 = vand.u32 %v4175, 4294901760
    %4177 = vmatprep.subr.mxu0 %v4176
    %v4178 = vand.u32 %v3682, 4294901760
    %v4179 = vsub.f32 %v3682, %v4178
    %v4180 = vand.u32 %v4179, 4294901760
    %4181 = vmatpush1.msra.mxu0 %v4180
    %v4182 = vand.u32 %v3685, 4294901760
    %v4183 = vsub.f32 %v3685, %v4182
    %v4184 = vand.u32 %v4183, 4294901760
    %4185 = vmatprep.subr.mxu0 %v4184
    %v4186 = vand.u32 %v3684, 4294901760
    %v4187 = vsub.f32 %v3684, %v4186
    %v4188 = vand.u32 %v4187, 4294901760
    %4189 = vmatpush1.msra.mxu0 %v4188
    %v4190 = vand.u32 %v3692, 4294901760
    %v4191 = vsub.f32 %v3692, %v4190
    %v4192 = vand.u32 %v4191, 4294901760
    %4193 = vmatprep.subr.mxu0 %v4192
    %v4194 = vand.u32 %v3689, 4294901760
    %v4195 = vsub.f32 %v3689, %v4194
    %v4196 = vand.u32 %v4195, 4294901760
    %4197 = vmatpush1.msra.mxu0 %v4196
    %4198 = vmatprep.subr.mxu0 0.0
    %4199 = vmatpush1.msra.mxu0 0.0
    %4200 = vmatprep.subr.mxu0 0.0
    %4201 = vmatpush1.msra.mxu0 0.0
    %4202 = vmatprep.subr.mxu0 0.0
    %4203 = vmatpush1.msra.mxu0 0.0
    %4204 = vmatprep.subr.mxu0 0.0
    %4205 = vmatpush1.msra.mxu0 0.0
    %4206 = vmatprep.subr.mxu0 0.0
    %4207 = vmatpush1.msra.mxu0 0.0
    %4208 = vmatprep.subr.mxu0 0.0
    %4209 = vmatpush1.msra.mxu0 0.0
    %4210 = vmatprep.subr.mxu0 0.0
    %4211 = vmatpush1.msra.mxu0 0.0
    %4212 = vmatprep.subr.mxu0 0.0
    %4213 = vmatpush1.msra.mxu0 0.0
    %4214 = vmatprep.subr.mxu0 0.0
    %4215 = vmatpush1.msra.mxu0 0.0
    %4216 = vmatprep.subr.mxu0 0.0
    %4217 = vmatpush1.msra.mxu0 0.0
    %4218 = vmatprep.subr.mxu0 0.0
    %4219 = vmatpush1.msra.mxu0 0.0
    %4220 = vmatprep.subr.mxu0 0.0
    %4221 = vmatpush1.msra.mxu0 0.0
    %4222 = vmatprep.subr.mxu0 0.0
    %4223 = vmatpush1.msra.mxu0 0.0
    %4224 = vmatprep.subr.mxu0 0.0
    %4225 = vmatpush1.msra.mxu0 0.0
    %4226 = vmatprep.subr.mxu0 0.0
    %4227 = vmatpush1.msra.mxu0 0.0
    %4228 = vmatprep.subr.mxu0 0.0
    %4229 = vmatpush1.msra.mxu0 0.0
    %4230 = vmatprep.subr.mxu0 0.0
    %4231 = vmatpush1.msra.mxu0 0.0
    %4232 = vmatprep.subr.mxu0 0.0
    %4233 = vmatpush1.msra.mxu0 0.0
    %4234 = vmatprep.subr.mxu0 0.0
    %4235 = vmatpush1.msra.mxu0 0.0
    %4236 = vmatprep.subr.mxu0 0.0
    %4237 = vmatpush1.msra.mxu0 0.0
    %4238 = vmatprep.subr.mxu0 0.0
    %4239 = vmatpush1.msra.mxu0 0.0
    %4240 = vmatprep.subr.mxu0 0.0
    %4241 = vmatpush1.msra.mxu0 0.0
    %4242 = vmatprep.subr.mxu0 0.0
    %4243 = vmatpush1.msra.mxu0 0.0
    %4244 = vmatprep.subr.mxu0 0.0
    %4245 = vmatpush1.msra.mxu0 0.0
    %4246 = vmatprep.subr.mxu0 0.0
    %4247 = vmatpush1.msra.mxu0 0.0
    %4248 = vmatprep.subr.mxu0 0.0
    %4249 = vmatpush1.msra.mxu0 0.0
    %4250 = vmatprep.subr.mxu0 0.0
    %4251 = vmatpush1.msra.mxu0 0.0
    %4252 = vmatprep.subr.mxu0 0.0
    %4253 = vmatpush1.msra.mxu0 0.0
    %4254 = vmatprep.mubr.f32.mxu0 0.0
    %v4255 = vand.u32 %v35, 4294901760
    %4256 = vmatmul.mubr.f32.gmra.mrb[0].mxu0 %v4255
    %v4257 = vpop.f32.mrb[0].mxu0
    %v4258 = vadd.f32 %v4135, %v4257
    %v4259 = vpop.f32.mrb[0].mxu0
    %v4260 = vadd.f32 %v4137, %v4259
    %4261 = vmatprep.mubr.f32.mxu0 0.0
    %v4262 = vand.u32 %v38, 4294901760
    %4263 = vmatmul.mubr.f32.gmra.mrb[0].mxu0 %v4262
    %v4264 = vpop.f32.mrb[0].mxu0
    %v4265 = vadd.f32 %v4144, %v4264
    %v4266 = vpop.f32.mrb[0].mxu0
    %v4267 = vadd.f32 %v4146, %v4266
    %4268 = vmatprep.mubr.f32.mxu0 0.0
    %v4269 = vand.u32 %v41, 4294901760
    %4270 = vmatmul.mubr.f32.gmra.mrb[0].mxu0 %v4269
    %v4271 = vpop.f32.mrb[0].mxu0
    %v4272 = vadd.f32 %v4153, %v4271
    %v4273 = vpop.f32.mrb[0].mxu0
    %v4274 = vadd.f32 %v4155, %v4273
    %4275 = vmatprep.mubr.f32.mxu0 0.0
    %v4276 = vand.u32 %v44, 4294901760
    %4277 = vmatmul.mubr.f32.gmra.mrb[0].mxu0 %v4276
    %v4278 = vpop.f32.mrb[0].mxu0
    %v4279 = vadd.f32 %v4162, %v4278
    %v4280 = vpop.f32.mrb[0].mxu0
    %v4281 = vadd.f32 %v4164, %v4280
    %4282 = vdwg.mxu0
    %v4283 = vand.u32 %v3681, 4294901760
    %4284 = vmatprep.subr.mxu0 %v4283
    %v4285 = vand.u32 %v3680, 4294901760
    %4286 = vmatpush1.msra.mxu0 %v4285
    %v4287 = vand.u32 %v3683, 4294901760
    %4288 = vmatprep.subr.mxu0 %v4287
    %v4289 = vand.u32 %v3682, 4294901760
    %4290 = vmatpush1.msra.mxu0 %v4289
    %v4291 = vand.u32 %v3685, 4294901760
    %4292 = vmatprep.subr.mxu0 %v4291
    %v4293 = vand.u32 %v3684, 4294901760
    %4294 = vmatpush1.msra.mxu0 %v4293
    %v4295 = vand.u32 %v3692, 4294901760
    %4296 = vmatprep.subr.mxu0 %v4295
    %v4297 = vand.u32 %v3689, 4294901760
    %4298 = vmatpush1.msra.mxu0 %v4297
    %4299 = vmatprep.subr.mxu0 0.0
    %4300 = vmatpush1.msra.mxu0 0.0
    %4301 = vmatprep.subr.mxu0 0.0
    %4302 = vmatpush1.msra.mxu0 0.0
    %4303 = vmatprep.subr.mxu0 0.0
    %4304 = vmatpush1.msra.mxu0 0.0
    %4305 = vmatprep.subr.mxu0 0.0
    %4306 = vmatpush1.msra.mxu0 0.0
    %4307 = vmatprep.subr.mxu0 0.0
    %4308 = vmatpush1.msra.mxu0 0.0
    %4309 = vmatprep.subr.mxu0 0.0
    %4310 = vmatpush1.msra.mxu0 0.0
    %4311 = vmatprep.subr.mxu0 0.0
    %4312 = vmatpush1.msra.mxu0 0.0
    %4313 = vmatprep.subr.mxu0 0.0
    %4314 = vmatpush1.msra.mxu0 0.0
    %4315 = vmatprep.subr.mxu0 0.0
    %4316 = vmatpush1.msra.mxu0 0.0
    %4317 = vmatprep.subr.mxu0 0.0
    %4318 = vmatpush1.msra.mxu0 0.0
    %4319 = vmatprep.subr.mxu0 0.0
    %4320 = vmatpush1.msra.mxu0 0.0
    %4321 = vmatprep.subr.mxu0 0.0
    %4322 = vmatpush1.msra.mxu0 0.0
    %4323 = vmatprep.subr.mxu0 0.0
    %4324 = vmatpush1.msra.mxu0 0.0
    %4325 = vmatprep.subr.mxu0 0.0
    %4326 = vmatpush1.msra.mxu0 0.0
    %4327 = vmatprep.subr.mxu0 0.0
    %4328 = vmatpush1.msra.mxu0 0.0
    %4329 = vmatprep.subr.mxu0 0.0
    %4330 = vmatpush1.msra.mxu0 0.0
    %4331 = vmatprep.subr.mxu0 0.0
    %4332 = vmatpush1.msra.mxu0 0.0
    %4333 = vmatprep.subr.mxu0 0.0
    %4334 = vmatpush1.msra.mxu0 0.0
    %4335 = vmatprep.subr.mxu0 0.0
    %4336 = vmatpush1.msra.mxu0 0.0
    %4337 = vmatprep.subr.mxu0 0.0
    %4338 = vmatpush1.msra.mxu0 0.0
    %4339 = vmatprep.subr.mxu0 0.0
    %4340 = vmatpush1.msra.mxu0 0.0
    %4341 = vmatprep.subr.mxu0 0.0
    %4342 = vmatpush1.msra.mxu0 0.0
    %4343 = vmatprep.subr.mxu0 0.0
    %4344 = vmatpush1.msra.mxu0 0.0
    %4345 = vmatprep.subr.mxu0 0.0
    %4346 = vmatpush1.msra.mxu0 0.0
    %4347 = vmatprep.subr.mxu0 0.0
    %4348 = vmatpush1.msra.mxu0 0.0
    %4349 = vmatprep.subr.mxu0 0.0
    %4350 = vmatpush1.msra.mxu0 0.0
    %4351 = vmatprep.subr.mxu0 0.0
    %4352 = vmatpush1.msra.mxu0 0.0
    %4353 = vmatprep.subr.mxu0 0.0
    %4354 = vmatpush1.msra.mxu0 0.0
    %4355 = vmatprep.mubr.f32.mxu0 0.0
    %v4356 = vand.u32 %v35, 4294901760
    %4357 = vmatmul.mubr.f32.gmra.mrb[0].mxu0 %v4356
    %v4358 = vpop.f32.mrb[0].mxu0
    %v4359 = vadd.f32 %v4258, %v4358
    %v4360 = vpop.f32.mrb[0].mxu0
    %v4361 = vadd.f32 %v4260, %v4360
    %4362 = vmatprep.mubr.f32.mxu0 0.0
    %v4363 = vand.u32 %v38, 4294901760
    %4364 = vmatmul.mubr.f32.gmra.mrb[0].mxu0 %v4363
    %v4365 = vpop.f32.mrb[0].mxu0
    %v4366 = vadd.f32 %v4265, %v4365
    %v4367 = vpop.f32.mrb[0].mxu0
    %v4368 = vadd.f32 %v4267, %v4367
    %4369 = vmatprep.mubr.f32.mxu0 0.0
    %v4370 = vand.u32 %v41, 4294901760
    %4371 = vmatmul.mubr.f32.gmra.mrb[0].mxu0 %v4370
    %v4372 = vpop.f32.mrb[0].mxu0
    %v4373 = vadd.f32 %v4272, %v4372
    %v4374 = vpop.f32.mrb[0].mxu0
    %v4375 = vadd.f32 %v4274, %v4374
    %4376 = vmatprep.mubr.f32.mxu0 0.0
    %v4377 = vand.u32 %v44, 4294901760
    %4378 = vmatmul.mubr.f32.gmra.mrb[0].mxu0 %v4377
    %v4379 = vpop.f32.mrb[0].mxu0
    %v4380 = vadd.f32 %v4279, %v4379
    %v4381 = vpop.f32.mrb[0].mxu0
    %v4382 = vadd.f32 %v4281, %v4381
    %4383 = vdwg.mxu0
    %v4392 = vrot.slane %v4359, 2
    %v4393 = vrot.slane %v4366, 2
    %v4394 = vsel %vm2200, %v4392, %v4393
    %v4395 = vrot.slane %v4361, 2
    %v4396 = vrot.slane %v4368, 2
    %v4397 = vsel %vm2200, %v4395, %v4396
    %v4398 = vrot.slane %v4373, 2
    %v4399 = vsel %vm2200, %v4393, %v4398
    %v4400 = vrot.slane %v4375, 2
    %v4401 = vsel %vm2200, %v4396, %v4400
    %v4402 = vrot.slane %v4380, 2
    %v4403 = vsel %vm2200, %v4398, %v4402
    %v4404 = vrot.slane %v4382, 2
    %v4405 = vsel %vm2200, %v4400, %v4404
    %v4414 = vadd.f32 %v3671, %v4394
    %v4415 = vadd.f32 %v3672, %v4397
    %v4416 = vadd.f32 %v3673, %v4399
    %v4417 = vadd.f32 %v3674, %v4401
    %v4418 = vadd.f32 %v3675, %v4403
    %v4419 = vadd.f32 %v3676, %v4405
    %v4420 = vadd.f32 %v3677, %v4402
    %v4421 = vadd.f32 %v3678, %v4404
    %v4422 = vmax.f32 %v2223, %v4414
    %v4423 = vmax.f32 %v2224, %v4415
    %v4424 = vmax.f32 %v2225, %v4416
    %v4425 = vmax.f32 %v2226, %v4417
    %v4426 = vmax.f32 %v2227, %v4418
    %v4427 = vmax.f32 %v2228, %v4419
    %v4428 = vmax.f32 %v2229, %v4420
    %v4429 = vmax.f32 %v2230, %v4421
    %v4430 = vld [vmem:[%s2] sm:$0x3]
    %v4432 = vlaneseq
    %v4433 = vshrl.u32 %v4432, 7
    %v4434 = vsub.s32 0, %v4433
    %v4435 = vrot.slane %v4430, %v4434
    %v4436 = vlaneseq
    %v4437 = vshrl.u32 %v4436, 7
    %v4438 = vsub.s32 1, %v4437
    %v4439 = vrot.slane %v4430, %v4438
    %v4442 = vadd.f32 %v4422, %v4435
    %v4443 = vadd.f32 %v4423, %v4439
    %v4444 = vadd.f32 %v4424, %v4435
    %v4445 = vadd.f32 %v4425, %v4439
    %v4446 = vadd.f32 %v4426, %v4435
    %v4447 = vadd.f32 %v4427, %v4439
    %v4448 = vadd.f32 %v4428, %v4435
    %v4449 = vadd.f32 %v4429, %v4439
    %v4458 = vrot.slane %v4442, 1
    %v4459 = vrot.slane %v4444, 1
    %v4460 = vsel %vm1456, %v4458, %v4459
    %v4461 = vrot.slane %v4443, 1
    %v4462 = vrot.slane %v4445, 1
    %v4463 = vsel %vm1456, %v4461, %v4462
    %v4464 = vrot.slane %v4446, 1
    %v4465 = vsel %vm1456, %v4459, %v4464
    %v4466 = vrot.slane %v4447, 1
    %v4467 = vsel %vm1456, %v4462, %v4466
    %v4468 = vrot.slane %v4448, 1
    %v4469 = vsel %vm1456, %v4464, %v4468
    %v4470 = vrot.slane %v4449, 1
    %v4471 = vsel %vm1456, %v4466, %v4470
    %v4480 = vmax.f32 %v4442, %v4460
    %v4481 = vmax.f32 %v4443, %v4463
    %v4482 = vmax.f32 %v4444, %v4465
    %v4483 = vmax.f32 %v4445, %v4467
    %v4484 = vmax.f32 %v4446, %v4469
    %v4485 = vmax.f32 %v4447, %v4471
    %v4486 = vmax.f32 %v4448, %v4468
    %v4487 = vmax.f32 %v4449, %v4470
    %v4488 = vmax.f32 %v4480, 0.0
    %v4489 = vmax.f32 %v4481, 0.0
    %v4490 = vmax.f32 %v4482, 0.0
    %v4491 = vmax.f32 %v4483, 0.0
    %v4492 = vmax.f32 %v4484, 0.0
    %v4493 = vmax.f32 %v4485, 0.0
    %v4494 = vmax.f32 %v4486, 0.0
    %v4495 = vmax.f32 %v4487, 0.0
    %4496 = vst [vmem:[#allocation2] sm:$0xff] %v4488
    %4497 = vst [vmem:[#allocation2 + $0x8] sm:$0xff] %v4489
    %4498 = vst [vmem:[#allocation2 + $0x10] sm:$0xff] %v4490
    %4499 = vst [vmem:[#allocation2 + $0x18] sm:$0xff] %v4491
    %4500 = vst [vmem:[#allocation2 + $0x20] sm:$0xff] %v4492
    %4501 = vst [vmem:[#allocation2 + $0x28] sm:$0xff] %v4493
    %4502 = vst [vmem:[#allocation2 + $0x30] sm:$0x1] %v4494
    %4503 = vst [vmem:[#allocation2 + $0x38] sm:$0x1] %v4495
    %s4504 = scalar_lea.vmem %s0, 32
    %v4505 = vld [vmem:[%s4504] sm:$0xff]
    %v4506 = vld [vmem:[%s4504 + $0x8] sm:$0xff]
    %v4507 = vld [vmem:[%s4504 + $0x10] sm:$0xff]
    %v4508 = vld [vmem:[%s4504 + $0x18] sm:$0xf]
    %v4509 = vld [vmem:[%s1] sm:$0xff]
    %v4510 = vld [vmem:[%s1 + $0x8] sm:$0xff]
    %v4511 = vld [vmem:[%s1 + $0x10] sm:$0xff]
    %v4512 = vld [vmem:[%s1 + $0x18] sm:$0xff]
    %v4513 = vld [vmem:[%s1 + $0x20] sm:$0xff]
    %v4514 = vld [vmem:[%s1 + $0x28] sm:$0xff]
    %v4515 = vld [vmem:[%s1 + $0x30] sm:$0xf]
    %v4516 = vld [vmem:[%s1 + $0x38] sm:$0xf]
    %v4518 = vsel %vm33, %v4505, 0
    %v4521 = vsel %vm33, %v4506, 0
    %v4524 = vsel %vm33, %v4507, 0
    %v4527 = vsel %vm33, %v4508, 0
    %v4530 = vsel %vm46, %v4515, 0
    %v4533 = vsel %vm46, %v4516, 0
    %v4535 = vand.u32 %v4510, 4294901760
    %4536 = vmatprep.subr.mxu0 %v4535
    %v4537 = vand.u32 %v4509, 4294901760
    %4538 = vmatpush1.msra.mxu0 %v4537
    %v4539 = vand.u32 %v4512, 4294901760
    %4540 = vmatprep.subr.mxu0 %v4539
    %v4541 = vand.u32 %v4511, 4294901760
    %4542 = vmatpush1.msra.mxu0 %v4541
    %v4543 = vand.u32 %v4514, 4294901760
    %4544 = vmatprep.subr.mxu0 %v4543
    %v4545 = vand.u32 %v4513, 4294901760
    %4546 = vmatpush1.msra.mxu0 %v4545
    %v4547 = vand.u32 %v4533, 4294901760
    %4548 = vmatprep.subr.mxu0 %v4547
    %v4549 = vand.u32 %v4530, 4294901760
    %4550 = vmatpush1.msra.mxu0 %v4549
    %4551 = vmatprep.subr.mxu0 0.0
    %4552 = vmatpush1.msra.mxu0 0.0
    %4553 = vmatprep.subr.mxu0 0.0
    %4554 = vmatpush1.msra.mxu0 0.0
    %4555 = vmatprep.subr.mxu0 0.0
    %4556 = vmatpush1.msra.mxu0 0.0
    %4557 = vmatprep.subr.mxu0 0.0
    %4558 = vmatpush1.msra.mxu0 0.0
    %4559 = vmatprep.subr.mxu0 0.0
    %4560 = vmatpush1.msra.mxu0 0.0
    %4561 = vmatprep.subr.mxu0 0.0
    %4562 = vmatpush1.msra.mxu0 0.0
    %4563 = vmatprep.subr.mxu0 0.0
    %4564 = vmatpush1.msra.mxu0 0.0
    %4565 = vmatprep.subr.mxu0 0.0
    %4566 = vmatpush1.msra.mxu0 0.0
    %4567 = vmatprep.subr.mxu0 0.0
    %4568 = vmatpush1.msra.mxu0 0.0
    %4569 = vmatprep.subr.mxu0 0.0
    %4570 = vmatpush1.msra.mxu0 0.0
    %4571 = vmatprep.subr.mxu0 0.0
    %4572 = vmatpush1.msra.mxu0 0.0
    %4573 = vmatprep.subr.mxu0 0.0
    %4574 = vmatpush1.msra.mxu0 0.0
    %4575 = vmatprep.subr.mxu0 0.0
    %4576 = vmatpush1.msra.mxu0 0.0
    %4577 = vmatprep.subr.mxu0 0.0
    %4578 = vmatpush1.msra.mxu0 0.0
    %4579 = vmatprep.subr.mxu0 0.0
    %4580 = vmatpush1.msra.mxu0 0.0
    %4581 = vmatprep.subr.mxu0 0.0
    %4582 = vmatpush1.msra.mxu0 0.0
    %4583 = vmatprep.subr.mxu0 0.0
    %4584 = vmatpush1.msra.mxu0 0.0
    %4585 = vmatprep.subr.mxu0 0.0
    %4586 = vmatpush1.msra.mxu0 0.0
    %4587 = vmatprep.subr.mxu0 0.0
    %4588 = vmatpush1.msra.mxu0 0.0
    %4589 = vmatprep.subr.mxu0 0.0
    %4590 = vmatpush1.msra.mxu0 0.0
    %4591 = vmatprep.subr.mxu0 0.0
    %4592 = vmatpush1.msra.mxu0 0.0
    %4593 = vmatprep.subr.mxu0 0.0
    %4594 = vmatpush1.msra.mxu0 0.0
    %4595 = vmatprep.subr.mxu0 0.0
    %4596 = vmatpush1.msra.mxu0 0.0
    %4597 = vmatprep.subr.mxu0 0.0
    %4598 = vmatpush1.msra.mxu0 0.0
    %4599 = vmatprep.subr.mxu0 0.0
    %4600 = vmatpush1.msra.mxu0 0.0
    %4601 = vmatprep.subr.mxu0 0.0
    %4602 = vmatpush1.msra.mxu0 0.0
    %4603 = vmatprep.subr.mxu0 0.0
    %4604 = vmatpush1.msra.mxu0 0.0
    %4605 = vmatprep.subr.mxu0 0.0
    %4606 = vmatpush1.msra.mxu0 0.0
    %4607 = vmatprep.mubr.f32.mxu0 0.0
    %v4608 = vand.u32 %v4518, 4294901760
    %v4609 = vsub.f32 %v4518, %v4608
    %v4610 = vand.u32 %v4609, 4294901760
    %v4611 = vsub.f32 %v4609, %v4610
    %v4612 = vand.u32 %v4611, 4294901760
    %4613 = vmatmul.mubr.f32.gmra.mrb[0].mxu0 %v4612
    %v4614 = vpop.f32.mrb[0].mxu0
    %v4615 = vadd.f32 0.0, %v4614
    %v4616 = vpop.f32.mrb[0].mxu0
    %v4617 = vadd.f32 0.0, %v4616
    %4618 = vmatprep.mubr.f32.mxu0 0.0
    %v4619 = vand.u32 %v4521, 4294901760
    %v4620 = vsub.f32 %v4521, %v4619
    %v4621 = vand.u32 %v4620, 4294901760
    %v4622 = vsub.f32 %v4620, %v4621
    %v4623 = vand.u32 %v4622, 4294901760
    %4624 = vmatmul.mubr.f32.gmra.mrb[0].mxu0 %v4623
    %v4625 = vpop.f32.mrb[0].mxu0
    %v4626 = vadd.f32 0.0, %v4625
    %v4627 = vpop.f32.mrb[0].mxu0
    %v4628 = vadd.f32 0.0, %v4627
    %4629 = vmatprep.mubr.f32.mxu0 0.0
    %v4630 = vand.u32 %v4524, 4294901760
    %v4631 = vsub.f32 %v4524, %v4630
    %v4632 = vand.u32 %v4631, 4294901760
    %v4633 = vsub.f32 %v4631, %v4632
    %v4634 = vand.u32 %v4633, 4294901760
    %4635 = vmatmul.mubr.f32.gmra.mrb[0].mxu0 %v4634
    %v4636 = vpop.f32.mrb[0].mxu0
    %v4637 = vadd.f32 0.0, %v4636
    %v4638 = vpop.f32.mrb[0].mxu0
    %v4639 = vadd.f32 0.0, %v4638
    %4640 = vmatprep.mubr.f32.mxu0 0.0
    %v4641 = vand.u32 %v4527, 4294901760
    %v4642 = vsub.f32 %v4527, %v4641
    %v4643 = vand.u32 %v4642, 4294901760
    %v4644 = vsub.f32 %v4642, %v4643
    %v4645 = vand.u32 %v4644, 4294901760
    %4646 = vmatmul.mubr.f32.gmra.mrb[0].mxu0 %v4645
    %v4647 = vpop.f32.mrb[0].mxu0
    %v4648 = vadd.f32 0.0, %v4647
    %v4649 = vpop.f32.mrb[0].mxu0
    %v4650 = vadd.f32 0.0, %v4649
    %4651 = vdwg.mxu0
    %v4652 = vand.u32 %v4510, 4294901760
    %v4653 = vsub.f32 %v4510, %v4652
    %v4654 = vand.u32 %v4653, 4294901760
    %v4655 = vsub.f32 %v4653, %v4654
    %v4656 = vand.u32 %v4655, 4294901760
    %4657 = vmatprep.subr.mxu0 %v4656
    %v4658 = vand.u32 %v4509, 4294901760
    %v4659 = vsub.f32 %v4509, %v4658
    %v4660 = vand.u32 %v4659, 4294901760
    %v4661 = vsub.f32 %v4659, %v4660
    %v4662 = vand.u32 %v4661, 4294901760
    %4663 = vmatpush1.msra.mxu0 %v4662
    %v4664 = vand.u32 %v4512, 4294901760
    %v4665 = vsub.f32 %v4512, %v4664
    %v4666 = vand.u32 %v4665, 4294901760
    %v4667 = vsub.f32 %v4665, %v4666
    %v4668 = vand.u32 %v4667, 4294901760
    %4669 = vmatprep.subr.mxu0 %v4668
    %v4670 = vand.u32 %v4511, 4294901760
    %v4671 = vsub.f32 %v4511, %v4670
    %v4672 = vand.u32 %v4671, 4294901760
    %v4673 = vsub.f32 %v4671, %v4672
    %v4674 = vand.u32 %v4673, 4294901760
    %4675 = vmatpush1.msra.mxu0 %v4674
    %v4676 = vand.u32 %v4514, 4294901760
    %v4677 = vsub.f32 %v4514, %v4676
    %v4678 = vand.u32 %v4677, 4294901760
    %v4679 = vsub.f32 %v4677, %v4678
    %v4680 = vand.u32 %v4679, 4294901760
    %4681 = vmatprep.subr.mxu0 %v4680
    %v4682 = vand.u32 %v4513, 4294901760
    %v4683 = vsub.f32 %v4513, %v4682
    %v4684 = vand.u32 %v4683, 4294901760
    %v4685 = vsub.f32 %v4683, %v4684
    %v4686 = vand.u32 %v4685, 4294901760
    %4687 = vmatpush1.msra.mxu0 %v4686
    %v4688 = vand.u32 %v4533, 4294901760
    %v4689 = vsub.f32 %v4533, %v4688
    %v4690 = vand.u32 %v4689, 4294901760
    %v4691 = vsub.f32 %v4689, %v4690
    %v4692 = vand.u32 %v4691, 4294901760
    %4693 = vmatprep.subr.mxu0 %v4692
    %v4694 = vand.u32 %v4530, 4294901760
    %v4695 = vsub.f32 %v4530, %v4694
    %v4696 = vand.u32 %v4695, 4294901760
    %v4697 = vsub.f32 %v4695, %v4696
    %v4698 = vand.u32 %v4697, 4294901760
    %4699 = vmatpush1.msra.mxu0 %v4698
    %4700 = vmatprep.subr.mxu0 0.0
    %4701 = vmatpush1.msra.mxu0 0.0
    %4702 = vmatprep.subr.mxu0 0.0
    %4703 = vmatpush1.msra.mxu0 0.0
    %4704 = vmatprep.subr.mxu0 0.0
    %4705 = vmatpush1.msra.mxu0 0.0
    %4706 = vmatprep.subr.mxu0 0.0
    %4707 = vmatpush1.msra.mxu0 0.0
    %4708 = vmatprep.subr.mxu0 0.0
    %4709 = vmatpush1.msra.mxu0 0.0
    %4710 = vmatprep.subr.mxu0 0.0
    %4711 = vmatpush1.msra.mxu0 0.0
    %4712 = vmatprep.subr.mxu0 0.0
    %4713 = vmatpush1.msra.mxu0 0.0
    %4714 = vmatprep.subr.mxu0 0.0
    %4715 = vmatpush1.msra.mxu0 0.0
    %4716 = vmatprep.subr.mxu0 0.0
    %4717 = vmatpush1.msra.mxu0 0.0
    %4718 = vmatprep.subr.mxu0 0.0
    %4719 = vmatpush1.msra.mxu0 0.0
    %4720 = vmatprep.subr.mxu0 0.0
    %4721 = vmatpush1.msra.mxu0 0.0
    %4722 = vmatprep.subr.mxu0 0.0
    %4723 = vmatpush1.msra.mxu0 0.0
    %4724 = vmatprep.subr.mxu0 0.0
    %4725 = vmatpush1.msra.mxu0 0.0
    %4726 = vmatprep.subr.mxu0 0.0
    %4727 = vmatpush1.msra.mxu0 0.0
    %4728 = vmatprep.subr.mxu0 0.0
    %4729 = vmatpush1.msra.mxu0 0.0
    %4730 = vmatprep.subr.mxu0 0.0
    %4731 = vmatpush1.msra.mxu0 0.0
    %4732 = vmatprep.subr.mxu0 0.0
    %4733 = vmatpush1.msra.mxu0 0.0
    %4734 = vmatprep.subr.mxu0 0.0
    %4735 = vmatpush1.msra.mxu0 0.0
    %4736 = vmatprep.subr.mxu0 0.0
    %4737 = vmatpush1.msra.mxu0 0.0
    %4738 = vmatprep.subr.mxu0 0.0
    %4739 = vmatpush1.msra.mxu0 0.0
    %4740 = vmatprep.subr.mxu0 0.0
    %4741 = vmatpush1.msra.mxu0 0.0
    %4742 = vmatprep.subr.mxu0 0.0
    %4743 = vmatpush1.msra.mxu0 0.0
    %4744 = vmatprep.subr.mxu0 0.0
    %4745 = vmatpush1.msra.mxu0 0.0
    %4746 = vmatprep.subr.mxu0 0.0
    %4747 = vmatpush1.msra.mxu0 0.0
    %4748 = vmatprep.subr.mxu0 0.0
    %4749 = vmatpush1.msra.mxu0 0.0
    %4750 = vmatprep.subr.mxu0 0.0
    %4751 = vmatpush1.msra.mxu0 0.0
    %4752 = vmatprep.subr.mxu0 0.0
    %4753 = vmatpush1.msra.mxu0 0.0
    %4754 = vmatprep.subr.mxu0 0.0
    %4755 = vmatpush1.msra.mxu0 0.0
    %4756 = vmatprep.mubr.f32.mxu0 0.0
    %v4757 = vand.u32 %v4518, 4294901760
    %4758 = vmatmul.mubr.f32.gmra.mrb[0].mxu0 %v4757
    %v4759 = vpop.f32.mrb[0].mxu0
    %v4760 = vadd.f32 %v4615, %v4759
    %v4761 = vpop.f32.mrb[0].mxu0
    %v4762 = vadd.f32 %v4617, %v4761
    %4763 = vmatprep.mubr.f32.mxu0 0.0
    %v4764 = vand.u32 %v4521, 4294901760
    %4765 = vmatmul.mubr.f32.gmra.mrb[0].mxu0 %v4764
    %v4766 = vpop.f32.mrb[0].mxu0
    %v4767 = vadd.f32 %v4626, %v4766
    %v4768 = vpop.f32.mrb[0].mxu0
    %v4769 = vadd.f32 %v4628, %v4768
    %4770 = vmatprep.mubr.f32.mxu0 0.0
    %v4771 = vand.u32 %v4524, 4294901760
    %4772 = vmatmul.mubr.f32.gmra.mrb[0].mxu0 %v4771
    %v4773 = vpop.f32.mrb[0].mxu0
    %v4774 = vadd.f32 %v4637, %v4773
    %v4775 = vpop.f32.mrb[0].mxu0
    %v4776 = vadd.f32 %v4639, %v4775
    %4777 = vmatprep.mubr.f32.mxu0 0.0
    %v4778 = vand.u32 %v4527, 4294901760
    %4779 = vmatmul.mubr.f32.gmra.mrb[0].mxu0 %v4778
    %v4780 = vpop.f32.mrb[0].mxu0
    %v4781 = vadd.f32 %v4648, %v4780
    %v4782 = vpop.f32.mrb[0].mxu0
    %v4783 = vadd.f32 %v4650, %v4782
    %4784 = vdwg.mxu0
    %v4785 = vand.u32 %v4510, 4294901760
    %v4786 = vsub.f32 %v4510, %v4785
    %4787 = vmatprep.subr.mxu0 %v4786
    %v4788 = vand.u32 %v4509, 4294901760
    %v4789 = vsub.f32 %v4509, %v4788
    %4790 = vmatpush1.msra.mxu0 %v4789
    %v4791 = vand.u32 %v4512, 4294901760
    %v4792 = vsub.f32 %v4512, %v4791
    %4793 = vmatprep.subr.mxu0 %v4792
    %v4794 = vand.u32 %v4511, 4294901760
    %v4795 = vsub.f32 %v4511, %v4794
    %4796 = vmatpush1.msra.mxu0 %v4795
    %v4797 = vand.u32 %v4514, 4294901760
    %v4798 = vsub.f32 %v4514, %v4797
    %4799 = vmatprep.subr.mxu0 %v4798
    %v4800 = vand.u32 %v4513, 4294901760
    %v4801 = vsub.f32 %v4513, %v4800
    %4802 = vmatpush1.msra.mxu0 %v4801
    %v4803 = vand.u32 %v4533, 4294901760
    %v4804 = vsub.f32 %v4533, %v4803
    %4805 = vmatprep.subr.mxu0 %v4804
    %v4806 = vand.u32 %v4530, 4294901760
    %v4807 = vsub.f32 %v4530, %v4806
    %4808 = vmatpush1.msra.mxu0 %v4807
    %4809 = vmatprep.subr.mxu0 0.0
    %4810 = vmatpush1.msra.mxu0 0.0
    %4811 = vmatprep.subr.mxu0 0.0
    %4812 = vmatpush1.msra.mxu0 0.0
    %4813 = vmatprep.subr.mxu0 0.0
    %4814 = vmatpush1.msra.mxu0 0.0
    %4815 = vmatprep.subr.mxu0 0.0
    %4816 = vmatpush1.msra.mxu0 0.0
    %4817 = vmatprep.subr.mxu0 0.0
    %4818 = vmatpush1.msra.mxu0 0.0
    %4819 = vmatprep.subr.mxu0 0.0
    %4820 = vmatpush1.msra.mxu0 0.0
    %4821 = vmatprep.subr.mxu0 0.0
    %4822 = vmatpush1.msra.mxu0 0.0
    %4823 = vmatprep.subr.mxu0 0.0
    %4824 = vmatpush1.msra.mxu0 0.0
    %4825 = vmatprep.subr.mxu0 0.0
    %4826 = vmatpush1.msra.mxu0 0.0
    %4827 = vmatprep.subr.mxu0 0.0
    %4828 = vmatpush1.msra.mxu0 0.0
    %4829 = vmatprep.subr.mxu0 0.0
    %4830 = vmatpush1.msra.mxu0 0.0
    %4831 = vmatprep.subr.mxu0 0.0
    %4832 = vmatpush1.msra.mxu0 0.0
    %4833 = vmatprep.subr.mxu0 0.0
    %4834 = vmatpush1.msra.mxu0 0.0
    %4835 = vmatprep.subr.mxu0 0.0
    %4836 = vmatpush1.msra.mxu0 0.0
    %4837 = vmatprep.subr.mxu0 0.0
    %4838 = vmatpush1.msra.mxu0 0.0
    %4839 = vmatprep.subr.mxu0 0.0
    %4840 = vmatpush1.msra.mxu0 0.0
    %4841 = vmatprep.subr.mxu0 0.0
    %4842 = vmatpush1.msra.mxu0 0.0
    %4843 = vmatprep.subr.mxu0 0.0
    %4844 = vmatpush1.msra.mxu0 0.0
    %4845 = vmatprep.subr.mxu0 0.0
    %4846 = vmatpush1.msra.mxu0 0.0
    %4847 = vmatprep.subr.mxu0 0.0
    %4848 = vmatpush1.msra.mxu0 0.0
    %4849 = vmatprep.subr.mxu0 0.0
    %4850 = vmatpush1.msra.mxu0 0.0
    %4851 = vmatprep.subr.mxu0 0.0
    %4852 = vmatpush1.msra.mxu0 0.0
    %4853 = vmatprep.subr.mxu0 0.0
    %4854 = vmatpush1.msra.mxu0 0.0
    %4855 = vmatprep.subr.mxu0 0.0
    %4856 = vmatpush1.msra.mxu0 0.0
    %4857 = vmatprep.subr.mxu0 0.0
    %4858 = vmatpush1.msra.mxu0 0.0
    %4859 = vmatprep.subr.mxu0 0.0
    %4860 = vmatpush1.msra.mxu0 0.0
    %4861 = vmatprep.subr.mxu0 0.0
    %4862 = vmatpush1.msra.mxu0 0.0
    %4863 = vmatprep.subr.mxu0 0.0
    %4864 = vmatpush1.msra.mxu0 0.0
    %4865 = vmatprep.mubr.f32.mxu0 0.0
    %v4866 = vand.u32 %v4518, 4294901760
    %v4867 = vsub.f32 %v4518, %v4866
    %4868 = vmatmul.mubr.f32.gmra.mrb[0].mxu0 %v4867
    %v4869 = vpop.f32.mrb[0].mxu0
    %v4870 = vadd.f32 %v4760, %v4869
    %v4871 = vpop.f32.mrb[0].mxu0
    %v4872 = vadd.f32 %v4762, %v4871
    %4873 = vmatprep.mubr.f32.mxu0 0.0
    %v4874 = vand.u32 %v4521, 4294901760
    %v4875 = vsub.f32 %v4521, %v4874
    %4876 = vmatmul.mubr.f32.gmra.mrb[0].mxu0 %v4875
    %v4877 = vpop.f32.mrb[0].mxu0
    %v4878 = vadd.f32 %v4767, %v4877
    %v4879 = vpop.f32.mrb[0].mxu0
    %v4880 = vadd.f32 %v4769, %v4879
    %4881 = vmatprep.mubr.f32.mxu0 0.0
    %v4882 = vand.u32 %v4524, 4294901760
    %v4883 = vsub.f32 %v4524, %v4882
    %4884 = vmatmul.mubr.f32.gmra.mrb[0].mxu0 %v4883
    %v4885 = vpop.f32.mrb[0].mxu0
    %v4886 = vadd.f32 %v4774, %v4885
    %v4887 = vpop.f32.mrb[0].mxu0
    %v4888 = vadd.f32 %v4776, %v4887
    %4889 = vmatprep.mubr.f32.mxu0 0.0
    %v4890 = vand.u32 %v4527, 4294901760
    %v4891 = vsub.f32 %v4527, %v4890
    %4892 = vmatmul.mubr.f32.gmra.mrb[0].mxu0 %v4891
    %v4893 = vpop.f32.mrb[0].mxu0
    %v4894 = vadd.f32 %v4781, %v4893
    %v4895 = vpop.f32.mrb[0].mxu0
    %v4896 = vadd.f32 %v4783, %v4895
    %4897 = vdwg.mxu0
    %v4898 = vand.u32 %v4510, 4294901760
    %4899 = vmatprep.subr.mxu0 %v4898
    %v4900 = vand.u32 %v4509, 4294901760
    %4901 = vmatpush1.msra.mxu0 %v4900
    %v4902 = vand.u32 %v4512, 4294901760
    %4903 = vmatprep.subr.mxu0 %v4902
    %v4904 = vand.u32 %v4511, 4294901760
    %4905 = vmatpush1.msra.mxu0 %v4904
    %v4906 = vand.u32 %v4514, 4294901760
    %4907 = vmatprep.subr.mxu0 %v4906
    %v4908 = vand.u32 %v4513, 4294901760
    %4909 = vmatpush1.msra.mxu0 %v4908
    %v4910 = vand.u32 %v4533, 4294901760
    %4911 = vmatprep.subr.mxu0 %v4910
    %v4912 = vand.u32 %v4530, 4294901760
    %4913 = vmatpush1.msra.mxu0 %v4912
    %4914 = vmatprep.subr.mxu0 0.0
    %4915 = vmatpush1.msra.mxu0 0.0
    %4916 = vmatprep.subr.mxu0 0.0
    %4917 = vmatpush1.msra.mxu0 0.0
    %4918 = vmatprep.subr.mxu0 0.0
    %4919 = vmatpush1.msra.mxu0 0.0
    %4920 = vmatprep.subr.mxu0 0.0
    %4921 = vmatpush1.msra.mxu0 0.0
    %4922 = vmatprep.subr.mxu0 0.0
    %4923 = vmatpush1.msra.mxu0 0.0
    %4924 = vmatprep.subr.mxu0 0.0
    %4925 = vmatpush1.msra.mxu0 0.0
    %4926 = vmatprep.subr.mxu0 0.0
    %4927 = vmatpush1.msra.mxu0 0.0
    %4928 = vmatprep.subr.mxu0 0.0
    %4929 = vmatpush1.msra.mxu0 0.0
    %4930 = vmatprep.subr.mxu0 0.0
    %4931 = vmatpush1.msra.mxu0 0.0
    %4932 = vmatprep.subr.mxu0 0.0
    %4933 = vmatpush1.msra.mxu0 0.0
    %4934 = vmatprep.subr.mxu0 0.0
    %4935 = vmatpush1.msra.mxu0 0.0
    %4936 = vmatprep.subr.mxu0 0.0
    %4937 = vmatpush1.msra.mxu0 0.0
    %4938 = vmatprep.subr.mxu0 0.0
    %4939 = vmatpush1.msra.mxu0 0.0
    %4940 = vmatprep.subr.mxu0 0.0
    %4941 = vmatpush1.msra.mxu0 0.0
    %4942 = vmatprep.subr.mxu0 0.0
    %4943 = vmatpush1.msra.mxu0 0.0
    %4944 = vmatprep.subr.mxu0 0.0
    %4945 = vmatpush1.msra.mxu0 0.0
    %4946 = vmatprep.subr.mxu0 0.0
    %4947 = vmatpush1.msra.mxu0 0.0
    %4948 = vmatprep.subr.mxu0 0.0
    %4949 = vmatpush1.msra.mxu0 0.0
    %4950 = vmatprep.subr.mxu0 0.0
    %4951 = vmatpush1.msra.mxu0 0.0
    %4952 = vmatprep.subr.mxu0 0.0
    %4953 = vmatpush1.msra.mxu0 0.0
    %4954 = vmatprep.subr.mxu0 0.0
    %4955 = vmatpush1.msra.mxu0 0.0
    %4956 = vmatprep.subr.mxu0 0.0
    %4957 = vmatpush1.msra.mxu0 0.0
    %4958 = vmatprep.subr.mxu0 0.0
    %4959 = vmatpush1.msra.mxu0 0.0
    %4960 = vmatprep.subr.mxu0 0.0
    %4961 = vmatpush1.msra.mxu0 0.0
    %4962 = vmatprep.subr.mxu0 0.0
    %4963 = vmatpush1.msra.mxu0 0.0
    %4964 = vmatprep.subr.mxu0 0.0
    %4965 = vmatpush1.msra.mxu0 0.0
    %4966 = vmatprep.subr.mxu0 0.0
    %4967 = vmatpush1.msra.mxu0 0.0
    %4968 = vmatprep.subr.mxu0 0.0
    %4969 = vmatpush1.msra.mxu0 0.0
    %4970 = vmatprep.mubr.f32.mxu0 0.0
    %v4971 = vand.u32 %v4518, 4294901760
    %v4972 = vsub.f32 %v4518, %v4971
    %v4973 = vand.u32 %v4972, 4294901760
    %4974 = vmatmul.mubr.f32.gmra.mrb[0].mxu0 %v4973
    %v4975 = vpop.f32.mrb[0].mxu0
    %v4976 = vadd.f32 %v4870, %v4975
    %v4977 = vpop.f32.mrb[0].mxu0
    %v4978 = vadd.f32 %v4872, %v4977
    %4979 = vmatprep.mubr.f32.mxu0 0.0
    %v4980 = vand.u32 %v4521, 4294901760
    %v4981 = vsub.f32 %v4521, %v4980
    %v4982 = vand.u32 %v4981, 4294901760
    %4983 = vmatmul.mubr.f32.gmra.mrb[0].mxu0 %v4982
    %v4984 = vpop.f32.mrb[0].mxu0
    %v4985 = vadd.f32 %v4878, %v4984
    %v4986 = vpop.f32.mrb[0].mxu0
    %v4987 = vadd.f32 %v4880, %v4986
    %4988 = vmatprep.mubr.f32.mxu0 0.0
    %v4989 = vand.u32 %v4524, 4294901760
    %v4990 = vsub.f32 %v4524, %v4989
    %v4991 = vand.u32 %v4990, 4294901760
    %4992 = vmatmul.mubr.f32.gmra.mrb[0].mxu0 %v4991
    %v4993 = vpop.f32.mrb[0].mxu0
    %v4994 = vadd.f32 %v4886, %v4993
    %v4995 = vpop.f32.mrb[0].mxu0
    %v4996 = vadd.f32 %v4888, %v4995
    %4997 = vmatprep.mubr.f32.mxu0 0.0
    %v4998 = vand.u32 %v4527, 4294901760
    %v4999 = vsub.f32 %v4527, %v4998
    %v5000 = vand.u32 %v4999, 4294901760
    %5001 = vmatmul.mubr.f32.gmra.mrb[0].mxu0 %v5000
    %v5002 = vpop.f32.mrb[0].mxu0
    %v5003 = vadd.f32 %v4894, %v5002
    %v5004 = vpop.f32.mrb[0].mxu0
    %v5005 = vadd.f32 %v4896, %v5004
    %5006 = vdwg.mxu0
    %v5007 = vand.u32 %v4510, 4294901760
    %v5008 = vsub.f32 %v4510, %v5007
    %v5009 = vand.u32 %v5008, 4294901760
    %5010 = vmatprep.subr.mxu0 %v5009
    %v5011 = vand.u32 %v4509, 4294901760
    %v5012 = vsub.f32 %v4509, %v5011
    %v5013 = vand.u32 %v5012, 4294901760
    %5014 = vmatpush1.msra.mxu0 %v5013
    %v5015 = vand.u32 %v4512, 4294901760
    %v5016 = vsub.f32 %v4512, %v5015
    %v5017 = vand.u32 %v5016, 4294901760
    %5018 = vmatprep.subr.mxu0 %v5017
    %v5019 = vand.u32 %v4511, 4294901760
    %v5020 = vsub.f32 %v4511, %v5019
    %v5021 = vand.u32 %v5020, 4294901760
    %5022 = vmatpush1.msra.mxu0 %v5021
    %v5023 = vand.u32 %v4514, 4294901760
    %v5024 = vsub.f32 %v4514, %v5023
    %v5025 = vand.u32 %v5024, 4294901760
    %5026 = vmatprep.subr.mxu0 %v5025
    %v5027 = vand.u32 %v4513, 4294901760
    %v5028 = vsub.f32 %v4513, %v5027
    %v5029 = vand.u32 %v5028, 4294901760
    %5030 = vmatpush1.msra.mxu0 %v5029
    %v5031 = vand.u32 %v4533, 4294901760
    %v5032 = vsub.f32 %v4533, %v5031
    %v5033 = vand.u32 %v5032, 4294901760
    %5034 = vmatprep.subr.mxu0 %v5033
    %v5035 = vand.u32 %v4530, 4294901760
    %v5036 = vsub.f32 %v4530, %v5035
    %v5037 = vand.u32 %v5036, 4294901760
    %5038 = vmatpush1.msra.mxu0 %v5037
    %5039 = vmatprep.subr.mxu0 0.0
    %5040 = vmatpush1.msra.mxu0 0.0
    %5041 = vmatprep.subr.mxu0 0.0
    %5042 = vmatpush1.msra.mxu0 0.0
    %5043 = vmatprep.subr.mxu0 0.0
    %5044 = vmatpush1.msra.mxu0 0.0
    %5045 = vmatprep.subr.mxu0 0.0
    %5046 = vmatpush1.msra.mxu0 0.0
    %5047 = vmatprep.subr.mxu0 0.0
    %5048 = vmatpush1.msra.mxu0 0.0
    %5049 = vmatprep.subr.mxu0 0.0
    %5050 = vmatpush1.msra.mxu0 0.0
    %5051 = vmatprep.subr.mxu0 0.0
    %5052 = vmatpush1.msra.mxu0 0.0
    %5053 = vmatprep.subr.mxu0 0.0
    %5054 = vmatpush1.msra.mxu0 0.0
    %5055 = vmatprep.subr.mxu0 0.0
    %5056 = vmatpush1.msra.mxu0 0.0
    %5057 = vmatprep.subr.mxu0 0.0
    %5058 = vmatpush1.msra.mxu0 0.0
    %5059 = vmatprep.subr.mxu0 0.0
    %5060 = vmatpush1.msra.mxu0 0.0
    %5061 = vmatprep.subr.mxu0 0.0
    %5062 = vmatpush1.msra.mxu0 0.0
    %5063 = vmatprep.subr.mxu0 0.0
    %5064 = vmatpush1.msra.mxu0 0.0
    %5065 = vmatprep.subr.mxu0 0.0
    %5066 = vmatpush1.msra.mxu0 0.0
    %5067 = vmatprep.subr.mxu0 0.0
    %5068 = vmatpush1.msra.mxu0 0.0
    %5069 = vmatprep.subr.mxu0 0.0
    %5070 = vmatpush1.msra.mxu0 0.0
    %5071 = vmatprep.subr.mxu0 0.0
    %5072 = vmatpush1.msra.mxu0 0.0
    %5073 = vmatprep.subr.mxu0 0.0
    %5074 = vmatpush1.msra.mxu0 0.0
    %5075 = vmatprep.subr.mxu0 0.0
    %5076 = vmatpush1.msra.mxu0 0.0
    %5077 = vmatprep.subr.mxu0 0.0
    %5078 = vmatpush1.msra.mxu0 0.0
    %5079 = vmatprep.subr.mxu0 0.0
    %5080 = vmatpush1.msra.mxu0 0.0
    %5081 = vmatprep.subr.mxu0 0.0
    %5082 = vmatpush1.msra.mxu0 0.0
    %5083 = vmatprep.subr.mxu0 0.0
    %5084 = vmatpush1.msra.mxu0 0.0
    %5085 = vmatprep.subr.mxu0 0.0
    %5086 = vmatpush1.msra.mxu0 0.0
    %5087 = vmatprep.subr.mxu0 0.0
    %5088 = vmatpush1.msra.mxu0 0.0
    %5089 = vmatprep.subr.mxu0 0.0
    %5090 = vmatpush1.msra.mxu0 0.0
    %5091 = vmatprep.subr.mxu0 0.0
    %5092 = vmatpush1.msra.mxu0 0.0
    %5093 = vmatprep.subr.mxu0 0.0
    %5094 = vmatpush1.msra.mxu0 0.0
    %5095 = vmatprep.mubr.f32.mxu0 0.0
    %v5096 = vand.u32 %v4518, 4294901760
    %5097 = vmatmul.mubr.f32.gmra.mrb[0].mxu0 %v5096
    %v5098 = vpop.f32.mrb[0].mxu0
    %v5099 = vadd.f32 %v4976, %v5098
    %v5100 = vpop.f32.mrb[0].mxu0
    %v5101 = vadd.f32 %v4978, %v5100
    %5102 = vmatprep.mubr.f32.mxu0 0.0
    %v5103 = vand.u32 %v4521, 4294901760
    %5104 = vmatmul.mubr.f32.gmra.mrb[0].mxu0 %v5103
    %v5105 = vpop.f32.mrb[0].mxu0
    %v5106 = vadd.f32 %v4985, %v5105
    %v5107 = vpop.f32.mrb[0].mxu0
    %v5108 = vadd.f32 %v4987, %v5107
    %5109 = vmatprep.mubr.f32.mxu0 0.0
    %v5110 = vand.u32 %v4524, 4294901760
    %5111 = vmatmul.mubr.f32.gmra.mrb[0].mxu0 %v5110
    %v5112 = vpop.f32.mrb[0].mxu0
    %v5113 = vadd.f32 %v4994, %v5112
    %v5114 = vpop.f32.mrb[0].mxu0
    %v5115 = vadd.f32 %v4996, %v5114
    %5116 = vmatprep.mubr.f32.mxu0 0.0
    %v5117 = vand.u32 %v4527, 4294901760
    %5118 = vmatmul.mubr.f32.gmra.mrb[0].mxu0 %v5117
    %v5119 = vpop.f32.mrb[0].mxu0
    %v5120 = vadd.f32 %v5003, %v5119
    %v5121 = vpop.f32.mrb[0].mxu0
    %v5122 = vadd.f32 %v5005, %v5121
    %5123 = vdwg.mxu0
    %v5124 = vand.u32 %v4510, 4294901760
    %5125 = vmatprep.subr.mxu0 %v5124
    %v5126 = vand.u32 %v4509, 4294901760
    %5127 = vmatpush1.msra.mxu0 %v5126
    %v5128 = vand.u32 %v4512, 4294901760
    %5129 = vmatprep.subr.mxu0 %v5128
    %v5130 = vand.u32 %v4511, 4294901760
    %5131 = vmatpush1.msra.mxu0 %v5130
    %v5132 = vand.u32 %v4514, 4294901760
    %5133 = vmatprep.subr.mxu0 %v5132
    %v5134 = vand.u32 %v4513, 4294901760
    %5135 = vmatpush1.msra.mxu0 %v5134
    %v5136 = vand.u32 %v4533, 4294901760
    %5137 = vmatprep.subr.mxu0 %v5136
    %v5138 = vand.u32 %v4530, 4294901760
    %5139 = vmatpush1.msra.mxu0 %v5138
    %5140 = vmatprep.subr.mxu0 0.0
    %5141 = vmatpush1.msra.mxu0 0.0
    %5142 = vmatprep.subr.mxu0 0.0
    %5143 = vmatpush1.msra.mxu0 0.0
    %5144 = vmatprep.subr.mxu0 0.0
    %5145 = vmatpush1.msra.mxu0 0.0
    %5146 = vmatprep.subr.mxu0 0.0
    %5147 = vmatpush1.msra.mxu0 0.0
    %5148 = vmatprep.subr.mxu0 0.0
    %5149 = vmatpush1.msra.mxu0 0.0
    %5150 = vmatprep.subr.mxu0 0.0
    %5151 = vmatpush1.msra.mxu0 0.0
    %5152 = vmatprep.subr.mxu0 0.0
    %5153 = vmatpush1.msra.mxu0 0.0
    %5154 = vmatprep.subr.mxu0 0.0
    %5155 = vmatpush1.msra.mxu0 0.0
    %5156 = vmatprep.subr.mxu0 0.0
    %5157 = vmatpush1.msra.mxu0 0.0
    %5158 = vmatprep.subr.mxu0 0.0
    %5159 = vmatpush1.msra.mxu0 0.0
    %5160 = vmatprep.subr.mxu0 0.0
    %5161 = vmatpush1.msra.mxu0 0.0
    %5162 = vmatprep.subr.mxu0 0.0
    %5163 = vmatpush1.msra.mxu0 0.0
    %5164 = vmatprep.subr.mxu0 0.0
    %5165 = vmatpush1.msra.mxu0 0.0
    %5166 = vmatprep.subr.mxu0 0.0
    %5167 = vmatpush1.msra.mxu0 0.0
    %5168 = vmatprep.subr.mxu0 0.0
    %5169 = vmatpush1.msra.mxu0 0.0
    %5170 = vmatprep.subr.mxu0 0.0
    %5171 = vmatpush1.msra.mxu0 0.0
    %5172 = vmatprep.subr.mxu0 0.0
    %5173 = vmatpush1.msra.mxu0 0.0
    %5174 = vmatprep.subr.mxu0 0.0
    %5175 = vmatpush1.msra.mxu0 0.0
    %5176 = vmatprep.subr.mxu0 0.0
    %5177 = vmatpush1.msra.mxu0 0.0
    %5178 = vmatprep.subr.mxu0 0.0
    %5179 = vmatpush1.msra.mxu0 0.0
    %5180 = vmatprep.subr.mxu0 0.0
    %5181 = vmatpush1.msra.mxu0 0.0
    %5182 = vmatprep.subr.mxu0 0.0
    %5183 = vmatpush1.msra.mxu0 0.0
    %5184 = vmatprep.subr.mxu0 0.0
    %5185 = vmatpush1.msra.mxu0 0.0
    %5186 = vmatprep.subr.mxu0 0.0
    %5187 = vmatpush1.msra.mxu0 0.0
    %5188 = vmatprep.subr.mxu0 0.0
    %5189 = vmatpush1.msra.mxu0 0.0
    %5190 = vmatprep.subr.mxu0 0.0
    %5191 = vmatpush1.msra.mxu0 0.0
    %5192 = vmatprep.subr.mxu0 0.0
    %5193 = vmatpush1.msra.mxu0 0.0
    %5194 = vmatprep.subr.mxu0 0.0
    %5195 = vmatpush1.msra.mxu0 0.0
    %5196 = vmatprep.mubr.f32.mxu0 0.0
    %v5197 = vand.u32 %v4518, 4294901760
    %5198 = vmatmul.mubr.f32.gmra.mrb[0].mxu0 %v5197
    %v5199 = vpop.f32.mrb[0].mxu0
    %v5200 = vadd.f32 %v5099, %v5199
    %v5201 = vpop.f32.mrb[0].mxu0
    %v5202 = vadd.f32 %v5101, %v5201
    %5203 = vmatprep.mubr.f32.mxu0 0.0
    %v5204 = vand.u32 %v4521, 4294901760
    %5205 = vmatmul.mubr.f32.gmra.mrb[0].mxu0 %v5204
    %v5206 = vpop.f32.mrb[0].mxu0
    %v5207 = vadd.f32 %v5106, %v5206
    %v5208 = vpop.f32.mrb[0].mxu0
    %v5209 = vadd.f32 %v5108, %v5208
    %5210 = vmatprep.mubr.f32.mxu0 0.0
    %v5211 = vand.u32 %v4524, 4294901760
    %5212 = vmatmul.mubr.f32.gmra.mrb[0].mxu0 %v5211
    %v5213 = vpop.f32.mrb[0].mxu0
    %v5214 = vadd.f32 %v5113, %v5213
    %v5215 = vpop.f32.mrb[0].mxu0
    %v5216 = vadd.f32 %v5115, %v5215
    %5217 = vmatprep.mubr.f32.mxu0 0.0
    %v5218 = vand.u32 %v4527, 4294901760
    %5219 = vmatmul.mubr.f32.gmra.mrb[0].mxu0 %v5218
    %v5220 = vpop.f32.mrb[0].mxu0
    %v5221 = vadd.f32 %v5120, %v5220
    %v5222 = vpop.f32.mrb[0].mxu0
    %v5223 = vadd.f32 %v5122, %v5222
    %5224 = vdwg.mxu0
    %v5225 = vld [vmem:[%s743] sm:$0xff]
    %v5226 = vld [vmem:[%s743 + $0x8] sm:$0xff]
    %v5227 = vld [vmem:[%s743 + $0x10] sm:$0xff]
    %v5228 = vld [vmem:[%s743 + $0x18] sm:$0xff]
    %v5229 = vld [vmem:[%s743 + $0x20] sm:$0xff]
    %v5230 = vld [vmem:[%s743 + $0x28] sm:$0xff]
    %v5231 = vld [vmem:[%s743 + $0x30] sm:$0xf]
    %v5232 = vld [vmem:[%s743 + $0x38] sm:$0xf]
    %v5234 = vsel %vm46, %v5231, 0
    %v5237 = vsel %vm46, %v5232, 0
    %v5239 = vand.u32 %v5226, 4294901760
    %5240 = vmatprep.subr.mxu0 %v5239
    %v5241 = vand.u32 %v5225, 4294901760
    %5242 = vmatpush1.msra.mxu0 %v5241
    %v5243 = vand.u32 %v5228, 4294901760
    %5244 = vmatprep.subr.mxu0 %v5243
    %v5245 = vand.u32 %v5227, 4294901760
    %5246 = vmatpush1.msra.mxu0 %v5245
    %v5247 = vand.u32 %v5230, 4294901760
    %5248 = vmatprep.subr.mxu0 %v5247
    %v5249 = vand.u32 %v5229, 4294901760
    %5250 = vmatpush1.msra.mxu0 %v5249
    %v5251 = vand.u32 %v5237, 4294901760
    %5252 = vmatprep.subr.mxu0 %v5251
    %v5253 = vand.u32 %v5234, 4294901760
    %5254 = vmatpush1.msra.mxu0 %v5253
    %5255 = vmatprep.subr.mxu0 0.0
    %5256 = vmatpush1.msra.mxu0 0.0
    %5257 = vmatprep.subr.mxu0 0.0
    %5258 = vmatpush1.msra.mxu0 0.0
    %5259 = vmatprep.subr.mxu0 0.0
    %5260 = vmatpush1.msra.mxu0 0.0
    %5261 = vmatprep.subr.mxu0 0.0
    %5262 = vmatpush1.msra.mxu0 0.0
    %5263 = vmatprep.subr.mxu0 0.0
    %5264 = vmatpush1.msra.mxu0 0.0
    %5265 = vmatprep.subr.mxu0 0.0
    %5266 = vmatpush1.msra.mxu0 0.0
    %5267 = vmatprep.subr.mxu0 0.0
    %5268 = vmatpush1.msra.mxu0 0.0
    %5269 = vmatprep.subr.mxu0 0.0
    %5270 = vmatpush1.msra.mxu0 0.0
    %5271 = vmatprep.subr.mxu0 0.0
    %5272 = vmatpush1.msra.mxu0 0.0
    %5273 = vmatprep.subr.mxu0 0.0
    %5274 = vmatpush1.msra.mxu0 0.0
    %5275 = vmatprep.subr.mxu0 0.0
    %5276 = vmatpush1.msra.mxu0 0.0
    %5277 = vmatprep.subr.mxu0 0.0
    %5278 = vmatpush1.msra.mxu0 0.0
    %5279 = vmatprep.subr.mxu0 0.0
    %5280 = vmatpush1.msra.mxu0 0.0
    %5281 = vmatprep.subr.mxu0 0.0
    %5282 = vmatpush1.msra.mxu0 0.0
    %5283 = vmatprep.subr.mxu0 0.0
    %5284 = vmatpush1.msra.mxu0 0.0
    %5285 = vmatprep.subr.mxu0 0.0
    %5286 = vmatpush1.msra.mxu0 0.0
    %5287 = vmatprep.subr.mxu0 0.0
    %5288 = vmatpush1.msra.mxu0 0.0
    %5289 = vmatprep.subr.mxu0 0.0
    %5290 = vmatpush1.msra.mxu0 0.0
    %5291 = vmatprep.subr.mxu0 0.0
    %5292 = vmatpush1.msra.mxu0 0.0
    %5293 = vmatprep.subr.mxu0 0.0
    %5294 = vmatpush1.msra.mxu0 0.0
    %5295 = vmatprep.subr.mxu0 0.0
    %5296 = vmatpush1.msra.mxu0 0.0
    %5297 = vmatprep.subr.mxu0 0.0
    %5298 = vmatpush1.msra.mxu0 0.0
    %5299 = vmatprep.subr.mxu0 0.0
    %5300 = vmatpush1.msra.mxu0 0.0
    %5301 = vmatprep.subr.mxu0 0.0
    %5302 = vmatpush1.msra.mxu0 0.0
    %5303 = vmatprep.subr.mxu0 0.0
    %5304 = vmatpush1.msra.mxu0 0.0
    %5305 = vmatprep.subr.mxu0 0.0
    %5306 = vmatpush1.msra.mxu0 0.0
    %5307 = vmatprep.subr.mxu0 0.0
    %5308 = vmatpush1.msra.mxu0 0.0
    %5309 = vmatprep.subr.mxu0 0.0
    %5310 = vmatpush1.msra.mxu0 0.0
    %5311 = vmatprep.mubr.f32.mxu0 0.0
    %v5312 = vand.u32 %v4518, 4294901760
    %v5313 = vsub.f32 %v4518, %v5312
    %v5314 = vand.u32 %v5313, 4294901760
    %v5315 = vsub.f32 %v5313, %v5314
    %v5316 = vand.u32 %v5315, 4294901760
    %5317 = vmatmul.mubr.f32.gmra.mrb[0].mxu0 %v5316
    %v5318 = vpop.f32.mrb[0].mxu0
    %v5319 = vadd.f32 0.0, %v5318
    %v5320 = vpop.f32.mrb[0].mxu0
    %v5321 = vadd.f32 0.0, %v5320
    %5322 = vmatprep.mubr.f32.mxu0 0.0
    %v5323 = vand.u32 %v4521, 4294901760
    %v5324 = vsub.f32 %v4521, %v5323
    %v5325 = vand.u32 %v5324, 4294901760
    %v5326 = vsub.f32 %v5324, %v5325
    %v5327 = vand.u32 %v5326, 4294901760
    %5328 = vmatmul.mubr.f32.gmra.mrb[0].mxu0 %v5327
    %v5329 = vpop.f32.mrb[0].mxu0
    %v5330 = vadd.f32 0.0, %v5329
    %v5331 = vpop.f32.mrb[0].mxu0
    %v5332 = vadd.f32 0.0, %v5331
    %5333 = vmatprep.mubr.f32.mxu0 0.0
    %v5334 = vand.u32 %v4524, 4294901760
    %v5335 = vsub.f32 %v4524, %v5334
    %v5336 = vand.u32 %v5335, 4294901760
    %v5337 = vsub.f32 %v5335, %v5336
    %v5338 = vand.u32 %v5337, 4294901760
    %5339 = vmatmul.mubr.f32.gmra.mrb[0].mxu0 %v5338
    %v5340 = vpop.f32.mrb[0].mxu0
    %v5341 = vadd.f32 0.0, %v5340
    %v5342 = vpop.f32.mrb[0].mxu0
    %v5343 = vadd.f32 0.0, %v5342
    %5344 = vmatprep.mubr.f32.mxu0 0.0
    %v5345 = vand.u32 %v4527, 4294901760
    %v5346 = vsub.f32 %v4527, %v5345
    %v5347 = vand.u32 %v5346, 4294901760
    %v5348 = vsub.f32 %v5346, %v5347
    %v5349 = vand.u32 %v5348, 4294901760
    %5350 = vmatmul.mubr.f32.gmra.mrb[0].mxu0 %v5349
    %v5351 = vpop.f32.mrb[0].mxu0
    %v5352 = vadd.f32 0.0, %v5351
    %v5353 = vpop.f32.mrb[0].mxu0
    %v5354 = vadd.f32 0.0, %v5353
    %5355 = vdwg.mxu0
    %v5356 = vand.u32 %v5226, 4294901760
    %v5357 = vsub.f32 %v5226, %v5356
    %v5358 = vand.u32 %v5357, 4294901760
    %v5359 = vsub.f32 %v5357, %v5358
    %v5360 = vand.u32 %v5359, 4294901760
    %5361 = vmatprep.subr.mxu0 %v5360
    %v5362 = vand.u32 %v5225, 4294901760
    %v5363 = vsub.f32 %v5225, %v5362
    %v5364 = vand.u32 %v5363, 4294901760
    %v5365 = vsub.f32 %v5363, %v5364
    %v5366 = vand.u32 %v5365, 4294901760
    %5367 = vmatpush1.msra.mxu0 %v5366
    %v5368 = vand.u32 %v5228, 4294901760
    %v5369 = vsub.f32 %v5228, %v5368
    %v5370 = vand.u32 %v5369, 4294901760
    %v5371 = vsub.f32 %v5369, %v5370
    %v5372 = vand.u32 %v5371, 4294901760
    %5373 = vmatprep.subr.mxu0 %v5372
    %v5374 = vand.u32 %v5227, 4294901760
    %v5375 = vsub.f32 %v5227, %v5374
    %v5376 = vand.u32 %v5375, 4294901760
    %v5377 = vsub.f32 %v5375, %v5376
    %v5378 = vand.u32 %v5377, 4294901760
    %5379 = vmatpush1.msra.mxu0 %v5378
    %v5380 = vand.u32 %v5230, 4294901760
    %v5381 = vsub.f32 %v5230, %v5380
    %v5382 = vand.u32 %v5381, 4294901760
    %v5383 = vsub.f32 %v5381, %v5382
    %v5384 = vand.u32 %v5383, 4294901760
    %5385 = vmatprep.subr.mxu0 %v5384
    %v5386 = vand.u32 %v5229, 4294901760
    %v5387 = vsub.f32 %v5229, %v5386
    %v5388 = vand.u32 %v5387, 4294901760
    %v5389 = vsub.f32 %v5387, %v5388
    %v5390 = vand.u32 %v5389, 4294901760
    %5391 = vmatpush1.msra.mxu0 %v5390
    %v5392 = vand.u32 %v5237, 4294901760
    %v5393 = vsub.f32 %v5237, %v5392
    %v5394 = vand.u32 %v5393, 4294901760
    %v5395 = vsub.f32 %v5393, %v5394
    %v5396 = vand.u32 %v5395, 4294901760
    %5397 = vmatprep.subr.mxu0 %v5396
    %v5398 = vand.u32 %v5234, 4294901760
    %v5399 = vsub.f32 %v5234, %v5398
    %v5400 = vand.u32 %v5399, 4294901760
    %v5401 = vsub.f32 %v5399, %v5400
    %v5402 = vand.u32 %v5401, 4294901760
    %5403 = vmatpush1.msra.mxu0 %v5402
    %5404 = vmatprep.subr.mxu0 0.0
    %5405 = vmatpush1.msra.mxu0 0.0
    %5406 = vmatprep.subr.mxu0 0.0
    %5407 = vmatpush1.msra.mxu0 0.0
    %5408 = vmatprep.subr.mxu0 0.0
    %5409 = vmatpush1.msra.mxu0 0.0
    %5410 = vmatprep.subr.mxu0 0.0
    %5411 = vmatpush1.msra.mxu0 0.0
    %5412 = vmatprep.subr.mxu0 0.0
    %5413 = vmatpush1.msra.mxu0 0.0
    %5414 = vmatprep.subr.mxu0 0.0
    %5415 = vmatpush1.msra.mxu0 0.0
    %5416 = vmatprep.subr.mxu0 0.0
    %5417 = vmatpush1.msra.mxu0 0.0
    %5418 = vmatprep.subr.mxu0 0.0
    %5419 = vmatpush1.msra.mxu0 0.0
    %5420 = vmatprep.subr.mxu0 0.0
    %5421 = vmatpush1.msra.mxu0 0.0
    %5422 = vmatprep.subr.mxu0 0.0
    %5423 = vmatpush1.msra.mxu0 0.0
    %5424 = vmatprep.subr.mxu0 0.0
    %5425 = vmatpush1.msra.mxu0 0.0
    %5426 = vmatprep.subr.mxu0 0.0
    %5427 = vmatpush1.msra.mxu0 0.0
    %5428 = vmatprep.subr.mxu0 0.0
    %5429 = vmatpush1.msra.mxu0 0.0
    %5430 = vmatprep.subr.mxu0 0.0
    %5431 = vmatpush1.msra.mxu0 0.0
    %5432 = vmatprep.subr.mxu0 0.0
    %5433 = vmatpush1.msra.mxu0 0.0
    %5434 = vmatprep.subr.mxu0 0.0
    %5435 = vmatpush1.msra.mxu0 0.0
    %5436 = vmatprep.subr.mxu0 0.0
    %5437 = vmatpush1.msra.mxu0 0.0
    %5438 = vmatprep.subr.mxu0 0.0
    %5439 = vmatpush1.msra.mxu0 0.0
    %5440 = vmatprep.subr.mxu0 0.0
    %5441 = vmatpush1.msra.mxu0 0.0
    %5442 = vmatprep.subr.mxu0 0.0
    %5443 = vmatpush1.msra.mxu0 0.0
    %5444 = vmatprep.subr.mxu0 0.0
    %5445 = vmatpush1.msra.mxu0 0.0
    %5446 = vmatprep.subr.mxu0 0.0
    %5447 = vmatpush1.msra.mxu0 0.0
    %5448 = vmatprep.subr.mxu0 0.0
    %5449 = vmatpush1.msra.mxu0 0.0
    %5450 = vmatprep.subr.mxu0 0.0
    %5451 = vmatpush1.msra.mxu0 0.0
    %5452 = vmatprep.subr.mxu0 0.0
    %5453 = vmatpush1.msra.mxu0 0.0
    %5454 = vmatprep.subr.mxu0 0.0
    %5455 = vmatpush1.msra.mxu0 0.0
    %5456 = vmatprep.subr.mxu0 0.0
    %5457 = vmatpush1.msra.mxu0 0.0
    %5458 = vmatprep.subr.mxu0 0.0
    %5459 = vmatpush1.msra.mxu0 0.0
    %5460 = vmatprep.mubr.f32.mxu0 0.0
    %v5461 = vand.u32 %v4518, 4294901760
    %5462 = vmatmul.mubr.f32.gmra.mrb[0].mxu0 %v5461
    %v5463 = vpop.f32.mrb[0].mxu0
    %v5464 = vadd.f32 %v5319, %v5463
    %v5465 = vpop.f32.mrb[0].mxu0
    %v5466 = vadd.f32 %v5321, %v5465
    %5467 = vmatprep.mubr.f32.mxu0 0.0
    %v5468 = vand.u32 %v4521, 4294901760
    %5469 = vmatmul.mubr.f32.gmra.mrb[0].mxu0 %v5468
    %v5470 = vpop.f32.mrb[0].mxu0
    %v5471 = vadd.f32 %v5330, %v5470
    %v5472 = vpop.f32.mrb[0].mxu0
    %v5473 = vadd.f32 %v5332, %v5472
    %5474 = vmatprep.mubr.f32.mxu0 0.0
    %v5475 = vand.u32 %v4524, 4294901760
    %5476 = vmatmul.mubr.f32.gmra.mrb[0].mxu0 %v5475
    %v5477 = vpop.f32.mrb[0].mxu0
    %v5478 = vadd.f32 %v5341, %v5477
    %v5479 = vpop.f32.mrb[0].mxu0
    %v5480 = vadd.f32 %v5343, %v5479
    %5481 = vmatprep.mubr.f32.mxu0 0.0
    %v5482 = vand.u32 %v4527, 4294901760
    %5483 = vmatmul.mubr.f32.gmra.mrb[0].mxu0 %v5482
    %v5484 = vpop.f32.mrb[0].mxu0
    %v5485 = vadd.f32 %v5352, %v5484
    %v5486 = vpop.f32.mrb[0].mxu0
    %v5487 = vadd.f32 %v5354, %v5486
    %5488 = vdwg.mxu0
    %v5489 = vand.u32 %v5226, 4294901760
    %v5490 = vsub.f32 %v5226, %v5489
    %5491 = vmatprep.subr.mxu0 %v5490
    %v5492 = vand.u32 %v5225, 4294901760
    %v5493 = vsub.f32 %v5225, %v5492
    %5494 = vmatpush1.msra.mxu0 %v5493
    %v5495 = vand.u32 %v5228, 4294901760
    %v5496 = vsub.f32 %v5228, %v5495
    %5497 = vmatprep.subr.mxu0 %v5496
    %v5498 = vand.u32 %v5227, 4294901760
    %v5499 = vsub.f32 %v5227, %v5498
    %5500 = vmatpush1.msra.mxu0 %v5499
    %v5501 = vand.u32 %v5230, 4294901760
    %v5502 = vsub.f32 %v5230, %v5501
    %5503 = vmatprep.subr.mxu0 %v5502
    %v5504 = vand.u32 %v5229, 4294901760
    %v5505 = vsub.f32 %v5229, %v5504
    %5506 = vmatpush1.msra.mxu0 %v5505
    %v5507 = vand.u32 %v5237, 4294901760
    %v5508 = vsub.f32 %v5237, %v5507
    %5509 = vmatprep.subr.mxu0 %v5508
    %v5510 = vand.u32 %v5234, 4294901760
    %v5511 = vsub.f32 %v5234, %v5510
    %5512 = vmatpush1.msra.mxu0 %v5511
    %5513 = vmatprep.subr.mxu0 0.0
    %5514 = vmatpush1.msra.mxu0 0.0
    %5515 = vmatprep.subr.mxu0 0.0
    %5516 = vmatpush1.msra.mxu0 0.0
    %5517 = vmatprep.subr.mxu0 0.0
    %5518 = vmatpush1.msra.mxu0 0.0
    %5519 = vmatprep.subr.mxu0 0.0
    %5520 = vmatpush1.msra.mxu0 0.0
    %5521 = vmatprep.subr.mxu0 0.0
    %5522 = vmatpush1.msra.mxu0 0.0
    %5523 = vmatprep.subr.mxu0 0.0
    %5524 = vmatpush1.msra.mxu0 0.0
    %5525 = vmatprep.subr.mxu0 0.0
    %5526 = vmatpush1.msra.mxu0 0.0
    %5527 = vmatprep.subr.mxu0 0.0
    %5528 = vmatpush1.msra.mxu0 0.0
    %5529 = vmatprep.subr.mxu0 0.0
    %5530 = vmatpush1.msra.mxu0 0.0
    %5531 = vmatprep.subr.mxu0 0.0
    %5532 = vmatpush1.msra.mxu0 0.0
    %5533 = vmatprep.subr.mxu0 0.0
    %5534 = vmatpush1.msra.mxu0 0.0
    %5535 = vmatprep.subr.mxu0 0.0
    %5536 = vmatpush1.msra.mxu0 0.0
    %5537 = vmatprep.subr.mxu0 0.0
    %5538 = vmatpush1.msra.mxu0 0.0
    %5539 = vmatprep.subr.mxu0 0.0
    %5540 = vmatpush1.msra.mxu0 0.0
    %5541 = vmatprep.subr.mxu0 0.0
    %5542 = vmatpush1.msra.mxu0 0.0
    %5543 = vmatprep.subr.mxu0 0.0
    %5544 = vmatpush1.msra.mxu0 0.0
    %5545 = vmatprep.subr.mxu0 0.0
    %5546 = vmatpush1.msra.mxu0 0.0
    %5547 = vmatprep.subr.mxu0 0.0
    %5548 = vmatpush1.msra.mxu0 0.0
    %5549 = vmatprep.subr.mxu0 0.0
    %5550 = vmatpush1.msra.mxu0 0.0
    %5551 = vmatprep.subr.mxu0 0.0
    %5552 = vmatpush1.msra.mxu0 0.0
    %5553 = vmatprep.subr.mxu0 0.0
    %5554 = vmatpush1.msra.mxu0 0.0
    %5555 = vmatprep.subr.mxu0 0.0
    %5556 = vmatpush1.msra.mxu0 0.0
    %5557 = vmatprep.subr.mxu0 0.0
    %5558 = vmatpush1.msra.mxu0 0.0
    %5559 = vmatprep.subr.mxu0 0.0
    %5560 = vmatpush1.msra.mxu0 0.0
    %5561 = vmatprep.subr.mxu0 0.0
    %5562 = vmatpush1.msra.mxu0 0.0
    %5563 = vmatprep.subr.mxu0 0.0
    %5564 = vmatpush1.msra.mxu0 0.0
    %5565 = vmatprep.subr.mxu0 0.0
    %5566 = vmatpush1.msra.mxu0 0.0
    %5567 = vmatprep.subr.mxu0 0.0
    %5568 = vmatpush1.msra.mxu0 0.0
    %5569 = vmatprep.mubr.f32.mxu0 0.0
    %v5570 = vand.u32 %v4518, 4294901760
    %v5571 = vsub.f32 %v4518, %v5570
    %5572 = vmatmul.mubr.f32.gmra.mrb[0].mxu0 %v5571
    %v5573 = vpop.f32.mrb[0].mxu0
    %v5574 = vadd.f32 %v5464, %v5573
    %v5575 = vpop.f32.mrb[0].mxu0
    %v5576 = vadd.f32 %v5466, %v5575
    %5577 = vmatprep.mubr.f32.mxu0 0.0
    %v5578 = vand.u32 %v4521, 4294901760
    %v5579 = vsub.f32 %v4521, %v5578
    %5580 = vmatmul.mubr.f32.gmra.mrb[0].mxu0 %v5579
    %v5581 = vpop.f32.mrb[0].mxu0
    %v5582 = vadd.f32 %v5471, %v5581
    %v5583 = vpop.f32.mrb[0].mxu0
    %v5584 = vadd.f32 %v5473, %v5583
    %5585 = vmatprep.mubr.f32.mxu0 0.0
    %v5586 = vand.u32 %v4524, 4294901760
    %v5587 = vsub.f32 %v4524, %v5586
    %5588 = vmatmul.mubr.f32.gmra.mrb[0].mxu0 %v5587
    %v5589 = vpop.f32.mrb[0].mxu0
    %v5590 = vadd.f32 %v5478, %v5589
    %v5591 = vpop.f32.mrb[0].mxu0
    %v5592 = vadd.f32 %v5480, %v5591
    %5593 = vmatprep.mubr.f32.mxu0 0.0
    %v5594 = vand.u32 %v4527, 4294901760
    %v5595 = vsub.f32 %v4527, %v5594
    %5596 = vmatmul.mubr.f32.gmra.mrb[0].mxu0 %v5595
    %v5597 = vpop.f32.mrb[0].mxu0
    %v5598 = vadd.f32 %v5485, %v5597
    %v5599 = vpop.f32.mrb[0].mxu0
    %v5600 = vadd.f32 %v5487, %v5599
    %5601 = vdwg.mxu0
    %v5602 = vand.u32 %v5226, 4294901760
    %5603 = vmatprep.subr.mxu0 %v5602
    %v5604 = vand.u32 %v5225, 4294901760
    %5605 = vmatpush1.msra.mxu0 %v5604
    %v5606 = vand.u32 %v5228, 4294901760
    %5607 = vmatprep.subr.mxu0 %v5606
    %v5608 = vand.u32 %v5227, 4294901760
    %5609 = vmatpush1.msra.mxu0 %v5608
    %v5610 = vand.u32 %v5230, 4294901760
    %5611 = vmatprep.subr.mxu0 %v5610
    %v5612 = vand.u32 %v5229, 4294901760
    %5613 = vmatpush1.msra.mxu0 %v5612
    %v5614 = vand.u32 %v5237, 4294901760
    %5615 = vmatprep.subr.mxu0 %v5614
    %v5616 = vand.u32 %v5234, 4294901760
    %5617 = vmatpush1.msra.mxu0 %v5616
    %5618 = vmatprep.subr.mxu0 0.0
    %5619 = vmatpush1.msra.mxu0 0.0
    %5620 = vmatprep.subr.mxu0 0.0
    %5621 = vmatpush1.msra.mxu0 0.0
    %5622 = vmatprep.subr.mxu0 0.0
    %5623 = vmatpush1.msra.mxu0 0.0
    %5624 = vmatprep.subr.mxu0 0.0
    %5625 = vmatpush1.msra.mxu0 0.0
    %5626 = vmatprep.subr.mxu0 0.0
    %5627 = vmatpush1.msra.mxu0 0.0
    %5628 = vmatprep.subr.mxu0 0.0
    %5629 = vmatpush1.msra.mxu0 0.0
    %5630 = vmatprep.subr.mxu0 0.0
    %5631 = vmatpush1.msra.mxu0 0.0
    %5632 = vmatprep.subr.mxu0 0.0
    %5633 = vmatpush1.msra.mxu0 0.0
    %5634 = vmatprep.subr.mxu0 0.0
    %5635 = vmatpush1.msra.mxu0 0.0
    %5636 = vmatprep.subr.mxu0 0.0
    %5637 = vmatpush1.msra.mxu0 0.0
    %5638 = vmatprep.subr.mxu0 0.0
    %5639 = vmatpush1.msra.mxu0 0.0
    %5640 = vmatprep.subr.mxu0 0.0
    %5641 = vmatpush1.msra.mxu0 0.0
    %5642 = vmatprep.subr.mxu0 0.0
    %5643 = vmatpush1.msra.mxu0 0.0
    %5644 = vmatprep.subr.mxu0 0.0
    %5645 = vmatpush1.msra.mxu0 0.0
    %5646 = vmatprep.subr.mxu0 0.0
    %5647 = vmatpush1.msra.mxu0 0.0
    %5648 = vmatprep.subr.mxu0 0.0
    %5649 = vmatpush1.msra.mxu0 0.0
    %5650 = vmatprep.subr.mxu0 0.0
    %5651 = vmatpush1.msra.mxu0 0.0
    %5652 = vmatprep.subr.mxu0 0.0
    %5653 = vmatpush1.msra.mxu0 0.0
    %5654 = vmatprep.subr.mxu0 0.0
    %5655 = vmatpush1.msra.mxu0 0.0
    %5656 = vmatprep.subr.mxu0 0.0
    %5657 = vmatpush1.msra.mxu0 0.0
    %5658 = vmatprep.subr.mxu0 0.0
    %5659 = vmatpush1.msra.mxu0 0.0
    %5660 = vmatprep.subr.mxu0 0.0
    %5661 = vmatpush1.msra.mxu0 0.0
    %5662 = vmatprep.subr.mxu0 0.0
    %5663 = vmatpush1.msra.mxu0 0.0
    %5664 = vmatprep.subr.mxu0 0.0
    %5665 = vmatpush1.msra.mxu0 0.0
    %5666 = vmatprep.subr.mxu0 0.0
    %5667 = vmatpush1.msra.mxu0 0.0
    %5668 = vmatprep.subr.mxu0 0.0
    %5669 = vmatpush1.msra.mxu0 0.0
    %5670 = vmatprep.subr.mxu0 0.0
    %5671 = vmatpush1.msra.mxu0 0.0
    %5672 = vmatprep.subr.mxu0 0.0
    %5673 = vmatpush1.msra.mxu0 0.0
    %5674 = vmatprep.mubr.f32.mxu0 0.0
    %v5675 = vand.u32 %v4518, 4294901760
    %v5676 = vsub.f32 %v4518, %v5675
    %v5677 = vand.u32 %v5676, 4294901760
    %5678 = vmatmul.mubr.f32.gmra.mrb[0].mxu0 %v5677
    %v5679 = vpop.f32.mrb[0].mxu0
    %v5680 = vadd.f32 %v5574, %v5679
    %v5681 = vpop.f32.mrb[0].mxu0
    %v5682 = vadd.f32 %v5576, %v5681
    %5683 = vmatprep.mubr.f32.mxu0 0.0
    %v5684 = vand.u32 %v4521, 4294901760
    %v5685 = vsub.f32 %v4521, %v5684
    %v5686 = vand.u32 %v5685, 4294901760
    %5687 = vmatmul.mubr.f32.gmra.mrb[0].mxu0 %v5686
    %v5688 = vpop.f32.mrb[0].mxu0
    %v5689 = vadd.f32 %v5582, %v5688
    %v5690 = vpop.f32.mrb[0].mxu0
    %v5691 = vadd.f32 %v5584, %v5690
    %5692 = vmatprep.mubr.f32.mxu0 0.0
    %v5693 = vand.u32 %v4524, 4294901760
    %v5694 = vsub.f32 %v4524, %v5693
    %v5695 = vand.u32 %v5694, 4294901760
    %5696 = vmatmul.mubr.f32.gmra.mrb[0].mxu0 %v5695
    %v5697 = vpop.f32.mrb[0].mxu0
    %v5698 = vadd.f32 %v5590, %v5697
    %v5699 = vpop.f32.mrb[0].mxu0
    %v5700 = vadd.f32 %v5592, %v5699
    %5701 = vmatprep.mubr.f32.mxu0 0.0
    %v5702 = vand.u32 %v4527, 4294901760
    %v5703 = vsub.f32 %v4527, %v5702
    %v5704 = vand.u32 %v5703, 4294901760
    %5705 = vmatmul.mubr.f32.gmra.mrb[0].mxu0 %v5704
    %v5706 = vpop.f32.mrb[0].mxu0
    %v5707 = vadd.f32 %v5598, %v5706
    %v5708 = vpop.f32.mrb[0].mxu0
    %v5709 = vadd.f32 %v5600, %v5708
    %5710 = vdwg.mxu0
    %v5711 = vand.u32 %v5226, 4294901760
    %v5712 = vsub.f32 %v5226, %v5711
    %v5713 = vand.u32 %v5712, 4294901760
    %5714 = vmatprep.subr.mxu0 %v5713
    %v5715 = vand.u32 %v5225, 4294901760
    %v5716 = vsub.f32 %v5225, %v5715
    %v5717 = vand.u32 %v5716, 4294901760
    %5718 = vmatpush1.msra.mxu0 %v5717
    %v5719 = vand.u32 %v5228, 4294901760
    %v5720 = vsub.f32 %v5228, %v5719
    %v5721 = vand.u32 %v5720, 4294901760
    %5722 = vmatprep.subr.mxu0 %v5721
    %v5723 = vand.u32 %v5227, 4294901760
    %v5724 = vsub.f32 %v5227, %v5723
    %v5725 = vand.u32 %v5724, 4294901760
    %5726 = vmatpush1.msra.mxu0 %v5725
    %v5727 = vand.u32 %v5230, 4294901760
    %v5728 = vsub.f32 %v5230, %v5727
    %v5729 = vand.u32 %v5728, 4294901760
    %5730 = vmatprep.subr.mxu0 %v5729
    %v5731 = vand.u32 %v5229, 4294901760
    %v5732 = vsub.f32 %v5229, %v5731
    %v5733 = vand.u32 %v5732, 4294901760
    %5734 = vmatpush1.msra.mxu0 %v5733
    %v5735 = vand.u32 %v5237, 4294901760
    %v5736 = vsub.f32 %v5237, %v5735
    %v5737 = vand.u32 %v5736, 4294901760
    %5738 = vmatprep.subr.mxu0 %v5737
    %v5739 = vand.u32 %v5234, 4294901760
    %v5740 = vsub.f32 %v5234, %v5739
    %v5741 = vand.u32 %v5740, 4294901760
    %5742 = vmatpush1.msra.mxu0 %v5741
    %5743 = vmatprep.subr.mxu0 0.0
    %5744 = vmatpush1.msra.mxu0 0.0
    %5745 = vmatprep.subr.mxu0 0.0
    %5746 = vmatpush1.msra.mxu0 0.0
    %5747 = vmatprep.subr.mxu0 0.0
    %5748 = vmatpush1.msra.mxu0 0.0
    %5749 = vmatprep.subr.mxu0 0.0
    %5750 = vmatpush1.msra.mxu0 0.0
    %5751 = vmatprep.subr.mxu0 0.0
    %5752 = vmatpush1.msra.mxu0 0.0
    %5753 = vmatprep.subr.mxu0 0.0
    %5754 = vmatpush1.msra.mxu0 0.0
    %5755 = vmatprep.subr.mxu0 0.0
    %5756 = vmatpush1.msra.mxu0 0.0
    %5757 = vmatprep.subr.mxu0 0.0
    %5758 = vmatpush1.msra.mxu0 0.0
    %5759 = vmatprep.subr.mxu0 0.0
    %5760 = vmatpush1.msra.mxu0 0.0
    %5761 = vmatprep.subr.mxu0 0.0
    %5762 = vmatpush1.msra.mxu0 0.0
    %5763 = vmatprep.subr.mxu0 0.0
    %5764 = vmatpush1.msra.mxu0 0.0
    %5765 = vmatprep.subr.mxu0 0.0
    %5766 = vmatpush1.msra.mxu0 0.0
    %5767 = vmatprep.subr.mxu0 0.0
    %5768 = vmatpush1.msra.mxu0 0.0
    %5769 = vmatprep.subr.mxu0 0.0
    %5770 = vmatpush1.msra.mxu0 0.0
    %5771 = vmatprep.subr.mxu0 0.0
    %5772 = vmatpush1.msra.mxu0 0.0
    %5773 = vmatprep.subr.mxu0 0.0
    %5774 = vmatpush1.msra.mxu0 0.0
    %5775 = vmatprep.subr.mxu0 0.0
    %5776 = vmatpush1.msra.mxu0 0.0
    %5777 = vmatprep.subr.mxu0 0.0
    %5778 = vmatpush1.msra.mxu0 0.0
    %5779 = vmatprep.subr.mxu0 0.0
    %5780 = vmatpush1.msra.mxu0 0.0
    %5781 = vmatprep.subr.mxu0 0.0
    %5782 = vmatpush1.msra.mxu0 0.0
    %5783 = vmatprep.subr.mxu0 0.0
    %5784 = vmatpush1.msra.mxu0 0.0
    %5785 = vmatprep.subr.mxu0 0.0
    %5786 = vmatpush1.msra.mxu0 0.0
    %5787 = vmatprep.subr.mxu0 0.0
    %5788 = vmatpush1.msra.mxu0 0.0
    %5789 = vmatprep.subr.mxu0 0.0
    %5790 = vmatpush1.msra.mxu0 0.0
    %5791 = vmatprep.subr.mxu0 0.0
    %5792 = vmatpush1.msra.mxu0 0.0
    %5793 = vmatprep.subr.mxu0 0.0
    %5794 = vmatpush1.msra.mxu0 0.0
    %5795 = vmatprep.subr.mxu0 0.0
    %5796 = vmatpush1.msra.mxu0 0.0
    %5797 = vmatprep.subr.mxu0 0.0
    %5798 = vmatpush1.msra.mxu0 0.0
    %5799 = vmatprep.mubr.f32.mxu0 0.0
    %v5800 = vand.u32 %v4518, 4294901760
    %5801 = vmatmul.mubr.f32.gmra.mrb[0].mxu0 %v5800
    %v5802 = vpop.f32.mrb[0].mxu0
    %v5803 = vadd.f32 %v5680, %v5802
    %v5804 = vpop.f32.mrb[0].mxu0
    %v5805 = vadd.f32 %v5682, %v5804
    %5806 = vmatprep.mubr.f32.mxu0 0.0
    %v5807 = vand.u32 %v4521, 4294901760
    %5808 = vmatmul.mubr.f32.gmra.mrb[0].mxu0 %v5807
    %v5809 = vpop.f32.mrb[0].mxu0
    %v5810 = vadd.f32 %v5689, %v5809
    %v5811 = vpop.f32.mrb[0].mxu0
    %v5812 = vadd.f32 %v5691, %v5811
    %5813 = vmatprep.mubr.f32.mxu0 0.0
    %v5814 = vand.u32 %v4524, 4294901760
    %5815 = vmatmul.mubr.f32.gmra.mrb[0].mxu0 %v5814
    %v5816 = vpop.f32.mrb[0].mxu0
    %v5817 = vadd.f32 %v5698, %v5816
    %v5818 = vpop.f32.mrb[0].mxu0
    %v5819 = vadd.f32 %v5700, %v5818
    %5820 = vmatprep.mubr.f32.mxu0 0.0
    %v5821 = vand.u32 %v4527, 4294901760
    %5822 = vmatmul.mubr.f32.gmra.mrb[0].mxu0 %v5821
    %v5823 = vpop.f32.mrb[0].mxu0
    %v5824 = vadd.f32 %v5707, %v5823
    %v5825 = vpop.f32.mrb[0].mxu0
    %v5826 = vadd.f32 %v5709, %v5825
    %5827 = vdwg.mxu0
    %v5828 = vand.u32 %v5226, 4294901760
    %5829 = vmatprep.subr.mxu0 %v5828
    %v5830 = vand.u32 %v5225, 4294901760
    %5831 = vmatpush1.msra.mxu0 %v5830
    %v5832 = vand.u32 %v5228, 4294901760
    %5833 = vmatprep.subr.mxu0 %v5832
    %v5834 = vand.u32 %v5227, 4294901760
    %5835 = vmatpush1.msra.mxu0 %v5834
    %v5836 = vand.u32 %v5230, 4294901760
    %5837 = vmatprep.subr.mxu0 %v5836
    %v5838 = vand.u32 %v5229, 4294901760
    %5839 = vmatpush1.msra.mxu0 %v5838
    %v5840 = vand.u32 %v5237, 4294901760
    %5841 = vmatprep.subr.mxu0 %v5840
    %v5842 = vand.u32 %v5234, 4294901760
    %5843 = vmatpush1.msra.mxu0 %v5842
    %5844 = vmatprep.subr.mxu0 0.0
    %5845 = vmatpush1.msra.mxu0 0.0
    %5846 = vmatprep.subr.mxu0 0.0
    %5847 = vmatpush1.msra.mxu0 0.0
    %5848 = vmatprep.subr.mxu0 0.0
    %5849 = vmatpush1.msra.mxu0 0.0
    %5850 = vmatprep.subr.mxu0 0.0
    %5851 = vmatpush1.msra.mxu0 0.0
    %5852 = vmatprep.subr.mxu0 0.0
    %5853 = vmatpush1.msra.mxu0 0.0
    %5854 = vmatprep.subr.mxu0 0.0
    %5855 = vmatpush1.msra.mxu0 0.0
    %5856 = vmatprep.subr.mxu0 0.0
    %5857 = vmatpush1.msra.mxu0 0.0
    %5858 = vmatprep.subr.mxu0 0.0
    %5859 = vmatpush1.msra.mxu0 0.0
    %5860 = vmatprep.subr.mxu0 0.0
    %5861 = vmatpush1.msra.mxu0 0.0
    %5862 = vmatprep.subr.mxu0 0.0
    %5863 = vmatpush1.msra.mxu0 0.0
    %5864 = vmatprep.subr.mxu0 0.0
    %5865 = vmatpush1.msra.mxu0 0.0
    %5866 = vmatprep.subr.mxu0 0.0
    %5867 = vmatpush1.msra.mxu0 0.0
    %5868 = vmatprep.subr.mxu0 0.0
    %5869 = vmatpush1.msra.mxu0 0.0
    %5870 = vmatprep.subr.mxu0 0.0
    %5871 = vmatpush1.msra.mxu0 0.0
    %5872 = vmatprep.subr.mxu0 0.0
    %5873 = vmatpush1.msra.mxu0 0.0
    %5874 = vmatprep.subr.mxu0 0.0
    %5875 = vmatpush1.msra.mxu0 0.0
    %5876 = vmatprep.subr.mxu0 0.0
    %5877 = vmatpush1.msra.mxu0 0.0
    %5878 = vmatprep.subr.mxu0 0.0
    %5879 = vmatpush1.msra.mxu0 0.0
    %5880 = vmatprep.subr.mxu0 0.0
    %5881 = vmatpush1.msra.mxu0 0.0
    %5882 = vmatprep.subr.mxu0 0.0
    %5883 = vmatpush1.msra.mxu0 0.0
    %5884 = vmatprep.subr.mxu0 0.0
    %5885 = vmatpush1.msra.mxu0 0.0
    %5886 = vmatprep.subr.mxu0 0.0
    %5887 = vmatpush1.msra.mxu0 0.0
    %5888 = vmatprep.subr.mxu0 0.0
    %5889 = vmatpush1.msra.mxu0 0.0
    %5890 = vmatprep.subr.mxu0 0.0
    %5891 = vmatpush1.msra.mxu0 0.0
    %5892 = vmatprep.subr.mxu0 0.0
    %5893 = vmatpush1.msra.mxu0 0.0
    %5894 = vmatprep.subr.mxu0 0.0
    %5895 = vmatpush1.msra.mxu0 0.0
    %5896 = vmatprep.subr.mxu0 0.0
    %5897 = vmatpush1.msra.mxu0 0.0
    %5898 = vmatprep.subr.mxu0 0.0
    %5899 = vmatpush1.msra.mxu0 0.0
    %5900 = vmatprep.mubr.f32.mxu0 0.0
    %v5901 = vand.u32 %v4518, 4294901760
    %5902 = vmatmul.mubr.f32.gmra.mrb[0].mxu0 %v5901
    %v5903 = vpop.f32.mrb[0].mxu0
    %v5904 = vadd.f32 %v5803, %v5903
    %v5905 = vpop.f32.mrb[0].mxu0
    %v5906 = vadd.f32 %v5805, %v5905
    %5907 = vmatprep.mubr.f32.mxu0 0.0
    %v5908 = vand.u32 %v4521, 4294901760
    %5909 = vmatmul.mubr.f32.gmra.mrb[0].mxu0 %v5908
    %v5910 = vpop.f32.mrb[0].mxu0
    %v5911 = vadd.f32 %v5810, %v5910
    %v5912 = vpop.f32.mrb[0].mxu0
    %v5913 = vadd.f32 %v5812, %v5912
    %5914 = vmatprep.mubr.f32.mxu0 0.0
    %v5915 = vand.u32 %v4524, 4294901760
    %5916 = vmatmul.mubr.f32.gmra.mrb[0].mxu0 %v5915
    %v5917 = vpop.f32.mrb[0].mxu0
    %v5918 = vadd.f32 %v5817, %v5917
    %v5919 = vpop.f32.mrb[0].mxu0
    %v5920 = vadd.f32 %v5819, %v5919
    %5921 = vmatprep.mubr.f32.mxu0 0.0
    %v5922 = vand.u32 %v4527, 4294901760
    %5923 = vmatmul.mubr.f32.gmra.mrb[0].mxu0 %v5922
    %v5924 = vpop.f32.mrb[0].mxu0
    %v5925 = vadd.f32 %v5824, %v5924
    %v5926 = vpop.f32.mrb[0].mxu0
    %v5927 = vadd.f32 %v5826, %v5926
    %5928 = vdwg.mxu0
    %v5937 = vrot.slane %v5904, 1
    %v5938 = vrot.slane %v5911, 1
    %v5939 = vsel %vm1456, %v5937, %v5938
    %v5940 = vrot.slane %v5906, 1
    %v5941 = vrot.slane %v5913, 1
    %v5942 = vsel %vm1456, %v5940, %v5941
    %v5943 = vrot.slane %v5918, 1
    %v5944 = vsel %vm1456, %v5938, %v5943
    %v5945 = vrot.slane %v5920, 1
    %v5946 = vsel %vm1456, %v5941, %v5945
    %v5947 = vrot.slane %v5925, 1
    %v5948 = vsel %vm1456, %v5943, %v5947
    %v5949 = vrot.slane %v5927, 1
    %v5950 = vsel %vm1456, %v5945, %v5949
    %v5959 = vadd.f32 %v5200, %v5939
    %v5960 = vadd.f32 %v5202, %v5942
    %v5961 = vadd.f32 %v5207, %v5944
    %v5962 = vadd.f32 %v5209, %v5946
    %v5963 = vadd.f32 %v5214, %v5948
    %v5964 = vadd.f32 %v5216, %v5950
    %v5965 = vadd.f32 %v5221, %v5947
    %v5966 = vadd.f32 %v5223, %v5949
    %v5967 = vld [vmem:[%s1487] sm:$0xff]
    %v5968 = vld [vmem:[%s1487 + $0x8] sm:$0xff]
    %v5969 = vld [vmem:[%s1487 + $0x10] sm:$0xff]
    %v5970 = vld [vmem:[%s1487 + $0x18] sm:$0xff]
    %v5971 = vld [vmem:[%s1487 + $0x20] sm:$0xff]
    %v5972 = vld [vmem:[%s1487 + $0x28] sm:$0xff]
    %v5973 = vld [vmem:[%s1487 + $0x30] sm:$0xf]
    %v5974 = vld [vmem:[%s1487 + $0x38] sm:$0xf]
    %v5976 = vsel %vm46, %v5973, 0
    %v5979 = vsel %vm46, %v5974, 0
    %v5981 = vand.u32 %v5968, 4294901760
    %5982 = vmatprep.subr.mxu0 %v5981
    %v5983 = vand.u32 %v5967, 4294901760
    %5984 = vmatpush1.msra.mxu0 %v5983
    %v5985 = vand.u32 %v5970, 4294901760
    %5986 = vmatprep.subr.mxu0 %v5985
    %v5987 = vand.u32 %v5969, 4294901760
    %5988 = vmatpush1.msra.mxu0 %v5987
    %v5989 = vand.u32 %v5972, 4294901760
    %5990 = vmatprep.subr.mxu0 %v5989
    %v5991 = vand.u32 %v5971, 4294901760
    %5992 = vmatpush1.msra.mxu0 %v5991
    %v5993 = vand.u32 %v5979, 4294901760
    %5994 = vmatprep.subr.mxu0 %v5993
    %v5995 = vand.u32 %v5976, 4294901760
    %5996 = vmatpush1.msra.mxu0 %v5995
    %5997 = vmatprep.subr.mxu0 0.0
    %5998 = vmatpush1.msra.mxu0 0.0
    %5999 = vmatprep.subr.mxu0 0.0
    %6000 = vmatpush1.msra.mxu0 0.0
    %6001 = vmatprep.subr.mxu0 0.0
    %6002 = vmatpush1.msra.mxu0 0.0
    %6003 = vmatprep.subr.mxu0 0.0
    %6004 = vmatpush1.msra.mxu0 0.0
    %6005 = vmatprep.subr.mxu0 0.0
    %6006 = vmatpush1.msra.mxu0 0.0
    %6007 = vmatprep.subr.mxu0 0.0
    %6008 = vmatpush1.msra.mxu0 0.0
    %6009 = vmatprep.subr.mxu0 0.0
    %6010 = vmatpush1.msra.mxu0 0.0
    %6011 = vmatprep.subr.mxu0 0.0
    %6012 = vmatpush1.msra.mxu0 0.0
    %6013 = vmatprep.subr.mxu0 0.0
    %6014 = vmatpush1.msra.mxu0 0.0
    %6015 = vmatprep.subr.mxu0 0.0
    %6016 = vmatpush1.msra.mxu0 0.0
    %6017 = vmatprep.subr.mxu0 0.0
    %6018 = vmatpush1.msra.mxu0 0.0
    %6019 = vmatprep.subr.mxu0 0.0
    %6020 = vmatpush1.msra.mxu0 0.0
    %6021 = vmatprep.subr.mxu0 0.0
    %6022 = vmatpush1.msra.mxu0 0.0
    %6023 = vmatprep.subr.mxu0 0.0
    %6024 = vmatpush1.msra.mxu0 0.0
    %6025 = vmatprep.subr.mxu0 0.0
    %6026 = vmatpush1.msra.mxu0 0.0
    %6027 = vmatprep.subr.mxu0 0.0
    %6028 = vmatpush1.msra.mxu0 0.0
    %6029 = vmatprep.subr.mxu0 0.0
    %6030 = vmatpush1.msra.mxu0 0.0
    %6031 = vmatprep.subr.mxu0 0.0
    %6032 = vmatpush1.msra.mxu0 0.0
    %6033 = vmatprep.subr.mxu0 0.0
    %6034 = vmatpush1.msra.mxu0 0.0
    %6035 = vmatprep.subr.mxu0 0.0
    %6036 = vmatpush1.msra.mxu0 0.0
    %6037 = vmatprep.subr.mxu0 0.0
    %6038 = vmatpush1.msra.mxu0 0.0
    %6039 = vmatprep.subr.mxu0 0.0
    %6040 = vmatpush1.msra.mxu0 0.0
    %6041 = vmatprep.subr.mxu0 0.0
    %6042 = vmatpush1.msra.mxu0 0.0
    %6043 = vmatprep.subr.mxu0 0.0
    %6044 = vmatpush1.msra.mxu0 0.0
    %6045 = vmatprep.subr.mxu0 0.0
    %6046 = vmatpush1.msra.mxu0 0.0
    %6047 = vmatprep.subr.mxu0 0.0
    %6048 = vmatpush1.msra.mxu0 0.0
    %6049 = vmatprep.subr.mxu0 0.0
    %6050 = vmatpush1.msra.mxu0 0.0
    %6051 = vmatprep.subr.mxu0 0.0
    %6052 = vmatpush1.msra.mxu0 0.0
    %6053 = vmatprep.mubr.f32.mxu0 0.0
    %v6054 = vand.u32 %v4518, 4294901760
    %v6055 = vsub.f32 %v4518, %v6054
    %v6056 = vand.u32 %v6055, 4294901760
    %v6057 = vsub.f32 %v6055, %v6056
    %v6058 = vand.u32 %v6057, 4294901760
    %6059 = vmatmul.mubr.f32.gmra.mrb[0].mxu0 %v6058
    %v6060 = vpop.f32.mrb[0].mxu0
    %v6061 = vadd.f32 0.0, %v6060
    %v6062 = vpop.f32.mrb[0].mxu0
    %v6063 = vadd.f32 0.0, %v6062
    %6064 = vmatprep.mubr.f32.mxu0 0.0
    %v6065 = vand.u32 %v4521, 4294901760
    %v6066 = vsub.f32 %v4521, %v6065
    %v6067 = vand.u32 %v6066, 4294901760
    %v6068 = vsub.f32 %v6066, %v6067
    %v6069 = vand.u32 %v6068, 4294901760
    %6070 = vmatmul.mubr.f32.gmra.mrb[0].mxu0 %v6069
    %v6071 = vpop.f32.mrb[0].mxu0
    %v6072 = vadd.f32 0.0, %v6071
    %v6073 = vpop.f32.mrb[0].mxu0
    %v6074 = vadd.f32 0.0, %v6073
    %6075 = vmatprep.mubr.f32.mxu0 0.0
    %v6076 = vand.u32 %v4524, 4294901760
    %v6077 = vsub.f32 %v4524, %v6076
    %v6078 = vand.u32 %v6077, 4294901760
    %v6079 = vsub.f32 %v6077, %v6078
    %v6080 = vand.u32 %v6079, 4294901760
    %6081 = vmatmul.mubr.f32.gmra.mrb[0].mxu0 %v6080
    %v6082 = vpop.f32.mrb[0].mxu0
    %v6083 = vadd.f32 0.0, %v6082
    %v6084 = vpop.f32.mrb[0].mxu0
    %v6085 = vadd.f32 0.0, %v6084
    %6086 = vmatprep.mubr.f32.mxu0 0.0
    %v6087 = vand.u32 %v4527, 4294901760
    %v6088 = vsub.f32 %v4527, %v6087
    %v6089 = vand.u32 %v6088, 4294901760
    %v6090 = vsub.f32 %v6088, %v6089
    %v6091 = vand.u32 %v6090, 4294901760
    %6092 = vmatmul.mubr.f32.gmra.mrb[0].mxu0 %v6091
    %v6093 = vpop.f32.mrb[0].mxu0
    %v6094 = vadd.f32 0.0, %v6093
    %v6095 = vpop.f32.mrb[0].mxu0
    %v6096 = vadd.f32 0.0, %v6095
    %6097 = vdwg.mxu0
    %v6098 = vand.u32 %v5968, 4294901760
    %v6099 = vsub.f32 %v5968, %v6098
    %v6100 = vand.u32 %v6099, 4294901760
    %v6101 = vsub.f32 %v6099, %v6100
    %v6102 = vand.u32 %v6101, 4294901760
    %6103 = vmatprep.subr.mxu0 %v6102
    %v6104 = vand.u32 %v5967, 4294901760
    %v6105 = vsub.f32 %v5967, %v6104
    %v6106 = vand.u32 %v6105, 4294901760
    %v6107 = vsub.f32 %v6105, %v6106
    %v6108 = vand.u32 %v6107, 4294901760
    %6109 = vmatpush1.msra.mxu0 %v6108
    %v6110 = vand.u32 %v5970, 4294901760
    %v6111 = vsub.f32 %v5970, %v6110
    %v6112 = vand.u32 %v6111, 4294901760
    %v6113 = vsub.f32 %v6111, %v6112
    %v6114 = vand.u32 %v6113, 4294901760
    %6115 = vmatprep.subr.mxu0 %v6114
    %v6116 = vand.u32 %v5969, 4294901760
    %v6117 = vsub.f32 %v5969, %v6116
    %v6118 = vand.u32 %v6117, 4294901760
    %v6119 = vsub.f32 %v6117, %v6118
    %v6120 = vand.u32 %v6119, 4294901760
    %6121 = vmatpush1.msra.mxu0 %v6120
    %v6122 = vand.u32 %v5972, 4294901760
    %v6123 = vsub.f32 %v5972, %v6122
    %v6124 = vand.u32 %v6123, 4294901760
    %v6125 = vsub.f32 %v6123, %v6124
    %v6126 = vand.u32 %v6125, 4294901760
    %6127 = vmatprep.subr.mxu0 %v6126
    %v6128 = vand.u32 %v5971, 4294901760
    %v6129 = vsub.f32 %v5971, %v6128
    %v6130 = vand.u32 %v6129, 4294901760
    %v6131 = vsub.f32 %v6129, %v6130
    %v6132 = vand.u32 %v6131, 4294901760
    %6133 = vmatpush1.msra.mxu0 %v6132
    %v6134 = vand.u32 %v5979, 4294901760
    %v6135 = vsub.f32 %v5979, %v6134
    %v6136 = vand.u32 %v6135, 4294901760
    %v6137 = vsub.f32 %v6135, %v6136
    %v6138 = vand.u32 %v6137, 4294901760
    %6139 = vmatprep.subr.mxu0 %v6138
    %v6140 = vand.u32 %v5976, 4294901760
    %v6141 = vsub.f32 %v5976, %v6140
    %v6142 = vand.u32 %v6141, 4294901760
    %v6143 = vsub.f32 %v6141, %v6142
    %v6144 = vand.u32 %v6143, 4294901760
    %6145 = vmatpush1.msra.mxu0 %v6144
    %6146 = vmatprep.subr.mxu0 0.0
    %6147 = vmatpush1.msra.mxu0 0.0
    %6148 = vmatprep.subr.mxu0 0.0
    %6149 = vmatpush1.msra.mxu0 0.0
    %6150 = vmatprep.subr.mxu0 0.0
    %6151 = vmatpush1.msra.mxu0 0.0
    %6152 = vmatprep.subr.mxu0 0.0
    %6153 = vmatpush1.msra.mxu0 0.0
    %6154 = vmatprep.subr.mxu0 0.0
    %6155 = vmatpush1.msra.mxu0 0.0
    %6156 = vmatprep.subr.mxu0 0.0
    %6157 = vmatpush1.msra.mxu0 0.0
    %6158 = vmatprep.subr.mxu0 0.0
    %6159 = vmatpush1.msra.mxu0 0.0
    %6160 = vmatprep.subr.mxu0 0.0
    %6161 = vmatpush1.msra.mxu0 0.0
    %6162 = vmatprep.subr.mxu0 0.0
    %6163 = vmatpush1.msra.mxu0 0.0
    %6164 = vmatprep.subr.mxu0 0.0
    %6165 = vmatpush1.msra.mxu0 0.0
    %6166 = vmatprep.subr.mxu0 0.0
    %6167 = vmatpush1.msra.mxu0 0.0
    %6168 = vmatprep.subr.mxu0 0.0
    %6169 = vmatpush1.msra.mxu0 0.0
    %6170 = vmatprep.subr.mxu0 0.0
    %6171 = vmatpush1.msra.mxu0 0.0
    %6172 = vmatprep.subr.mxu0 0.0
    %6173 = vmatpush1.msra.mxu0 0.0
    %6174 = vmatprep.subr.mxu0 0.0
    %6175 = vmatpush1.msra.mxu0 0.0
    %6176 = vmatprep.subr.mxu0 0.0
    %6177 = vmatpush1.msra.mxu0 0.0
    %6178 = vmatprep.subr.mxu0 0.0
    %6179 = vmatpush1.msra.mxu0 0.0
    %6180 = vmatprep.subr.mxu0 0.0
    %6181 = vmatpush1.msra.mxu0 0.0
    %6182 = vmatprep.subr.mxu0 0.0
    %6183 = vmatpush1.msra.mxu0 0.0
    %6184 = vmatprep.subr.mxu0 0.0
    %6185 = vmatpush1.msra.mxu0 0.0
    %6186 = vmatprep.subr.mxu0 0.0
    %6187 = vmatpush1.msra.mxu0 0.0
    %6188 = vmatprep.subr.mxu0 0.0
    %6189 = vmatpush1.msra.mxu0 0.0
    %6190 = vmatprep.subr.mxu0 0.0
    %6191 = vmatpush1.msra.mxu0 0.0
    %6192 = vmatprep.subr.mxu0 0.0
    %6193 = vmatpush1.msra.mxu0 0.0
    %6194 = vmatprep.subr.mxu0 0.0
    %6195 = vmatpush1.msra.mxu0 0.0
    %6196 = vmatprep.subr.mxu0 0.0
    %6197 = vmatpush1.msra.mxu0 0.0
    %6198 = vmatprep.subr.mxu0 0.0
    %6199 = vmatpush1.msra.mxu0 0.0
    %6200 = vmatprep.subr.mxu0 0.0
    %6201 = vmatpush1.msra.mxu0 0.0
    %6202 = vmatprep.mubr.f32.mxu0 0.0
    %v6203 = vand.u32 %v4518, 4294901760
    %6204 = vmatmul.mubr.f32.gmra.mrb[0].mxu0 %v6203
    %v6205 = vpop.f32.mrb[0].mxu0
    %v6206 = vadd.f32 %v6061, %v6205
    %v6207 = vpop.f32.mrb[0].mxu0
    %v6208 = vadd.f32 %v6063, %v6207
    %6209 = vmatprep.mubr.f32.mxu0 0.0
    %v6210 = vand.u32 %v4521, 4294901760
    %6211 = vmatmul.mubr.f32.gmra.mrb[0].mxu0 %v6210
    %v6212 = vpop.f32.mrb[0].mxu0
    %v6213 = vadd.f32 %v6072, %v6212
    %v6214 = vpop.f32.mrb[0].mxu0
    %v6215 = vadd.f32 %v6074, %v6214
    %6216 = vmatprep.mubr.f32.mxu0 0.0
    %v6217 = vand.u32 %v4524, 4294901760
    %6218 = vmatmul.mubr.f32.gmra.mrb[0].mxu0 %v6217
    %v6219 = vpop.f32.mrb[0].mxu0
    %v6220 = vadd.f32 %v6083, %v6219
    %v6221 = vpop.f32.mrb[0].mxu0
    %v6222 = vadd.f32 %v6085, %v6221
    %6223 = vmatprep.mubr.f32.mxu0 0.0
    %v6224 = vand.u32 %v4527, 4294901760
    %6225 = vmatmul.mubr.f32.gmra.mrb[0].mxu0 %v6224
    %v6226 = vpop.f32.mrb[0].mxu0
    %v6227 = vadd.f32 %v6094, %v6226
    %v6228 = vpop.f32.mrb[0].mxu0
    %v6229 = vadd.f32 %v6096, %v6228
    %6230 = vdwg.mxu0
    %v6231 = vand.u32 %v5968, 4294901760
    %v6232 = vsub.f32 %v5968, %v6231
    %6233 = vmatprep.subr.mxu0 %v6232
    %v6234 = vand.u32 %v5967, 4294901760
    %v6235 = vsub.f32 %v5967, %v6234
    %6236 = vmatpush1.msra.mxu0 %v6235
    %v6237 = vand.u32 %v5970, 4294901760
    %v6238 = vsub.f32 %v5970, %v6237
    %6239 = vmatprep.subr.mxu0 %v6238
    %v6240 = vand.u32 %v5969, 4294901760
    %v6241 = vsub.f32 %v5969, %v6240
    %6242 = vmatpush1.msra.mxu0 %v6241
    %v6243 = vand.u32 %v5972, 4294901760
    %v6244 = vsub.f32 %v5972, %v6243
    %6245 = vmatprep.subr.mxu0 %v6244
    %v6246 = vand.u32 %v5971, 4294901760
    %v6247 = vsub.f32 %v5971, %v6246
    %6248 = vmatpush1.msra.mxu0 %v6247
    %v6249 = vand.u32 %v5979, 4294901760
    %v6250 = vsub.f32 %v5979, %v6249
    %6251 = vmatprep.subr.mxu0 %v6250
    %v6252 = vand.u32 %v5976, 4294901760
    %v6253 = vsub.f32 %v5976, %v6252
    %6254 = vmatpush1.msra.mxu0 %v6253
    %6255 = vmatprep.subr.mxu0 0.0
    %6256 = vmatpush1.msra.mxu0 0.0
    %6257 = vmatprep.subr.mxu0 0.0
    %6258 = vmatpush1.msra.mxu0 0.0
    %6259 = vmatprep.subr.mxu0 0.0
    %6260 = vmatpush1.msra.mxu0 0.0
    %6261 = vmatprep.subr.mxu0 0.0
    %6262 = vmatpush1.msra.mxu0 0.0
    %6263 = vmatprep.subr.mxu0 0.0
    %6264 = vmatpush1.msra.mxu0 0.0
    %6265 = vmatprep.subr.mxu0 0.0
    %6266 = vmatpush1.msra.mxu0 0.0
    %6267 = vmatprep.subr.mxu0 0.0
    %6268 = vmatpush1.msra.mxu0 0.0
    %6269 = vmatprep.subr.mxu0 0.0
    %6270 = vmatpush1.msra.mxu0 0.0
    %6271 = vmatprep.subr.mxu0 0.0
    %6272 = vmatpush1.msra.mxu0 0.0
    %6273 = vmatprep.subr.mxu0 0.0
    %6274 = vmatpush1.msra.mxu0 0.0
    %6275 = vmatprep.subr.mxu0 0.0
    %6276 = vmatpush1.msra.mxu0 0.0
    %6277 = vmatprep.subr.mxu0 0.0
    %6278 = vmatpush1.msra.mxu0 0.0
    %6279 = vmatprep.subr.mxu0 0.0
    %6280 = vmatpush1.msra.mxu0 0.0
    %6281 = vmatprep.subr.mxu0 0.0
    %6282 = vmatpush1.msra.mxu0 0.0
    %6283 = vmatprep.subr.mxu0 0.0
    %6284 = vmatpush1.msra.mxu0 0.0
    %6285 = vmatprep.subr.mxu0 0.0
    %6286 = vmatpush1.msra.mxu0 0.0
    %6287 = vmatprep.subr.mxu0 0.0
    %6288 = vmatpush1.msra.mxu0 0.0
    %6289 = vmatprep.subr.mxu0 0.0
    %6290 = vmatpush1.msra.mxu0 0.0
    %6291 = vmatprep.subr.mxu0 0.0
    %6292 = vmatpush1.msra.mxu0 0.0
    %6293 = vmatprep.subr.mxu0 0.0
    %6294 = vmatpush1.msra.mxu0 0.0
    %6295 = vmatprep.subr.mxu0 0.0
    %6296 = vmatpush1.msra.mxu0 0.0
    %6297 = vmatprep.subr.mxu0 0.0
    %6298 = vmatpush1.msra.mxu0 0.0
    %6299 = vmatprep.subr.mxu0 0.0
    %6300 = vmatpush1.msra.mxu0 0.0
    %6301 = vmatprep.subr.mxu0 0.0
    %6302 = vmatpush1.msra.mxu0 0.0
    %6303 = vmatprep.subr.mxu0 0.0
    %6304 = vmatpush1.msra.mxu0 0.0
    %6305 = vmatprep.subr.mxu0 0.0
    %6306 = vmatpush1.msra.mxu0 0.0
    %6307 = vmatprep.subr.mxu0 0.0
    %6308 = vmatpush1.msra.mxu0 0.0
    %6309 = vmatprep.subr.mxu0 0.0
    %6310 = vmatpush1.msra.mxu0 0.0
    %6311 = vmatprep.mubr.f32.mxu0 0.0
    %v6312 = vand.u32 %v4518, 4294901760
    %v6313 = vsub.f32 %v4518, %v6312
    %6314 = vmatmul.mubr.f32.gmra.mrb[0].mxu0 %v6313
    %v6315 = vpop.f32.mrb[0].mxu0
    %v6316 = vadd.f32 %v6206, %v6315
    %v6317 = vpop.f32.mrb[0].mxu0
    %v6318 = vadd.f32 %v6208, %v6317
    %6319 = vmatprep.mubr.f32.mxu0 0.0
    %v6320 = vand.u32 %v4521, 4294901760
    %v6321 = vsub.f32 %v4521, %v6320
    %6322 = vmatmul.mubr.f32.gmra.mrb[0].mxu0 %v6321
    %v6323 = vpop.f32.mrb[0].mxu0
    %v6324 = vadd.f32 %v6213, %v6323
    %v6325 = vpop.f32.mrb[0].mxu0
    %v6326 = vadd.f32 %v6215, %v6325
    %6327 = vmatprep.mubr.f32.mxu0 0.0
    %v6328 = vand.u32 %v4524, 4294901760
    %v6329 = vsub.f32 %v4524, %v6328
    %6330 = vmatmul.mubr.f32.gmra.mrb[0].mxu0 %v6329
    %v6331 = vpop.f32.mrb[0].mxu0
    %v6332 = vadd.f32 %v6220, %v6331
    %v6333 = vpop.f32.mrb[0].mxu0
    %v6334 = vadd.f32 %v6222, %v6333
    %6335 = vmatprep.mubr.f32.mxu0 0.0
    %v6336 = vand.u32 %v4527, 4294901760
    %v6337 = vsub.f32 %v4527, %v6336
    %6338 = vmatmul.mubr.f32.gmra.mrb[0].mxu0 %v6337
    %v6339 = vpop.f32.mrb[0].mxu0
    %v6340 = vadd.f32 %v6227, %v6339
    %v6341 = vpop.f32.mrb[0].mxu0
    %v6342 = vadd.f32 %v6229, %v6341
    %6343 = vdwg.mxu0
    %v6344 = vand.u32 %v5968, 4294901760
    %6345 = vmatprep.subr.mxu0 %v6344
    %v6346 = vand.u32 %v5967, 4294901760
    %6347 = vmatpush1.msra.mxu0 %v6346
    %v6348 = vand.u32 %v5970, 4294901760
    %6349 = vmatprep.subr.mxu0 %v6348
    %v6350 = vand.u32 %v5969, 4294901760
    %6351 = vmatpush1.msra.mxu0 %v6350
    %v6352 = vand.u32 %v5972, 4294901760
    %6353 = vmatprep.subr.mxu0 %v6352
    %v6354 = vand.u32 %v5971, 4294901760
    %6355 = vmatpush1.msra.mxu0 %v6354
    %v6356 = vand.u32 %v5979, 4294901760
    %6357 = vmatprep.subr.mxu0 %v6356
    %v6358 = vand.u32 %v5976, 4294901760
    %6359 = vmatpush1.msra.mxu0 %v6358
    %6360 = vmatprep.subr.mxu0 0.0
    %6361 = vmatpush1.msra.mxu0 0.0
    %6362 = vmatprep.subr.mxu0 0.0
    %6363 = vmatpush1.msra.mxu0 0.0
    %6364 = vmatprep.subr.mxu0 0.0
    %6365 = vmatpush1.msra.mxu0 0.0
    %6366 = vmatprep.subr.mxu0 0.0
    %6367 = vmatpush1.msra.mxu0 0.0
    %6368 = vmatprep.subr.mxu0 0.0
    %6369 = vmatpush1.msra.mxu0 0.0
    %6370 = vmatprep.subr.mxu0 0.0
    %6371 = vmatpush1.msra.mxu0 0.0
    %6372 = vmatprep.subr.mxu0 0.0
    %6373 = vmatpush1.msra.mxu0 0.0
    %6374 = vmatprep.subr.mxu0 0.0
    %6375 = vmatpush1.msra.mxu0 0.0
    %6376 = vmatprep.subr.mxu0 0.0
    %6377 = vmatpush1.msra.mxu0 0.0
    %6378 = vmatprep.subr.mxu0 0.0
    %6379 = vmatpush1.msra.mxu0 0.0
    %6380 = vmatprep.subr.mxu0 0.0
    %6381 = vmatpush1.msra.mxu0 0.0
    %6382 = vmatprep.subr.mxu0 0.0
    %6383 = vmatpush1.msra.mxu0 0.0
    %6384 = vmatprep.subr.mxu0 0.0
    %6385 = vmatpush1.msra.mxu0 0.0
    %6386 = vmatprep.subr.mxu0 0.0
    %6387 = vmatpush1.msra.mxu0 0.0
    %6388 = vmatprep.subr.mxu0 0.0
    %6389 = vmatpush1.msra.mxu0 0.0
    %6390 = vmatprep.subr.mxu0 0.0
    %6391 = vmatpush1.msra.mxu0 0.0
    %6392 = vmatprep.subr.mxu0 0.0
    %6393 = vmatpush1.msra.mxu0 0.0
    %6394 = vmatprep.subr.mxu0 0.0
    %6395 = vmatpush1.msra.mxu0 0.0
    %6396 = vmatprep.subr.mxu0 0.0
    %6397 = vmatpush1.msra.mxu0 0.0
    %6398 = vmatprep.subr.mxu0 0.0
    %6399 = vmatpush1.msra.mxu0 0.0
    %6400 = vmatprep.subr.mxu0 0.0
    %6401 = vmatpush1.msra.mxu0 0.0
    %6402 = vmatprep.subr.mxu0 0.0
    %6403 = vmatpush1.msra.mxu0 0.0
    %6404 = vmatprep.subr.mxu0 0.0
    %6405 = vmatpush1.msra.mxu0 0.0
    %6406 = vmatprep.subr.mxu0 0.0
    %6407 = vmatpush1.msra.mxu0 0.0
    %6408 = vmatprep.subr.mxu0 0.0
    %6409 = vmatpush1.msra.mxu0 0.0
    %6410 = vmatprep.subr.mxu0 0.0
    %6411 = vmatpush1.msra.mxu0 0.0
    %6412 = vmatprep.subr.mxu0 0.0
    %6413 = vmatpush1.msra.mxu0 0.0
    %6414 = vmatprep.subr.mxu0 0.0
    %6415 = vmatpush1.msra.mxu0 0.0
    %6416 = vmatprep.mubr.f32.mxu0 0.0
    %v6417 = vand.u32 %v4518, 4294901760
    %v6418 = vsub.f32 %v4518, %v6417
    %v6419 = vand.u32 %v6418, 4294901760
    %6420 = vmatmul.mubr.f32.gmra.mrb[0].mxu0 %v6419
    %v6421 = vpop.f32.mrb[0].mxu0
    %v6422 = vadd.f32 %v6316, %v6421
    %v6423 = vpop.f32.mrb[0].mxu0
    %v6424 = vadd.f32 %v6318, %v6423
    %6425 = vmatprep.mubr.f32.mxu0 0.0
    %v6426 = vand.u32 %v4521, 4294901760
    %v6427 = vsub.f32 %v4521, %v6426
    %v6428 = vand.u32 %v6427, 4294901760
    %6429 = vmatmul.mubr.f32.gmra.mrb[0].mxu0 %v6428
    %v6430 = vpop.f32.mrb[0].mxu0
    %v6431 = vadd.f32 %v6324, %v6430
    %v6432 = vpop.f32.mrb[0].mxu0
    %v6433 = vadd.f32 %v6326, %v6432
    %6434 = vmatprep.mubr.f32.mxu0 0.0
    %v6435 = vand.u32 %v4524, 4294901760
    %v6436 = vsub.f32 %v4524, %v6435
    %v6437 = vand.u32 %v6436, 4294901760
    %6438 = vmatmul.mubr.f32.gmra.mrb[0].mxu0 %v6437
    %v6439 = vpop.f32.mrb[0].mxu0
    %v6440 = vadd.f32 %v6332, %v6439
    %v6441 = vpop.f32.mrb[0].mxu0
    %v6442 = vadd.f32 %v6334, %v6441
    %6443 = vmatprep.mubr.f32.mxu0 0.0
    %v6444 = vand.u32 %v4527, 4294901760
    %v6445 = vsub.f32 %v4527, %v6444
    %v6446 = vand.u32 %v6445, 4294901760
    %6447 = vmatmul.mubr.f32.gmra.mrb[0].mxu0 %v6446
    %v6448 = vpop.f32.mrb[0].mxu0
    %v6449 = vadd.f32 %v6340, %v6448
    %v6450 = vpop.f32.mrb[0].mxu0
    %v6451 = vadd.f32 %v6342, %v6450
    %6452 = vdwg.mxu0
    %v6453 = vand.u32 %v5968, 4294901760
    %v6454 = vsub.f32 %v5968, %v6453
    %v6455 = vand.u32 %v6454, 4294901760
    %6456 = vmatprep.subr.mxu0 %v6455
    %v6457 = vand.u32 %v5967, 4294901760
    %v6458 = vsub.f32 %v5967, %v6457
    %v6459 = vand.u32 %v6458, 4294901760
    %6460 = vmatpush1.msra.mxu0 %v6459
    %v6461 = vand.u32 %v5970, 4294901760
    %v6462 = vsub.f32 %v5970, %v6461
    %v6463 = vand.u32 %v6462, 4294901760
    %6464 = vmatprep.subr.mxu0 %v6463
    %v6465 = vand.u32 %v5969, 4294901760
    %v6466 = vsub.f32 %v5969, %v6465
    %v6467 = vand.u32 %v6466, 4294901760
    %6468 = vmatpush1.msra.mxu0 %v6467
    %v6469 = vand.u32 %v5972, 4294901760
    %v6470 = vsub.f32 %v5972, %v6469
    %v6471 = vand.u32 %v6470, 4294901760
    %6472 = vmatprep.subr.mxu0 %v6471
    %v6473 = vand.u32 %v5971, 4294901760
    %v6474 = vsub.f32 %v5971, %v6473
    %v6475 = vand.u32 %v6474, 4294901760
    %6476 = vmatpush1.msra.mxu0 %v6475
    %v6477 = vand.u32 %v5979, 4294901760
    %v6478 = vsub.f32 %v5979, %v6477
    %v6479 = vand.u32 %v6478, 4294901760
    %6480 = vmatprep.subr.mxu0 %v6479
    %v6481 = vand.u32 %v5976, 4294901760
    %v6482 = vsub.f32 %v5976, %v6481
    %v6483 = vand.u32 %v6482, 4294901760
    %6484 = vmatpush1.msra.mxu0 %v6483
    %6485 = vmatprep.subr.mxu0 0.0
    %6486 = vmatpush1.msra.mxu0 0.0
    %6487 = vmatprep.subr.mxu0 0.0
    %6488 = vmatpush1.msra.mxu0 0.0
    %6489 = vmatprep.subr.mxu0 0.0
    %6490 = vmatpush1.msra.mxu0 0.0
    %6491 = vmatprep.subr.mxu0 0.0
    %6492 = vmatpush1.msra.mxu0 0.0
    %6493 = vmatprep.subr.mxu0 0.0
    %6494 = vmatpush1.msra.mxu0 0.0
    %6495 = vmatprep.subr.mxu0 0.0
    %6496 = vmatpush1.msra.mxu0 0.0
    %6497 = vmatprep.subr.mxu0 0.0
    %6498 = vmatpush1.msra.mxu0 0.0
    %6499 = vmatprep.subr.mxu0 0.0
    %6500 = vmatpush1.msra.mxu0 0.0
    %6501 = vmatprep.subr.mxu0 0.0
    %6502 = vmatpush1.msra.mxu0 0.0
    %6503 = vmatprep.subr.mxu0 0.0
    %6504 = vmatpush1.msra.mxu0 0.0
    %6505 = vmatprep.subr.mxu0 0.0
    %6506 = vmatpush1.msra.mxu0 0.0
    %6507 = vmatprep.subr.mxu0 0.0
    %6508 = vmatpush1.msra.mxu0 0.0
    %6509 = vmatprep.subr.mxu0 0.0
    %6510 = vmatpush1.msra.mxu0 0.0
    %6511 = vmatprep.subr.mxu0 0.0
    %6512 = vmatpush1.msra.mxu0 0.0
    %6513 = vmatprep.subr.mxu0 0.0
    %6514 = vmatpush1.msra.mxu0 0.0
    %6515 = vmatprep.subr.mxu0 0.0
    %6516 = vmatpush1.msra.mxu0 0.0
    %6517 = vmatprep.subr.mxu0 0.0
    %6518 = vmatpush1.msra.mxu0 0.0
    %6519 = vmatprep.subr.mxu0 0.0
    %6520 = vmatpush1.msra.mxu0 0.0
    %6521 = vmatprep.subr.mxu0 0.0
    %6522 = vmatpush1.msra.mxu0 0.0
    %6523 = vmatprep.subr.mxu0 0.0
    %6524 = vmatpush1.msra.mxu0 0.0
    %6525 = vmatprep.subr.mxu0 0.0
    %6526 = vmatpush1.msra.mxu0 0.0
    %6527 = vmatprep.subr.mxu0 0.0
    %6528 = vmatpush1.msra.mxu0 0.0
    %6529 = vmatprep.subr.mxu0 0.0
    %6530 = vmatpush1.msra.mxu0 0.0
    %6531 = vmatprep.subr.mxu0 0.0
    %6532 = vmatpush1.msra.mxu0 0.0
    %6533 = vmatprep.subr.mxu0 0.0
    %6534 = vmatpush1.msra.mxu0 0.0
    %6535 = vmatprep.subr.mxu0 0.0
    %6536 = vmatpush1.msra.mxu0 0.0
    %6537 = vmatprep.subr.mxu0 0.0
    %6538 = vmatpush1.msra.mxu0 0.0
    %6539 = vmatprep.subr.mxu0 0.0
    %6540 = vmatpush1.msra.mxu0 0.0
    %6541 = vmatprep.mubr.f32.mxu0 0.0
    %v6542 = vand.u32 %v4518, 4294901760
    %6543 = vmatmul.mubr.f32.gmra.mrb[0].mxu0 %v6542
    %v6544 = vpop.f32.mrb[0].mxu0
    %v6545 = vadd.f32 %v6422, %v6544
    %v6546 = vpop.f32.mrb[0].mxu0
    %v6547 = vadd.f32 %v6424, %v6546
    %6548 = vmatprep.mubr.f32.mxu0 0.0
    %v6549 = vand.u32 %v4521, 4294901760
    %6550 = vmatmul.mubr.f32.gmra.mrb[0].mxu0 %v6549
    %v6551 = vpop.f32.mrb[0].mxu0
    %v6552 = vadd.f32 %v6431, %v6551
    %v6553 = vpop.f32.mrb[0].mxu0
    %v6554 = vadd.f32 %v6433, %v6553
    %6555 = vmatprep.mubr.f32.mxu0 0.0
    %v6556 = vand.u32 %v4524, 4294901760
    %6557 = vmatmul.mubr.f32.gmra.mrb[0].mxu0 %v6556
    %v6558 = vpop.f32.mrb[0].mxu0
    %v6559 = vadd.f32 %v6440, %v6558
    %v6560 = vpop.f32.mrb[0].mxu0
    %v6561 = vadd.f32 %v6442, %v6560
    %6562 = vmatprep.mubr.f32.mxu0 0.0
    %v6563 = vand.u32 %v4527, 4294901760
    %6564 = vmatmul.mubr.f32.gmra.mrb[0].mxu0 %v6563
    %v6565 = vpop.f32.mrb[0].mxu0
    %v6566 = vadd.f32 %v6449, %v6565
    %v6567 = vpop.f32.mrb[0].mxu0
    %v6568 = vadd.f32 %v6451, %v6567
    %6569 = vdwg.mxu0
    %v6570 = vand.u32 %v5968, 4294901760
    %6571 = vmatprep.subr.mxu0 %v6570
    %v6572 = vand.u32 %v5967, 4294901760
    %6573 = vmatpush1.msra.mxu0 %v6572
    %v6574 = vand.u32 %v5970, 4294901760
    %6575 = vmatprep.subr.mxu0 %v6574
    %v6576 = vand.u32 %v5969, 4294901760
    %6577 = vmatpush1.msra.mxu0 %v6576
    %v6578 = vand.u32 %v5972, 4294901760
    %6579 = vmatprep.subr.mxu0 %v6578
    %v6580 = vand.u32 %v5971, 4294901760
    %6581 = vmatpush1.msra.mxu0 %v6580
    %v6582 = vand.u32 %v5979, 4294901760
    %6583 = vmatprep.subr.mxu0 %v6582
    %v6584 = vand.u32 %v5976, 4294901760
    %6585 = vmatpush1.msra.mxu0 %v6584
    %6586 = vmatprep.subr.mxu0 0.0
    %6587 = vmatpush1.msra.mxu0 0.0
    %6588 = vmatprep.subr.mxu0 0.0
    %6589 = vmatpush1.msra.mxu0 0.0
    %6590 = vmatprep.subr.mxu0 0.0
    %6591 = vmatpush1.msra.mxu0 0.0
    %6592 = vmatprep.subr.mxu0 0.0
    %6593 = vmatpush1.msra.mxu0 0.0
    %6594 = vmatprep.subr.mxu0 0.0
    %6595 = vmatpush1.msra.mxu0 0.0
    %6596 = vmatprep.subr.mxu0 0.0
    %6597 = vmatpush1.msra.mxu0 0.0
    %6598 = vmatprep.subr.mxu0 0.0
    %6599 = vmatpush1.msra.mxu0 0.0
    %6600 = vmatprep.subr.mxu0 0.0
    %6601 = vmatpush1.msra.mxu0 0.0
    %6602 = vmatprep.subr.mxu0 0.0
    %6603 = vmatpush1.msra.mxu0 0.0
    %6604 = vmatprep.subr.mxu0 0.0
    %6605 = vmatpush1.msra.mxu0 0.0
    %6606 = vmatprep.subr.mxu0 0.0
    %6607 = vmatpush1.msra.mxu0 0.0
    %6608 = vmatprep.subr.mxu0 0.0
    %6609 = vmatpush1.msra.mxu0 0.0
    %6610 = vmatprep.subr.mxu0 0.0
    %6611 = vmatpush1.msra.mxu0 0.0
    %6612 = vmatprep.subr.mxu0 0.0
    %6613 = vmatpush1.msra.mxu0 0.0
    %6614 = vmatprep.subr.mxu0 0.0
    %6615 = vmatpush1.msra.mxu0 0.0
    %6616 = vmatprep.subr.mxu0 0.0
    %6617 = vmatpush1.msra.mxu0 0.0
    %6618 = vmatprep.subr.mxu0 0.0
    %6619 = vmatpush1.msra.mxu0 0.0
    %6620 = vmatprep.subr.mxu0 0.0
    %6621 = vmatpush1.msra.mxu0 0.0
    %6622 = vmatprep.subr.mxu0 0.0
    %6623 = vmatpush1.msra.mxu0 0.0
    %6624 = vmatprep.subr.mxu0 0.0
    %6625 = vmatpush1.msra.mxu0 0.0
    %6626 = vmatprep.subr.mxu0 0.0
    %6627 = vmatpush1.msra.mxu0 0.0
    %6628 = vmatprep.subr.mxu0 0.0
    %6629 = vmatpush1.msra.mxu0 0.0
    %6630 = vmatprep.subr.mxu0 0.0
    %6631 = vmatpush1.msra.mxu0 0.0
    %6632 = vmatprep.subr.mxu0 0.0
    %6633 = vmatpush1.msra.mxu0 0.0
    %6634 = vmatprep.subr.mxu0 0.0
    %6635 = vmatpush1.msra.mxu0 0.0
    %6636 = vmatprep.subr.mxu0 0.0
    %6637 = vmatpush1.msra.mxu0 0.0
    %6638 = vmatprep.subr.mxu0 0.0
    %6639 = vmatpush1.msra.mxu0 0.0
    %6640 = vmatprep.subr.mxu0 0.0
    %6641 = vmatpush1.msra.mxu0 0.0
    %6642 = vmatprep.mubr.f32.mxu0 0.0
    %v6643 = vand.u32 %v4518, 4294901760
    %6644 = vmatmul.mubr.f32.gmra.mrb[0].mxu0 %v6643
    %v6645 = vpop.f32.mrb[0].mxu0
    %v6646 = vadd.f32 %v6545, %v6645
    %v6647 = vpop.f32.mrb[0].mxu0
    %v6648 = vadd.f32 %v6547, %v6647
    %6649 = vmatprep.mubr.f32.mxu0 0.0
    %v6650 = vand.u32 %v4521, 4294901760
    %6651 = vmatmul.mubr.f32.gmra.mrb[0].mxu0 %v6650
    %v6652 = vpop.f32.mrb[0].mxu0
    %v6653 = vadd.f32 %v6552, %v6652
    %v6654 = vpop.f32.mrb[0].mxu0
    %v6655 = vadd.f32 %v6554, %v6654
    %6656 = vmatprep.mubr.f32.mxu0 0.0
    %v6657 = vand.u32 %v4524, 4294901760
    %6658 = vmatmul.mubr.f32.gmra.mrb[0].mxu0 %v6657
    %v6659 = vpop.f32.mrb[0].mxu0
    %v6660 = vadd.f32 %v6559, %v6659
    %v6661 = vpop.f32.mrb[0].mxu0
    %v6662 = vadd.f32 %v6561, %v6661
    %6663 = vmatprep.mubr.f32.mxu0 0.0
    %v6664 = vand.u32 %v4527, 4294901760
    %6665 = vmatmul.mubr.f32.gmra.mrb[0].mxu0 %v6664
    %v6666 = vpop.f32.mrb[0].mxu0
    %v6667 = vadd.f32 %v6566, %v6666
    %v6668 = vpop.f32.mrb[0].mxu0
    %v6669 = vadd.f32 %v6568, %v6668
    %6670 = vdwg.mxu0
    %v6679 = vrot.slane %v6646, 2
    %v6680 = vrot.slane %v6653, 2
    %v6681 = vsel %vm2200, %v6679, %v6680
    %v6682 = vrot.slane %v6648, 2
    %v6683 = vrot.slane %v6655, 2
    %v6684 = vsel %vm2200, %v6682, %v6683
    %v6685 = vrot.slane %v6660, 2
    %v6686 = vsel %vm2200, %v6680, %v6685
    %v6687 = vrot.slane %v6662, 2
    %v6688 = vsel %vm2200, %v6683, %v6687
    %v6689 = vrot.slane %v6667, 2
    %v6690 = vsel %vm2200, %v6685, %v6689
    %v6691 = vrot.slane %v6669, 2
    %v6692 = vsel %vm2200, %v6687, %v6691
    %v6701 = vadd.f32 %v5959, %v6681
    %v6702 = vadd.f32 %v5960, %v6684
    %v6703 = vadd.f32 %v5961, %v6686
    %v6704 = vadd.f32 %v5962, %v6688
    %v6705 = vadd.f32 %v5963, %v6690
    %v6706 = vadd.f32 %v5964, %v6692
    %v6707 = vadd.f32 %v5965, %v6689
    %v6708 = vadd.f32 %v5966, %v6691
    %v6709 = vld [vmem:[%s2231] sm:$0xff]
    %v6710 = vld [vmem:[%s2231 + $0x8] sm:$0xff]
    %v6711 = vld [vmem:[%s2231 + $0x10] sm:$0xff]
    %v6712 = vld [vmem:[%s2231 + $0x18] sm:$0xff]
    %v6713 = vld [vmem:[%s2231 + $0x20] sm:$0xff]
    %v6714 = vld [vmem:[%s2231 + $0x28] sm:$0xff]
    %v6715 = vld [vmem:[%s2231 + $0x30] sm:$0xf]
    %v6716 = vld [vmem:[%s2231 + $0x38] sm:$0xf]
    %v6718 = vsel %vm46, %v6715, 0
    %v6721 = vsel %vm46, %v6716, 0
    %v6723 = vand.u32 %v6710, 4294901760
    %6724 = vmatprep.subr.mxu0 %v6723
    %v6725 = vand.u32 %v6709, 4294901760
    %6726 = vmatpush1.msra.mxu0 %v6725
    %v6727 = vand.u32 %v6712, 4294901760
    %6728 = vmatprep.subr.mxu0 %v6727
    %v6729 = vand.u32 %v6711, 4294901760
    %6730 = vmatpush1.msra.mxu0 %v6729
    %v6731 = vand.u32 %v6714, 4294901760
    %6732 = vmatprep.subr.mxu0 %v6731
    %v6733 = vand.u32 %v6713, 4294901760
    %6734 = vmatpush1.msra.mxu0 %v6733
    %v6735 = vand.u32 %v6721, 4294901760
    %6736 = vmatprep.subr.mxu0 %v6735
    %v6737 = vand.u32 %v6718, 4294901760
    %6738 = vmatpush1.msra.mxu0 %v6737
    %6739 = vmatprep.subr.mxu0 0.0
    %6740 = vmatpush1.msra.mxu0 0.0
    %6741 = vmatprep.subr.mxu0 0.0
    %6742 = vmatpush1.msra.mxu0 0.0
    %6743 = vmatprep.subr.mxu0 0.0
    %6744 = vmatpush1.msra.mxu0 0.0
    %6745 = vmatprep.subr.mxu0 0.0
    %6746 = vmatpush1.msra.mxu0 0.0
    %6747 = vmatprep.subr.mxu0 0.0
    %6748 = vmatpush1.msra.mxu0 0.0
    %6749 = vmatprep.subr.mxu0 0.0
    %6750 = vmatpush1.msra.mxu0 0.0
    %6751 = vmatprep.subr.mxu0 0.0
    %6752 = vmatpush1.msra.mxu0 0.0
    %6753 = vmatprep.subr.mxu0 0.0
    %6754 = vmatpush1.msra.mxu0 0.0
    %6755 = vmatprep.subr.mxu0 0.0
    %6756 = vmatpush1.msra.mxu0 0.0
    %6757 = vmatprep.subr.mxu0 0.0
    %6758 = vmatpush1.msra.mxu0 0.0
    %6759 = vmatprep.subr.mxu0 0.0
    %6760 = vmatpush1.msra.mxu0 0.0
    %6761 = vmatprep.subr.mxu0 0.0
    %6762 = vmatpush1.msra.mxu0 0.0
    %6763 = vmatprep.subr.mxu0 0.0
    %6764 = vmatpush1.msra.mxu0 0.0
    %6765 = vmatprep.subr.mxu0 0.0
    %6766 = vmatpush1.msra.mxu0 0.0
    %6767 = vmatprep.subr.mxu0 0.0
    %6768 = vmatpush1.msra.mxu0 0.0
    %6769 = vmatprep.subr.mxu0 0.0
    %6770 = vmatpush1.msra.mxu0 0.0
    %6771 = vmatprep.subr.mxu0 0.0
    %6772 = vmatpush1.msra.mxu0 0.0
    %6773 = vmatprep.subr.mxu0 0.0
    %6774 = vmatpush1.msra.mxu0 0.0
    %6775 = vmatprep.subr.mxu0 0.0
    %6776 = vmatpush1.msra.mxu0 0.0
    %6777 = vmatprep.subr.mxu0 0.0
    %6778 = vmatpush1.msra.mxu0 0.0
    %6779 = vmatprep.subr.mxu0 0.0
    %6780 = vmatpush1.msra.mxu0 0.0
    %6781 = vmatprep.subr.mxu0 0.0
    %6782 = vmatpush1.msra.mxu0 0.0
    %6783 = vmatprep.subr.mxu0 0.0
    %6784 = vmatpush1.msra.mxu0 0.0
    %6785 = vmatprep.subr.mxu0 0.0
    %6786 = vmatpush1.msra.mxu0 0.0
    %6787 = vmatprep.subr.mxu0 0.0
    %6788 = vmatpush1.msra.mxu0 0.0
    %6789 = vmatprep.subr.mxu0 0.0
    %6790 = vmatpush1.msra.mxu0 0.0
    %6791 = vmatprep.subr.mxu0 0.0
    %6792 = vmatpush1.msra.mxu0 0.0
    %6793 = vmatprep.subr.mxu0 0.0
    %6794 = vmatpush1.msra.mxu0 0.0
    %6795 = vmatprep.mubr.f32.mxu0 0.0
    %v6796 = vand.u32 %v4518, 4294901760
    %v6797 = vsub.f32 %v4518, %v6796
    %v6798 = vand.u32 %v6797, 4294901760
    %v6799 = vsub.f32 %v6797, %v6798
    %v6800 = vand.u32 %v6799, 4294901760
    %6801 = vmatmul.mubr.f32.gmra.mrb[0].mxu0 %v6800
    %v6802 = vpop.f32.mrb[0].mxu0
    %v6803 = vadd.f32 0.0, %v6802
    %v6804 = vpop.f32.mrb[0].mxu0
    %v6805 = vadd.f32 0.0, %v6804
    %6806 = vmatprep.mubr.f32.mxu0 0.0
    %v6807 = vand.u32 %v4521, 4294901760
    %v6808 = vsub.f32 %v4521, %v6807
    %v6809 = vand.u32 %v6808, 4294901760
    %v6810 = vsub.f32 %v6808, %v6809
    %v6811 = vand.u32 %v6810, 4294901760
    %6812 = vmatmul.mubr.f32.gmra.mrb[0].mxu0 %v6811
    %v6813 = vpop.f32.mrb[0].mxu0
    %v6814 = vadd.f32 0.0, %v6813
    %v6815 = vpop.f32.mrb[0].mxu0
    %v6816 = vadd.f32 0.0, %v6815
    %6817 = vmatprep.mubr.f32.mxu0 0.0
    %v6818 = vand.u32 %v4524, 4294901760
    %v6819 = vsub.f32 %v4524, %v6818
    %v6820 = vand.u32 %v6819, 4294901760
    %v6821 = vsub.f32 %v6819, %v6820
    %v6822 = vand.u32 %v6821, 4294901760
    %6823 = vmatmul.mubr.f32.gmra.mrb[0].mxu0 %v6822
    %v6824 = vpop.f32.mrb[0].mxu0
    %v6825 = vadd.f32 0.0, %v6824
    %v6826 = vpop.f32.mrb[0].mxu0
    %v6827 = vadd.f32 0.0, %v6826
    %6828 = vmatprep.mubr.f32.mxu0 0.0
    %v6829 = vand.u32 %v4527, 4294901760
    %v6830 = vsub.f32 %v4527, %v6829
    %v6831 = vand.u32 %v6830, 4294901760
    %v6832 = vsub.f32 %v6830, %v6831
    %v6833 = vand.u32 %v6832, 4294901760
    %6834 = vmatmul.mubr.f32.gmra.mrb[0].mxu0 %v6833
    %v6835 = vpop.f32.mrb[0].mxu0
    %v6836 = vadd.f32 0.0, %v6835
    %v6837 = vpop.f32.mrb[0].mxu0
    %v6838 = vadd.f32 0.0, %v6837
    %6839 = vdwg.mxu0
    %v6840 = vand.u32 %v6710, 4294901760
    %v6841 = vsub.f32 %v6710, %v6840
    %v6842 = vand.u32 %v6841, 4294901760
    %v6843 = vsub.f32 %v6841, %v6842
    %v6844 = vand.u32 %v6843, 4294901760
    %6845 = vmatprep.subr.mxu0 %v6844
    %v6846 = vand.u32 %v6709, 4294901760
    %v6847 = vsub.f32 %v6709, %v6846
    %v6848 = vand.u32 %v6847, 4294901760
    %v6849 = vsub.f32 %v6847, %v6848
    %v6850 = vand.u32 %v6849, 4294901760
    %6851 = vmatpush1.msra.mxu0 %v6850
    %v6852 = vand.u32 %v6712, 4294901760
    %v6853 = vsub.f32 %v6712, %v6852
    %v6854 = vand.u32 %v6853, 4294901760
    %v6855 = vsub.f32 %v6853, %v6854
    %v6856 = vand.u32 %v6855, 4294901760
    %6857 = vmatprep.subr.mxu0 %v6856
    %v6858 = vand.u32 %v6711, 4294901760
    %v6859 = vsub.f32 %v6711, %v6858
    %v6860 = vand.u32 %v6859, 4294901760
    %v6861 = vsub.f32 %v6859, %v6860
    %v6862 = vand.u32 %v6861, 4294901760
    %6863 = vmatpush1.msra.mxu0 %v6862
    %v6864 = vand.u32 %v6714, 4294901760
    %v6865 = vsub.f32 %v6714, %v6864
    %v6866 = vand.u32 %v6865, 4294901760
    %v6867 = vsub.f32 %v6865, %v6866
    %v6868 = vand.u32 %v6867, 4294901760
    %6869 = vmatprep.subr.mxu0 %v6868
    %v6870 = vand.u32 %v6713, 4294901760
    %v6871 = vsub.f32 %v6713, %v6870
    %v6872 = vand.u32 %v6871, 4294901760
    %v6873 = vsub.f32 %v6871, %v6872
    %v6874 = vand.u32 %v6873, 4294901760
    %6875 = vmatpush1.msra.mxu0 %v6874
    %v6876 = vand.u32 %v6721, 4294901760
    %v6877 = vsub.f32 %v6721, %v6876
    %v6878 = vand.u32 %v6877, 4294901760
    %v6879 = vsub.f32 %v6877, %v6878
    %v6880 = vand.u32 %v6879, 4294901760
    %6881 = vmatprep.subr.mxu0 %v6880
    %v6882 = vand.u32 %v6718, 4294901760
    %v6883 = vsub.f32 %v6718, %v6882
    %v6884 = vand.u32 %v6883, 4294901760
    %v6885 = vsub.f32 %v6883, %v6884
    %v6886 = vand.u32 %v6885, 4294901760
    %6887 = vmatpush1.msra.mxu0 %v6886
    %6888 = vmatprep.subr.mxu0 0.0
    %6889 = vmatpush1.msra.mxu0 0.0
    %6890 = vmatprep.subr.mxu0 0.0
    %6891 = vmatpush1.msra.mxu0 0.0
    %6892 = vmatprep.subr.mxu0 0.0
    %6893 = vmatpush1.msra.mxu0 0.0
    %6894 = vmatprep.subr.mxu0 0.0
    %6895 = vmatpush1.msra.mxu0 0.0
    %6896 = vmatprep.subr.mxu0 0.0
    %6897 = vmatpush1.msra.mxu0 0.0
    %6898 = vmatprep.subr.mxu0 0.0
    %6899 = vmatpush1.msra.mxu0 0.0
    %6900 = vmatprep.subr.mxu0 0.0
    %6901 = vmatpush1.msra.mxu0 0.0
    %6902 = vmatprep.subr.mxu0 0.0
    %6903 = vmatpush1.msra.mxu0 0.0
    %6904 = vmatprep.subr.mxu0 0.0
    %6905 = vmatpush1.msra.mxu0 0.0
    %6906 = vmatprep.subr.mxu0 0.0
    %6907 = vmatpush1.msra.mxu0 0.0
    %6908 = vmatprep.subr.mxu0 0.0
    %6909 = vmatpush1.msra.mxu0 0.0
    %6910 = vmatprep.subr.mxu0 0.0
    %6911 = vmatpush1.msra.mxu0 0.0
    %6912 = vmatprep.subr.mxu0 0.0
    %6913 = vmatpush1.msra.mxu0 0.0
    %6914 = vmatprep.subr.mxu0 0.0
    %6915 = vmatpush1.msra.mxu0 0.0
    %6916 = vmatprep.subr.mxu0 0.0
    %6917 = vmatpush1.msra.mxu0 0.0
    %6918 = vmatprep.subr.mxu0 0.0
    %6919 = vmatpush1.msra.mxu0 0.0
    %6920 = vmatprep.subr.mxu0 0.0
    %6921 = vmatpush1.msra.mxu0 0.0
    %6922 = vmatprep.subr.mxu0 0.0
    %6923 = vmatpush1.msra.mxu0 0.0
    %6924 = vmatprep.subr.mxu0 0.0
    %6925 = vmatpush1.msra.mxu0 0.0
    %6926 = vmatprep.subr.mxu0 0.0
    %6927 = vmatpush1.msra.mxu0 0.0
    %6928 = vmatprep.subr.mxu0 0.0
    %6929 = vmatpush1.msra.mxu0 0.0
    %6930 = vmatprep.subr.mxu0 0.0
    %6931 = vmatpush1.msra.mxu0 0.0
    %6932 = vmatprep.subr.mxu0 0.0
    %6933 = vmatpush1.msra.mxu0 0.0
    %6934 = vmatprep.subr.mxu0 0.0
    %6935 = vmatpush1.msra.mxu0 0.0
    %6936 = vmatprep.subr.mxu0 0.0
    %6937 = vmatpush1.msra.mxu0 0.0
    %6938 = vmatprep.subr.mxu0 0.0
    %6939 = vmatpush1.msra.mxu0 0.0
    %6940 = vmatprep.subr.mxu0 0.0
    %6941 = vmatpush1.msra.mxu0 0.0
    %6942 = vmatprep.subr.mxu0 0.0
    %6943 = vmatpush1.msra.mxu0 0.0
    %6944 = vmatprep.mubr.f32.mxu0 0.0
    %v6945 = vand.u32 %v4518, 4294901760
    %6946 = vmatmul.mubr.f32.gmra.mrb[0].mxu0 %v6945
    %v6947 = vpop.f32.mrb[0].mxu0
    %v6948 = vadd.f32 %v6803, %v6947
    %v6949 = vpop.f32.mrb[0].mxu0
    %v6950 = vadd.f32 %v6805, %v6949
    %6951 = vmatprep.mubr.f32.mxu0 0.0
    %v6952 = vand.u32 %v4521, 4294901760
    %6953 = vmatmul.mubr.f32.gmra.mrb[0].mxu0 %v6952
    %v6954 = vpop.f32.mrb[0].mxu0
    %v6955 = vadd.f32 %v6814, %v6954
    %v6956 = vpop.f32.mrb[0].mxu0
    %v6957 = vadd.f32 %v6816, %v6956
    %6958 = vmatprep.mubr.f32.mxu0 0.0
    %v6959 = vand.u32 %v4524, 4294901760
    %6960 = vmatmul.mubr.f32.gmra.mrb[0].mxu0 %v6959
    %v6961 = vpop.f32.mrb[0].mxu0
    %v6962 = vadd.f32 %v6825, %v6961
    %v6963 = vpop.f32.mrb[0].mxu0
    %v6964 = vadd.f32 %v6827, %v6963
    %6965 = vmatprep.mubr.f32.mxu0 0.0
    %v6966 = vand.u32 %v4527, 4294901760
    %6967 = vmatmul.mubr.f32.gmra.mrb[0].mxu0 %v6966
    %v6968 = vpop.f32.mrb[0].mxu0
    %v6969 = vadd.f32 %v6836, %v6968
    %v6970 = vpop.f32.mrb[0].mxu0
    %v6971 = vadd.f32 %v6838, %v6970
    %6972 = vdwg.mxu0
    %v6973 = vand.u32 %v6710, 4294901760
    %v6974 = vsub.f32 %v6710, %v6973
    %6975 = vmatprep.subr.mxu0 %v6974
    %v6976 = vand.u32 %v6709, 4294901760
    %v6977 = vsub.f32 %v6709, %v6976
    %6978 = vmatpush1.msra.mxu0 %v6977
    %v6979 = vand.u32 %v6712, 4294901760
    %v6980 = vsub.f32 %v6712, %v6979
    %6981 = vmatprep.subr.mxu0 %v6980
    %v6982 = vand.u32 %v6711, 4294901760
    %v6983 = vsub.f32 %v6711, %v6982
    %6984 = vmatpush1.msra.mxu0 %v6983
    %v6985 = vand.u32 %v6714, 4294901760
    %v6986 = vsub.f32 %v6714, %v6985
    %6987 = vmatprep.subr.mxu0 %v6986
    %v6988 = vand.u32 %v6713, 4294901760
    %v6989 = vsub.f32 %v6713, %v6988
    %6990 = vmatpush1.msra.mxu0 %v6989
    %v6991 = vand.u32 %v6721, 4294901760
    %v6992 = vsub.f32 %v6721, %v6991
    %6993 = vmatprep.subr.mxu0 %v6992
    %v6994 = vand.u32 %v6718, 4294901760
    %v6995 = vsub.f32 %v6718, %v6994
    %6996 = vmatpush1.msra.mxu0 %v6995
    %6997 = vmatprep.subr.mxu0 0.0
    %6998 = vmatpush1.msra.mxu0 0.0
    %6999 = vmatprep.subr.mxu0 0.0
    %7000 = vmatpush1.msra.mxu0 0.0
    %7001 = vmatprep.subr.mxu0 0.0
    %7002 = vmatpush1.msra.mxu0 0.0
    %7003 = vmatprep.subr.mxu0 0.0
    %7004 = vmatpush1.msra.mxu0 0.0
    %7005 = vmatprep.subr.mxu0 0.0
    %7006 = vmatpush1.msra.mxu0 0.0
    %7007 = vmatprep.subr.mxu0 0.0
    %7008 = vmatpush1.msra.mxu0 0.0
    %7009 = vmatprep.subr.mxu0 0.0
    %7010 = vmatpush1.msra.mxu0 0.0
    %7011 = vmatprep.subr.mxu0 0.0
    %7012 = vmatpush1.msra.mxu0 0.0
    %7013 = vmatprep.subr.mxu0 0.0
    %7014 = vmatpush1.msra.mxu0 0.0
    %7015 = vmatprep.subr.mxu0 0.0
    %7016 = vmatpush1.msra.mxu0 0.0
    %7017 = vmatprep.subr.mxu0 0.0
    %7018 = vmatpush1.msra.mxu0 0.0
    %7019 = vmatprep.subr.mxu0 0.0
    %7020 = vmatpush1.msra.mxu0 0.0
    %7021 = vmatprep.subr.mxu0 0.0
    %7022 = vmatpush1.msra.mxu0 0.0
    %7023 = vmatprep.subr.mxu0 0.0
    %7024 = vmatpush1.msra.mxu0 0.0
    %7025 = vmatprep.subr.mxu0 0.0
    %7026 = vmatpush1.msra.mxu0 0.0
    %7027 = vmatprep.subr.mxu0 0.0
    %7028 = vmatpush1.msra.mxu0 0.0
    %7029 = vmatprep.subr.mxu0 0.0
    %7030 = vmatpush1.msra.mxu0 0.0
    %7031 = vmatprep.subr.mxu0 0.0
    %7032 = vmatpush1.msra.mxu0 0.0
    %7033 = vmatprep.subr.mxu0 0.0
    %7034 = vmatpush1.msra.mxu0 0.0
    %7035 = vmatprep.subr.mxu0 0.0
    %7036 = vmatpush1.msra.mxu0 0.0
    %7037 = vmatprep.subr.mxu0 0.0
    %7038 = vmatpush1.msra.mxu0 0.0
    %7039 = vmatprep.subr.mxu0 0.0
    %7040 = vmatpush1.msra.mxu0 0.0
    %7041 = vmatprep.subr.mxu0 0.0
    %7042 = vmatpush1.msra.mxu0 0.0
    %7043 = vmatprep.subr.mxu0 0.0
    %7044 = vmatpush1.msra.mxu0 0.0
    %7045 = vmatprep.subr.mxu0 0.0
    %7046 = vmatpush1.msra.mxu0 0.0
    %7047 = vmatprep.subr.mxu0 0.0
    %7048 = vmatpush1.msra.mxu0 0.0
    %7049 = vmatprep.subr.mxu0 0.0
    %7050 = vmatpush1.msra.mxu0 0.0
    %7051 = vmatprep.subr.mxu0 0.0
    %7052 = vmatpush1.msra.mxu0 0.0
    %7053 = vmatprep.mubr.f32.mxu0 0.0
    %v7054 = vand.u32 %v4518, 4294901760
    %v7055 = vsub.f32 %v4518, %v7054
    %7056 = vmatmul.mubr.f32.gmra.mrb[0].mxu0 %v7055
    %v7057 = vpop.f32.mrb[0].mxu0
    %v7058 = vadd.f32 %v6948, %v7057
    %v7059 = vpop.f32.mrb[0].mxu0
    %v7060 = vadd.f32 %v6950, %v7059
    %7061 = vmatprep.mubr.f32.mxu0 0.0
    %v7062 = vand.u32 %v4521, 4294901760
    %v7063 = vsub.f32 %v4521, %v7062
    %7064 = vmatmul.mubr.f32.gmra.mrb[0].mxu0 %v7063
    %v7065 = vpop.f32.mrb[0].mxu0
    %v7066 = vadd.f32 %v6955, %v7065
    %v7067 = vpop.f32.mrb[0].mxu0
    %v7068 = vadd.f32 %v6957, %v7067
    %7069 = vmatprep.mubr.f32.mxu0 0.0
    %v7070 = vand.u32 %v4524, 4294901760
    %v7071 = vsub.f32 %v4524, %v7070
    %7072 = vmatmul.mubr.f32.gmra.mrb[0].mxu0 %v7071
    %v7073 = vpop.f32.mrb[0].mxu0
    %v7074 = vadd.f32 %v6962, %v7073
    %v7075 = vpop.f32.mrb[0].mxu0
    %v7076 = vadd.f32 %v6964, %v7075
    %7077 = vmatprep.mubr.f32.mxu0 0.0
    %v7078 = vand.u32 %v4527, 4294901760
    %v7079 = vsub.f32 %v4527, %v7078
    %7080 = vmatmul.mubr.f32.gmra.mrb[0].mxu0 %v7079
    %v7081 = vpop.f32.mrb[0].mxu0
    %v7082 = vadd.f32 %v6969, %v7081
    %v7083 = vpop.f32.mrb[0].mxu0
    %v7084 = vadd.f32 %v6971, %v7083
    %7085 = vdwg.mxu0
    %v7086 = vand.u32 %v6710, 4294901760
    %7087 = vmatprep.subr.mxu0 %v7086
    %v7088 = vand.u32 %v6709, 4294901760
    %7089 = vmatpush1.msra.mxu0 %v7088
    %v7090 = vand.u32 %v6712, 4294901760
    %7091 = vmatprep.subr.mxu0 %v7090
    %v7092 = vand.u32 %v6711, 4294901760
    %7093 = vmatpush1.msra.mxu0 %v7092
    %v7094 = vand.u32 %v6714, 4294901760
    %7095 = vmatprep.subr.mxu0 %v7094
    %v7096 = vand.u32 %v6713, 4294901760
    %7097 = vmatpush1.msra.mxu0 %v7096
    %v7098 = vand.u32 %v6721, 4294901760
    %7099 = vmatprep.subr.mxu0 %v7098
    %v7100 = vand.u32 %v6718, 4294901760
    %7101 = vmatpush1.msra.mxu0 %v7100
    %7102 = vmatprep.subr.mxu0 0.0
    %7103 = vmatpush1.msra.mxu0 0.0
    %7104 = vmatprep.subr.mxu0 0.0
    %7105 = vmatpush1.msra.mxu0 0.0
    %7106 = vmatprep.subr.mxu0 0.0
    %7107 = vmatpush1.msra.mxu0 0.0
    %7108 = vmatprep.subr.mxu0 0.0
    %7109 = vmatpush1.msra.mxu0 0.0
    %7110 = vmatprep.subr.mxu0 0.0
    %7111 = vmatpush1.msra.mxu0 0.0
    %7112 = vmatprep.subr.mxu0 0.0
    %7113 = vmatpush1.msra.mxu0 0.0
    %7114 = vmatprep.subr.mxu0 0.0
    %7115 = vmatpush1.msra.mxu0 0.0
    %7116 = vmatprep.subr.mxu0 0.0
    %7117 = vmatpush1.msra.mxu0 0.0
    %7118 = vmatprep.subr.mxu0 0.0
    %7119 = vmatpush1.msra.mxu0 0.0
    %7120 = vmatprep.subr.mxu0 0.0
    %7121 = vmatpush1.msra.mxu0 0.0
    %7122 = vmatprep.subr.mxu0 0.0
    %7123 = vmatpush1.msra.mxu0 0.0
    %7124 = vmatprep.subr.mxu0 0.0
    %7125 = vmatpush1.msra.mxu0 0.0
    %7126 = vmatprep.subr.mxu0 0.0
    %7127 = vmatpush1.msra.mxu0 0.0
    %7128 = vmatprep.subr.mxu0 0.0
    %7129 = vmatpush1.msra.mxu0 0.0
    %7130 = vmatprep.subr.mxu0 0.0
    %7131 = vmatpush1.msra.mxu0 0.0
    %7132 = vmatprep.subr.mxu0 0.0
    %7133 = vmatpush1.msra.mxu0 0.0
    %7134 = vmatprep.subr.mxu0 0.0
    %7135 = vmatpush1.msra.mxu0 0.0
    %7136 = vmatprep.subr.mxu0 0.0
    %7137 = vmatpush1.msra.mxu0 0.0
    %7138 = vmatprep.subr.mxu0 0.0
    %7139 = vmatpush1.msra.mxu0 0.0
    %7140 = vmatprep.subr.mxu0 0.0
    %7141 = vmatpush1.msra.mxu0 0.0
    %7142 = vmatprep.subr.mxu0 0.0
    %7143 = vmatpush1.msra.mxu0 0.0
    %7144 = vmatprep.subr.mxu0 0.0
    %7145 = vmatpush1.msra.mxu0 0.0
    %7146 = vmatprep.subr.mxu0 0.0
    %7147 = vmatpush1.msra.mxu0 0.0
    %7148 = vmatprep.subr.mxu0 0.0
    %7149 = vmatpush1.msra.mxu0 0.0
    %7150 = vmatprep.subr.mxu0 0.0
    %7151 = vmatpush1.msra.mxu0 0.0
    %7152 = vmatprep.subr.mxu0 0.0
    %7153 = vmatpush1.msra.mxu0 0.0
    %7154 = vmatprep.subr.mxu0 0.0
    %7155 = vmatpush1.msra.mxu0 0.0
    %7156 = vmatprep.subr.mxu0 0.0
    %7157 = vmatpush1.msra.mxu0 0.0
    %7158 = vmatprep.mubr.f32.mxu0 0.0
    %v7159 = vand.u32 %v4518, 4294901760
    %v7160 = vsub.f32 %v4518, %v7159
    %v7161 = vand.u32 %v7160, 4294901760
    %7162 = vmatmul.mubr.f32.gmra.mrb[0].mxu0 %v7161
    %v7163 = vpop.f32.mrb[0].mxu0
    %v7164 = vadd.f32 %v7058, %v7163
    %v7165 = vpop.f32.mrb[0].mxu0
    %v7166 = vadd.f32 %v7060, %v7165
    %7167 = vmatprep.mubr.f32.mxu0 0.0
    %v7168 = vand.u32 %v4521, 4294901760
    %v7169 = vsub.f32 %v4521, %v7168
    %v7170 = vand.u32 %v7169, 4294901760
    %7171 = vmatmul.mubr.f32.gmra.mrb[0].mxu0 %v7170
    %v7172 = vpop.f32.mrb[0].mxu0
    %v7173 = vadd.f32 %v7066, %v7172
    %v7174 = vpop.f32.mrb[0].mxu0
    %v7175 = vadd.f32 %v7068, %v7174
    %7176 = vmatprep.mubr.f32.mxu0 0.0
    %v7177 = vand.u32 %v4524, 4294901760
    %v7178 = vsub.f32 %v4524, %v7177
    %v7179 = vand.u32 %v7178, 4294901760
    %7180 = vmatmul.mubr.f32.gmra.mrb[0].mxu0 %v7179
    %v7181 = vpop.f32.mrb[0].mxu0
    %v7182 = vadd.f32 %v7074, %v7181
    %v7183 = vpop.f32.mrb[0].mxu0
    %v7184 = vadd.f32 %v7076, %v7183
    %7185 = vmatprep.mubr.f32.mxu0 0.0
    %v7186 = vand.u32 %v4527, 4294901760
    %v7187 = vsub.f32 %v4527, %v7186
    %v7188 = vand.u32 %v7187, 4294901760
    %7189 = vmatmul.mubr.f32.gmra.mrb[0].mxu0 %v7188
    %v7190 = vpop.f32.mrb[0].mxu0
    %v7191 = vadd.f32 %v7082, %v7190
    %v7192 = vpop.f32.mrb[0].mxu0
    %v7193 = vadd.f32 %v7084, %v7192
    %7194 = vdwg.mxu0
    %v7195 = vand.u32 %v6710, 4294901760
    %v7196 = vsub.f32 %v6710, %v7195
    %v7197 = vand.u32 %v7196, 4294901760
    %7198 = vmatprep.subr.mxu0 %v7197
    %v7199 = vand.u32 %v6709, 4294901760
    %v7200 = vsub.f32 %v6709, %v7199
    %v7201 = vand.u32 %v7200, 4294901760
    %7202 = vmatpush1.msra.mxu0 %v7201
    %v7203 = vand.u32 %v6712, 4294901760
    %v7204 = vsub.f32 %v6712, %v7203
    %v7205 = vand.u32 %v7204, 4294901760
    %7206 = vmatprep.subr.mxu0 %v7205
    %v7207 = vand.u32 %v6711, 4294901760
    %v7208 = vsub.f32 %v6711, %v7207
    %v7209 = vand.u32 %v7208, 4294901760
    %7210 = vmatpush1.msra.mxu0 %v7209
    %v7211 = vand.u32 %v6714, 4294901760
    %v7212 = vsub.f32 %v6714, %v7211
    %v7213 = vand.u32 %v7212, 4294901760
    %7214 = vmatprep.subr.mxu0 %v7213
    %v7215 = vand.u32 %v6713, 4294901760
    %v7216 = vsub.f32 %v6713, %v7215
    %v7217 = vand.u32 %v7216, 4294901760
    %7218 = vmatpush1.msra.mxu0 %v7217
    %v7219 = vand.u32 %v6721, 4294901760
    %v7220 = vsub.f32 %v6721, %v7219
    %v7221 = vand.u32 %v7220, 4294901760
    %7222 = vmatprep.subr.mxu0 %v7221
    %v7223 = vand.u32 %v6718, 4294901760
    %v7224 = vsub.f32 %v6718, %v7223
    %v7225 = vand.u32 %v7224, 4294901760
    %7226 = vmatpush1.msra.mxu0 %v7225
    %7227 = vmatprep.subr.mxu0 0.0
    %7228 = vmatpush1.msra.mxu0 0.0
    %7229 = vmatprep.subr.mxu0 0.0
    %7230 = vmatpush1.msra.mxu0 0.0
    %7231 = vmatprep.subr.mxu0 0.0
    %7232 = vmatpush1.msra.mxu0 0.0
    %7233 = vmatprep.subr.mxu0 0.0
    %7234 = vmatpush1.msra.mxu0 0.0
    %7235 = vmatprep.subr.mxu0 0.0
    %7236 = vmatpush1.msra.mxu0 0.0
    %7237 = vmatprep.subr.mxu0 0.0
    %7238 = vmatpush1.msra.mxu0 0.0
    %7239 = vmatprep.subr.mxu0 0.0
    %7240 = vmatpush1.msra.mxu0 0.0
    %7241 = vmatprep.subr.mxu0 0.0
    %7242 = vmatpush1.msra.mxu0 0.0
    %7243 = vmatprep.subr.mxu0 0.0
    %7244 = vmatpush1.msra.mxu0 0.0
    %7245 = vmatprep.subr.mxu0 0.0
    %7246 = vmatpush1.msra.mxu0 0.0
    %7247 = vmatprep.subr.mxu0 0.0
    %7248 = vmatpush1.msra.mxu0 0.0
    %7249 = vmatprep.subr.mxu0 0.0
    %7250 = vmatpush1.msra.mxu0 0.0
    %7251 = vmatprep.subr.mxu0 0.0
    %7252 = vmatpush1.msra.mxu0 0.0
    %7253 = vmatprep.subr.mxu0 0.0
    %7254 = vmatpush1.msra.mxu0 0.0
    %7255 = vmatprep.subr.mxu0 0.0
    %7256 = vmatpush1.msra.mxu0 0.0
    %7257 = vmatprep.subr.mxu0 0.0
    %7258 = vmatpush1.msra.mxu0 0.0
    %7259 = vmatprep.subr.mxu0 0.0
    %7260 = vmatpush1.msra.mxu0 0.0
    %7261 = vmatprep.subr.mxu0 0.0
    %7262 = vmatpush1.msra.mxu0 0.0
    %7263 = vmatprep.subr.mxu0 0.0
    %7264 = vmatpush1.msra.mxu0 0.0
    %7265 = vmatprep.subr.mxu0 0.0
    %7266 = vmatpush1.msra.mxu0 0.0
    %7267 = vmatprep.subr.mxu0 0.0
    %7268 = vmatpush1.msra.mxu0 0.0
    %7269 = vmatprep.subr.mxu0 0.0
    %7270 = vmatpush1.msra.mxu0 0.0
    %7271 = vmatprep.subr.mxu0 0.0
    %7272 = vmatpush1.msra.mxu0 0.0
    %7273 = vmatprep.subr.mxu0 0.0
    %7274 = vmatpush1.msra.mxu0 0.0
    %7275 = vmatprep.subr.mxu0 0.0
    %7276 = vmatpush1.msra.mxu0 0.0
    %7277 = vmatprep.subr.mxu0 0.0
    %7278 = vmatpush1.msra.mxu0 0.0
    %7279 = vmatprep.subr.mxu0 0.0
    %7280 = vmatpush1.msra.mxu0 0.0
    %7281 = vmatprep.subr.mxu0 0.0
    %7282 = vmatpush1.msra.mxu0 0.0
    %7283 = vmatprep.mubr.f32.mxu0 0.0
    %v7284 = vand.u32 %v4518, 4294901760
    %7285 = vmatmul.mubr.f32.gmra.mrb[0].mxu0 %v7284
    %v7286 = vpop.f32.mrb[0].mxu0
    %v7287 = vadd.f32 %v7164, %v7286
    %v7288 = vpop.f32.mrb[0].mxu0
    %v7289 = vadd.f32 %v7166, %v7288
    %7290 = vmatprep.mubr.f32.mxu0 0.0
    %v7291 = vand.u32 %v4521, 4294901760
    %7292 = vmatmul.mubr.f32.gmra.mrb[0].mxu0 %v7291
    %v7293 = vpop.f32.mrb[0].mxu0
    %v7294 = vadd.f32 %v7173, %v7293
    %v7295 = vpop.f32.mrb[0].mxu0
    %v7296 = vadd.f32 %v7175, %v7295
    %7297 = vmatprep.mubr.f32.mxu0 0.0
    %v7298 = vand.u32 %v4524, 4294901760
    %7299 = vmatmul.mubr.f32.gmra.mrb[0].mxu0 %v7298
    %v7300 = vpop.f32.mrb[0].mxu0
    %v7301 = vadd.f32 %v7182, %v7300
    %v7302 = vpop.f32.mrb[0].mxu0
    %v7303 = vadd.f32 %v7184, %v7302
    %7304 = vmatprep.mubr.f32.mxu0 0.0
    %v7305 = vand.u32 %v4527, 4294901760
    %7306 = vmatmul.mubr.f32.gmra.mrb[0].mxu0 %v7305
    %v7307 = vpop.f32.mrb[0].mxu0
    %v7308 = vadd.f32 %v7191, %v7307
    %v7309 = vpop.f32.mrb[0].mxu0
    %v7310 = vadd.f32 %v7193, %v7309
    %7311 = vdwg.mxu0
    %v7312 = vand.u32 %v6710, 4294901760
    %7313 = vmatprep.subr.mxu0 %v7312
    %v7314 = vand.u32 %v6709, 4294901760
    %7315 = vmatpush1.msra.mxu0 %v7314
    %v7316 = vand.u32 %v6712, 4294901760
    %7317 = vmatprep.subr.mxu0 %v7316
    %v7318 = vand.u32 %v6711, 4294901760
    %7319 = vmatpush1.msra.mxu0 %v7318
    %v7320 = vand.u32 %v6714, 4294901760
    %7321 = vmatprep.subr.mxu0 %v7320
    %v7322 = vand.u32 %v6713, 4294901760
    %7323 = vmatpush1.msra.mxu0 %v7322
    %v7324 = vand.u32 %v6721, 4294901760
    %7325 = vmatprep.subr.mxu0 %v7324
    %v7326 = vand.u32 %v6718, 4294901760
    %7327 = vmatpush1.msra.mxu0 %v7326
    %7328 = vmatprep.subr.mxu0 0.0
    %7329 = vmatpush1.msra.mxu0 0.0
    %7330 = vmatprep.subr.mxu0 0.0
    %7331 = vmatpush1.msra.mxu0 0.0
    %7332 = vmatprep.subr.mxu0 0.0
    %7333 = vmatpush1.msra.mxu0 0.0
    %7334 = vmatprep.subr.mxu0 0.0
    %7335 = vmatpush1.msra.mxu0 0.0
    %7336 = vmatprep.subr.mxu0 0.0
    %7337 = vmatpush1.msra.mxu0 0.0
    %7338 = vmatprep.subr.mxu0 0.0
    %7339 = vmatpush1.msra.mxu0 0.0
    %7340 = vmatprep.subr.mxu0 0.0
    %7341 = vmatpush1.msra.mxu0 0.0
    %7342 = vmatprep.subr.mxu0 0.0
    %7343 = vmatpush1.msra.mxu0 0.0
    %7344 = vmatprep.subr.mxu0 0.0
    %7345 = vmatpush1.msra.mxu0 0.0
    %7346 = vmatprep.subr.mxu0 0.0
    %7347 = vmatpush1.msra.mxu0 0.0
    %7348 = vmatprep.subr.mxu0 0.0
    %7349 = vmatpush1.msra.mxu0 0.0
    %7350 = vmatprep.subr.mxu0 0.0
    %7351 = vmatpush1.msra.mxu0 0.0
    %7352 = vmatprep.subr.mxu0 0.0
    %7353 = vmatpush1.msra.mxu0 0.0
    %7354 = vmatprep.subr.mxu0 0.0
    %7355 = vmatpush1.msra.mxu0 0.0
    %7356 = vmatprep.subr.mxu0 0.0
    %7357 = vmatpush1.msra.mxu0 0.0
    %7358 = vmatprep.subr.mxu0 0.0
    %7359 = vmatpush1.msra.mxu0 0.0
    %7360 = vmatprep.subr.mxu0 0.0
    %7361 = vmatpush1.msra.mxu0 0.0
    %7362 = vmatprep.subr.mxu0 0.0
    %7363 = vmatpush1.msra.mxu0 0.0
    %7364 = vmatprep.subr.mxu0 0.0
    %7365 = vmatpush1.msra.mxu0 0.0
    %7366 = vmatprep.subr.mxu0 0.0
    %7367 = vmatpush1.msra.mxu0 0.0
    %7368 = vmatprep.subr.mxu0 0.0
    %7369 = vmatpush1.msra.mxu0 0.0
    %7370 = vmatprep.subr.mxu0 0.0
    %7371 = vmatpush1.msra.mxu0 0.0
    %7372 = vmatprep.subr.mxu0 0.0
    %7373 = vmatpush1.msra.mxu0 0.0
    %7374 = vmatprep.subr.mxu0 0.0
    %7375 = vmatpush1.msra.mxu0 0.0
    %7376 = vmatprep.subr.mxu0 0.0
    %7377 = vmatpush1.msra.mxu0 0.0
    %7378 = vmatprep.subr.mxu0 0.0
    %7379 = vmatpush1.msra.mxu0 0.0
    %7380 = vmatprep.subr.mxu0 0.0
    %7381 = vmatpush1.msra.mxu0 0.0
    %7382 = vmatprep.subr.mxu0 0.0
    %7383 = vmatpush1.msra.mxu0 0.0
    %7384 = vmatprep.mubr.f32.mxu0 0.0
    %v7385 = vand.u32 %v4518, 4294901760
    %7386 = vmatmul.mubr.f32.gmra.mrb[0].mxu0 %v7385
    %v7387 = vpop.f32.mrb[0].mxu0
    %v7388 = vadd.f32 %v7287, %v7387
    %v7389 = vpop.f32.mrb[0].mxu0
    %v7390 = vadd.f32 %v7289, %v7389
    %7391 = vmatprep.mubr.f32.mxu0 0.0
    %v7392 = vand.u32 %v4521, 4294901760
    %7393 = vmatmul.mubr.f32.gmra.mrb[0].mxu0 %v7392
    %v7394 = vpop.f32.mrb[0].mxu0
    %v7395 = vadd.f32 %v7294, %v7394
    %v7396 = vpop.f32.mrb[0].mxu0
    %v7397 = vadd.f32 %v7296, %v7396
    %7398 = vmatprep.mubr.f32.mxu0 0.0
    %v7399 = vand.u32 %v4524, 4294901760
    %7400 = vmatmul.mubr.f32.gmra.mrb[0].mxu0 %v7399
    %v7401 = vpop.f32.mrb[0].mxu0
    %v7402 = vadd.f32 %v7301, %v7401
    %v7403 = vpop.f32.mrb[0].mxu0
    %v7404 = vadd.f32 %v7303, %v7403
    %7405 = vmatprep.mubr.f32.mxu0 0.0
    %v7406 = vand.u32 %v4527, 4294901760
    %7407 = vmatmul.mubr.f32.gmra.mrb[0].mxu0 %v7406
    %v7408 = vpop.f32.mrb[0].mxu0
    %v7409 = vadd.f32 %v7308, %v7408
    %v7410 = vpop.f32.mrb[0].mxu0
    %v7411 = vadd.f32 %v7310, %v7410
    %7412 = vdwg.mxu0
    %v7413 = vld [vmem:[%s2936] sm:$0xff]
    %v7414 = vld [vmem:[%s2936 + $0x8] sm:$0xff]
    %v7415 = vld [vmem:[%s2936 + $0x10] sm:$0xff]
    %v7416 = vld [vmem:[%s2936 + $0x18] sm:$0xff]
    %v7417 = vld [vmem:[%s2936 + $0x20] sm:$0xff]
    %v7418 = vld [vmem:[%s2936 + $0x28] sm:$0xff]
    %v7419 = vld [vmem:[%s2936 + $0x30] sm:$0xf]
    %v7420 = vld [vmem:[%s2936 + $0x38] sm:$0xf]
    %v7422 = vsel %vm46, %v7419, 0
    %v7425 = vsel %vm46, %v7420, 0
    %v7427 = vand.u32 %v7414, 4294901760
    %7428 = vmatprep.subr.mxu0 %v7427
    %v7429 = vand.u32 %v7413, 4294901760
    %7430 = vmatpush1.msra.mxu0 %v7429
    %v7431 = vand.u32 %v7416, 4294901760
    %7432 = vmatprep.subr.mxu0 %v7431
    %v7433 = vand.u32 %v7415, 4294901760
    %7434 = vmatpush1.msra.mxu0 %v7433
    %v7435 = vand.u32 %v7418, 4294901760
    %7436 = vmatprep.subr.mxu0 %v7435
    %v7437 = vand.u32 %v7417, 4294901760
    %7438 = vmatpush1.msra.mxu0 %v7437
    %v7439 = vand.u32 %v7425, 4294901760
    %7440 = vmatprep.subr.mxu0 %v7439
    %v7441 = vand.u32 %v7422, 4294901760
    %7442 = vmatpush1.msra.mxu0 %v7441
    %7443 = vmatprep.subr.mxu0 0.0
    %7444 = vmatpush1.msra.mxu0 0.0
    %7445 = vmatprep.subr.mxu0 0.0
    %7446 = vmatpush1.msra.mxu0 0.0
    %7447 = vmatprep.subr.mxu0 0.0
    %7448 = vmatpush1.msra.mxu0 0.0
    %7449 = vmatprep.subr.mxu0 0.0
    %7450 = vmatpush1.msra.mxu0 0.0
    %7451 = vmatprep.subr.mxu0 0.0
    %7452 = vmatpush1.msra.mxu0 0.0
    %7453 = vmatprep.subr.mxu0 0.0
    %7454 = vmatpush1.msra.mxu0 0.0
    %7455 = vmatprep.subr.mxu0 0.0
    %7456 = vmatpush1.msra.mxu0 0.0
    %7457 = vmatprep.subr.mxu0 0.0
    %7458 = vmatpush1.msra.mxu0 0.0
    %7459 = vmatprep.subr.mxu0 0.0
    %7460 = vmatpush1.msra.mxu0 0.0
    %7461 = vmatprep.subr.mxu0 0.0
    %7462 = vmatpush1.msra.mxu0 0.0
    %7463 = vmatprep.subr.mxu0 0.0
    %7464 = vmatpush1.msra.mxu0 0.0
    %7465 = vmatprep.subr.mxu0 0.0
    %7466 = vmatpush1.msra.mxu0 0.0
    %7467 = vmatprep.subr.mxu0 0.0
    %7468 = vmatpush1.msra.mxu0 0.0
    %7469 = vmatprep.subr.mxu0 0.0
    %7470 = vmatpush1.msra.mxu0 0.0
    %7471 = vmatprep.subr.mxu0 0.0
    %7472 = vmatpush1.msra.mxu0 0.0
    %7473 = vmatprep.subr.mxu0 0.0
    %7474 = vmatpush1.msra.mxu0 0.0
    %7475 = vmatprep.subr.mxu0 0.0
    %7476 = vmatpush1.msra.mxu0 0.0
    %7477 = vmatprep.subr.mxu0 0.0
    %7478 = vmatpush1.msra.mxu0 0.0
    %7479 = vmatprep.subr.mxu0 0.0
    %7480 = vmatpush1.msra.mxu0 0.0
    %7481 = vmatprep.subr.mxu0 0.0
    %7482 = vmatpush1.msra.mxu0 0.0
    %7483 = vmatprep.subr.mxu0 0.0
    %7484 = vmatpush1.msra.mxu0 0.0
    %7485 = vmatprep.subr.mxu0 0.0
    %7486 = vmatpush1.msra.mxu0 0.0
    %7487 = vmatprep.subr.mxu0 0.0
    %7488 = vmatpush1.msra.mxu0 0.0
    %7489 = vmatprep.subr.mxu0 0.0
    %7490 = vmatpush1.msra.mxu0 0.0
    %7491 = vmatprep.subr.mxu0 0.0
    %7492 = vmatpush1.msra.mxu0 0.0
    %7493 = vmatprep.subr.mxu0 0.0
    %7494 = vmatpush1.msra.mxu0 0.0
    %7495 = vmatprep.subr.mxu0 0.0
    %7496 = vmatpush1.msra.mxu0 0.0
    %7497 = vmatprep.subr.mxu0 0.0
    %7498 = vmatpush1.msra.mxu0 0.0
    %7499 = vmatprep.mubr.f32.mxu0 0.0
    %v7500 = vand.u32 %v4518, 4294901760
    %v7501 = vsub.f32 %v4518, %v7500
    %v7502 = vand.u32 %v7501, 4294901760
    %v7503 = vsub.f32 %v7501, %v7502
    %v7504 = vand.u32 %v7503, 4294901760
    %7505 = vmatmul.mubr.f32.gmra.mrb[0].mxu0 %v7504
    %v7506 = vpop.f32.mrb[0].mxu0
    %v7507 = vadd.f32 0.0, %v7506
    %v7508 = vpop.f32.mrb[0].mxu0
    %v7509 = vadd.f32 0.0, %v7508
    %7510 = vmatprep.mubr.f32.mxu0 0.0
    %v7511 = vand.u32 %v4521, 4294901760
    %v7512 = vsub.f32 %v4521, %v7511
    %v7513 = vand.u32 %v7512, 4294901760
    %v7514 = vsub.f32 %v7512, %v7513
    %v7515 = vand.u32 %v7514, 4294901760
    %7516 = vmatmul.mubr.f32.gmra.mrb[0].mxu0 %v7515
    %v7517 = vpop.f32.mrb[0].mxu0
    %v7518 = vadd.f32 0.0, %v7517
    %v7519 = vpop.f32.mrb[0].mxu0
    %v7520 = vadd.f32 0.0, %v7519
    %7521 = vmatprep.mubr.f32.mxu0 0.0
    %v7522 = vand.u32 %v4524, 4294901760
    %v7523 = vsub.f32 %v4524, %v7522
    %v7524 = vand.u32 %v7523, 4294901760
    %v7525 = vsub.f32 %v7523, %v7524
    %v7526 = vand.u32 %v7525, 4294901760
    %7527 = vmatmul.mubr.f32.gmra.mrb[0].mxu0 %v7526
    %v7528 = vpop.f32.mrb[0].mxu0
    %v7529 = vadd.f32 0.0, %v7528
    %v7530 = vpop.f32.mrb[0].mxu0
    %v7531 = vadd.f32 0.0, %v7530
    %7532 = vmatprep.mubr.f32.mxu0 0.0
    %v7533 = vand.u32 %v4527, 4294901760
    %v7534 = vsub.f32 %v4527, %v7533
    %v7535 = vand.u32 %v7534, 4294901760
    %v7536 = vsub.f32 %v7534, %v7535
    %v7537 = vand.u32 %v7536, 4294901760
    %7538 = vmatmul.mubr.f32.gmra.mrb[0].mxu0 %v7537
    %v7539 = vpop.f32.mrb[0].mxu0
    %v7540 = vadd.f32 0.0, %v7539
    %v7541 = vpop.f32.mrb[0].mxu0
    %v7542 = vadd.f32 0.0, %v7541
    %7543 = vdwg.mxu0
    %v7544 = vand.u32 %v7414, 4294901760
    %v7545 = vsub.f32 %v7414, %v7544
    %v7546 = vand.u32 %v7545, 4294901760
    %v7547 = vsub.f32 %v7545, %v7546
    %v7548 = vand.u32 %v7547, 4294901760
    %7549 = vmatprep.subr.mxu0 %v7548
    %v7550 = vand.u32 %v7413, 4294901760
    %v7551 = vsub.f32 %v7413, %v7550
    %v7552 = vand.u32 %v7551, 4294901760
    %v7553 = vsub.f32 %v7551, %v7552
    %v7554 = vand.u32 %v7553, 4294901760
    %7555 = vmatpush1.msra.mxu0 %v7554
    %v7556 = vand.u32 %v7416, 4294901760
    %v7557 = vsub.f32 %v7416, %v7556
    %v7558 = vand.u32 %v7557, 4294901760
    %v7559 = vsub.f32 %v7557, %v7558
    %v7560 = vand.u32 %v7559, 4294901760
    %7561 = vmatprep.subr.mxu0 %v7560
    %v7562 = vand.u32 %v7415, 4294901760
    %v7563 = vsub.f32 %v7415, %v7562
    %v7564 = vand.u32 %v7563, 4294901760
    %v7565 = vsub.f32 %v7563, %v7564
    %v7566 = vand.u32 %v7565, 4294901760
    %7567 = vmatpush1.msra.mxu0 %v7566
    %v7568 = vand.u32 %v7418, 4294901760
    %v7569 = vsub.f32 %v7418, %v7568
    %v7570 = vand.u32 %v7569, 4294901760
    %v7571 = vsub.f32 %v7569, %v7570
    %v7572 = vand.u32 %v7571, 4294901760
    %7573 = vmatprep.subr.mxu0 %v7572
    %v7574 = vand.u32 %v7417, 4294901760
    %v7575 = vsub.f32 %v7417, %v7574
    %v7576 = vand.u32 %v7575, 4294901760
    %v7577 = vsub.f32 %v7575, %v7576
    %v7578 = vand.u32 %v7577, 4294901760
    %7579 = vmatpush1.msra.mxu0 %v7578
    %v7580 = vand.u32 %v7425, 4294901760
    %v7581 = vsub.f32 %v7425, %v7580
    %v7582 = vand.u32 %v7581, 4294901760
    %v7583 = vsub.f32 %v7581, %v7582
    %v7584 = vand.u32 %v7583, 4294901760
    %7585 = vmatprep.subr.mxu0 %v7584
    %v7586 = vand.u32 %v7422, 4294901760
    %v7587 = vsub.f32 %v7422, %v7586
    %v7588 = vand.u32 %v7587, 4294901760
    %v7589 = vsub.f32 %v7587, %v7588
    %v7590 = vand.u32 %v7589, 4294901760
    %7591 = vmatpush1.msra.mxu0 %v7590
    %7592 = vmatprep.subr.mxu0 0.0
    %7593 = vmatpush1.msra.mxu0 0.0
    %7594 = vmatprep.subr.mxu0 0.0
    %7595 = vmatpush1.msra.mxu0 0.0
    %7596 = vmatprep.subr.mxu0 0.0
    %7597 = vmatpush1.msra.mxu0 0.0
    %7598 = vmatprep.subr.mxu0 0.0
    %7599 = vmatpush1.msra.mxu0 0.0
    %7600 = vmatprep.subr.mxu0 0.0
    %7601 = vmatpush1.msra.mxu0 0.0
    %7602 = vmatprep.subr.mxu0 0.0
    %7603 = vmatpush1.msra.mxu0 0.0
    %7604 = vmatprep.subr.mxu0 0.0
    %7605 = vmatpush1.msra.mxu0 0.0
    %7606 = vmatprep.subr.mxu0 0.0
    %7607 = vmatpush1.msra.mxu0 0.0
    %7608 = vmatprep.subr.mxu0 0.0
    %7609 = vmatpush1.msra.mxu0 0.0
    %7610 = vmatprep.subr.mxu0 0.0
    %7611 = vmatpush1.msra.mxu0 0.0
    %7612 = vmatprep.subr.mxu0 0.0
    %7613 = vmatpush1.msra.mxu0 0.0
    %7614 = vmatprep.subr.mxu0 0.0
    %7615 = vmatpush1.msra.mxu0 0.0
    %7616 = vmatprep.subr.mxu0 0.0
    %7617 = vmatpush1.msra.mxu0 0.0
    %7618 = vmatprep.subr.mxu0 0.0
    %7619 = vmatpush1.msra.mxu0 0.0
    %7620 = vmatprep.subr.mxu0 0.0
    %7621 = vmatpush1.msra.mxu0 0.0
    %7622 = vmatprep.subr.mxu0 0.0
    %7623 = vmatpush1.msra.mxu0 0.0
    %7624 = vmatprep.subr.mxu0 0.0
    %7625 = vmatpush1.msra.mxu0 0.0
    %7626 = vmatprep.subr.mxu0 0.0
    %7627 = vmatpush1.msra.mxu0 0.0
    %7628 = vmatprep.subr.mxu0 0.0
    %7629 = vmatpush1.msra.mxu0 0.0
    %7630 = vmatprep.subr.mxu0 0.0
    %7631 = vmatpush1.msra.mxu0 0.0
    %7632 = vmatprep.subr.mxu0 0.0
    %7633 = vmatpush1.msra.mxu0 0.0
    %7634 = vmatprep.subr.mxu0 0.0
    %7635 = vmatpush1.msra.mxu0 0.0
    %7636 = vmatprep.subr.mxu0 0.0
    %7637 = vmatpush1.msra.mxu0 0.0
    %7638 = vmatprep.subr.mxu0 0.0
    %7639 = vmatpush1.msra.mxu0 0.0
    %7640 = vmatprep.subr.mxu0 0.0
    %7641 = vmatpush1.msra.mxu0 0.0
    %7642 = vmatprep.subr.mxu0 0.0
    %7643 = vmatpush1.msra.mxu0 0.0
    %7644 = vmatprep.subr.mxu0 0.0
    %7645 = vmatpush1.msra.mxu0 0.0
    %7646 = vmatprep.subr.mxu0 0.0
    %7647 = vmatpush1.msra.mxu0 0.0
    %7648 = vmatprep.mubr.f32.mxu0 0.0
    %v7649 = vand.u32 %v4518, 4294901760
    %7650 = vmatmul.mubr.f32.gmra.mrb[0].mxu0 %v7649
    %v7651 = vpop.f32.mrb[0].mxu0
    %v7652 = vadd.f32 %v7507, %v7651
    %v7653 = vpop.f32.mrb[0].mxu0
    %v7654 = vadd.f32 %v7509, %v7653
    %7655 = vmatprep.mubr.f32.mxu0 0.0
    %v7656 = vand.u32 %v4521, 4294901760
    %7657 = vmatmul.mubr.f32.gmra.mrb[0].mxu0 %v7656
    %v7658 = vpop.f32.mrb[0].mxu0
    %v7659 = vadd.f32 %v7518, %v7658
    %v7660 = vpop.f32.mrb[0].mxu0
    %v7661 = vadd.f32 %v7520, %v7660
    %7662 = vmatprep.mubr.f32.mxu0 0.0
    %v7663 = vand.u32 %v4524, 4294901760
    %7664 = vmatmul.mubr.f32.gmra.mrb[0].mxu0 %v7663
    %v7665 = vpop.f32.mrb[0].mxu0
    %v7666 = vadd.f32 %v7529, %v7665
    %v7667 = vpop.f32.mrb[0].mxu0
    %v7668 = vadd.f32 %v7531, %v7667
    %7669 = vmatprep.mubr.f32.mxu0 0.0
    %v7670 = vand.u32 %v4527, 4294901760
    %7671 = vmatmul.mubr.f32.gmra.mrb[0].mxu0 %v7670
    %v7672 = vpop.f32.mrb[0].mxu0
    %v7673 = vadd.f32 %v7540, %v7672
    %v7674 = vpop.f32.mrb[0].mxu0
    %v7675 = vadd.f32 %v7542, %v7674
    %7676 = vdwg.mxu0
    %v7677 = vand.u32 %v7414, 4294901760
    %v7678 = vsub.f32 %v7414, %v7677
    %7679 = vmatprep.subr.mxu0 %v7678
    %v7680 = vand.u32 %v7413, 4294901760
    %v7681 = vsub.f32 %v7413, %v7680
    %7682 = vmatpush1.msra.mxu0 %v7681
    %v7683 = vand.u32 %v7416, 4294901760
    %v7684 = vsub.f32 %v7416, %v7683
    %7685 = vmatprep.subr.mxu0 %v7684
    %v7686 = vand.u32 %v7415, 4294901760
    %v7687 = vsub.f32 %v7415, %v7686
    %7688 = vmatpush1.msra.mxu0 %v7687
    %v7689 = vand.u32 %v7418, 4294901760
    %v7690 = vsub.f32 %v7418, %v7689
    %7691 = vmatprep.subr.mxu0 %v7690
    %v7692 = vand.u32 %v7417, 4294901760
    %v7693 = vsub.f32 %v7417, %v7692
    %7694 = vmatpush1.msra.mxu0 %v7693
    %v7695 = vand.u32 %v7425, 4294901760
    %v7696 = vsub.f32 %v7425, %v7695
    %7697 = vmatprep.subr.mxu0 %v7696
    %v7698 = vand.u32 %v7422, 4294901760
    %v7699 = vsub.f32 %v7422, %v7698
    %7700 = vmatpush1.msra.mxu0 %v7699
    %7701 = vmatprep.subr.mxu0 0.0
    %7702 = vmatpush1.msra.mxu0 0.0
    %7703 = vmatprep.subr.mxu0 0.0
    %7704 = vmatpush1.msra.mxu0 0.0
    %7705 = vmatprep.subr.mxu0 0.0
    %7706 = vmatpush1.msra.mxu0 0.0
    %7707 = vmatprep.subr.mxu0 0.0
    %7708 = vmatpush1.msra.mxu0 0.0
    %7709 = vmatprep.subr.mxu0 0.0
    %7710 = vmatpush1.msra.mxu0 0.0
    %7711 = vmatprep.subr.mxu0 0.0
    %7712 = vmatpush1.msra.mxu0 0.0
    %7713 = vmatprep.subr.mxu0 0.0
    %7714 = vmatpush1.msra.mxu0 0.0
    %7715 = vmatprep.subr.mxu0 0.0
    %7716 = vmatpush1.msra.mxu0 0.0
    %7717 = vmatprep.subr.mxu0 0.0
    %7718 = vmatpush1.msra.mxu0 0.0
    %7719 = vmatprep.subr.mxu0 0.0
    %7720 = vmatpush1.msra.mxu0 0.0
    %7721 = vmatprep.subr.mxu0 0.0
    %7722 = vmatpush1.msra.mxu0 0.0
    %7723 = vmatprep.subr.mxu0 0.0
    %7724 = vmatpush1.msra.mxu0 0.0
    %7725 = vmatprep.subr.mxu0 0.0
    %7726 = vmatpush1.msra.mxu0 0.0
    %7727 = vmatprep.subr.mxu0 0.0
    %7728 = vmatpush1.msra.mxu0 0.0
    %7729 = vmatprep.subr.mxu0 0.0
    %7730 = vmatpush1.msra.mxu0 0.0
    %7731 = vmatprep.subr.mxu0 0.0
    %7732 = vmatpush1.msra.mxu0 0.0
    %7733 = vmatprep.subr.mxu0 0.0
    %7734 = vmatpush1.msra.mxu0 0.0
    %7735 = vmatprep.subr.mxu0 0.0
    %7736 = vmatpush1.msra.mxu0 0.0
    %7737 = vmatprep.subr.mxu0 0.0
    %7738 = vmatpush1.msra.mxu0 0.0
    %7739 = vmatprep.subr.mxu0 0.0
    %7740 = vmatpush1.msra.mxu0 0.0
    %7741 = vmatprep.subr.mxu0 0.0
    %7742 = vmatpush1.msra.mxu0 0.0
    %7743 = vmatprep.subr.mxu0 0.0
    %7744 = vmatpush1.msra.mxu0 0.0
    %7745 = vmatprep.subr.mxu0 0.0
    %7746 = vmatpush1.msra.mxu0 0.0
    %7747 = vmatprep.subr.mxu0 0.0
    %7748 = vmatpush1.msra.mxu0 0.0
    %7749 = vmatprep.subr.mxu0 0.0
    %7750 = vmatpush1.msra.mxu0 0.0
    %7751 = vmatprep.subr.mxu0 0.0
    %7752 = vmatpush1.msra.mxu0 0.0
    %7753 = vmatprep.subr.mxu0 0.0
    %7754 = vmatpush1.msra.mxu0 0.0
    %7755 = vmatprep.subr.mxu0 0.0
    %7756 = vmatpush1.msra.mxu0 0.0
    %7757 = vmatprep.mubr.f32.mxu0 0.0
    %v7758 = vand.u32 %v4518, 4294901760
    %v7759 = vsub.f32 %v4518, %v7758
    %7760 = vmatmul.mubr.f32.gmra.mrb[0].mxu0 %v7759
    %v7761 = vpop.f32.mrb[0].mxu0
    %v7762 = vadd.f32 %v7652, %v7761
    %v7763 = vpop.f32.mrb[0].mxu0
    %v7764 = vadd.f32 %v7654, %v7763
    %7765 = vmatprep.mubr.f32.mxu0 0.0
    %v7766 = vand.u32 %v4521, 4294901760
    %v7767 = vsub.f32 %v4521, %v7766
    %7768 = vmatmul.mubr.f32.gmra.mrb[0].mxu0 %v7767
    %v7769 = vpop.f32.mrb[0].mxu0
    %v7770 = vadd.f32 %v7659, %v7769
    %v7771 = vpop.f32.mrb[0].mxu0
    %v7772 = vadd.f32 %v7661, %v7771
    %7773 = vmatprep.mubr.f32.mxu0 0.0
    %v7774 = vand.u32 %v4524, 4294901760
    %v7775 = vsub.f32 %v4524, %v7774
    %7776 = vmatmul.mubr.f32.gmra.mrb[0].mxu0 %v7775
    %v7777 = vpop.f32.mrb[0].mxu0
    %v7778 = vadd.f32 %v7666, %v7777
    %v7779 = vpop.f32.mrb[0].mxu0
    %v7780 = vadd.f32 %v7668, %v7779
    %7781 = vmatprep.mubr.f32.mxu0 0.0
    %v7782 = vand.u32 %v4527, 4294901760
    %v7783 = vsub.f32 %v4527, %v7782
    %7784 = vmatmul.mubr.f32.gmra.mrb[0].mxu0 %v7783
    %v7785 = vpop.f32.mrb[0].mxu0
    %v7786 = vadd.f32 %v7673, %v7785
    %v7787 = vpop.f32.mrb[0].mxu0
    %v7788 = vadd.f32 %v7675, %v7787
    %7789 = vdwg.mxu0
    %v7790 = vand.u32 %v7414, 4294901760
    %7791 = vmatprep.subr.mxu0 %v7790
    %v7792 = vand.u32 %v7413, 4294901760
    %7793 = vmatpush1.msra.mxu0 %v7792
    %v7794 = vand.u32 %v7416, 4294901760
    %7795 = vmatprep.subr.mxu0 %v7794
    %v7796 = vand.u32 %v7415, 4294901760
    %7797 = vmatpush1.msra.mxu0 %v7796
    %v7798 = vand.u32 %v7418, 4294901760
    %7799 = vmatprep.subr.mxu0 %v7798
    %v7800 = vand.u32 %v7417, 4294901760
    %7801 = vmatpush1.msra.mxu0 %v7800
    %v7802 = vand.u32 %v7425, 4294901760
    %7803 = vmatprep.subr.mxu0 %v7802
    %v7804 = vand.u32 %v7422, 4294901760
    %7805 = vmatpush1.msra.mxu0 %v7804
    %7806 = vmatprep.subr.mxu0 0.0
    %7807 = vmatpush1.msra.mxu0 0.0
    %7808 = vmatprep.subr.mxu0 0.0
    %7809 = vmatpush1.msra.mxu0 0.0
    %7810 = vmatprep.subr.mxu0 0.0
    %7811 = vmatpush1.msra.mxu0 0.0
    %7812 = vmatprep.subr.mxu0 0.0
    %7813 = vmatpush1.msra.mxu0 0.0
    %7814 = vmatprep.subr.mxu0 0.0
    %7815 = vmatpush1.msra.mxu0 0.0
    %7816 = vmatprep.subr.mxu0 0.0
    %7817 = vmatpush1.msra.mxu0 0.0
    %7818 = vmatprep.subr.mxu0 0.0
    %7819 = vmatpush1.msra.mxu0 0.0
    %7820 = vmatprep.subr.mxu0 0.0
    %7821 = vmatpush1.msra.mxu0 0.0
    %7822 = vmatprep.subr.mxu0 0.0
    %7823 = vmatpush1.msra.mxu0 0.0
    %7824 = vmatprep.subr.mxu0 0.0
    %7825 = vmatpush1.msra.mxu0 0.0
    %7826 = vmatprep.subr.mxu0 0.0
    %7827 = vmatpush1.msra.mxu0 0.0
    %7828 = vmatprep.subr.mxu0 0.0
    %7829 = vmatpush1.msra.mxu0 0.0
    %7830 = vmatprep.subr.mxu0 0.0
    %7831 = vmatpush1.msra.mxu0 0.0
    %7832 = vmatprep.subr.mxu0 0.0
    %7833 = vmatpush1.msra.mxu0 0.0
    %7834 = vmatprep.subr.mxu0 0.0
    %7835 = vmatpush1.msra.mxu0 0.0
    %7836 = vmatprep.subr.mxu0 0.0
    %7837 = vmatpush1.msra.mxu0 0.0
    %7838 = vmatprep.subr.mxu0 0.0
    %7839 = vmatpush1.msra.mxu0 0.0
    %7840 = vmatprep.subr.mxu0 0.0
    %7841 = vmatpush1.msra.mxu0 0.0
    %7842 = vmatprep.subr.mxu0 0.0
    %7843 = vmatpush1.msra.mxu0 0.0
    %7844 = vmatprep.subr.mxu0 0.0
    %7845 = vmatpush1.msra.mxu0 0.0
    %7846 = vmatprep.subr.mxu0 0.0
    %7847 = vmatpush1.msra.mxu0 0.0
    %7848 = vmatprep.subr.mxu0 0.0
    %7849 = vmatpush1.msra.mxu0 0.0
    %7850 = vmatprep.subr.mxu0 0.0
    %7851 = vmatpush1.msra.mxu0 0.0
    %7852 = vmatprep.subr.mxu0 0.0
    %7853 = vmatpush1.msra.mxu0 0.0
    %7854 = vmatprep.subr.mxu0 0.0
    %7855 = vmatpush1.msra.mxu0 0.0
    %7856 = vmatprep.subr.mxu0 0.0
    %7857 = vmatpush1.msra.mxu0 0.0
    %7858 = vmatprep.subr.mxu0 0.0
    %7859 = vmatpush1.msra.mxu0 0.0
    %7860 = vmatprep.subr.mxu0 0.0
    %7861 = vmatpush1.msra.mxu0 0.0
    %7862 = vmatprep.mubr.f32.mxu0 0.0
    %v7863 = vand.u32 %v4518, 4294901760
    %v7864 = vsub.f32 %v4518, %v7863
    %v7865 = vand.u32 %v7864, 4294901760
    %7866 = vmatmul.mubr.f32.gmra.mrb[0].mxu0 %v7865
    %v7867 = vpop.f32.mrb[0].mxu0
    %v7868 = vadd.f32 %v7762, %v7867
    %v7869 = vpop.f32.mrb[0].mxu0
    %v7870 = vadd.f32 %v7764, %v7869
    %7871 = vmatprep.mubr.f32.mxu0 0.0
    %v7872 = vand.u32 %v4521, 4294901760
    %v7873 = vsub.f32 %v4521, %v7872
    %v7874 = vand.u32 %v7873, 4294901760
    %7875 = vmatmul.mubr.f32.gmra.mrb[0].mxu0 %v7874
    %v7876 = vpop.f32.mrb[0].mxu0
    %v7877 = vadd.f32 %v7770, %v7876
    %v7878 = vpop.f32.mrb[0].mxu0
    %v7879 = vadd.f32 %v7772, %v7878
    %7880 = vmatprep.mubr.f32.mxu0 0.0
    %v7881 = vand.u32 %v4524, 4294901760
    %v7882 = vsub.f32 %v4524, %v7881
    %v7883 = vand.u32 %v7882, 4294901760
    %7884 = vmatmul.mubr.f32.gmra.mrb[0].mxu0 %v7883
    %v7885 = vpop.f32.mrb[0].mxu0
    %v7886 = vadd.f32 %v7778, %v7885
    %v7887 = vpop.f32.mrb[0].mxu0
    %v7888 = vadd.f32 %v7780, %v7887
    %7889 = vmatprep.mubr.f32.mxu0 0.0
    %v7890 = vand.u32 %v4527, 4294901760
    %v7891 = vsub.f32 %v4527, %v7890
    %v7892 = vand.u32 %v7891, 4294901760
    %7893 = vmatmul.mubr.f32.gmra.mrb[0].mxu0 %v7892
    %v7894 = vpop.f32.mrb[0].mxu0
    %v7895 = vadd.f32 %v7786, %v7894
    %v7896 = vpop.f32.mrb[0].mxu0
    %v7897 = vadd.f32 %v7788, %v7896
    %7898 = vdwg.mxu0
    %v7899 = vand.u32 %v7414, 4294901760
    %v7900 = vsub.f32 %v7414, %v7899
    %v7901 = vand.u32 %v7900, 4294901760
    %7902 = vmatprep.subr.mxu0 %v7901
    %v7903 = vand.u32 %v7413, 4294901760
    %v7904 = vsub.f32 %v7413, %v7903
    %v7905 = vand.u32 %v7904, 4294901760
    %7906 = vmatpush1.msra.mxu0 %v7905
    %v7907 = vand.u32 %v7416, 4294901760
    %v7908 = vsub.f32 %v7416, %v7907
    %v7909 = vand.u32 %v7908, 4294901760
    %7910 = vmatprep.subr.mxu0 %v7909
    %v7911 = vand.u32 %v7415, 4294901760
    %v7912 = vsub.f32 %v7415, %v7911
    %v7913 = vand.u32 %v7912, 4294901760
    %7914 = vmatpush1.msra.mxu0 %v7913
    %v7915 = vand.u32 %v7418, 4294901760
    %v7916 = vsub.f32 %v7418, %v7915
    %v7917 = vand.u32 %v7916, 4294901760
    %7918 = vmatprep.subr.mxu0 %v7917
    %v7919 = vand.u32 %v7417, 4294901760
    %v7920 = vsub.f32 %v7417, %v7919
    %v7921 = vand.u32 %v7920, 4294901760
    %7922 = vmatpush1.msra.mxu0 %v7921
    %v7923 = vand.u32 %v7425, 4294901760
    %v7924 = vsub.f32 %v7425, %v7923
    %v7925 = vand.u32 %v7924, 4294901760
    %7926 = vmatprep.subr.mxu0 %v7925
    %v7927 = vand.u32 %v7422, 4294901760
    %v7928 = vsub.f32 %v7422, %v7927
    %v7929 = vand.u32 %v7928, 4294901760
    %7930 = vmatpush1.msra.mxu0 %v7929
    %7931 = vmatprep.subr.mxu0 0.0
    %7932 = vmatpush1.msra.mxu0 0.0
    %7933 = vmatprep.subr.mxu0 0.0
    %7934 = vmatpush1.msra.mxu0 0.0
    %7935 = vmatprep.subr.mxu0 0.0
    %7936 = vmatpush1.msra.mxu0 0.0
    %7937 = vmatprep.subr.mxu0 0.0
    %7938 = vmatpush1.msra.mxu0 0.0
    %7939 = vmatprep.subr.mxu0 0.0
    %7940 = vmatpush1.msra.mxu0 0.0
    %7941 = vmatprep.subr.mxu0 0.0
    %7942 = vmatpush1.msra.mxu0 0.0
    %7943 = vmatprep.subr.mxu0 0.0
    %7944 = vmatpush1.msra.mxu0 0.0
    %7945 = vmatprep.subr.mxu0 0.0
    %7946 = vmatpush1.msra.mxu0 0.0
    %7947 = vmatprep.subr.mxu0 0.0
    %7948 = vmatpush1.msra.mxu0 0.0
    %7949 = vmatprep.subr.mxu0 0.0
    %7950 = vmatpush1.msra.mxu0 0.0
    %7951 = vmatprep.subr.mxu0 0.0
    %7952 = vmatpush1.msra.mxu0 0.0
    %7953 = vmatprep.subr.mxu0 0.0
    %7954 = vmatpush1.msra.mxu0 0.0
    %7955 = vmatprep.subr.mxu0 0.0
    %7956 = vmatpush1.msra.mxu0 0.0
    %7957 = vmatprep.subr.mxu0 0.0
    %7958 = vmatpush1.msra.mxu0 0.0
    %7959 = vmatprep.subr.mxu0 0.0
    %7960 = vmatpush1.msra.mxu0 0.0
    %7961 = vmatprep.subr.mxu0 0.0
    %7962 = vmatpush1.msra.mxu0 0.0
    %7963 = vmatprep.subr.mxu0 0.0
    %7964 = vmatpush1.msra.mxu0 0.0
    %7965 = vmatprep.subr.mxu0 0.0
    %7966 = vmatpush1.msra.mxu0 0.0
    %7967 = vmatprep.subr.mxu0 0.0
    %7968 = vmatpush1.msra.mxu0 0.0
    %7969 = vmatprep.subr.mxu0 0.0
    %7970 = vmatpush1.msra.mxu0 0.0
    %7971 = vmatprep.subr.mxu0 0.0
    %7972 = vmatpush1.msra.mxu0 0.0
    %7973 = vmatprep.subr.mxu0 0.0
    %7974 = vmatpush1.msra.mxu0 0.0
    %7975 = vmatprep.subr.mxu0 0.0
    %7976 = vmatpush1.msra.mxu0 0.0
    %7977 = vmatprep.subr.mxu0 0.0
    %7978 = vmatpush1.msra.mxu0 0.0
    %7979 = vmatprep.subr.mxu0 0.0
    %7980 = vmatpush1.msra.mxu0 0.0
    %7981 = vmatprep.subr.mxu0 0.0
    %7982 = vmatpush1.msra.mxu0 0.0
    %7983 = vmatprep.subr.mxu0 0.0
    %7984 = vmatpush1.msra.mxu0 0.0
    %7985 = vmatprep.subr.mxu0 0.0
    %7986 = vmatpush1.msra.mxu0 0.0
    %7987 = vmatprep.mubr.f32.mxu0 0.0
    %v7988 = vand.u32 %v4518, 4294901760
    %7989 = vmatmul.mubr.f32.gmra.mrb[0].mxu0 %v7988
    %v7990 = vpop.f32.mrb[0].mxu0
    %v7991 = vadd.f32 %v7868, %v7990
    %v7992 = vpop.f32.mrb[0].mxu0
    %v7993 = vadd.f32 %v7870, %v7992
    %7994 = vmatprep.mubr.f32.mxu0 0.0
    %v7995 = vand.u32 %v4521, 4294901760
    %7996 = vmatmul.mubr.f32.gmra.mrb[0].mxu0 %v7995
    %v7997 = vpop.f32.mrb[0].mxu0
    %v7998 = vadd.f32 %v7877, %v7997
    %v7999 = vpop.f32.mrb[0].mxu0
    %v8000 = vadd.f32 %v7879, %v7999
    %8001 = vmatprep.mubr.f32.mxu0 0.0
    %v8002 = vand.u32 %v4524, 4294901760
    %8003 = vmatmul.mubr.f32.gmra.mrb[0].mxu0 %v8002
    %v8004 = vpop.f32.mrb[0].mxu0
    %v8005 = vadd.f32 %v7886, %v8004
    %v8006 = vpop.f32.mrb[0].mxu0
    %v8007 = vadd.f32 %v7888, %v8006
    %8008 = vmatprep.mubr.f32.mxu0 0.0
    %v8009 = vand.u32 %v4527, 4294901760
    %8010 = vmatmul.mubr.f32.gmra.mrb[0].mxu0 %v8009
    %v8011 = vpop.f32.mrb[0].mxu0
    %v8012 = vadd.f32 %v7895, %v8011
    %v8013 = vpop.f32.mrb[0].mxu0
    %v8014 = vadd.f32 %v7897, %v8013
    %8015 = vdwg.mxu0
    %v8016 = vand.u32 %v7414, 4294901760
    %8017 = vmatprep.subr.mxu0 %v8016
    %v8018 = vand.u32 %v7413, 4294901760
    %8019 = vmatpush1.msra.mxu0 %v8018
    %v8020 = vand.u32 %v7416, 4294901760
    %8021 = vmatprep.subr.mxu0 %v8020
    %v8022 = vand.u32 %v7415, 4294901760
    %8023 = vmatpush1.msra.mxu0 %v8022
    %v8024 = vand.u32 %v7418, 4294901760
    %8025 = vmatprep.subr.mxu0 %v8024
    %v8026 = vand.u32 %v7417, 4294901760
    %8027 = vmatpush1.msra.mxu0 %v8026
    %v8028 = vand.u32 %v7425, 4294901760
    %8029 = vmatprep.subr.mxu0 %v8028
    %v8030 = vand.u32 %v7422, 4294901760
    %8031 = vmatpush1.msra.mxu0 %v8030
    %8032 = vmatprep.subr.mxu0 0.0
    %8033 = vmatpush1.msra.mxu0 0.0
    %8034 = vmatprep.subr.mxu0 0.0
    %8035 = vmatpush1.msra.mxu0 0.0
    %8036 = vmatprep.subr.mxu0 0.0
    %8037 = vmatpush1.msra.mxu0 0.0
    %8038 = vmatprep.subr.mxu0 0.0
    %8039 = vmatpush1.msra.mxu0 0.0
    %8040 = vmatprep.subr.mxu0 0.0
    %8041 = vmatpush1.msra.mxu0 0.0
    %8042 = vmatprep.subr.mxu0 0.0
    %8043 = vmatpush1.msra.mxu0 0.0
    %8044 = vmatprep.subr.mxu0 0.0
    %8045 = vmatpush1.msra.mxu0 0.0
    %8046 = vmatprep.subr.mxu0 0.0
    %8047 = vmatpush1.msra.mxu0 0.0
    %8048 = vmatprep.subr.mxu0 0.0
    %8049 = vmatpush1.msra.mxu0 0.0
    %8050 = vmatprep.subr.mxu0 0.0
    %8051 = vmatpush1.msra.mxu0 0.0
    %8052 = vmatprep.subr.mxu0 0.0
    %8053 = vmatpush1.msra.mxu0 0.0
    %8054 = vmatprep.subr.mxu0 0.0
    %8055 = vmatpush1.msra.mxu0 0.0
    %8056 = vmatprep.subr.mxu0 0.0
    %8057 = vmatpush1.msra.mxu0 0.0
    %8058 = vmatprep.subr.mxu0 0.0
    %8059 = vmatpush1.msra.mxu0 0.0
    %8060 = vmatprep.subr.mxu0 0.0
    %8061 = vmatpush1.msra.mxu0 0.0
    %8062 = vmatprep.subr.mxu0 0.0
    %8063 = vmatpush1.msra.mxu0 0.0
    %8064 = vmatprep.subr.mxu0 0.0
    %8065 = vmatpush1.msra.mxu0 0.0
    %8066 = vmatprep.subr.mxu0 0.0
    %8067 = vmatpush1.msra.mxu0 0.0
    %8068 = vmatprep.subr.mxu0 0.0
    %8069 = vmatpush1.msra.mxu0 0.0
    %8070 = vmatprep.subr.mxu0 0.0
    %8071 = vmatpush1.msra.mxu0 0.0
    %8072 = vmatprep.subr.mxu0 0.0
    %8073 = vmatpush1.msra.mxu0 0.0
    %8074 = vmatprep.subr.mxu0 0.0
    %8075 = vmatpush1.msra.mxu0 0.0
    %8076 = vmatprep.subr.mxu0 0.0
    %8077 = vmatpush1.msra.mxu0 0.0
    %8078 = vmatprep.subr.mxu0 0.0
    %8079 = vmatpush1.msra.mxu0 0.0
    %8080 = vmatprep.subr.mxu0 0.0
    %8081 = vmatpush1.msra.mxu0 0.0
    %8082 = vmatprep.subr.mxu0 0.0
    %8083 = vmatpush1.msra.mxu0 0.0
    %8084 = vmatprep.subr.mxu0 0.0
    %8085 = vmatpush1.msra.mxu0 0.0
    %8086 = vmatprep.subr.mxu0 0.0
    %8087 = vmatpush1.msra.mxu0 0.0
    %8088 = vmatprep.mubr.f32.mxu0 0.0
    %v8089 = vand.u32 %v4518, 4294901760
    %8090 = vmatmul.mubr.f32.gmra.mrb[0].mxu0 %v8089
    %v8091 = vpop.f32.mrb[0].mxu0
    %v8092 = vadd.f32 %v7991, %v8091
    %v8093 = vpop.f32.mrb[0].mxu0
    %v8094 = vadd.f32 %v7993, %v8093
    %8095 = vmatprep.mubr.f32.mxu0 0.0
    %v8096 = vand.u32 %v4521, 4294901760
    %8097 = vmatmul.mubr.f32.gmra.mrb[0].mxu0 %v8096
    %v8098 = vpop.f32.mrb[0].mxu0
    %v8099 = vadd.f32 %v7998, %v8098
    %v8100 = vpop.f32.mrb[0].mxu0
    %v8101 = vadd.f32 %v8000, %v8100
    %8102 = vmatprep.mubr.f32.mxu0 0.0
    %v8103 = vand.u32 %v4524, 4294901760
    %8104 = vmatmul.mubr.f32.gmra.mrb[0].mxu0 %v8103
    %v8105 = vpop.f32.mrb[0].mxu0
    %v8106 = vadd.f32 %v8005, %v8105
    %v8107 = vpop.f32.mrb[0].mxu0
    %v8108 = vadd.f32 %v8007, %v8107
    %8109 = vmatprep.mubr.f32.mxu0 0.0
    %v8110 = vand.u32 %v4527, 4294901760
    %8111 = vmatmul.mubr.f32.gmra.mrb[0].mxu0 %v8110
    %v8112 = vpop.f32.mrb[0].mxu0
    %v8113 = vadd.f32 %v8012, %v8112
    %v8114 = vpop.f32.mrb[0].mxu0
    %v8115 = vadd.f32 %v8014, %v8114
    %8116 = vdwg.mxu0
    %v8125 = vrot.slane %v8092, 1
    %v8126 = vrot.slane %v8099, 1
    %v8127 = vsel %vm1456, %v8125, %v8126
    %v8128 = vrot.slane %v8094, 1
    %v8129 = vrot.slane %v8101, 1
    %v8130 = vsel %vm1456, %v8128, %v8129
    %v8131 = vrot.slane %v8106, 1
    %v8132 = vsel %vm1456, %v8126, %v8131
    %v8133 = vrot.slane %v8108, 1
    %v8134 = vsel %vm1456, %v8129, %v8133
    %v8135 = vrot.slane %v8113, 1
    %v8136 = vsel %vm1456, %v8131, %v8135
    %v8137 = vrot.slane %v8115, 1
    %v8138 = vsel %vm1456, %v8133, %v8137
    %v8147 = vadd.f32 %v7388, %v8127
    %v8148 = vadd.f32 %v7390, %v8130
    %v8149 = vadd.f32 %v7395, %v8132
    %v8150 = vadd.f32 %v7397, %v8134
    %v8151 = vadd.f32 %v7402, %v8136
    %v8152 = vadd.f32 %v7404, %v8138
    %v8153 = vadd.f32 %v7409, %v8135
    %v8154 = vadd.f32 %v7411, %v8137
    %v8155 = vld [vmem:[%s3679] sm:$0xff]
    %v8156 = vld [vmem:[%s3679 + $0x8] sm:$0xff]
    %v8157 = vld [vmem:[%s3679 + $0x10] sm:$0xff]
    %v8158 = vld [vmem:[%s3679 + $0x18] sm:$0xff]
    %v8159 = vld [vmem:[%s3679 + $0x20] sm:$0xff]
    %v8160 = vld [vmem:[%s3679 + $0x28] sm:$0xff]
    %v8161 = vld [vmem:[%s3679 + $0x30] sm:$0xf]
    %v8162 = vld [vmem:[%s3679 + $0x38] sm:$0xf]
    %v8164 = vsel %vm46, %v8161, 0
    %v8167 = vsel %vm46, %v8162, 0
    %v8169 = vand.u32 %v8156, 4294901760
    %8170 = vmatprep.subr.mxu0 %v8169
    %v8171 = vand.u32 %v8155, 4294901760
    %8172 = vmatpush1.msra.mxu0 %v8171
    %v8173 = vand.u32 %v8158, 4294901760
    %8174 = vmatprep.subr.mxu0 %v8173
    %v8175 = vand.u32 %v8157, 4294901760
    %8176 = vmatpush1.msra.mxu0 %v8175
    %v8177 = vand.u32 %v8160, 4294901760
    %8178 = vmatprep.subr.mxu0 %v8177
    %v8179 = vand.u32 %v8159, 4294901760
    %8180 = vmatpush1.msra.mxu0 %v8179
    %v8181 = vand.u32 %v8167, 4294901760
    %8182 = vmatprep.subr.mxu0 %v8181
    %v8183 = vand.u32 %v8164, 4294901760
    %8184 = vmatpush1.msra.mxu0 %v8183
    %8185 = vmatprep.subr.mxu0 0.0
    %8186 = vmatpush1.msra.mxu0 0.0
    %8187 = vmatprep.subr.mxu0 0.0
    %8188 = vmatpush1.msra.mxu0 0.0
    %8189 = vmatprep.subr.mxu0 0.0
    %8190 = vmatpush1.msra.mxu0 0.0
    %8191 = vmatprep.subr.mxu0 0.0
    %8192 = vmatpush1.msra.mxu0 0.0
    %8193 = vmatprep.subr.mxu0 0.0
    %8194 = vmatpush1.msra.mxu0 0.0
    %8195 = vmatprep.subr.mxu0 0.0
    %8196 = vmatpush1.msra.mxu0 0.0
    %8197 = vmatprep.subr.mxu0 0.0
    %8198 = vmatpush1.msra.mxu0 0.0
    %8199 = vmatprep.subr.mxu0 0.0
    %8200 = vmatpush1.msra.mxu0 0.0
    %8201 = vmatprep.subr.mxu0 0.0
    %8202 = vmatpush1.msra.mxu0 0.0
    %8203 = vmatprep.subr.mxu0 0.0
    %8204 = vmatpush1.msra.mxu0 0.0
    %8205 = vmatprep.subr.mxu0 0.0
    %8206 = vmatpush1.msra.mxu0 0.0
    %8207 = vmatprep.subr.mxu0 0.0
    %8208 = vmatpush1.msra.mxu0 0.0
    %8209 = vmatprep.subr.mxu0 0.0
    %8210 = vmatpush1.msra.mxu0 0.0
    %8211 = vmatprep.subr.mxu0 0.0
    %8212 = vmatpush1.msra.mxu0 0.0
    %8213 = vmatprep.subr.mxu0 0.0
    %8214 = vmatpush1.msra.mxu0 0.0
    %8215 = vmatprep.subr.mxu0 0.0
    %8216 = vmatpush1.msra.mxu0 0.0
    %8217 = vmatprep.subr.mxu0 0.0
    %8218 = vmatpush1.msra.mxu0 0.0
    %8219 = vmatprep.subr.mxu0 0.0
    %8220 = vmatpush1.msra.mxu0 0.0
    %8221 = vmatprep.subr.mxu0 0.0
    %8222 = vmatpush1.msra.mxu0 0.0
    %8223 = vmatprep.subr.mxu0 0.0
    %8224 = vmatpush1.msra.mxu0 0.0
    %8225 = vmatprep.subr.mxu0 0.0
    %8226 = vmatpush1.msra.mxu0 0.0
    %8227 = vmatprep.subr.mxu0 0.0
    %8228 = vmatpush1.msra.mxu0 0.0
    %8229 = vmatprep.subr.mxu0 0.0
    %8230 = vmatpush1.msra.mxu0 0.0
    %8231 = vmatprep.subr.mxu0 0.0
    %8232 = vmatpush1.msra.mxu0 0.0
    %8233 = vmatprep.subr.mxu0 0.0
    %8234 = vmatpush1.msra.mxu0 0.0
    %8235 = vmatprep.subr.mxu0 0.0
    %8236 = vmatpush1.msra.mxu0 0.0
    %8237 = vmatprep.subr.mxu0 0.0
    %8238 = vmatpush1.msra.mxu0 0.0
    %8239 = vmatprep.subr.mxu0 0.0
    %8240 = vmatpush1.msra.mxu0 0.0
    %8241 = vmatprep.mubr.f32.mxu0 0.0
    %v8242 = vand.u32 %v4518, 4294901760
    %v8243 = vsub.f32 %v4518, %v8242
    %v8244 = vand.u32 %v8243, 4294901760
    %v8245 = vsub.f32 %v8243, %v8244
    %v8246 = vand.u32 %v8245, 4294901760
    %8247 = vmatmul.mubr.f32.gmra.mrb[0].mxu0 %v8246
    %v8248 = vpop.f32.mrb[0].mxu0
    %v8249 = vadd.f32 0.0, %v8248
    %v8250 = vpop.f32.mrb[0].mxu0
    %v8251 = vadd.f32 0.0, %v8250
    %8252 = vmatprep.mubr.f32.mxu0 0.0
    %v8253 = vand.u32 %v4521, 4294901760
    %v8254 = vsub.f32 %v4521, %v8253
    %v8255 = vand.u32 %v8254, 4294901760
    %v8256 = vsub.f32 %v8254, %v8255
    %v8257 = vand.u32 %v8256, 4294901760
    %8258 = vmatmul.mubr.f32.gmra.mrb[0].mxu0 %v8257
    %v8259 = vpop.f32.mrb[0].mxu0
    %v8260 = vadd.f32 0.0, %v8259
    %v8261 = vpop.f32.mrb[0].mxu0
    %v8262 = vadd.f32 0.0, %v8261
    %8263 = vmatprep.mubr.f32.mxu0 0.0
    %v8264 = vand.u32 %v4524, 4294901760
    %v8265 = vsub.f32 %v4524, %v8264
    %v8266 = vand.u32 %v8265, 4294901760
    %v8267 = vsub.f32 %v8265, %v8266
    %v8268 = vand.u32 %v8267, 4294901760
    %8269 = vmatmul.mubr.f32.gmra.mrb[0].mxu0 %v8268
    %v8270 = vpop.f32.mrb[0].mxu0
    %v8271 = vadd.f32 0.0, %v8270
    %v8272 = vpop.f32.mrb[0].mxu0
    %v8273 = vadd.f32 0.0, %v8272
    %8274 = vmatprep.mubr.f32.mxu0 0.0
    %v8275 = vand.u32 %v4527, 4294901760
    %v8276 = vsub.f32 %v4527, %v8275
    %v8277 = vand.u32 %v8276, 4294901760
    %v8278 = vsub.f32 %v8276, %v8277
    %v8279 = vand.u32 %v8278, 4294901760
    %8280 = vmatmul.mubr.f32.gmra.mrb[0].mxu0 %v8279
    %v8281 = vpop.f32.mrb[0].mxu0
    %v8282 = vadd.f32 0.0, %v8281
    %v8283 = vpop.f32.mrb[0].mxu0
    %v8284 = vadd.f32 0.0, %v8283
    %8285 = vdwg.mxu0
    %v8286 = vand.u32 %v8156, 4294901760
    %v8287 = vsub.f32 %v8156, %v8286
    %v8288 = vand.u32 %v8287, 4294901760
    %v8289 = vsub.f32 %v8287, %v8288
    %v8290 = vand.u32 %v8289, 4294901760
    %8291 = vmatprep.subr.mxu0 %v8290
    %v8292 = vand.u32 %v8155, 4294901760
    %v8293 = vsub.f32 %v8155, %v8292
    %v8294 = vand.u32 %v8293, 4294901760
    %v8295 = vsub.f32 %v8293, %v8294
    %v8296 = vand.u32 %v8295, 4294901760
    %8297 = vmatpush1.msra.mxu0 %v8296
    %v8298 = vand.u32 %v8158, 4294901760
    %v8299 = vsub.f32 %v8158, %v8298
    %v8300 = vand.u32 %v8299, 4294901760
    %v8301 = vsub.f32 %v8299, %v8300
    %v8302 = vand.u32 %v8301, 4294901760
    %8303 = vmatprep.subr.mxu0 %v8302
    %v8304 = vand.u32 %v8157, 4294901760
    %v8305 = vsub.f32 %v8157, %v8304
    %v8306 = vand.u32 %v8305, 4294901760
    %v8307 = vsub.f32 %v8305, %v8306
    %v8308 = vand.u32 %v8307, 4294901760
    %8309 = vmatpush1.msra.mxu0 %v8308
    %v8310 = vand.u32 %v8160, 4294901760
    %v8311 = vsub.f32 %v8160, %v8310
    %v8312 = vand.u32 %v8311, 4294901760
    %v8313 = vsub.f32 %v8311, %v8312
    %v8314 = vand.u32 %v8313, 4294901760
    %8315 = vmatprep.subr.mxu0 %v8314
    %v8316 = vand.u32 %v8159, 4294901760
    %v8317 = vsub.f32 %v8159, %v8316
    %v8318 = vand.u32 %v8317, 4294901760
    %v8319 = vsub.f32 %v8317, %v8318
    %v8320 = vand.u32 %v8319, 4294901760
    %8321 = vmatpush1.msra.mxu0 %v8320
    %v8322 = vand.u32 %v8167, 4294901760
    %v8323 = vsub.f32 %v8167, %v8322
    %v8324 = vand.u32 %v8323, 4294901760
    %v8325 = vsub.f32 %v8323, %v8324
    %v8326 = vand.u32 %v8325, 4294901760
    %8327 = vmatprep.subr.mxu0 %v8326
    %v8328 = vand.u32 %v8164, 4294901760
    %v8329 = vsub.f32 %v8164, %v8328
    %v8330 = vand.u32 %v8329, 4294901760
    %v8331 = vsub.f32 %v8329, %v8330
    %v8332 = vand.u32 %v8331, 4294901760
    %8333 = vmatpush1.msra.mxu0 %v8332
    %8334 = vmatprep.subr.mxu0 0.0
    %8335 = vmatpush1.msra.mxu0 0.0
    %8336 = vmatprep.subr.mxu0 0.0
    %8337 = vmatpush1.msra.mxu0 0.0
    %8338 = vmatprep.subr.mxu0 0.0
    %8339 = vmatpush1.msra.mxu0 0.0
    %8340 = vmatprep.subr.mxu0 0.0
    %8341 = vmatpush1.msra.mxu0 0.0
    %8342 = vmatprep.subr.mxu0 0.0
    %8343 = vmatpush1.msra.mxu0 0.0
    %8344 = vmatprep.subr.mxu0 0.0
    %8345 = vmatpush1.msra.mxu0 0.0
    %8346 = vmatprep.subr.mxu0 0.0
    %8347 = vmatpush1.msra.mxu0 0.0
    %8348 = vmatprep.subr.mxu0 0.0
    %8349 = vmatpush1.msra.mxu0 0.0
    %8350 = vmatprep.subr.mxu0 0.0
    %8351 = vmatpush1.msra.mxu0 0.0
    %8352 = vmatprep.subr.mxu0 0.0
    %8353 = vmatpush1.msra.mxu0 0.0
    %8354 = vmatprep.subr.mxu0 0.0
    %8355 = vmatpush1.msra.mxu0 0.0
    %8356 = vmatprep.subr.mxu0 0.0
    %8357 = vmatpush1.msra.mxu0 0.0
    %8358 = vmatprep.subr.mxu0 0.0
    %8359 = vmatpush1.msra.mxu0 0.0
    %8360 = vmatprep.subr.mxu0 0.0
    %8361 = vmatpush1.msra.mxu0 0.0
    %8362 = vmatprep.subr.mxu0 0.0
    %8363 = vmatpush1.msra.mxu0 0.0
    %8364 = vmatprep.subr.mxu0 0.0
    %8365 = vmatpush1.msra.mxu0 0.0
    %8366 = vmatprep.subr.mxu0 0.0
    %8367 = vmatpush1.msra.mxu0 0.0
    %8368 = vmatprep.subr.mxu0 0.0
    %8369 = vmatpush1.msra.mxu0 0.0
    %8370 = vmatprep.subr.mxu0 0.0
    %8371 = vmatpush1.msra.mxu0 0.0
    %8372 = vmatprep.subr.mxu0 0.0
    %8373 = vmatpush1.msra.mxu0 0.0
    %8374 = vmatprep.subr.mxu0 0.0
    %8375 = vmatpush1.msra.mxu0 0.0
    %8376 = vmatprep.subr.mxu0 0.0
    %8377 = vmatpush1.msra.mxu0 0.0
    %8378 = vmatprep.subr.mxu0 0.0
    %8379 = vmatpush1.msra.mxu0 0.0
    %8380 = vmatprep.subr.mxu0 0.0
    %8381 = vmatpush1.msra.mxu0 0.0
    %8382 = vmatprep.subr.mxu0 0.0
    %8383 = vmatpush1.msra.mxu0 0.0
    %8384 = vmatprep.subr.mxu0 0.0
    %8385 = vmatpush1.msra.mxu0 0.0
    %8386 = vmatprep.subr.mxu0 0.0
    %8387 = vmatpush1.msra.mxu0 0.0
    %8388 = vmatprep.subr.mxu0 0.0
    %8389 = vmatpush1.msra.mxu0 0.0
    %8390 = vmatprep.mubr.f32.mxu0 0.0
    %v8391 = vand.u32 %v4518, 4294901760
    %8392 = vmatmul.mubr.f32.gmra.mrb[0].mxu0 %v8391
    %v8393 = vpop.f32.mrb[0].mxu0
    %v8394 = vadd.f32 %v8249, %v8393
    %v8395 = vpop.f32.mrb[0].mxu0
    %v8396 = vadd.f32 %v8251, %v8395
    %8397 = vmatprep.mubr.f32.mxu0 0.0
    %v8398 = vand.u32 %v4521, 4294901760
    %8399 = vmatmul.mubr.f32.gmra.mrb[0].mxu0 %v8398
    %v8400 = vpop.f32.mrb[0].mxu0
    %v8401 = vadd.f32 %v8260, %v8400
    %v8402 = vpop.f32.mrb[0].mxu0
    %v8403 = vadd.f32 %v8262, %v8402
    %8404 = vmatprep.mubr.f32.mxu0 0.0
    %v8405 = vand.u32 %v4524, 4294901760
    %8406 = vmatmul.mubr.f32.gmra.mrb[0].mxu0 %v8405
    %v8407 = vpop.f32.mrb[0].mxu0
    %v8408 = vadd.f32 %v8271, %v8407
    %v8409 = vpop.f32.mrb[0].mxu0
    %v8410 = vadd.f32 %v8273, %v8409
    %8411 = vmatprep.mubr.f32.mxu0 0.0
    %v8412 = vand.u32 %v4527, 4294901760
    %8413 = vmatmul.mubr.f32.gmra.mrb[0].mxu0 %v8412
    %v8414 = vpop.f32.mrb[0].mxu0
    %v8415 = vadd.f32 %v8282, %v8414
    %v8416 = vpop.f32.mrb[0].mxu0
    %v8417 = vadd.f32 %v8284, %v8416
    %8418 = vdwg.mxu0
    %v8419 = vand.u32 %v8156, 4294901760
    %v8420 = vsub.f32 %v8156, %v8419
    %8421 = vmatprep.subr.mxu0 %v8420
    %v8422 = vand.u32 %v8155, 4294901760
    %v8423 = vsub.f32 %v8155, %v8422
    %8424 = vmatpush1.msra.mxu0 %v8423
    %v8425 = vand.u32 %v8158, 4294901760
    %v8426 = vsub.f32 %v8158, %v8425
    %8427 = vmatprep.subr.mxu0 %v8426
    %v8428 = vand.u32 %v8157, 4294901760
    %v8429 = vsub.f32 %v8157, %v8428
    %8430 = vmatpush1.msra.mxu0 %v8429
    %v8431 = vand.u32 %v8160, 4294901760
    %v8432 = vsub.f32 %v8160, %v8431
    %8433 = vmatprep.subr.mxu0 %v8432
    %v8434 = vand.u32 %v8159, 4294901760
    %v8435 = vsub.f32 %v8159, %v8434
    %8436 = vmatpush1.msra.mxu0 %v8435
    %v8437 = vand.u32 %v8167, 4294901760
    %v8438 = vsub.f32 %v8167, %v8437
    %8439 = vmatprep.subr.mxu0 %v8438
    %v8440 = vand.u32 %v8164, 4294901760
    %v8441 = vsub.f32 %v8164, %v8440
    %8442 = vmatpush1.msra.mxu0 %v8441
    %8443 = vmatprep.subr.mxu0 0.0
    %8444 = vmatpush1.msra.mxu0 0.0
    %8445 = vmatprep.subr.mxu0 0.0
    %8446 = vmatpush1.msra.mxu0 0.0
    %8447 = vmatprep.subr.mxu0 0.0
    %8448 = vmatpush1.msra.mxu0 0.0
    %8449 = vmatprep.subr.mxu0 0.0
    %8450 = vmatpush1.msra.mxu0 0.0
    %8451 = vmatprep.subr.mxu0 0.0
    %8452 = vmatpush1.msra.mxu0 0.0
    %8453 = vmatprep.subr.mxu0 0.0
    %8454 = vmatpush1.msra.mxu0 0.0
    %8455 = vmatprep.subr.mxu0 0.0
    %8456 = vmatpush1.msra.mxu0 0.0
    %8457 = vmatprep.subr.mxu0 0.0
    %8458 = vmatpush1.msra.mxu0 0.0
    %8459 = vmatprep.subr.mxu0 0.0
    %8460 = vmatpush1.msra.mxu0 0.0
    %8461 = vmatprep.subr.mxu0 0.0
    %8462 = vmatpush1.msra.mxu0 0.0
    %8463 = vmatprep.subr.mxu0 0.0
    %8464 = vmatpush1.msra.mxu0 0.0
    %8465 = vmatprep.subr.mxu0 0.0
    %8466 = vmatpush1.msra.mxu0 0.0
    %8467 = vmatprep.subr.mxu0 0.0
    %8468 = vmatpush1.msra.mxu0 0.0
    %8469 = vmatprep.subr.mxu0 0.0
    %8470 = vmatpush1.msra.mxu0 0.0
    %8471 = vmatprep.subr.mxu0 0.0
    %8472 = vmatpush1.msra.mxu0 0.0
    %8473 = vmatprep.subr.mxu0 0.0
    %8474 = vmatpush1.msra.mxu0 0.0
    %8475 = vmatprep.subr.mxu0 0.0
    %8476 = vmatpush1.msra.mxu0 0.0
    %8477 = vmatprep.subr.mxu0 0.0
    %8478 = vmatpush1.msra.mxu0 0.0
    %8479 = vmatprep.subr.mxu0 0.0
    %8480 = vmatpush1.msra.mxu0 0.0
    %8481 = vmatprep.subr.mxu0 0.0
    %8482 = vmatpush1.msra.mxu0 0.0
    %8483 = vmatprep.subr.mxu0 0.0
    %8484 = vmatpush1.msra.mxu0 0.0
    %8485 = vmatprep.subr.mxu0 0.0
    %8486 = vmatpush1.msra.mxu0 0.0
    %8487 = vmatprep.subr.mxu0 0.0
    %8488 = vmatpush1.msra.mxu0 0.0
    %8489 = vmatprep.subr.mxu0 0.0
    %8490 = vmatpush1.msra.mxu0 0.0
    %8491 = vmatprep.subr.mxu0 0.0
    %8492 = vmatpush1.msra.mxu0 0.0
    %8493 = vmatprep.subr.mxu0 0.0
    %8494 = vmatpush1.msra.mxu0 0.0
    %8495 = vmatprep.subr.mxu0 0.0
    %8496 = vmatpush1.msra.mxu0 0.0
    %8497 = vmatprep.subr.mxu0 0.0
    %8498 = vmatpush1.msra.mxu0 0.0
    %8499 = vmatprep.mubr.f32.mxu0 0.0
    %v8500 = vand.u32 %v4518, 4294901760
    %v8501 = vsub.f32 %v4518, %v8500
    %8502 = vmatmul.mubr.f32.gmra.mrb[0].mxu0 %v8501
    %v8503 = vpop.f32.mrb[0].mxu0
    %v8504 = vadd.f32 %v8394, %v8503
    %v8505 = vpop.f32.mrb[0].mxu0
    %v8506 = vadd.f32 %v8396, %v8505
    %8507 = vmatprep.mubr.f32.mxu0 0.0
    %v8508 = vand.u32 %v4521, 4294901760
    %v8509 = vsub.f32 %v4521, %v8508
    %8510 = vmatmul.mubr.f32.gmra.mrb[0].mxu0 %v8509
    %v8511 = vpop.f32.mrb[0].mxu0
    %v8512 = vadd.f32 %v8401, %v8511
    %v8513 = vpop.f32.mrb[0].mxu0
    %v8514 = vadd.f32 %v8403, %v8513
    %8515 = vmatprep.mubr.f32.mxu0 0.0
    %v8516 = vand.u32 %v4524, 4294901760
    %v8517 = vsub.f32 %v4524, %v8516
    %8518 = vmatmul.mubr.f32.gmra.mrb[0].mxu0 %v8517
    %v8519 = vpop.f32.mrb[0].mxu0
    %v8520 = vadd.f32 %v8408, %v8519
    %v8521 = vpop.f32.mrb[0].mxu0
    %v8522 = vadd.f32 %v8410, %v8521
    %8523 = vmatprep.mubr.f32.mxu0 0.0
    %v8524 = vand.u32 %v4527, 4294901760
    %v8525 = vsub.f32 %v4527, %v8524
    %8526 = vmatmul.mubr.f32.gmra.mrb[0].mxu0 %v8525
    %v8527 = vpop.f32.mrb[0].mxu0
    %v8528 = vadd.f32 %v8415, %v8527
    %v8529 = vpop.f32.mrb[0].mxu0
    %v8530 = vadd.f32 %v8417, %v8529
    %8531 = vdwg.mxu0
    %v8532 = vand.u32 %v8156, 4294901760
    %8533 = vmatprep.subr.mxu0 %v8532
    %v8534 = vand.u32 %v8155, 4294901760
    %8535 = vmatpush1.msra.mxu0 %v8534
    %v8536 = vand.u32 %v8158, 4294901760
    %8537 = vmatprep.subr.mxu0 %v8536
    %v8538 = vand.u32 %v8157, 4294901760
    %8539 = vmatpush1.msra.mxu0 %v8538
    %v8540 = vand.u32 %v8160, 4294901760
    %8541 = vmatprep.subr.mxu0 %v8540
    %v8542 = vand.u32 %v8159, 4294901760
    %8543 = vmatpush1.msra.mxu0 %v8542
    %v8544 = vand.u32 %v8167, 4294901760
    %8545 = vmatprep.subr.mxu0 %v8544
    %v8546 = vand.u32 %v8164, 4294901760
    %8547 = vmatpush1.msra.mxu0 %v8546
    %8548 = vmatprep.subr.mxu0 0.0
    %8549 = vmatpush1.msra.mxu0 0.0
    %8550 = vmatprep.subr.mxu0 0.0
    %8551 = vmatpush1.msra.mxu0 0.0
    %8552 = vmatprep.subr.mxu0 0.0
    %8553 = vmatpush1.msra.mxu0 0.0
    %8554 = vmatprep.subr.mxu0 0.0
    %8555 = vmatpush1.msra.mxu0 0.0
    %8556 = vmatprep.subr.mxu0 0.0
    %8557 = vmatpush1.msra.mxu0 0.0
    %8558 = vmatprep.subr.mxu0 0.0
    %8559 = vmatpush1.msra.mxu0 0.0
    %8560 = vmatprep.subr.mxu0 0.0
    %8561 = vmatpush1.msra.mxu0 0.0
    %8562 = vmatprep.subr.mxu0 0.0
    %8563 = vmatpush1.msra.mxu0 0.0
    %8564 = vmatprep.subr.mxu0 0.0
    %8565 = vmatpush1.msra.mxu0 0.0
    %8566 = vmatprep.subr.mxu0 0.0
    %8567 = vmatpush1.msra.mxu0 0.0
    %8568 = vmatprep.subr.mxu0 0.0
    %8569 = vmatpush1.msra.mxu0 0.0
    %8570 = vmatprep.subr.mxu0 0.0
    %8571 = vmatpush1.msra.mxu0 0.0
    %8572 = vmatprep.subr.mxu0 0.0
    %8573 = vmatpush1.msra.mxu0 0.0
    %8574 = vmatprep.subr.mxu0 0.0
    %8575 = vmatpush1.msra.mxu0 0.0
    %8576 = vmatprep.subr.mxu0 0.0
    %8577 = vmatpush1.msra.mxu0 0.0
    %8578 = vmatprep.subr.mxu0 0.0
    %8579 = vmatpush1.msra.mxu0 0.0
    %8580 = vmatprep.subr.mxu0 0.0
    %8581 = vmatpush1.msra.mxu0 0.0
    %8582 = vmatprep.subr.mxu0 0.0
    %8583 = vmatpush1.msra.mxu0 0.0
    %8584 = vmatprep.subr.mxu0 0.0
    %8585 = vmatpush1.msra.mxu0 0.0
    %8586 = vmatprep.subr.mxu0 0.0
    %8587 = vmatpush1.msra.mxu0 0.0
    %8588 = vmatprep.subr.mxu0 0.0
    %8589 = vmatpush1.msra.mxu0 0.0
    %8590 = vmatprep.subr.mxu0 0.0
    %8591 = vmatpush1.msra.mxu0 0.0
    %8592 = vmatprep.subr.mxu0 0.0
    %8593 = vmatpush1.msra.mxu0 0.0
    %8594 = vmatprep.subr.mxu0 0.0
    %8595 = vmatpush1.msra.mxu0 0.0
    %8596 = vmatprep.subr.mxu0 0.0
    %8597 = vmatpush1.msra.mxu0 0.0
    %8598 = vmatprep.subr.mxu0 0.0
    %8599 = vmatpush1.msra.mxu0 0.0
    %8600 = vmatprep.subr.mxu0 0.0
    %8601 = vmatpush1.msra.mxu0 0.0
    %8602 = vmatprep.subr.mxu0 0.0
    %8603 = vmatpush1.msra.mxu0 0.0
    %8604 = vmatprep.mubr.f32.mxu0 0.0
    %v8605 = vand.u32 %v4518, 4294901760
    %v8606 = vsub.f32 %v4518, %v8605
    %v8607 = vand.u32 %v8606, 4294901760
    %8608 = vmatmul.mubr.f32.gmra.mrb[0].mxu0 %v8607
    %v8609 = vpop.f32.mrb[0].mxu0
    %v8610 = vadd.f32 %v8504, %v8609
    %v8611 = vpop.f32.mrb[0].mxu0
    %v8612 = vadd.f32 %v8506, %v8611
    %8613 = vmatprep.mubr.f32.mxu0 0.0
    %v8614 = vand.u32 %v4521, 4294901760
    %v8615 = vsub.f32 %v4521, %v8614
    %v8616 = vand.u32 %v8615, 4294901760
    %8617 = vmatmul.mubr.f32.gmra.mrb[0].mxu0 %v8616
    %v8618 = vpop.f32.mrb[0].mxu0
    %v8619 = vadd.f32 %v8512, %v8618
    %v8620 = vpop.f32.mrb[0].mxu0
    %v8621 = vadd.f32 %v8514, %v8620
    %8622 = vmatprep.mubr.f32.mxu0 0.0
    %v8623 = vand.u32 %v4524, 4294901760
    %v8624 = vsub.f32 %v4524, %v8623
    %v8625 = vand.u32 %v8624, 4294901760
    %8626 = vmatmul.mubr.f32.gmra.mrb[0].mxu0 %v8625
    %v8627 = vpop.f32.mrb[0].mxu0
    %v8628 = vadd.f32 %v8520, %v8627
    %v8629 = vpop.f32.mrb[0].mxu0
    %v8630 = vadd.f32 %v8522, %v8629
    %8631 = vmatprep.mubr.f32.mxu0 0.0
    %v8632 = vand.u32 %v4527, 4294901760
    %v8633 = vsub.f32 %v4527, %v8632
    %v8634 = vand.u32 %v8633, 4294901760
    %8635 = vmatmul.mubr.f32.gmra.mrb[0].mxu0 %v8634
    %v8636 = vpop.f32.mrb[0].mxu0
    %v8637 = vadd.f32 %v8528, %v8636
    %v8638 = vpop.f32.mrb[0].mxu0
    %v8639 = vadd.f32 %v8530, %v8638
    %8640 = vdwg.mxu0
    %v8641 = vand.u32 %v8156, 4294901760
    %v8642 = vsub.f32 %v8156, %v8641
    %v8643 = vand.u32 %v8642, 4294901760
    %8644 = vmatprep.subr.mxu0 %v8643
    %v8645 = vand.u32 %v8155, 4294901760
    %v8646 = vsub.f32 %v8155, %v8645
    %v8647 = vand.u32 %v8646, 4294901760
    %8648 = vmatpush1.msra.mxu0 %v8647
    %v8649 = vand.u32 %v8158, 4294901760
    %v8650 = vsub.f32 %v8158, %v8649
    %v8651 = vand.u32 %v8650, 4294901760
    %8652 = vmatprep.subr.mxu0 %v8651
    %v8653 = vand.u32 %v8157, 4294901760
    %v8654 = vsub.f32 %v8157, %v8653
    %v8655 = vand.u32 %v8654, 4294901760
    %8656 = vmatpush1.msra.mxu0 %v8655
    %v8657 = vand.u32 %v8160, 4294901760
    %v8658 = vsub.f32 %v8160, %v8657
    %v8659 = vand.u32 %v8658, 4294901760
    %8660 = vmatprep.subr.mxu0 %v8659
    %v8661 = vand.u32 %v8159, 4294901760
    %v8662 = vsub.f32 %v8159, %v8661
    %v8663 = vand.u32 %v8662, 4294901760
    %8664 = vmatpush1.msra.mxu0 %v8663
    %v8665 = vand.u32 %v8167, 4294901760
    %v8666 = vsub.f32 %v8167, %v8665
    %v8667 = vand.u32 %v8666, 4294901760
    %8668 = vmatprep.subr.mxu0 %v8667
    %v8669 = vand.u32 %v8164, 4294901760
    %v8670 = vsub.f32 %v8164, %v8669
    %v8671 = vand.u32 %v8670, 4294901760
    %8672 = vmatpush1.msra.mxu0 %v8671
    %8673 = vmatprep.subr.mxu0 0.0
    %8674 = vmatpush1.msra.mxu0 0.0
    %8675 = vmatprep.subr.mxu0 0.0
    %8676 = vmatpush1.msra.mxu0 0.0
    %8677 = vmatprep.subr.mxu0 0.0
    %8678 = vmatpush1.msra.mxu0 0.0
    %8679 = vmatprep.subr.mxu0 0.0
    %8680 = vmatpush1.msra.mxu0 0.0
    %8681 = vmatprep.subr.mxu0 0.0
    %8682 = vmatpush1.msra.mxu0 0.0
    %8683 = vmatprep.subr.mxu0 0.0
    %8684 = vmatpush1.msra.mxu0 0.0
    %8685 = vmatprep.subr.mxu0 0.0
    %8686 = vmatpush1.msra.mxu0 0.0
    %8687 = vmatprep.subr.mxu0 0.0
    %8688 = vmatpush1.msra.mxu0 0.0
    %8689 = vmatprep.subr.mxu0 0.0
    %8690 = vmatpush1.msra.mxu0 0.0
    %8691 = vmatprep.subr.mxu0 0.0
    %8692 = vmatpush1.msra.mxu0 0.0
    %8693 = vmatprep.subr.mxu0 0.0
    %8694 = vmatpush1.msra.mxu0 0.0
    %8695 = vmatprep.subr.mxu0 0.0
    %8696 = vmatpush1.msra.mxu0 0.0
    %8697 = vmatprep.subr.mxu0 0.0
    %8698 = vmatpush1.msra.mxu0 0.0
    %8699 = vmatprep.subr.mxu0 0.0
    %8700 = vmatpush1.msra.mxu0 0.0
    %8701 = vmatprep.subr.mxu0 0.0
    %8702 = vmatpush1.msra.mxu0 0.0
    %8703 = vmatprep.subr.mxu0 0.0
    %8704 = vmatpush1.msra.mxu0 0.0
    %8705 = vmatprep.subr.mxu0 0.0
    %8706 = vmatpush1.msra.mxu0 0.0
    %8707 = vmatprep.subr.mxu0 0.0
    %8708 = vmatpush1.msra.mxu0 0.0
    %8709 = vmatprep.subr.mxu0 0.0
    %8710 = vmatpush1.msra.mxu0 0.0
    %8711 = vmatprep.subr.mxu0 0.0
    %8712 = vmatpush1.msra.mxu0 0.0
    %8713 = vmatprep.subr.mxu0 0.0
    %8714 = vmatpush1.msra.mxu0 0.0
    %8715 = vmatprep.subr.mxu0 0.0
    %8716 = vmatpush1.msra.mxu0 0.0
    %8717 = vmatprep.subr.mxu0 0.0
    %8718 = vmatpush1.msra.mxu0 0.0
    %8719 = vmatprep.subr.mxu0 0.0
    %8720 = vmatpush1.msra.mxu0 0.0
    %8721 = vmatprep.subr.mxu0 0.0
    %8722 = vmatpush1.msra.mxu0 0.0
    %8723 = vmatprep.subr.mxu0 0.0
    %8724 = vmatpush1.msra.mxu0 0.0
    %8725 = vmatprep.subr.mxu0 0.0
    %8726 = vmatpush1.msra.mxu0 0.0
    %8727 = vmatprep.subr.mxu0 0.0
    %8728 = vmatpush1.msra.mxu0 0.0
    %8729 = vmatprep.mubr.f32.mxu0 0.0
    %v8730 = vand.u32 %v4518, 4294901760
    %8731 = vmatmul.mubr.f32.gmra.mrb[0].mxu0 %v8730
    %v8732 = vpop.f32.mrb[0].mxu0
    %v8733 = vadd.f32 %v8610, %v8732
    %v8734 = vpop.f32.mrb[0].mxu0
    %v8735 = vadd.f32 %v8612, %v8734
    %8736 = vmatprep.mubr.f32.mxu0 0.0
    %v8737 = vand.u32 %v4521, 4294901760
    %8738 = vmatmul.mubr.f32.gmra.mrb[0].mxu0 %v8737
    %v8739 = vpop.f32.mrb[0].mxu0
    %v8740 = vadd.f32 %v8619, %v8739
    %v8741 = vpop.f32.mrb[0].mxu0
    %v8742 = vadd.f32 %v8621, %v8741
    %8743 = vmatprep.mubr.f32.mxu0 0.0
    %v8744 = vand.u32 %v4524, 4294901760
    %8745 = vmatmul.mubr.f32.gmra.mrb[0].mxu0 %v8744
    %v8746 = vpop.f32.mrb[0].mxu0
    %v8747 = vadd.f32 %v8628, %v8746
    %v8748 = vpop.f32.mrb[0].mxu0
    %v8749 = vadd.f32 %v8630, %v8748
    %8750 = vmatprep.mubr.f32.mxu0 0.0
    %v8751 = vand.u32 %v4527, 4294901760
    %8752 = vmatmul.mubr.f32.gmra.mrb[0].mxu0 %v8751
    %v8753 = vpop.f32.mrb[0].mxu0
    %v8754 = vadd.f32 %v8637, %v8753
    %v8755 = vpop.f32.mrb[0].mxu0
    %v8756 = vadd.f32 %v8639, %v8755
    %8757 = vdwg.mxu0
    %v8758 = vand.u32 %v8156, 4294901760
    %8759 = vmatprep.subr.mxu0 %v8758
    %v8760 = vand.u32 %v8155, 4294901760
    %8761 = vmatpush1.msra.mxu0 %v8760
    %v8762 = vand.u32 %v8158, 4294901760
    %8763 = vmatprep.subr.mxu0 %v8762
    %v8764 = vand.u32 %v8157, 4294901760
    %8765 = vmatpush1.msra.mxu0 %v8764
    %v8766 = vand.u32 %v8160, 4294901760
    %8767 = vmatprep.subr.mxu0 %v8766
    %v8768 = vand.u32 %v8159, 4294901760
    %8769 = vmatpush1.msra.mxu0 %v8768
    %v8770 = vand.u32 %v8167, 4294901760
    %8771 = vmatprep.subr.mxu0 %v8770
    %v8772 = vand.u32 %v8164, 4294901760
    %8773 = vmatpush1.msra.mxu0 %v8772
    %8774 = vmatprep.subr.mxu0 0.0
    %8775 = vmatpush1.msra.mxu0 0.0
    %8776 = vmatprep.subr.mxu0 0.0
    %8777 = vmatpush1.msra.mxu0 0.0
    %8778 = vmatprep.subr.mxu0 0.0
    %8779 = vmatpush1.msra.mxu0 0.0
    %8780 = vmatprep.subr.mxu0 0.0
    %8781 = vmatpush1.msra.mxu0 0.0
    %8782 = vmatprep.subr.mxu0 0.0
    %8783 = vmatpush1.msra.mxu0 0.0
    %8784 = vmatprep.subr.mxu0 0.0
    %8785 = vmatpush1.msra.mxu0 0.0
    %8786 = vmatprep.subr.mxu0 0.0
    %8787 = vmatpush1.msra.mxu0 0.0
    %8788 = vmatprep.subr.mxu0 0.0
    %8789 = vmatpush1.msra.mxu0 0.0
    %8790 = vmatprep.subr.mxu0 0.0
    %8791 = vmatpush1.msra.mxu0 0.0
    %8792 = vmatprep.subr.mxu0 0.0
    %8793 = vmatpush1.msra.mxu0 0.0
    %8794 = vmatprep.subr.mxu0 0.0
    %8795 = vmatpush1.msra.mxu0 0.0
    %8796 = vmatprep.subr.mxu0 0.0
    %8797 = vmatpush1.msra.mxu0 0.0
    %8798 = vmatprep.subr.mxu0 0.0
    %8799 = vmatpush1.msra.mxu0 0.0
    %8800 = vmatprep.subr.mxu0 0.0
    %8801 = vmatpush1.msra.mxu0 0.0
    %8802 = vmatprep.subr.mxu0 0.0
    %8803 = vmatpush1.msra.mxu0 0.0
    %8804 = vmatprep.subr.mxu0 0.0
    %8805 = vmatpush1.msra.mxu0 0.0
    %8806 = vmatprep.subr.mxu0 0.0
    %8807 = vmatpush1.msra.mxu0 0.0
    %8808 = vmatprep.subr.mxu0 0.0
    %8809 = vmatpush1.msra.mxu0 0.0
    %8810 = vmatprep.subr.mxu0 0.0
    %8811 = vmatpush1.msra.mxu0 0.0
    %8812 = vmatprep.subr.mxu0 0.0
    %8813 = vmatpush1.msra.mxu0 0.0
    %8814 = vmatprep.subr.mxu0 0.0
    %8815 = vmatpush1.msra.mxu0 0.0
    %8816 = vmatprep.subr.mxu0 0.0
    %8817 = vmatpush1.msra.mxu0 0.0
    %8818 = vmatprep.subr.mxu0 0.0
    %8819 = vmatpush1.msra.mxu0 0.0
    %8820 = vmatprep.subr.mxu0 0.0
    %8821 = vmatpush1.msra.mxu0 0.0
    %8822 = vmatprep.subr.mxu0 0.0
    %8823 = vmatpush1.msra.mxu0 0.0
    %8824 = vmatprep.subr.mxu0 0.0
    %8825 = vmatpush1.msra.mxu0 0.0
    %8826 = vmatprep.subr.mxu0 0.0
    %8827 = vmatpush1.msra.mxu0 0.0
    %8828 = vmatprep.subr.mxu0 0.0
    %8829 = vmatpush1.msra.mxu0 0.0
    %8830 = vmatprep.mubr.f32.mxu0 0.0
    %v8831 = vand.u32 %v4518, 4294901760
    %8832 = vmatmul.mubr.f32.gmra.mrb[0].mxu0 %v8831
    %v8833 = vpop.f32.mrb[0].mxu0
    %v8834 = vadd.f32 %v8733, %v8833
    %v8835 = vpop.f32.mrb[0].mxu0
    %v8836 = vadd.f32 %v8735, %v8835
    %8837 = vmatprep.mubr.f32.mxu0 0.0
    %v8838 = vand.u32 %v4521, 4294901760
    %8839 = vmatmul.mubr.f32.gmra.mrb[0].mxu0 %v8838
    %v8840 = vpop.f32.mrb[0].mxu0
    %v8841 = vadd.f32 %v8740, %v8840
    %v8842 = vpop.f32.mrb[0].mxu0
    %v8843 = vadd.f32 %v8742, %v8842
    %8844 = vmatprep.mubr.f32.mxu0 0.0
    %v8845 = vand.u32 %v4524, 4294901760
    %8846 = vmatmul.mubr.f32.gmra.mrb[0].mxu0 %v8845
    %v8847 = vpop.f32.mrb[0].mxu0
    %v8848 = vadd.f32 %v8747, %v8847
    %v8849 = vpop.f32.mrb[0].mxu0
    %v8850 = vadd.f32 %v8749, %v8849
    %8851 = vmatprep.mubr.f32.mxu0 0.0
    %v8852 = vand.u32 %v4527, 4294901760
    %8853 = vmatmul.mubr.f32.gmra.mrb[0].mxu0 %v8852
    %v8854 = vpop.f32.mrb[0].mxu0
    %v8855 = vadd.f32 %v8754, %v8854
    %v8856 = vpop.f32.mrb[0].mxu0
    %v8857 = vadd.f32 %v8756, %v8856
    %8858 = vdwg.mxu0
    %v8867 = vrot.slane %v8834, 2
    %v8868 = vrot.slane %v8841, 2
    %v8869 = vsel %vm2200, %v8867, %v8868
    %v8870 = vrot.slane %v8836, 2
    %v8871 = vrot.slane %v8843, 2
    %v8872 = vsel %vm2200, %v8870, %v8871
    %v8873 = vrot.slane %v8848, 2
    %v8874 = vsel %vm2200, %v8868, %v8873
    %v8875 = vrot.slane %v8850, 2
    %v8876 = vsel %vm2200, %v8871, %v8875
    %v8877 = vrot.slane %v8855, 2
    %v8878 = vsel %vm2200, %v8873, %v8877
    %v8879 = vrot.slane %v8857, 2
    %v8880 = vsel %vm2200, %v8875, %v8879
    %v8889 = vadd.f32 %v8147, %v8869
    %v8890 = vadd.f32 %v8148, %v8872
    %v8891 = vadd.f32 %v8149, %v8874
    %v8892 = vadd.f32 %v8150, %v8876
    %v8893 = vadd.f32 %v8151, %v8878
    %v8894 = vadd.f32 %v8152, %v8880
    %v8895 = vadd.f32 %v8153, %v8877
    %v8896 = vadd.f32 %v8154, %v8879
    %v8897 = vmax.f32 %v6701, %v8889
    %v8898 = vmax.f32 %v6702, %v8890
    %v8899 = vmax.f32 %v6703, %v8891
    %v8900 = vmax.f32 %v6704, %v8892
    %v8901 = vmax.f32 %v6705, %v8893
    %v8902 = vmax.f32 %v6706, %v8894
    %v8903 = vmax.f32 %v6707, %v8895
    %v8904 = vmax.f32 %v6708, %v8896
    %v8905 = vld [vmem:[%s2] sm:$0x3]
    %v8907 = vlaneseq
    %v8908 = vshrl.u32 %v8907, 7
    %v8909 = vsub.s32 0, %v8908
    %v8910 = vrot.slane %v8905, %v8909
    %v8911 = vlaneseq
    %v8912 = vshrl.u32 %v8911, 7
    %v8913 = vsub.s32 1, %v8912
    %v8914 = vrot.slane %v8905, %v8913
    %v8917 = vadd.f32 %v8897, %v8910
    %v8918 = vadd.f32 %v8898, %v8914
    %v8919 = vadd.f32 %v8899, %v8910
    %v8920 = vadd.f32 %v8900, %v8914
    %v8921 = vadd.f32 %v8901, %v8910
    %v8922 = vadd.f32 %v8902, %v8914
    %v8923 = vadd.f32 %v8903, %v8910
    %v8924 = vadd.f32 %v8904, %v8914
    %v8933 = vrot.slane %v8917, 1
    %v8934 = vrot.slane %v8919, 1
    %v8935 = vsel %vm1456, %v8933, %v8934
    %v8936 = vrot.slane %v8918, 1
    %v8937 = vrot.slane %v8920, 1
    %v8938 = vsel %vm1456, %v8936, %v8937
    %v8939 = vrot.slane %v8921, 1
    %v8940 = vsel %vm1456, %v8934, %v8939
    %v8941 = vrot.slane %v8922, 1
    %v8942 = vsel %vm1456, %v8937, %v8941
    %v8943 = vrot.slane %v8923, 1
    %v8944 = vsel %vm1456, %v8939, %v8943
    %v8945 = vrot.slane %v8924, 1
    %v8946 = vsel %vm1456, %v8941, %v8945
    %v8955 = vmax.f32 %v8917, %v8935
    %v8956 = vmax.f32 %v8918, %v8938
    %v8957 = vmax.f32 %v8919, %v8940
    %v8958 = vmax.f32 %v8920, %v8942
    %v8959 = vmax.f32 %v8921, %v8944
    %v8960 = vmax.f32 %v8922, %v8946
    %v8961 = vmax.f32 %v8923, %v8943
    %v8962 = vmax.f32 %v8924, %v8945
    %v8963 = vmax.f32 %v8955, 0.0
    %v8964 = vmax.f32 %v8956, 0.0
    %v8965 = vmax.f32 %v8957, 0.0
    %v8966 = vmax.f32 %v8958, 0.0
    %v8967 = vmax.f32 %v8959, 0.0
    %v8968 = vmax.f32 %v8960, 0.0
    %v8969 = vmax.f32 %v8961, 0.0
    %v8970 = vmax.f32 %v8962, 0.0
    %s8971 = scalar_lea.vmem [#allocation2], 64
    %8972 = vst [vmem:[%s8971] sm:$0xff] %v8963
    %8973 = vst [vmem:[%s8971 + $0x8] sm:$0xff] %v8964
    %8974 = vst [vmem:[%s8971 + $0x10] sm:$0xff] %v8965
    %8975 = vst [vmem:[%s8971 + $0x18] sm:$0xff] %v8966
    %8976 = vst [vmem:[%s8971 + $0x20] sm:$0xff] %v8967
    %8977 = vst [vmem:[%s8971 + $0x28] sm:$0xff] %v8968
    %8978 = vst [vmem:[%s8971 + $0x30] sm:$0x1] %v8969
    %8979 = vst [vmem:[%s8971 + $0x38] sm:$0x1] %v8970
    %v8980 = vld [vmem:[#allocation2] ss:$8 sm:$0x3]
    %s8981 = scalar_lea.vmem [#allocation2], 64
    %v8982 = vld [vmem:[%s8981] ss:$8 sm:$0x3]
    %v8983 = vld [vmem:[%s3] sm:$0xff]
    %v8984 = vld [vmem:[%s3 + $0x8] sm:$0xff]
    %v8985 = vld [vmem:[%s3 + $0x10] sm:$0x3]
    %v8986 = vld [vmem:[%s3 + $0x18] sm:$0x3]
    %v8989 = vlaneseq
    %v8990 = vshrl.u32 %v8989, 7
    %v8991 = vsub.s32 0, %v8990
    %v8992 = vrot.slane %v8980, %v8991
    %v8993 = vlaneseq
    %v8994 = vshrl.u32 %v8993, 7
    %v8995 = vsub.s32 1, %v8994
    %v8996 = vrot.slane %v8980, %v8995
    %v8997 = vlaneseq
    %v8998 = vshrl.u32 %v8997, 7
    %v8999 = vsub.s32 0, %v8998
    %v9000 = vrot.slane %v8982, %v8999
    %v9001 = vlaneseq
    %v9002 = vshrl.u32 %v9001, 7
    %v9003 = vsub.s32 1, %v9002
    %v9004 = vrot.slane %v8982, %v9003
    %v9009 = vmul.f32 %v8992, %v8983
    %v9010 = vmul.f32 %v8996, %v8984
    %v9011 = vmul.f32 %v8992, %v8985
    %v9012 = vmul.f32 %v8996, %v8986
    %v9013 = vmul.f32 %v9000, %v8983
    %v9014 = vmul.f32 %v9004, %v8984
    %v9015 = vmul.f32 %v9000, %v8985
    %v9016 = vmul.f32 %v9004, %v8986
    %v9017 = vadd.f32 %v9009, 0.0
    %v9018 = vadd.f32 %v9010, 0.0
    %v9019 = vadd.f32 %v9011, 0.0
    %v9020 = vadd.f32 %v9012, 0.0
    %v9021 = vadd.f32 %v9013, 0.0
    %v9022 = vadd.f32 %v9014, 0.0
    %v9023 = vadd.f32 %v9015, 0.0
    %v9024 = vadd.f32 %v9016, 0.0
    %s9025 = scalar_lea.vmem [#allocation2], 2
    %v9026 = vld [vmem:[%s9025] ss:$8 sm:$0x3]
    %s9027 = scalar_lea.vmem [#allocation2], 66
    %v9028 = vld [vmem:[%s9027] ss:$8 sm:$0x3]
    %s9029 = scalar_lea.vmem %s3, 32
    %v9030 = vld [vmem:[%s9029] sm:$0xff]
    %v9031 = vld [vmem:[%s9029 + $0x8] sm:$0xff]
    %v9032 = vld [vmem:[%s9029 + $0x10] sm:$0x3]
    %v9033 = vld [vmem:[%s9029 + $0x18] sm:$0x3]
    %v9036 = vlaneseq
    %v9037 = vshrl.u32 %v9036, 7
    %v9038 = vsub.s32 0, %v9037
    %v9039 = vrot.slane %v9026, %v9038
    %v9040 = vlaneseq
    %v9041 = vshrl.u32 %v9040, 7
    %v9042 = vsub.s32 1, %v9041
    %v9043 = vrot.slane %v9026, %v9042
    %v9044 = vlaneseq
    %v9045 = vshrl.u32 %v9044, 7
    %v9046 = vsub.s32 0, %v9045
    %v9047 = vrot.slane %v9028, %v9046
    %v9048 = vlaneseq
    %v9049 = vshrl.u32 %v9048, 7
    %v9050 = vsub.s32 1, %v9049
    %v9051 = vrot.slane %v9028, %v9050
    %v9056 = vmul.f32 %v9039, %v9030
    %v9057 = vmul.f32 %v9043, %v9031
    %v9058 = vmul.f32 %v9039, %v9032
    %v9059 = vmul.f32 %v9043, %v9033
    %v9060 = vmul.f32 %v9047, %v9030
    %v9061 = vmul.f32 %v9051, %v9031
    %v9062 = vmul.f32 %v9047, %v9032
    %v9063 = vmul.f32 %v9051, %v9033
    %v9064 = vadd.f32 %v9017, %v9056
    %v9065 = vadd.f32 %v9018, %v9057
    %v9066 = vadd.f32 %v9019, %v9058
    %v9067 = vadd.f32 %v9020, %v9059
    %v9068 = vadd.f32 %v9021, %v9060
    %v9069 = vadd.f32 %v9022, %v9061
    %v9070 = vadd.f32 %v9023, %v9062
    %v9071 = vadd.f32 %v9024, %v9063
    %s9072 = scalar_lea.vmem [#allocation2], 4
    %v9073 = vld [vmem:[%s9072] ss:$8 sm:$0x3]
    %s9074 = scalar_lea.vmem [#allocation2], 68
    %v9075 = vld [vmem:[%s9074] ss:$8 sm:$0x3]
    %s9076 = scalar_lea.vmem %s3, 64
    %v9077 = vld [vmem:[%s9076] sm:$0xff]
    %v9078 = vld [vmem:[%s9076 + $0x8] sm:$0xff]
    %v9079 = vld [vmem:[%s9076 + $0x10] sm:$0x3]
    %v9080 = vld [vmem:[%s9076 + $0x18] sm:$0x3]
    %v9083 = vlaneseq
    %v9084 = vshrl.u32 %v9083, 7
    %v9085 = vsub.s32 0, %v9084
    %v9086 = vrot.slane %v9073, %v9085
    %v9087 = vlaneseq
    %v9088 = vshrl.u32 %v9087, 7
    %v9089 = vsub.s32 1, %v9088
    %v9090 = vrot.slane %v9073, %v9089
    %v9091 = vlaneseq
    %v9092 = vshrl.u32 %v9091, 7
    %v9093 = vsub.s32 0, %v9092
    %v9094 = vrot.slane %v9075, %v9093
    %v9095 = vlaneseq
    %v9096 = vshrl.u32 %v9095, 7
    %v9097 = vsub.s32 1, %v9096
    %v9098 = vrot.slane %v9075, %v9097
    %v9103 = vmul.f32 %v9086, %v9077
    %v9104 = vmul.f32 %v9090, %v9078
    %v9105 = vmul.f32 %v9086, %v9079
    %v9106 = vmul.f32 %v9090, %v9080
    %v9107 = vmul.f32 %v9094, %v9077
    %v9108 = vmul.f32 %v9098, %v9078
    %v9109 = vmul.f32 %v9094, %v9079
    %v9110 = vmul.f32 %v9098, %v9080
    %v9111 = vadd.f32 %v9064, %v9103
    %v9112 = vadd.f32 %v9065, %v9104
    %v9113 = vadd.f32 %v9066, %v9105
    %v9114 = vadd.f32 %v9067, %v9106
    %v9115 = vadd.f32 %v9068, %v9107
    %v9116 = vadd.f32 %v9069, %v9108
    %v9117 = vadd.f32 %v9070, %v9109
    %v9118 = vadd.f32 %v9071, %v9110
    %s9119 = scalar_lea.vmem [#allocation2], 6
    %v9120 = vld [vmem:[%s9119] ss:$8 sm:$0x3]
    %s9121 = scalar_lea.vmem [#allocation2], 70
    %v9122 = vld [vmem:[%s9121] ss:$8 sm:$0x3]
    %s9123 = scalar_lea.vmem %s3, 96
    %v9124 = vld [vmem:[%s9123] sm:$0xff]
    %v9125 = vld [vmem:[%s9123 + $0x8] sm:$0xff]
    %v9126 = vld [vmem:[%s9123 + $0x10] sm:$0x3]
    %v9127 = vld [vmem:[%s9123 + $0x18] sm:$0x3]
    %v9130 = vlaneseq
    %v9131 = vshrl.u32 %v9130, 7
    %v9132 = vsub.s32 0, %v9131
    %v9133 = vrot.slane %v9120, %v9132
    %v9134 = vlaneseq
    %v9135 = vshrl.u32 %v9134, 7
    %v9136 = vsub.s32 1, %v9135
    %v9137 = vrot.slane %v9120, %v9136
    %v9138 = vlaneseq
    %v9139 = vshrl.u32 %v9138, 7
    %v9140 = vsub.s32 0, %v9139
    %v9141 = vrot.slane %v9122, %v9140
    %v9142 = vlaneseq
    %v9143 = vshrl.u32 %v9142, 7
    %v9144 = vsub.s32 1, %v9143
    %v9145 = vrot.slane %v9122, %v9144
    %v9150 = vmul.f32 %v9133, %v9124
    %v9151 = vmul.f32 %v9137, %v9125
    %v9152 = vmul.f32 %v9133, %v9126
    %v9153 = vmul.f32 %v9137, %v9127
    %v9154 = vmul.f32 %v9141, %v9124
    %v9155 = vmul.f32 %v9145, %v9125
    %v9156 = vmul.f32 %v9141, %v9126
    %v9157 = vmul.f32 %v9145, %v9127
    %v9158 = vadd.f32 %v9111, %v9150
    %v9159 = vadd.f32 %v9112, %v9151
    %v9160 = vadd.f32 %v9113, %v9152
    %v9161 = vadd.f32 %v9114, %v9153
    %v9162 = vadd.f32 %v9115, %v9154
    %v9163 = vadd.f32 %v9116, %v9155
    %v9164 = vadd.f32 %v9117, %v9156
    %v9165 = vadd.f32 %v9118, %v9157
    %s9166 = scalar_lea.vmem [#allocation2], 16
    %v9167 = vld [vmem:[%s9166] ss:$8 sm:$0x3]
    %s9168 = scalar_lea.vmem [#allocation2], 80
    %v9169 = vld [vmem:[%s9168] ss:$8 sm:$0x3]
    %s9170 = scalar_lea.vmem %s3, 128
    %v9171 = vld [vmem:[%s9170] sm:$0xff]
    %v9172 = vld [vmem:[%s9170 + $0x8] sm:$0xff]
    %v9173 = vld [vmem:[%s9170 + $0x10] sm:$0x3]
    %v9174 = vld [vmem:[%s9170 + $0x18] sm:$0x3]
    %v9177 = vlaneseq
    %v9178 = vshrl.u32 %v9177, 7
    %v9179 = vsub.s32 0, %v9178
    %v9180 = vrot.slane %v9167, %v9179
    %v9181 = vlaneseq
    %v9182 = vshrl.u32 %v9181, 7
    %v9183 = vsub.s32 1, %v9182
    %v9184 = vrot.slane %v9167, %v9183
    %v9185 = vlaneseq
    %v9186 = vshrl.u32 %v9185, 7
    %v9187 = vsub.s32 0, %v9186
    %v9188 = vrot.slane %v9169, %v9187
    %v9189 = vlaneseq
    %v9190 = vshrl.u32 %v9189, 7
    %v9191 = vsub.s32 1, %v9190
    %v9192 = vrot.slane %v9169, %v9191
    %v9197 = vmul.f32 %v9180, %v9171
    %v9198 = vmul.f32 %v9184, %v9172
    %v9199 = vmul.f32 %v9180, %v9173
    %v9200 = vmul.f32 %v9184, %v9174
    %v9201 = vmul.f32 %v9188, %v9171
    %v9202 = vmul.f32 %v9192, %v9172
    %v9203 = vmul.f32 %v9188, %v9173
    %v9204 = vmul.f32 %v9192, %v9174
    %v9205 = vadd.f32 %v9158, %v9197
    %v9206 = vadd.f32 %v9159, %v9198
    %v9207 = vadd.f32 %v9160, %v9199
    %v9208 = vadd.f32 %v9161, %v9200
    %v9209 = vadd.f32 %v9162, %v9201
    %v9210 = vadd.f32 %v9163, %v9202
    %v9211 = vadd.f32 %v9164, %v9203
    %v9212 = vadd.f32 %v9165, %v9204
    %s9213 = scalar_lea.vmem [#allocation2], 18
    %v9214 = vld [vmem:[%s9213] ss:$8 sm:$0x3]
    %s9215 = scalar_lea.vmem [#allocation2], 82
    %v9216 = vld [vmem:[%s9215] ss:$8 sm:$0x3]
    %s9217 = scalar_lea.vmem %s3, 160
    %v9218 = vld [vmem:[%s9217] sm:$0xff]
    %v9219 = vld [vmem:[%s9217 + $0x8] sm:$0xff]
    %v9220 = vld [vmem:[%s9217 + $0x10] sm:$0x3]
    %v9221 = vld [vmem:[%s9217 + $0x18] sm:$0x3]
    %v9224 = vlaneseq
    %v9225 = vshrl.u32 %v9224, 7
    %v9226 = vsub.s32 0, %v9225
    %v9227 = vrot.slane %v9214, %v9226
    %v9228 = vlaneseq
    %v9229 = vshrl.u32 %v9228, 7
    %v9230 = vsub.s32 1, %v9229
    %v9231 = vrot.slane %v9214, %v9230
    %v9232 = vlaneseq
    %v9233 = vshrl.u32 %v9232, 7
    %v9234 = vsub.s32 0, %v9233
    %v9235 = vrot.slane %v9216, %v9234
    %v9236 = vlaneseq
    %v9237 = vshrl.u32 %v9236, 7
    %v9238 = vsub.s32 1, %v9237
    %v9239 = vrot.slane %v9216, %v9238
    %v9244 = vmul.f32 %v9227, %v9218
    %v9245 = vmul.f32 %v9231, %v9219
    %v9246 = vmul.f32 %v9227, %v9220
    %v9247 = vmul.f32 %v9231, %v9221
    %v9248 = vmul.f32 %v9235, %v9218
    %v9249 = vmul.f32 %v9239, %v9219
    %v9250 = vmul.f32 %v9235, %v9220
    %v9251 = vmul.f32 %v9239, %v9221
    %v9252 = vadd.f32 %v9205, %v9244
    %v9253 = vadd.f32 %v9206, %v9245
    %v9254 = vadd.f32 %v9207, %v9246
    %v9255 = vadd.f32 %v9208, %v9247
    %v9256 = vadd.f32 %v9209, %v9248
    %v9257 = vadd.f32 %v9210, %v9249
    %v9258 = vadd.f32 %v9211, %v9250
    %v9259 = vadd.f32 %v9212, %v9251
    %s9260 = scalar_lea.vmem [#allocation2], 20
    %v9261 = vld [vmem:[%s9260] ss:$8 sm:$0x3]
    %s9262 = scalar_lea.vmem [#allocation2], 84
    %v9263 = vld [vmem:[%s9262] ss:$8 sm:$0x3]
    %s9264 = scalar_lea.vmem %s3, 192
    %v9265 = vld [vmem:[%s9264] sm:$0xff]
    %v9266 = vld [vmem:[%s9264 + $0x8] sm:$0xff]
    %v9267 = vld [vmem:[%s9264 + $0x10] sm:$0x3]
    %v9268 = vld [vmem:[%s9264 + $0x18] sm:$0x3]
    %v9271 = vlaneseq
    %v9272 = vshrl.u32 %v9271, 7
    %v9273 = vsub.s32 0, %v9272
    %v9274 = vrot.slane %v9261, %v9273
    %v9275 = vlaneseq
    %v9276 = vshrl.u32 %v9275, 7
    %v9277 = vsub.s32 1, %v9276
    %v9278 = vrot.slane %v9261, %v9277
    %v9279 = vlaneseq
    %v9280 = vshrl.u32 %v9279, 7
    %v9281 = vsub.s32 0, %v9280
    %v9282 = vrot.slane %v9263, %v9281
    %v9283 = vlaneseq
    %v9284 = vshrl.u32 %v9283, 7
    %v9285 = vsub.s32 1, %v9284
    %v9286 = vrot.slane %v9263, %v9285
    %v9291 = vmul.f32 %v9274, %v9265
    %v9292 = vmul.f32 %v9278, %v9266
    %v9293 = vmul.f32 %v9274, %v9267
    %v9294 = vmul.f32 %v9278, %v9268
    %v9295 = vmul.f32 %v9282, %v9265
    %v9296 = vmul.f32 %v9286, %v9266
    %v9297 = vmul.f32 %v9282, %v9267
    %v9298 = vmul.f32 %v9286, %v9268
    %v9299 = vadd.f32 %v9252, %v9291
    %v9300 = vadd.f32 %v9253, %v9292
    %v9301 = vadd.f32 %v9254, %v9293
    %v9302 = vadd.f32 %v9255, %v9294
    %v9303 = vadd.f32 %v9256, %v9295
    %v9304 = vadd.f32 %v9257, %v9296
    %v9305 = vadd.f32 %v9258, %v9297
    %v9306 = vadd.f32 %v9259, %v9298
    %s9307 = scalar_lea.vmem [#allocation2], 22
    %v9308 = vld [vmem:[%s9307] ss:$8 sm:$0x3]
    %s9309 = scalar_lea.vmem [#allocation2], 86
    %v9310 = vld [vmem:[%s9309] ss:$8 sm:$0x3]
    %s9311 = scalar_lea.vmem %s3, 224
    %v9312 = vld [vmem:[%s9311] sm:$0xff]
    %v9313 = vld [vmem:[%s9311 + $0x8] sm:$0xff]
    %v9314 = vld [vmem:[%s9311 + $0x10] sm:$0x3]
    %v9315 = vld [vmem:[%s9311 + $0x18] sm:$0x3]
    %v9318 = vlaneseq
    %v9319 = vshrl.u32 %v9318, 7
    %v9320 = vsub.s32 0, %v9319
    %v9321 = vrot.slane %v9308, %v9320
    %v9322 = vlaneseq
    %v9323 = vshrl.u32 %v9322, 7
    %v9324 = vsub.s32 1, %v9323
    %v9325 = vrot.slane %v9308, %v9324
    %v9326 = vlaneseq
    %v9327 = vshrl.u32 %v9326, 7
    %v9328 = vsub.s32 0, %v9327
    %v9329 = vrot.slane %v9310, %v9328
    %v9330 = vlaneseq
    %v9331 = vshrl.u32 %v9330, 7
    %v9332 = vsub.s32 1, %v9331
    %v9333 = vrot.slane %v9310, %v9332
    %v9338 = vmul.f32 %v9321, %v9312
    %v9339 = vmul.f32 %v9325, %v9313
    %v9340 = vmul.f32 %v9321, %v9314
    %v9341 = vmul.f32 %v9325, %v9315
    %v9342 = vmul.f32 %v9329, %v9312
    %v9343 = vmul.f32 %v9333, %v9313
    %v9344 = vmul.f32 %v9329, %v9314
    %v9345 = vmul.f32 %v9333, %v9315
    %v9346 = vadd.f32 %v9299, %v9338
    %v9347 = vadd.f32 %v9300, %v9339
    %v9348 = vadd.f32 %v9301, %v9340
    %v9349 = vadd.f32 %v9302, %v9341
    %v9350 = vadd.f32 %v9303, %v9342
    %v9351 = vadd.f32 %v9304, %v9343
    %v9352 = vadd.f32 %v9305, %v9344
    %v9353 = vadd.f32 %v9306, %v9345
    %s9354 = scalar_lea.vmem [#allocation2], 32
    %v9355 = vld [vmem:[%s9354] ss:$8 sm:$0x3]
    %s9356 = scalar_lea.vmem [#allocation2], 96
    %v9357 = vld [vmem:[%s9356] ss:$8 sm:$0x3]
    %s9358 = scalar_lea.vmem %s3, 256
    %v9359 = vld [vmem:[%s9358] sm:$0xff]
    %v9360 = vld [vmem:[%s9358 + $0x8] sm:$0xff]
    %v9361 = vld [vmem:[%s9358 + $0x10] sm:$0x3]
    %v9362 = vld [vmem:[%s9358 + $0x18] sm:$0x3]
    %v9365 = vlaneseq
    %v9366 = vshrl.u32 %v9365, 7
    %v9367 = vsub.s32 0, %v9366
    %v9368 = vrot.slane %v9355, %v9367
    %v9369 = vlaneseq
    %v9370 = vshrl.u32 %v9369, 7
    %v9371 = vsub.s32 1, %v9370
    %v9372 = vrot.slane %v9355, %v9371
    %v9373 = vlaneseq
    %v9374 = vshrl.u32 %v9373, 7
    %v9375 = vsub.s32 0, %v9374
    %v9376 = vrot.slane %v9357, %v9375
    %v9377 = vlaneseq
    %v9378 = vshrl.u32 %v9377, 7
    %v9379 = vsub.s32 1, %v9378
    %v9380 = vrot.slane %v9357, %v9379
    %v9385 = vmul.f32 %v9368, %v9359
    %v9386 = vmul.f32 %v9372, %v9360
    %v9387 = vmul.f32 %v9368, %v9361
    %v9388 = vmul.f32 %v9372, %v9362
    %v9389 = vmul.f32 %v9376, %v9359
    %v9390 = vmul.f32 %v9380, %v9360
    %v9391 = vmul.f32 %v9376, %v9361
    %v9392 = vmul.f32 %v9380, %v9362
    %v9393 = vadd.f32 %v9346, %v9385
    %v9394 = vadd.f32 %v9347, %v9386
    %v9395 = vadd.f32 %v9348, %v9387
    %v9396 = vadd.f32 %v9349, %v9388
    %v9397 = vadd.f32 %v9350, %v9389
    %v9398 = vadd.f32 %v9351, %v9390
    %v9399 = vadd.f32 %v9352, %v9391
    %v9400 = vadd.f32 %v9353, %v9392
    %s9401 = scalar_lea.vmem [#allocation2], 34
    %v9402 = vld [vmem:[%s9401] ss:$8 sm:$0x3]
    %s9403 = scalar_lea.vmem [#allocation2], 98
    %v9404 = vld [vmem:[%s9403] ss:$8 sm:$0x3]
    %s9405 = scalar_lea.vmem %s3, 288
    %v9406 = vld [vmem:[%s9405] sm:$0xff]
    %v9407 = vld [vmem:[%s9405 + $0x8] sm:$0xff]
    %v9408 = vld [vmem:[%s9405 + $0x10] sm:$0x3]
    %v9409 = vld [vmem:[%s9405 + $0x18] sm:$0x3]
    %v9412 = vlaneseq
    %v9413 = vshrl.u32 %v9412, 7
    %v9414 = vsub.s32 0, %v9413
    %v9415 = vrot.slane %v9402, %v9414
    %v9416 = vlaneseq
    %v9417 = vshrl.u32 %v9416, 7
    %v9418 = vsub.s32 1, %v9417
    %v9419 = vrot.slane %v9402, %v9418
    %v9420 = vlaneseq
    %v9421 = vshrl.u32 %v9420, 7
    %v9422 = vsub.s32 0, %v9421
    %v9423 = vrot.slane %v9404, %v9422
    %v9424 = vlaneseq
    %v9425 = vshrl.u32 %v9424, 7
    %v9426 = vsub.s32 1, %v9425
    %v9427 = vrot.slane %v9404, %v9426
    %v9432 = vmul.f32 %v9415, %v9406
    %v9433 = vmul.f32 %v9419, %v9407
    %v9434 = vmul.f32 %v9415, %v9408
    %v9435 = vmul.f32 %v9419, %v9409
    %v9436 = vmul.f32 %v9423, %v9406
    %v9437 = vmul.f32 %v9427, %v9407
    %v9438 = vmul.f32 %v9423, %v9408
    %v9439 = vmul.f32 %v9427, %v9409
    %v9440 = vadd.f32 %v9393, %v9432
    %v9441 = vadd.f32 %v9394, %v9433
    %v9442 = vadd.f32 %v9395, %v9434
    %v9443 = vadd.f32 %v9396, %v9435
    %v9444 = vadd.f32 %v9397, %v9436
    %v9445 = vadd.f32 %v9398, %v9437
    %v9446 = vadd.f32 %v9399, %v9438
    %v9447 = vadd.f32 %v9400, %v9439
    %s9448 = scalar_lea.vmem [#allocation2], 36
    %v9449 = vld [vmem:[%s9448] ss:$8 sm:$0x3]
    %s9450 = scalar_lea.vmem [#allocation2], 100
    %v9451 = vld [vmem:[%s9450] ss:$8 sm:$0x3]
    %s9452 = scalar_lea.vmem %s3, 320
    %v9453 = vld [vmem:[%s9452] sm:$0xff]
    %v9454 = vld [vmem:[%s9452 + $0x8] sm:$0xff]
    %v9455 = vld [vmem:[%s9452 + $0x10] sm:$0x3]
    %v9456 = vld [vmem:[%s9452 + $0x18] sm:$0x3]
    %v9459 = vlaneseq
    %v9460 = vshrl.u32 %v9459, 7
    %v9461 = vsub.s32 0, %v9460
    %v9462 = vrot.slane %v9449, %v9461
    %v9463 = vlaneseq
    %v9464 = vshrl.u32 %v9463, 7
    %v9465 = vsub.s32 1, %v9464
    %v9466 = vrot.slane %v9449, %v9465
    %v9467 = vlaneseq
    %v9468 = vshrl.u32 %v9467, 7
    %v9469 = vsub.s32 0, %v9468
    %v9470 = vrot.slane %v9451, %v9469
    %v9471 = vlaneseq
    %v9472 = vshrl.u32 %v9471, 7
    %v9473 = vsub.s32 1, %v9472
    %v9474 = vrot.slane %v9451, %v9473
    %v9479 = vmul.f32 %v9462, %v9453
    %v9480 = vmul.f32 %v9466, %v9454
    %v9481 = vmul.f32 %v9462, %v9455
    %v9482 = vmul.f32 %v9466, %v9456
    %v9483 = vmul.f32 %v9470, %v9453
    %v9484 = vmul.f32 %v9474, %v9454
    %v9485 = vmul.f32 %v9470, %v9455
    %v9486 = vmul.f32 %v9474, %v9456
    %v9487 = vadd.f32 %v9440, %v9479
    %v9488 = vadd.f32 %v9441, %v9480
    %v9489 = vadd.f32 %v9442, %v9481
    %v9490 = vadd.f32 %v9443, %v9482
    %v9491 = vadd.f32 %v9444, %v9483
    %v9492 = vadd.f32 %v9445, %v9484
    %v9493 = vadd.f32 %v9446, %v9485
    %v9494 = vadd.f32 %v9447, %v9486
    %s9495 = scalar_lea.vmem [#allocation2], 38
    %v9496 = vld [vmem:[%s9495] ss:$8 sm:$0x3]
    %s9497 = scalar_lea.vmem [#allocation2], 102
    %v9498 = vld [vmem:[%s9497] ss:$8 sm:$0x3]
    %s9499 = scalar_lea.vmem %s3, 352
    %v9500 = vld [vmem:[%s9499] sm:$0xff]
    %v9501 = vld [vmem:[%s9499 + $0x8] sm:$0xff]
    %v9502 = vld [vmem:[%s9499 + $0x10] sm:$0x3]
    %v9503 = vld [vmem:[%s9499 + $0x18] sm:$0x3]
    %v9506 = vlaneseq
    %v9507 = vshrl.u32 %v9506, 7
    %v9508 = vsub.s32 0, %v9507
    %v9509 = vrot.slane %v9496, %v9508
    %v9510 = vlaneseq
    %v9511 = vshrl.u32 %v9510, 7
    %v9512 = vsub.s32 1, %v9511
    %v9513 = vrot.slane %v9496, %v9512
    %v9514 = vlaneseq
    %v9515 = vshrl.u32 %v9514, 7
    %v9516 = vsub.s32 0, %v9515
    %v9517 = vrot.slane %v9498, %v9516
    %v9518 = vlaneseq
    %v9519 = vshrl.u32 %v9518, 7
    %v9520 = vsub.s32 1, %v9519
    %v9521 = vrot.slane %v9498, %v9520
    %v9526 = vmul.f32 %v9509, %v9500
    %v9527 = vmul.f32 %v9513, %v9501
    %v9528 = vmul.f32 %v9509, %v9502
    %v9529 = vmul.f32 %v9513, %v9503
    %v9530 = vmul.f32 %v9517, %v9500
    %v9531 = vmul.f32 %v9521, %v9501
    %v9532 = vmul.f32 %v9517, %v9502
    %v9533 = vmul.f32 %v9521, %v9503
    %v9534 = vadd.f32 %v9487, %v9526
    %v9535 = vadd.f32 %v9488, %v9527
    %v9536 = vadd.f32 %v9489, %v9528
    %v9537 = vadd.f32 %v9490, %v9529
    %v9538 = vadd.f32 %v9491, %v9530
    %v9539 = vadd.f32 %v9492, %v9531
    %v9540 = vadd.f32 %v9493, %v9532
    %v9541 = vadd.f32 %v9494, %v9533
    %s9542 = scalar_lea.vmem [#allocation2], 48
    %v9543 = vld [vmem:[%s9542] ss:$8 sm:$0x3]
    %s9544 = scalar_lea.vmem [#allocation2], 112
    %v9545 = vld [vmem:[%s9544] ss:$8 sm:$0x3]
    %s9546 = scalar_lea.vmem %s3, 384
    %v9547 = vld [vmem:[%s9546] sm:$0xff]
    %v9548 = vld [vmem:[%s9546 + $0x8] sm:$0xff]
    %v9549 = vld [vmem:[%s9546 + $0x10] sm:$0x3]
    %v9550 = vld [vmem:[%s9546 + $0x18] sm:$0x3]
    %v9553 = vlaneseq
    %v9554 = vshrl.u32 %v9553, 7
    %v9555 = vsub.s32 0, %v9554
    %v9556 = vrot.slane %v9543, %v9555
    %v9557 = vlaneseq
    %v9558 = vshrl.u32 %v9557, 7
    %v9559 = vsub.s32 1, %v9558
    %v9560 = vrot.slane %v9543, %v9559
    %v9561 = vlaneseq
    %v9562 = vshrl.u32 %v9561, 7
    %v9563 = vsub.s32 0, %v9562
    %v9564 = vrot.slane %v9545, %v9563
    %v9565 = vlaneseq
    %v9566 = vshrl.u32 %v9565, 7
    %v9567 = vsub.s32 1, %v9566
    %v9568 = vrot.slane %v9545, %v9567
    %v9573 = vmul.f32 %v9556, %v9547
    %v9574 = vmul.f32 %v9560, %v9548
    %v9575 = vmul.f32 %v9556, %v9549
    %v9576 = vmul.f32 %v9560, %v9550
    %v9577 = vmul.f32 %v9564, %v9547
    %v9578 = vmul.f32 %v9568, %v9548
    %v9579 = vmul.f32 %v9564, %v9549
    %v9580 = vmul.f32 %v9568, %v9550
    %v9581 = vadd.f32 %v9534, %v9573
    %v9582 = vadd.f32 %v9535, %v9574
    %v9583 = vadd.f32 %v9536, %v9575
    %v9584 = vadd.f32 %v9537, %v9576
    %v9585 = vadd.f32 %v9538, %v9577
    %v9586 = vadd.f32 %v9539, %v9578
    %v9587 = vadd.f32 %v9540, %v9579
    %v9588 = vadd.f32 %v9541, %v9580
    %v9589 = vadd.f32 %v9581, %v9582
    %9590 = vadd.xlane.f32.xlu0 %v9589
    %v9591 = vpop.xlane.xlu0 %9590
    %vm9592 = vcmask 1041408
    %v9593 = vsel %vm9592, %v9583, 0.0
    %v9594 = vsel %vm9592, %v9584, 0.0
    %v9595 = vadd.f32 %v9593, %v9594
    %9596 = vadd.xlane.f32.xlu0 %v9595
    %v9597 = vpop.xlane.xlu0 %9596
    %v9598 = vadd.f32 %v9585, %v9586
    %9599 = vadd.xlane.f32.xlu0 %v9598
    %v9600 = vpop.xlane.xlu0 %9599
    %v9601 = vsel %vm9592, %v9587, 0.0
    %v9602 = vsel %vm9592, %v9588, 0.0
    %v9603 = vadd.f32 %v9601, %v9602
    %9604 = vadd.xlane.f32.xlu0 %v9603
    %v9605 = vpop.xlane.xlu0 %9604
    %v9606 = vld [vmem:[%s4] sm:$0x1]
    %v9608 = vlaneseq
    %v9609 = vshrl.u32 %v9608, 7
    %v9610 = vsub.s32 0, %v9609
    %v9611 = vrot.slane %v9606, %v9610
    %9613 = vbcast.lane.b32.xlu0 %v9611, 256
    %v9614 = vpop.permute.xlu0 %9613
    %s9616 = sor.u32 256, 8
    %9617 = vbcast.lane.b32.xlu0 %v9611, %s9616
    %v9618 = vpop.permute.xlu0 %9617
    %v9621 = vadd.f32 %v9591, %v9614
    %v9622 = vadd.f32 %v9597, %v9618
    %v9623 = vadd.f32 %v9600, %v9614
    %v9624 = vadd.f32 %v9605, %v9618
    %9629 = vset.pattern.permute.xlu0 0
    %9630 = vperm.xlu0 %9629, %v9621
    %v9631 = vpop.permute.xlu0 %9630
    %9632 = vset.pattern.permute.xlu0 0
    %9633 = vperm.xlu0 %9632, %v9622
    %v9634 = vpop.permute.xlu0 %9633
    %9635 = vset.pattern.permute.xlu0 0
    %9636 = vperm.xlu0 %9635, %v9623
    %v9637 = vpop.permute.xlu0 %9636
    %9638 = vset.pattern.permute.xlu0 0
    %9639 = vperm.xlu0 %9638, %v9624
    %v9640 = vpop.permute.xlu0 %9639
    %v9641 = vlaneseq
    %v9642 = vand.u32 %v9641, 127
    %v9643 = vlaneseq
    %v9644 = vshrl.u32 %v9643, 7
    %v9645 = vsub.s32 %v9642, %v9644
    %v9646 = vrot.slane %v9631, %v9645
    %v9647 = vadd.s32 %v9642, 4294967288
    %v9648 = vlaneseq
    %v9649 = vshrl.u32 %v9648, 7
    %v9650 = vsub.s32 %v9647, %v9649
    %v9651 = vrot.slane %v9634, %v9650
    %vm9652 = vcmask 130112
    %v9653 = vsel %vm9652, %v9651, %v9646
    %v9654 = vlaneseq
    %v9655 = vshrl.u32 %v9654, 7
    %v9656 = vsub.s32 %v9642, %v9655
    %v9657 = vrot.slane %v9637, %v9656
    %v9658 = vlaneseq
    %v9659 = vshrl.u32 %v9658, 7
    %v9660 = vsub.s32 %v9647, %v9659
    %v9661 = vrot.slane %v9640, %v9660
    %v9662 = vsel %vm9652, %v9661, %v9657
    %vm9663 = vcmask 1041409
    %v9664 = vsel %vm9663, %v9662, %v9653
    %vm9666 = vcmask 74752
    %v9667 = vsel %vm9666, %v9664, -inf
    %9668 = vmax.xlane.f32.xlu0 %v9667
    %v9669 = vpop.xlane.xlu0 %9668
    %v9671 = vlaneseq
    %v9672 = vshrl.u32 %v9671, 7
    %v9673 = vsub.s32 0, %v9672
    %v9674 = vrot.slane %v9669, %v9673
    %v9675 = vlaneseq
    %v9676 = vshrl.u32 %v9675, 7
    %v9677 = vsub.s32 1, %v9676
    %v9678 = vrot.slane %v9669, %v9677
    %v9681 = vsub.f32 %v9621, %v9674
    %v9682 = vsub.f32 %v9622, %v9674
    %v9683 = vsub.f32 %v9623, %v9678
    %v9684 = vsub.f32 %v9624, %v9678
    %v9685 = vmul.f32 %v9681, 1.442695
    %v9686 = vpow.pop %v9685
    %v9687 = vmul.f32 %v9682, 1.442695
    %v9688 = vpow.pop %v9687
    %v9689 = vmul.f32 %v9683, 1.442695
    %v9690 = vpow.pop %v9689
    %v9691 = vmul.f32 %v9684, 1.442695
    %v9692 = vpow.pop %v9691
    %9697 = vset.pattern.permute.xlu0 0
    %9698 = vperm.xlu0 %9697, %v9686
    %v9699 = vpop.permute.xlu0 %9698
    %9700 = vset.pattern.permute.xlu0 0
    %9701 = vperm.xlu0 %9700, %v9688
    %v9702 = vpop.permute.xlu0 %9701
    %9703 = vset.pattern.permute.xlu0 0
    %9704 = vperm.xlu0 %9703, %v9690
    %v9705 = vpop.permute.xlu0 %9704
    %9706 = vset.pattern.permute.xlu0 0
    %9707 = vperm.xlu0 %9706, %v9692
    %v9708 = vpop.permute.xlu0 %9707
    %v9709 = vlaneseq
    %v9710 = vshrl.u32 %v9709, 7
    %v9711 = vsub.s32 %v9642, %v9710
    %v9712 = vrot.slane %v9699, %v9711
    %v9713 = vlaneseq
    %v9714 = vshrl.u32 %v9713, 7
    %v9715 = vsub.s32 %v9647, %v9714
    %v9716 = vrot.slane %v9702, %v9715
    %v9717 = vsel %vm9652, %v9716, %v9712
    %v9718 = vlaneseq
    %v9719 = vshrl.u32 %v9718, 7
    %v9720 = vsub.s32 %v9642, %v9719
    %v9721 = vrot.slane %v9705, %v9720
    %v9722 = vlaneseq
    %v9723 = vshrl.u32 %v9722, 7
    %v9724 = vsub.s32 %v9647, %v9723
    %v9725 = vrot.slane %v9708, %v9724
    %v9726 = vsel %vm9652, %v9725, %v9721
    %v9727 = vsel %vm9663, %v9726, %v9717
    %v9729 = vsel %vm9666, %v9727, 0.0
    %9730 = vadd.xlane.f32.xlu0 %v9729
    %v9731 = vpop.xlane.xlu0 %9730
    %v9732 = vlog2.pop %v9731
    %v9733 = vmul.f32 %v9732, 0.6931472
    %v9735 = vlaneseq
    %v9736 = vshrl.u32 %v9735, 7
    %v9737 = vsub.s32 0, %v9736
    %v9738 = vrot.slane %v9733, %v9737
    %v9739 = vlaneseq
    %v9740 = vshrl.u32 %v9739, 7
    %v9741 = vsub.s32 1, %v9740
    %v9742 = vrot.slane %v9733, %v9741
    %v9745 = vsub.f32 %v9681, %v9738
    %v9746 = vsub.f32 %v9682, %v9738
    %v9747 = vsub.f32 %v9683, %v9742
    %v9748 = vsub.f32 %v9684, %v9742
    %9753 = vset.pattern.permute.xlu0 0
    %9754 = vperm.xlu0 %9753, %v9745
    %v9755 = vpop.permute.xlu0 %9754
    %9756 = vset.pattern.permute.xlu0 0
    %9757 = vperm.xlu0 %9756, %v9746
    %v9758 = vpop.permute.xlu0 %9757
    %9759 = vset.pattern.permute.xlu0 0
    %9760 = vperm.xlu0 %9759, %v9747
    %v9761 = vpop.permute.xlu0 %9760
    %9762 = vset.pattern.permute.xlu0 0
    %9763 = vperm.xlu0 %9762, %v9748
    %v9764 = vpop.permute.xlu0 %9763
    %v9765 = vlaneseq
    %v9766 = vshrl.u32 %v9765, 7
    %v9767 = vsub.s32 %v9642, %v9766
    %v9768 = vrot.slane %v9755, %v9767
    %v9769 = vlaneseq
    %v9770 = vshrl.u32 %v9769, 7
    %v9771 = vsub.s32 %v9647, %v9770
    %v9772 = vrot.slane %v9758, %v9771
    %v9773 = vsel %vm9652, %v9772, %v9768
    %v9774 = vlaneseq
    %v9775 = vshrl.u32 %v9774, 7
    %v9776 = vsub.s32 %v9642, %v9775
    %v9777 = vrot.slane %v9761, %v9776
    %v9778 = vlaneseq
    %v9779 = vshrl.u32 %v9778, 7
    %v9780 = vsub.s32 %v9647, %v9779
    %v9781 = vrot.slane %v9764, %v9780
    %v9782 = vsel %vm9652, %v9781, %v9777
    %v9783 = vsel %vm9663, %v9782, %v9773
    %9785 = vst.msk [vmem:[#allocation3] sm:$0x3] %vm9666, %v9783
    // Predicated region
    $region22: #{net_forward.1} parent=1 // pred_check
      _
    $region23: #{net_forward.1} parent=1 // pred_check_branch
      %9787 = sbr.rel (0) target = $region25
    $region24: #{net_forward.1} parent=1 // pred_region
      %s9789 = ssub.s32 32, 32
      %9790 = vsyncadd [#allocation4], %s9789
      %s9792 = sshll.u32 [#allocation3], 4
      %s9793 = int_to_ptr.vmem [resolvable:$true] %s9792
      %9795 = dma.vmem_to_hbm [thread:$0]  %s9793, 32, %s5, [#allocation4]
    $region25: #{net_forward.1} parent=1 // pred_fallthru
      _
    // Predicated region
    $region26: #{net_forward.1} parent=1 // pred_check
      _
    $region27: #{net_forward.1} parent=1 // pred_check_branch
      %9797 = sbr.rel (0) target = $region29
    $region28: #{net_forward.1} parent=1 // pred_region
      %9798 = dma.done [#allocation4], 32
    $region29: #{net_forward.1} parent=1 // pred_fallthru
      _
    %9799 = vsyncpa [#allocation4], 1

</llo_original>
